<compile_context>
chip_gen: v7x
topology: tpu7x:2x2x1
jax: 0.10.0
libtpu: 0.0.40
codegen_flags: <defaults>
</compile_context>

<pallas_src>
import functools
import math

import jax
import jax.numpy as jnp
from jax import lax
from jax.experimental import pallas as pl
from jax.experimental.pallas import tpu as pltpu


NEG_INF = -1e9
LN_EPS = 1e-5


# ----------------------------- in-kernel helpers ----------------------------

def _layernorm(x, g, b, eps):
    """Row-wise LayerNorm in f32.  x: (T, D); g, b: (1, D)."""
    mean = jnp.mean(x, axis=-1, keepdims=True)
    xc = x - mean
    var = jnp.mean(xc * xc, axis=-1, keepdims=True)
    return xc * lax.rsqrt(var + eps) * g + b


def _mha_heads(q, k, v, *, num_heads, causal):
    """Multi-head attention for one batch element, all heads in-kernel.

    q: (Tq, D) f32, k/v: (Tk, D) f32 -> (Tq, D) f32.
    Softmax math kept in f32; causal mask generated with iota (no HBM mask).
    """
    tq, d = q.shape
    tk = k.shape[0]
    hd = d // num_heads
    scale = 1.0 / math.sqrt(hd)

    if causal:
        row = lax.broadcasted_iota(jnp.int32, (tq, tk), 0)
        col = lax.broadcasted_iota(jnp.int32, (tq, tk), 1)
        keep = row >= col

    outs = []
    for h in range(num_heads):
        sl = slice(h * hd, (h + 1) * hd)
        qh, kh, vh = q[:, sl], k[:, sl], v[:, sl]
        s = jnp.dot(qh, kh.T, preferred_element_type=jnp.float32) * scale
        if causal:
            s = jnp.where(keep, s, NEG_INF)
        s = s - jnp.max(s, axis=-1, keepdims=True)
        p = jnp.exp(s)
        p = p * pl.reciprocal(jnp.sum(p, axis=-1, keepdims=True), approx=True)
        outs.append(jnp.dot(p, vh, preferred_element_type=jnp.float32))
    return jnp.concatenate(outs, axis=-1)            # (Tq, D)


# ------------------------- fused decoder-layer kernel ------------------------

def _decoder_layer_kernel(
        x_ref, enc_ref,
        sa_wqkv_ref, sa_bqkv_ref, sa_wo_ref, sa_bo_ref,
        ln_g_ref, ln_b_ref,
        ca_wq_ref, ca_bq_ref, ca_wkv_ref, ca_bkv_ref, ca_wo_ref, ca_bo_ref,
        ln1_g_ref, ln1_b_ref,
        ff1_w_ref, ff1_b_ref, ff2_w_ref, ff2_b_ref,
        ln2_g_ref, ln2_b_ref,
        o_ref,
        *, num_heads, eps):
    d = x_ref.shape[-1]
    x = x_ref[0]            # (T, D)  f32
    enc = enc_ref[0]        # (Tk, D) f32

    # ---- masked self-attention (fused QKV) + residual + LayerNorm ----------
    qkv = jnp.dot(x.astype(jnp.bfloat16), sa_wqkv_ref[...],
                  preferred_element_type=jnp.float32) + sa_bqkv_ref[...]
    q, k, v = qkv[:, :d], qkv[:, d:2 * d], qkv[:, 2 * d:]
    sa = _mha_heads(q, k, v, num_heads=num_heads, causal=True)
    sa = jnp.dot(sa.astype(jnp.bfloat16), sa_wo_ref[...],
                 preferred_element_type=jnp.float32) + sa_bo_ref[...]
    x1 = _layernorm(x + sa, ln_g_ref[...], ln_b_ref[...], eps)

    # ---- cross-attention (fused KV, unmasked source) + residual + LN -------
    q2 = jnp.dot(x1.astype(jnp.bfloat16), ca_wq_ref[...],
                 preferred_element_type=jnp.float32) + ca_bq_ref[...]
    kv = jnp.dot(enc.astype(jnp.bfloat16), ca_wkv_ref[...],
                 preferred_element_type=jnp.float32) + ca_bkv_ref[...]
    k2, v2 = kv[:, :d], kv[:, d:]
    ca = _mha_heads(q2, k2, v2, num_heads=num_heads, causal=False)
    ca = jnp.dot(ca.astype(jnp.bfloat16), ca_wo_ref[...],
                 preferred_element_type=jnp.float32) + ca_bo_ref[...]
    x2 = _layernorm(ca + x1, ln1_g_ref[...], ln1_b_ref[...], eps)

    # ---- feed-forward + residual + LayerNorm -------------------------------
    h = jnp.dot(x2.astype(jnp.bfloat16), ff1_w_ref[...],
                preferred_element_type=jnp.float32) + ff1_b_ref[...]
    h = jnp.maximum(h, 0.0)
    ff = jnp.dot(h.astype(jnp.bfloat16), ff2_w_ref[...],
                 preferred_element_type=jnp.float32) + ff2_b_ref[...]
    out = _layernorm(ff + x2, ln2_g_ref[...], ln2_b_ref[...], eps)

    o_ref[0] = out.astype(o_ref.dtype)


def decoder_layer(x, enc, lp, num_heads, eps=LN_EPS):
    """One fused DecoderBlock forward.  x, enc: (B, T, D) f32."""
    B, T, D = x.shape
    Tk = enc.shape[1]

    weights = [
        lp["sa_wqkv"], lp["sa_bqkv"], lp["sa_wo"], lp["sa_bo"],
        lp["ln_g"], lp["ln_b"],
        lp["ca_wq"], lp["ca_bq"], lp["ca_wkv"], lp["ca_bkv"],
        lp["ca_wo"], lp["ca_bo"],
        lp["ln1_g"], lp["ln1_b"],
        lp["ff1_w"], lp["ff1_b"], lp["ff2_w"], lp["ff2_b"],
        lp["ln2_g"], lp["ln2_b"],
    ]
    # Weight blocks are full arrays with a constant index_map, so they stay
    # resident in VMEM across the batch grid (no re-DMA per program).
    weight_specs = [pl.BlockSpec(w.shape, lambda b: (0, 0)) for w in weights]

    return pl.pallas_call(
        functools.partial(_decoder_layer_kernel, num_heads=num_heads, eps=eps),
        out_shape=jax.ShapeDtypeStruct((B, T, D), jnp.float32),
        grid=(B,),
        in_specs=[pl.BlockSpec((1, T, D), lambda b: (b, 0, 0)),
                  pl.BlockSpec((1, Tk, D), lambda b: (b, 0, 0))] + weight_specs,
        out_specs=pl.BlockSpec((1, T, D), lambda b: (b, 0, 0)),
        compiler_params=pltpu.CompilerParams(
            dimension_semantics=("parallel",)),
    )(x, enc, *weights)


# --------------------------- final vocab projection --------------------------

def _logits_kernel(x_ref, w_ref, b_ref, o_ref):
    y = jnp.dot(x_ref[...].astype(jnp.bfloat16), w_ref[...],
                preferred_element_type=jnp.float32) + b_ref[...]
    o_ref[...] = y.astype(o_ref.dtype)


def vocab_projection(x2d, w_pad, b_pad, tm=8):
    """x2d: (M, D) f32 @ w_pad: (D, Vp) bf16 + b_pad: (1, Vp) -> (M, Vp) f32."""
    M, D = x2d.shape
    Vp = w_pad.shape[1]
    return pl.pallas_call(
        _logits_kernel,
        out_shape=jax.ShapeDtypeStruct((M, Vp), jnp.float32),
        grid=(M // tm,),
        in_specs=[
            pl.BlockSpec((tm, D), lambda i: (i, 0)),
            pl.BlockSpec((D, Vp), lambda i: (0, 0)),
            pl.BlockSpec((1, Vp), lambda i: (0, 0)),
        ],
        out_specs=pl.BlockSpec((tm, Vp), lambda i: (i, 0)),
        compiler_params=pltpu.CompilerParams(
            dimension_semantics=("parallel",)),
    )(x2d, w_pad, b_pad)


# ----------------------------- decoder forward -------------------------------

def decoder_forward(params, tokens, enc_out, *, num_heads, vocab):
    """Decoder.forward(x, enc_out, src_mask, trg_mask) with the standard masks:
    causal target mask (generated in-kernel) and all-ones source mask (no-op).
    """
    # TODO(synk): arbitrary user-supplied padding masks would need to be passed
    # into the fused layer kernel as an extra (B, T, T) input.
    B, T = tokens.shape
    D = params["emb"].shape[1]
    x = params["emb"][tokens] + params["pos"][None, :T, :]   # gather = JAX glue
    # dropout is identity in eval mode
    for lp in params["layers"]:
        x = decoder_layer(x, enc_out, lp, num_heads)
    logits_pad = vocab_projection(x.reshape(B * T, D),
                                  params["fc_w"], params["fc_b"])
    return logits_pad[:, :vocab].reshape(B, T, vocab)


# ------------------------- deterministic param init --------------------------

def _init_linear(key, fan_in, fan_out):
    kw, kb = jax.random.split(key)
    bound = 1.0 / math.sqrt(fan_in)
    w = jax.random.uniform(kw, (fan_in, fan_out), jnp.float32, -bound, bound)
    b = jax.random.uniform(kb, (fan_out,), jnp.float32, -bound, bound)
    return w, b


def _init_mha(key, d):
    ks = jax.random.split(key, 4)
    wq, bq = _init_linear(ks[0], d, d)
    wk, bk = _init_linear(ks[1], d, d)
    wv, bv = _init_linear(ks[2], d, d)
    wo, bo = _init_linear(ks[3], d, d)
    return wq, bq, wk, bk, wv, bv, wo, bo


def _sinusoidal_pe(block_size, d):
    pos = jnp.arange(block_size, dtype=jnp.float32)[:, None]
    i = jnp.arange(0, d, 2, dtype=jnp.float32)
    div = jnp.exp(-math.log(10000.0) * i / d)
    pe = jnp.zeros((block_size, d), jnp.float32)
    pe = pe.at[:, 0::2].set(jnp.sin(pos * div))
    pe = pe.at[:, 1::2].set(jnp.cos(pos * div))
    return pe


def init_decoder_params(key, vocab, num_layers, n_embed, block_size, ff_mult=4):
    d = n_embed
    vocab_pad = ((vocab + 127) // 128) * 128          # lane-dense logits store
    keys = jax.random.split(key, 2 + num_layers)
    emb = 0.02 * jax.random.normal(keys[0], (vocab, d), jnp.float32)

    fc_w, fc_b = _init_linear(keys[1], d, vocab)
    fc_w_pad = jnp.zeros((d, vocab_pad), jnp.float32).at[:, :vocab].set(fc_w)
    fc_b_pad = jnp.zeros((1, vocab_pad), jnp.float32).at[0, :vocab].set(fc_b)

    layers = []
    for li in range(num_layers):
        lk = jax.random.split(keys[2 + li], 4)
        swq, sbq, swk, sbk, swv, sbv, swo, sbo = _init_mha(lk[0], d)
        cwq, cbq, cwk, cbk, cwv, cbv, cwo, cbo = _init_mha(lk[1], d)
        ff1_w, ff1_b = _init_linear(lk[2], d, ff_mult * d)
        ff2_w, ff2_b = _init_linear(lk[3], ff_mult * d, d)
        layers.append(dict(
            # masked self-attention (fused QKV weight, bf16 matmul operands)
            sa_wqkv=jnp.concatenate([swq, swk, swv], axis=1).astype(jnp.bfloat16),
            sa_bqkv=jnp.concatenate([sbq, sbk, sbv]).reshape(1, 3 * d),
            sa_wo=swo.astype(jnp.bfloat16), sa_bo=sbo.reshape(1, d),
            ln_g=jnp.ones((1, d), jnp.float32), ln_b=jnp.zeros((1, d), jnp.float32),
            # cross-attention (fused KV weight)
            ca_wq=cwq.astype(jnp.bfloat16), ca_bq=cbq.reshape(1, d),
            ca_wkv=jnp.concatenate([cwk, cwv], axis=1).astype(jnp.bfloat16),
            ca_bkv=jnp.concatenate([cbk, cbv]).reshape(1, 2 * d),
            ca_wo=cwo.astype(jnp.bfloat16), ca_bo=cbo.reshape(1, d),
            ln1_g=jnp.ones((1, d), jnp.float32), ln1_b=jnp.zeros((1, d), jnp.float32),
            # feed-forward
            ff1_w=ff1_w.astype(jnp.bfloat16), ff1_b=ff1_b.reshape(1, ff_mult * d),
            ff2_w=ff2_w.astype(jnp.bfloat16), ff2_b=ff2_b.reshape(1, d),
            ln2_g=jnp.ones((1, d), jnp.float32), ln2_b=jnp.zeros((1, d), jnp.float32),
        ))
    return dict(emb=emb, pos=_sinusoidal_pe(block_size, d),
                layers=layers, fc_w=fc_w_pad.astype(jnp.bfloat16), fc_b=fc_b_pad)


# ---------------------------------- main ------------------------------------

if __name__ == "__main__":
    B, T = 2, 8                 # batch, sequence length (== block_size)
    n_embed, num_heads = 32, 4  # head_dim = 8
    num_layers = 2
    vocab = 50
    block_size = 8

    root = jax.random.PRNGKey(0)
    k_par, k_tok, k_enc = jax.random.split(root, 3)

    params = init_decoder_params(k_par, vocab, num_layers, n_embed, block_size)
    tokens = jax.random.randint(k_tok, (B, T), 0, vocab, dtype=jnp.int32)
    enc_out = jax.random.normal(k_enc, (B, T, n_embed), jnp.float32)

    fwd = jax.jit(functools.partial(decoder_forward,
                                    num_heads=num_heads, vocab=vocab))
    logits = fwd(params, tokens, enc_out)
    jax.block_until_ready(logits)

    assert logits.shape == (B, T, vocab), logits.shape
    assert bool(jnp.all(jnp.isfinite(logits)))
    print("KERNEL_OK")
</pallas_src>

<mosaic_0001>
module attributes {stable_mosaic.version = 11 : i64} {
  func.func @_logits_kernel(%arg0: i32, %arg1: memref<8x32xf32, #tpu.memory_space<vmem>>, %arg2: memref<32x128xbf16, #tpu.memory_space<vmem>>, %arg3: memref<1x128xf32, #tpu.memory_space<vmem>>, %arg4: memref<8x128xf32, #tpu.memory_space<vmem>>) attributes {dimension_semantics = [#tpu.dimension_semantics<parallel>], iteration_bounds = array<i64: 2>, scalar_prefetch = 0 : i64, scratch_operands = 0 : i64, tpu.core_type = #tpu.core_type<tc>, window_params = [{transform_indices = @transform_0, window_bounds = array<i64: 8, 32>}, {pipeline_mode = #tpu.pipeline_mode<synchronous>, transform_indices = @transform_1, window_bounds = array<i64: 32, 128>}, {pipeline_mode = #tpu.pipeline_mode<synchronous>, transform_indices = @transform_2, window_bounds = array<i64: 1, 128>}, {transform_indices = @transform_3, window_bounds = array<i64: 8, 128>}]} {
    %c0 = arith.constant 0 : index
    %c0_0 = arith.constant 0 : index
    %0 = vector.load %arg1[%c0, %c0_0] : memref<8x32xf32, #tpu.memory_space<vmem>>, vector<8x32xf32>
    %1 = arith.truncf %0 : vector<8x32xf32> to vector<8x32xbf16>
    %c0_1 = arith.constant 0 : index
    %c0_2 = arith.constant 0 : index
    %2 = vector.load %arg2[%c0_1, %c0_2] : memref<32x128xbf16, #tpu.memory_space<vmem>>, vector<32x128xbf16>
    %cst = arith.constant dense<0.000000e+00> : vector<8x128xf32>
    %3 = tpu.matmul %1, %2, %cst {dimension_numbers = #tpu.dot_dimension_numbers<[1], [0], [0], [1], [0, 0, 1, 1], [], []>} : vector<8x32xbf16>, vector<32x128xbf16>, vector<8x128xf32> -> vector<8x128xf32>
    %c0_3 = arith.constant 0 : index
    %c0_4 = arith.constant 0 : index
    %4 = vector.load %arg3[%c0_3, %c0_4] : memref<1x128xf32, #tpu.memory_space<vmem>>, vector<1x128xf32>
    %5 = vector.broadcast %4 : vector<1x128xf32> to vector<8x128xf32>
    %6 = arith.addf %3, %5 : vector<8x128xf32>
    %c0_5 = arith.constant 0 : index
    %c0_6 = arith.constant 0 : index
    %7 = vector.load %arg4[%c0_5, %c0_6] : memref<8x128xf32, #tpu.memory_space<vmem>>, vector<8x128xf32>
    tpu.vector_store %arg4[%c0_5, %c0_6], %6 {strides = array<i32>} : memref<8x128xf32, #tpu.memory_space<vmem>>, vector<8x128xf32>,
    return
  }
  func.func @transform_0(%arg0: i32) -> (i32, i32) {
    %c0_i32 = arith.constant 0 : i32
    %c0_i32_0 = arith.constant 0 : i32
    return %arg0, %c0_i32 : i32, i32
  }
  func.func @transform_1(%arg0: i32) -> (i32, i32) {
    %c0_i32 = arith.constant 0 : i32
    %c0_i32_0 = arith.constant 0 : i32
    %c0_i32_1 = arith.constant 0 : i32
    return %c0_i32, %c0_i32_0 : i32, i32
  }
  func.func @transform_2(%arg0: i32) -> (i32, i32) {
    %c0_i32 = arith.constant 0 : i32
    %c0_i32_0 = arith.constant 0 : i32
    %c0_i32_1 = arith.constant 0 : i32
    return %c0_i32, %c0_i32_0 : i32, i32
  }
  func.func @transform_3(%arg0: i32) -> (i32, i32) {
    %c0_i32 = arith.constant 0 : i32
    %c0_i32_0 = arith.constant 0 : i32
    return %arg0, %c0_i32 : i32, i32
  }
}

module attributes {stable_mosaic.version = 11 : i64} {
  func.func @_decoder_layer_kernel(%arg0: i32, %arg1: memref<1x8x32xf32, #tpu.memory_space<vmem>>, %arg2: memref<1x8x32xf32, #tpu.memory_space<vmem>>, %arg3: memref<32x96xbf16, #tpu.memory_space<vmem>>, %arg4: memref<1x96xf32, #tpu.memory_space<vmem>>, %arg5: memref<32x32xbf16, #tpu.memory_space<vmem>>, %arg6: memref<1x32xf32, #tpu.memory_space<vmem>>, %arg7: memref<1x32xf32, #tpu.memory_space<vmem>>, %arg8: memref<1x32xf32, #tpu.memory_space<vmem>>, %arg9: memref<32x32xbf16, #tpu.memory_space<vmem>>, %arg10: memref<1x32xf32, #tpu.memory_space<vmem>>, %arg11: memref<32x64xbf16, #tpu.memory_space<vmem>>, %arg12: memref<1x64xf32, #tpu.memory_space<vmem>>, %arg13: memref<32x32xbf16, #tpu.memory_space<vmem>>, %arg14: memref<1x32xf32, #tpu.memory_space<vmem>>, %arg15: memref<1x32xf32, #tpu.memory_space<vmem>>, %arg16: memref<1x32xf32, #tpu.memory_space<vmem>>, %arg17: memref<32x128xbf16, #tpu.memory_space<vmem>>, %arg18: memref<1x128xf32, #tpu.memory_space<vmem>>, %arg19: memref<128x32xbf16, #tpu.memory_space<vmem>>, %arg20: memref<1x32xf32, #tpu.memory_space<vmem>>, %arg21: memref<1x32xf32, #tpu.memory_space<vmem>>, %arg22: memref<1x32xf32, #tpu.memory_space<vmem>>, %arg23: memref<1x8x32xf32, #tpu.memory_space<vmem>>) attributes {dimension_semantics = [#tpu.dimension_semantics<parallel>], iteration_bounds = array<i64: 2>, scalar_prefetch = 0 : i64, scratch_operands = 0 : i64, tpu.core_type = #tpu.core_type<tc>, window_params = [{transform_indices = @transform_0, window_bounds = array<i64: 1, 8, 32>}, {transform_indices = @transform_1, window_bounds = array<i64: 1, 8, 32>}, {pipeline_mode = #tpu.pipeline_mode<synchronous>, transform_indices = @transform_2, window_bounds = array<i64: 32, 96>}, {pipeline_mode = #tpu.pipeline_mode<synchronous>, transform_indices = @transform_3, window_bounds = array<i64: 1, 96>}, {pipeline_mode = #tpu.pipeline_mode<synchronous>, transform_indices = @transform_4, window_bounds = array<i64: 32, 32>}, {pipeline_mode = #tpu.pipeline_mode<synchronous>, transform_indices = @transform_5, window_bounds = array<i64: 1, 32>}, {pipeline_mode = #tpu.pipeline_mode<synchronous>, transform_indices = @transform_6, window_bounds = array<i64: 1, 32>}, {pipeline_mode = #tpu.pipeline_mode<synchronous>, transform_indices = @transform_7, window_bounds = array<i64: 1, 32>}, {pipeline_mode = #tpu.pipeline_mode<synchronous>, transform_indices = @transform_8, window_bounds = array<i64: 32, 32>}, {pipeline_mode = #tpu.pipeline_mode<synchronous>, transform_indices = @transform_9, window_bounds = array<i64: 1, 32>}, {pipeline_mode = #tpu.pipeline_mode<synchronous>, transform_indices = @transform_10, window_bounds = array<i64: 32, 64>}, {pipeline_mode = #tpu.pipeline_mode<synchronous>, transform_indices = @transform_11, window_bounds = array<i64: 1, 64>}, {pipeline_mode = #tpu.pipeline_mode<synchronous>, transform_indices = @transform_12, window_bounds = array<i64: 32, 32>}, {pipeline_mode = #tpu.pipeline_mode<synchronous>, transform_indices = @transform_13, window_bounds = array<i64: 1, 32>}, {pipeline_mode = #tpu.pipeline_mode<synchronous>, transform_indices = @transform_14, window_bounds = array<i64: 1, 32>}, {pipeline_mode = #tpu.pipeline_mode<synchronous>, transform_indices = @transform_15, window_bounds = array<i64: 1, 32>}, {pipeline_mode = #tpu.pipeline_mode<synchronous>, transform_indices = @transform_16, window_bounds = array<i64: 32, 128>}, {pipeline_mode = #tpu.pipeline_mode<synchronous>, transform_indices = @transform_17, window_bounds = array<i64: 1, 128>}, {pipeline_mode = #tpu.pipeline_mode<synchronous>, transform_indices = @transform_18, window_bounds = array<i64: 128, 32>}, {pipeline_mode = #tpu.pipeline_mode<synchronous>, transform_indices = @transform_19, window_bounds = array<i64: 1, 32>}, {pipeline_mode = #tpu.pipeline_mode<synchronous>, transform_indices = @transform_20, window_bounds = array<i64: 1, 32>}, {pipeline_mode = #tpu.pipeline_mode<synchronous>, transform_indices = @transform_21, window_bounds = array<i64: 1, 32>}, {transform_indices = @transform_22, window_bounds = array<i64: 1, 8, 32>}]} {
    %c0 = arith.constant 0 : index
    %c0_0 = arith.constant 0 : index
    %c0_1 = arith.constant 0 : index
    %0 = vector.load %arg1[%c0, %c0_0, %c0_1] : memref<1x8x32xf32, #tpu.memory_space<vmem>>, vector<1x8x32xf32>
    %1 = vector.shape_cast %0 : vector<1x8x32xf32> to vector<8x32xf32>
    %c0_2 = arith.constant 0 : index
    %c0_3 = arith.constant 0 : index
    %c0_4 = arith.constant 0 : index
    %2 = vector.load %arg2[%c0_2, %c0_3, %c0_4] : memref<1x8x32xf32, #tpu.memory_space<vmem>>, vector<1x8x32xf32>
    %3 = vector.shape_cast %2 : vector<1x8x32xf32> to vector<8x32xf32>
    %4 = arith.truncf %1 : vector<8x32xf32> to vector<8x32xbf16>
    %c0_5 = arith.constant 0 : index
    %c0_6 = arith.constant 0 : index
    %5 = vector.load %arg3[%c0_5, %c0_6] : memref<32x96xbf16, #tpu.memory_space<vmem>>, vector<32x96xbf16>
    %cst = arith.constant dense<0.000000e+00> : vector<8x96xf32>
    %6 = tpu.matmul %4, %5, %cst {dimension_numbers = #tpu.dot_dimension_numbers<[1], [0], [0], [1], [0, 0, 1, 1], [], []>} : vector<8x32xbf16>, vector<32x96xbf16>, vector<8x96xf32> -> vector<8x96xf32>
    %c0_7 = arith.constant 0 : index
    %c0_8 = arith.constant 0 : index
    %7 = vector.load %arg4[%c0_7, %c0_8] : memref<1x96xf32, #tpu.memory_space<vmem>>, vector<1x96xf32>
    %8 = vector.broadcast %7 : vector<1x96xf32> to vector<8x96xf32>
    %9 = arith.addf %6, %8 : vector<8x96xf32>
    %10 = vector.extract_strided_slice %9 {offsets = [0, 0], sizes = [8, 32], strides = [1, 1]} : vector<8x96xf32> to vector<8x32xf32>
    %11 = vector.extract_strided_slice %9 {offsets = [0, 32], sizes = [8, 32], strides = [1, 1]} : vector<8x96xf32> to vector<8x32xf32>
    %12 = vector.extract_strided_slice %9 {offsets = [0, 64], sizes = [8, 32], strides = [1, 1]} : vector<8x96xf32> to vector<8x32xf32>
    %13 = tpu.iota {dimensions = array<i32: 0>} : vector<8x8xi32>
    %14 = tpu.iota {dimensions = array<i32: 1>} : vector<8x8xi32>
    %15 = arith.cmpi sge, %13, %14 : vector<8x8xi32>
    %16 = vector.extract_strided_slice %10 {offsets = [0, 0], sizes = [8, 8], strides = [1, 1]} : vector<8x32xf32> to vector<8x8xf32>
    %17 = vector.extract_strided_slice %11 {offsets = [0, 0], sizes = [8, 8], strides = [1, 1]} : vector<8x32xf32> to vector<8x8xf32>
    %18 = vector.extract_strided_slice %12 {offsets = [0, 0], sizes = [8, 8], strides = [1, 1]} : vector<8x32xf32> to vector<8x8xf32>
    %19 = tpu.transpose %17, [1, 0] : vector<8x8xf32> -> vector<8x8xf32>
    %cst_9 = arith.constant dense<0.000000e+00> : vector<8x8xf32>
    %20 = tpu.matmul %16, %19, %cst_9 {dimension_numbers = #tpu.dot_dimension_numbers<[1], [0], [0], [1], [0, 0, 1, 1], [], []>} : vector<8x8xf32>, vector<8x8xf32>, vector<8x8xf32> -> vector<8x8xf32>
    %cst_10 = arith.constant 0.353553385 : f32
    %21 = vector.broadcast %cst_10 : f32 to vector<8x8xf32>
    %22 = arith.mulf %20, %21 : vector<8x8xf32>
    %cst_11 = arith.constant -1.000000e+09 : f32
    %23 = vector.broadcast %cst_11 : f32 to vector<8x8xf32>
    %24 = arith.select %15, %22, %23 : vector<8x8xi1>, vector<8x8xf32>
    %cst_12 = arith.constant dense<0xFF800000> : vector<8xf32>
    %25 = vector.multi_reduction <maximumf>, %24, %cst_12 [1] : vector<8x8xf32> to vector<8xf32>
    %26 = vector.shape_cast %25 : vector<8xf32> to vector<8x1xf32>
    %27 = vector.broadcast %26 : vector<8x1xf32> to vector<8x8xf32>
    %28 = arith.subf %24, %27 : vector<8x8xf32>
    %29 = math.exp %28 : vector<8x8xf32>
    %cst_13 = arith.constant dense<0.000000e+00> : vector<8xf32>
    %30 = vector.multi_reduction <add>, %29, %cst_13 [1] : vector<8x8xf32> to vector<8xf32>
    %31 = vector.shape_cast %30 : vector<8xf32> to vector<8x1xf32>
    %32 = tpu.reciprocal %31 {approx = true} : vector<8x1xf32> -> vector<8x1xf32>
    %33 = vector.broadcast %32 : vector<8x1xf32> to vector<8x8xf32>
    %34 = arith.mulf %29, %33 : vector<8x8xf32>
    %cst_14 = arith.constant dense<0.000000e+00> : vector<8x8xf32>
    %35 = tpu.matmul %34, %18, %cst_14 {dimension_numbers = #tpu.dot_dimension_numbers<[1], [0], [0], [1], [0, 0, 1, 1], [], []>} : vector<8x8xf32>, vector<8x8xf32>, vector<8x8xf32> -> vector<8x8xf32>
    %36 = vector.extract_strided_slice %10 {offsets = [0, 8], sizes = [8, 8], strides = [1, 1]} : vector<8x32xf32> to vector<8x8xf32>
    %37 = vector.extract_strided_slice %11 {offsets = [0, 8], sizes = [8, 8], strides = [1, 1]} : vector<8x32xf32> to vector<8x8xf32>
    %38 = vector.extract_strided_slice %12 {offsets = [0, 8], sizes = [8, 8], strides = [1, 1]} : vector<8x32xf32> to vector<8x8xf32>
    %39 = tpu.transpose %37, [1, 0] : vector<8x8xf32> -> vector<8x8xf32>
    %cst_15 = arith.constant dense<0.000000e+00> : vector<8x8xf32>
    %40 = tpu.matmul %36, %39, %cst_15 {dimension_numbers = #tpu.dot_dimension_numbers<[1], [0], [0], [1], [0, 0, 1, 1], [], []>} : vector<8x8xf32>, vector<8x8xf32>, vector<8x8xf32> -> vector<8x8xf32>
    %cst_16 = arith.constant 0.353553385 : f32
    %41 = vector.broadcast %cst_16 : f32 to vector<8x8xf32>
    %42 = arith.mulf %40, %41 : vector<8x8xf32>
    %cst_17 = arith.constant -1.000000e+09 : f32
    %43 = vector.broadcast %cst_17 : f32 to vector<8x8xf32>
    %44 = arith.select %15, %42, %43 : vector<8x8xi1>, vector<8x8xf32>
    %cst_18 = arith.constant dense<0xFF800000> : vector<8xf32>
    %45 = vector.multi_reduction <maximumf>, %44, %cst_18 [1] : vector<8x8xf32> to vector<8xf32>
    %46 = vector.shape_cast %45 : vector<8xf32> to vector<8x1xf32>
    %47 = vector.broadcast %46 : vector<8x1xf32> to vector<8x8xf32>
    %48 = arith.subf %44, %47 : vector<8x8xf32>
    %49 = math.exp %48 : vector<8x8xf32>
    %cst_19 = arith.constant dense<0.000000e+00> : vector<8xf32>
    %50 = vector.multi_reduction <add>, %49, %cst_19 [1] : vector<8x8xf32> to vector<8xf32>
    %51 = vector.shape_cast %50 : vector<8xf32> to vector<8x1xf32>
    %52 = tpu.reciprocal %51 {approx = true} : vector<8x1xf32> -> vector<8x1xf32>
    %53 = vector.broadcast %52 : vector<8x1xf32> to vector<8x8xf32>
    %54 = arith.mulf %49, %53 : vector<8x8xf32>
    %cst_20 = arith.constant dense<0.000000e+00> : vector<8x8xf32>
    %55 = tpu.matmul %54, %38, %cst_20 {dimension_numbers = #tpu.dot_dimension_numbers<[1], [0], [0], [1], [0, 0, 1, 1], [], []>} : vector<8x8xf32>, vector<8x8xf32>, vector<8x8xf32> -> vector<8x8xf32>
    %56 = vector.extract_strided_slice %10 {offsets = [0, 16], sizes = [8, 8], strides = [1, 1]} : vector<8x32xf32> to vector<8x8xf32>
    %57 = vector.extract_strided_slice %11 {offsets = [0, 16], sizes = [8, 8], strides = [1, 1]} : vector<8x32xf32> to vector<8x8xf32>
    %58 = vector.extract_strided_slice %12 {offsets = [0, 16], sizes = [8, 8], strides = [1, 1]} : vector<8x32xf32> to vector<8x8xf32>
    %59 = tpu.transpose %57, [1, 0] : vector<8x8xf32> -> vector<8x8xf32>
    %cst_21 = arith.constant dense<0.000000e+00> : vector<8x8xf32>
    %60 = tpu.matmul %56, %59, %cst_21 {dimension_numbers = #tpu.dot_dimension_numbers<[1], [0], [0], [1], [0, 0, 1, 1], [], []>} : vector<8x8xf32>, vector<8x8xf32>, vector<8x8xf32> -> vector<8x8xf32>
    %cst_22 = arith.constant 0.353553385 : f32
    %61 = vector.broadcast %cst_22 : f32 to vector<8x8xf32>
    %62 = arith.mulf %60, %61 : vector<8x8xf32>
    %cst_23 = arith.constant -1.000000e+09 : f32
    %63 = vector.broadcast %cst_23 : f32 to vector<8x8xf32>
    %64 = arith.select %15, %62, %63 : vector<8x8xi1>, vector<8x8xf32>
    %cst_24 = arith.constant dense<0xFF800000> : vector<8xf32>
    %65 = vector.multi_reduction <maximumf>, %64, %cst_24 [1] : vector<8x8xf32> to vector<8xf32>
    %66 = vector.shape_cast %65 : vector<8xf32> to vector<8x1xf32>
    %67 = vector.broadcast %66 : vector<8x1xf32> to vector<8x8xf32>
    %68 = arith.subf %64, %67 : vector<8x8xf32>
    %69 = math.exp %68 : vector<8x8xf32>
    %cst_25 = arith.constant dense<0.000000e+00> : vector<8xf32>
    %70 = vector.multi_reduction <add>, %69, %cst_25 [1] : vector<8x8xf32> to vector<8xf32>
    %71 = vector.shape_cast %70 : vector<8xf32> to vector<8x1xf32>
    %72 = tpu.reciprocal %71 {approx = true} : vector<8x1xf32> -> vector<8x1xf32>
    %73 = vector.broadcast %72 : vector<8x1xf32> to vector<8x8xf32>
    %74 = arith.mulf %69, %73 : vector<8x8xf32>
    %cst_26 = arith.constant dense<0.000000e+00> : vector<8x8xf32>
    %75 = tpu.matmul %74, %58, %cst_26 {dimension_numbers = #tpu.dot_dimension_numbers<[1], [0], [0], [1], [0, 0, 1, 1], [], []>} : vector<8x8xf32>, vector<8x8xf32>, vector<8x8xf32> -> vector<8x8xf32>
    %76 = vector.extract_strided_slice %10 {offsets = [0, 24], sizes = [8, 8], strides = [1, 1]} : vector<8x32xf32> to vector<8x8xf32>
    %77 = vector.extract_strided_slice %11 {offsets = [0, 24], sizes = [8, 8], strides = [1, 1]} : vector<8x32xf32> to vector<8x8xf32>
    %78 = vector.extract_strided_slice %12 {offsets = [0, 24], sizes = [8, 8], strides = [1, 1]} : vector<8x32xf32> to vector<8x8xf32>
    %79 = tpu.transpose %77, [1, 0] : vector<8x8xf32> -> vector<8x8xf32>
    %cst_27 = arith.constant dense<0.000000e+00> : vector<8x8xf32>
    %80 = tpu.matmul %76, %79, %cst_27 {dimension_numbers = #tpu.dot_dimension_numbers<[1], [0], [0], [1], [0, 0, 1, 1], [], []>} : vector<8x8xf32>, vector<8x8xf32>, vector<8x8xf32> -> vector<8x8xf32>
    %cst_28 = arith.constant 0.353553385 : f32
    %81 = vector.broadcast %cst_28 : f32 to vector<8x8xf32>
    %82 = arith.mulf %80, %81 : vector<8x8xf32>
    %cst_29 = arith.constant -1.000000e+09 : f32
    %83 = vector.broadcast %cst_29 : f32 to vector<8x8xf32>
    %84 = arith.select %15, %82, %83 : vector<8x8xi1>, vector<8x8xf32>
    %cst_30 = arith.constant dense<0xFF800000> : vector<8xf32>
    %85 = vector.multi_reduction <maximumf>, %84, %cst_30 [1] : vector<8x8xf32> to vector<8xf32>
    %86 = vector.shape_cast %85 : vector<8xf32> to vector<8x1xf32>
    %87 = vector.broadcast %86 : vector<8x1xf32> to vector<8x8xf32>
    %88 = arith.subf %84, %87 : vector<8x8xf32>
    %89 = math.exp %88 : vector<8x8xf32>
    %cst_31 = arith.constant dense<0.000000e+00> : vector<8xf32>
    %90 = vector.multi_reduction <add>, %89, %cst_31 [1] : vector<8x8xf32> to vector<8xf32>
    %91 = vector.shape_cast %90 : vector<8xf32> to vector<8x1xf32>
    %92 = tpu.reciprocal %91 {approx = true} : vector<8x1xf32> -> vector<8x1xf32>
    %93 = vector.broadcast %92 : vector<8x1xf32> to vector<8x8xf32>
    %94 = arith.mulf %89, %93 : vector<8x8xf32>
    %cst_32 = arith.constant dense<0.000000e+00> : vector<8x8xf32>
    %95 = tpu.matmul %94, %78, %cst_32 {dimension_numbers = #tpu.dot_dimension_numbers<[1], [0], [0], [1], [0, 0, 1, 1], [], []>} : vector<8x8xf32>, vector<8x8xf32>, vector<8x8xf32> -> vector<8x8xf32>
    %96 = tpu.concatenate %35, %55, %75, %95 in 1 : vector<8x8xf32>, vector<8x8xf32>, vector<8x8xf32>, vector<8x8xf32> -> vector<8x32xf32>
    %97 = arith.truncf %96 : vector<8x32xf32> to vector<8x32xbf16>
    %c0_33 = arith.constant 0 : index
    %c0_34 = arith.constant 0 : index
    %98 = vector.load %arg5[%c0_33, %c0_34] : memref<32x32xbf16, #tpu.memory_space<vmem>>, vector<32x32xbf16>
    %cst_35 = arith.constant dense<0.000000e+00> : vector<8x32xf32>
    %99 = tpu.matmul %97, %98, %cst_35 {dimension_numbers = #tpu.dot_dimension_numbers<[1], [0], [0], [1], [0, 0, 1, 1], [], []>} : vector<8x32xbf16>, vector<32x32xbf16>, vector<8x32xf32> -> vector<8x32xf32>
    %c0_36 = arith.constant 0 : index
    %c0_37 = arith.constant 0 : index
    %100 = vector.load %arg6[%c0_36, %c0_37] : memref<1x32xf32, #tpu.memory_space<vmem>>, vector<1x32xf32>
    %101 = vector.broadcast %100 : vector<1x32xf32> to vector<8x32xf32>
    %102 = arith.addf %99, %101 : vector<8x32xf32>
    %103 = arith.addf %1, %102 : vector<8x32xf32>
    %c0_38 = arith.constant 0 : index
    %c0_39 = arith.constant 0 : index
    %104 = vector.load %arg7[%c0_38, %c0_39] : memref<1x32xf32, #tpu.memory_space<vmem>>, vector<1x32xf32>
    %c0_40 = arith.constant 0 : index
    %c0_41 = arith.constant 0 : index
    %105 = vector.load %arg8[%c0_40, %c0_41] : memref<1x32xf32, #tpu.memory_space<vmem>>, vector<1x32xf32>
    %cst_42 = arith.constant dense<0.000000e+00> : vector<8xf32>
    %106 = vector.multi_reduction <add>, %103, %cst_42 [1] : vector<8x32xf32> to vector<8xf32>
    %107 = vector.shape_cast %106 : vector<8xf32> to vector<8x1xf32>
    %cst_43 = arith.constant 3.200000e+01 : f32
    %108 = vector.broadcast %cst_43 : f32 to vector<8x1xf32>
    %109 = arith.divf %107, %108 : vector<8x1xf32>
    %110 = vector.broadcast %109 : vector<8x1xf32> to vector<8x32xf32>
    %111 = arith.subf %103, %110 : vector<8x32xf32>
    %112 = arith.mulf %111, %111 : vector<8x32xf32>
    %cst_44 = arith.constant dense<0.000000e+00> : vector<8xf32>
    %113 = vector.multi_reduction <add>, %112, %cst_44 [1] : vector<8x32xf32> to vector<8xf32>
    %114 = vector.shape_cast %113 : vector<8xf32> to vector<8x1xf32>
    %cst_45 = arith.constant 3.200000e+01 : f32
    %115 = vector.broadcast %cst_45 : f32 to vector<8x1xf32>
    %116 = arith.divf %114, %115 : vector<8x1xf32>
    %cst_46 = arith.constant 9.99999974E-6 : f32
    %117 = vector.broadcast %cst_46 : f32 to vector<8x1xf32>
    %118 = arith.addf %116, %117 : vector<8x1xf32>
    %119 = math.rsqrt %118 : vector<8x1xf32>
    %120 = vector.broadcast %119 : vector<8x1xf32> to vector<8x32xf32>
    %121 = arith.mulf %111, %120 : vector<8x32xf32>
    %122 = vector.broadcast %104 : vector<1x32xf32> to vector<8x32xf32>
    %123 = arith.mulf %121, %122 : vector<8x32xf32>
    %124 = vector.broadcast %105 : vector<1x32xf32> to vector<8x32xf32>
    %125 = arith.addf %123, %124 : vector<8x32xf32>
    %126 = arith.truncf %125 : vector<8x32xf32> to vector<8x32xbf16>
    %c0_47 = arith.constant 0 : index
    %c0_48 = arith.constant 0 : index
    %127 = vector.load %arg9[%c0_47, %c0_48] : memref<32x32xbf16, #tpu.memory_space<vmem>>, vector<32x32xbf16>
    %cst_49 = arith.constant dense<0.000000e+00> : vector<8x32xf32>
    %128 = tpu.matmul %126, %127, %cst_49 {dimension_numbers = #tpu.dot_dimension_numbers<[1], [0], [0], [1], [0, 0, 1, 1], [], []>} : vector<8x32xbf16>, vector<32x32xbf16>, vector<8x32xf32> -> vector<8x32xf32>
    %c0_50 = arith.constant 0 : index
    %c0_51 = arith.constant 0 : index
    %129 = vector.load %arg10[%c0_50, %c0_51] : memref<1x32xf32, #tpu.memory_space<vmem>>, vector<1x32xf32>
    %130 = vector.broadcast %129 : vector<1x32xf32> to vector<8x32xf32>
    %131 = arith.addf %128, %130 : vector<8x32xf32>
    %132 = arith.truncf %3 : vector<8x32xf32> to vector<8x32xbf16>
    %c0_52 = arith.constant 0 : index
    %c0_53 = arith.constant 0 : index
    %133 = vector.load %arg11[%c0_52, %c0_53] : memref<32x64xbf16, #tpu.memory_space<vmem>>, vector<32x64xbf16>
    %cst_54 = arith.constant dense<0.000000e+00> : vector<8x64xf32>
    %134 = tpu.matmul %132, %133, %cst_54 {dimension_numbers = #tpu.dot_dimension_numbers<[1], [0], [0], [1], [0, 0, 1, 1], [], []>} : vector<8x32xbf16>, vector<32x64xbf16>, vector<8x64xf32> -> vector<8x64xf32>
    %c0_55 = arith.constant 0 : index
    %c0_56 = arith.constant 0 : index
    %135 = vector.load %arg12[%c0_55, %c0_56] : memref<1x64xf32, #tpu.memory_space<vmem>>, vector<1x64xf32>
    %136 = vector.broadcast %135 : vector<1x64xf32> to vector<8x64xf32>
    %137 = arith.addf %134, %136 : vector<8x64xf32>
    %138 = vector.extract_strided_slice %137 {offsets = [0, 0], sizes = [8, 32], strides = [1, 1]} : vector<8x64xf32> to vector<8x32xf32>
    %139 = vector.extract_strided_slice %137 {offsets = [0, 32], sizes = [8, 32], strides = [1, 1]} : vector<8x64xf32> to vector<8x32xf32>
    %140 = vector.extract_strided_slice %131 {offsets = [0, 0], sizes = [8, 8], strides = [1, 1]} : vector<8x32xf32> to vector<8x8xf32>
    %141 = vector.extract_strided_slice %138 {offsets = [0, 0], sizes = [8, 8], strides = [1, 1]} : vector<8x32xf32> to vector<8x8xf32>
    %142 = vector.extract_strided_slice %139 {offsets = [0, 0], sizes = [8, 8], strides = [1, 1]} : vector<8x32xf32> to vector<8x8xf32>
    %143 = tpu.transpose %141, [1, 0] : vector<8x8xf32> -> vector<8x8xf32>
    %cst_57 = arith.constant dense<0.000000e+00> : vector<8x8xf32>
    %144 = tpu.matmul %140, %143, %cst_57 {dimension_numbers = #tpu.dot_dimension_numbers<[1], [0], [0], [1], [0, 0, 1, 1], [], []>} : vector<8x8xf32>, vector<8x8xf32>, vector<8x8xf32> -> vector<8x8xf32>
    %cst_58 = arith.constant 0.353553385 : f32
    %145 = vector.broadcast %cst_58 : f32 to vector<8x8xf32>
    %146 = arith.mulf %144, %145 : vector<8x8xf32>
    %cst_59 = arith.constant dense<0xFF800000> : vector<8xf32>
    %147 = vector.multi_reduction <maximumf>, %146, %cst_59 [1] : vector<8x8xf32> to vector<8xf32>
    %148 = vector.shape_cast %147 : vector<8xf32> to vector<8x1xf32>
    %149 = vector.broadcast %148 : vector<8x1xf32> to vector<8x8xf32>
    %150 = arith.subf %146, %149 : vector<8x8xf32>
    %151 = math.exp %150 : vector<8x8xf32>
    %cst_60 = arith.constant dense<0.000000e+00> : vector<8xf32>
    %152 = vector.multi_reduction <add>, %151, %cst_60 [1] : vector<8x8xf32> to vector<8xf32>
    %153 = vector.shape_cast %152 : vector<8xf32> to vector<8x1xf32>
    %154 = tpu.reciprocal %153 {approx = true} : vector<8x1xf32> -> vector<8x1xf32>
    %155 = vector.broadcast %154 : vector<8x1xf32> to vector<8x8xf32>
    %156 = arith.mulf %151, %155 : vector<8x8xf32>
    %cst_61 = arith.constant dense<0.000000e+00> : vector<8x8xf32>
    %157 = tpu.matmul %156, %142, %cst_61 {dimension_numbers = #tpu.dot_dimension_numbers<[1], [0], [0], [1], [0, 0, 1, 1], [], []>} : vector<8x8xf32>, vector<8x8xf32>, vector<8x8xf32> -> vector<8x8xf32>
    %158 = vector.extract_strided_slice %131 {offsets = [0, 8], sizes = [8, 8], strides = [1, 1]} : vector<8x32xf32> to vector<8x8xf32>
    %159 = vector.extract_strided_slice %138 {offsets = [0, 8], sizes = [8, 8], strides = [1, 1]} : vector<8x32xf32> to vector<8x8xf32>
    %160 = vector.extract_strided_slice %139 {offsets = [0, 8], sizes = [8, 8], strides = [1, 1]} : vector<8x32xf32> to vector<8x8xf32>
    %161 = tpu.transpose %159, [1, 0] : vector<8x8xf32> -> vector<8x8xf32>
    %cst_62 = arith.constant dense<0.000000e+00> : vector<8x8xf32>
    %162 = tpu.matmul %158, %161, %cst_62 {dimension_numbers = #tpu.dot_dimension_numbers<[1], [0], [0], [1], [0, 0, 1, 1], [], []>} : vector<8x8xf32>, vector<8x8xf32>, vector<8x8xf32> -> vector<8x8xf32>
    %cst_63 = arith.constant 0.353553385 : f32
    %163 = vector.broadcast %cst_63 : f32 to vector<8x8xf32>
    %164 = arith.mulf %162, %163 : vector<8x8xf32>
    %cst_64 = arith.constant dense<0xFF800000> : vector<8xf32>
    %165 = vector.multi_reduction <maximumf>, %164, %cst_64 [1] : vector<8x8xf32> to vector<8xf32>
    %166 = vector.shape_cast %165 : vector<8xf32> to vector<8x1xf32>
    %167 = vector.broadcast %166 : vector<8x1xf32> to vector<8x8xf32>
    %168 = arith.subf %164, %167 : vector<8x8xf32>
    %169 = math.exp %168 : vector<8x8xf32>
    %cst_65 = arith.constant dense<0.000000e+00> : vector<8xf32>
    %170 = vector.multi_reduction <add>, %169, %cst_65 [1] : vector<8x8xf32> to vector<8xf32>
    %171 = vector.shape_cast %170 : vector<8xf32> to vector<8x1xf32>
    %172 = tpu.reciprocal %171 {approx = true} : vector<8x1xf32> -> vector<8x1xf32>
    %173 = vector.broadcast %172 : vector<8x1xf32> to vector<8x8xf32>
    %174 = arith.mulf %169, %173 : vector<8x8xf32>
    %cst_66 = arith.constant dense<0.000000e+00> : vector<8x8xf32>
    %175 = tpu.matmul %174, %160, %cst_66 {dimension_numbers = #tpu.dot_dimension_numbers<[1], [0], [0], [1], [0, 0, 1, 1], [], []>} : vector<8x8xf32>, vector<8x8xf32>, vector<8x8xf32> -> vector<8x8xf32>
    %176 = vector.extract_strided_slice %131 {offsets = [0, 16], sizes = [8, 8], strides = [1, 1]} : vector<8x32xf32> to vector<8x8xf32>
    %177 = vector.extract_strided_slice %138 {offsets = [0, 16], sizes = [8, 8], strides = [1, 1]} : vector<8x32xf32> to vector<8x8xf32>
    %178 = vector.extract_strided_slice %139 {offsets = [0, 16], sizes = [8, 8], strides = [1, 1]} : vector<8x32xf32> to vector<8x8xf32>
    %179 = tpu.transpose %177, [1, 0] : vector<8x8xf32> -> vector<8x8xf32>
    %cst_67 = arith.constant dense<0.000000e+00> : vector<8x8xf32>
    %180 = tpu.matmul %176, %179, %cst_67 {dimension_numbers = #tpu.dot_dimension_numbers<[1], [0], [0], [1], [0, 0, 1, 1], [], []>} : vector<8x8xf32>, vector<8x8xf32>, vector<8x8xf32> -> vector<8x8xf32>
    %cst_68 = arith.constant 0.353553385 : f32
    %181 = vector.broadcast %cst_68 : f32 to vector<8x8xf32>
    %182 = arith.mulf %180, %181 : vector<8x8xf32>
    %cst_69 = arith.constant dense<0xFF800000> : vector<8xf32>
    %183 = vector.multi_reduction <maximumf>, %182, %cst_69 [1] : vector<8x8xf32> to vector<8xf32>
    %184 = vector.shape_cast %183 : vector<8xf32> to vector<8x1xf32>
    %185 = vector.broadcast %184 : vector<8x1xf32> to vector<8x8xf32>
    %186 = arith.subf %182, %185 : vector<8x8xf32>
    %187 = math.exp %186 : vector<8x8xf32>
    %cst_70 = arith.constant dense<0.000000e+00> : vector<8xf32>
    %188 = vector.multi_reduction <add>, %187, %cst_70 [1] : vector<8x8xf32> to vector<8xf32>
    %189 = vector.shape_cast %188 : vector<8xf32> to vector<8x1xf32>
    %190 = tpu.reciprocal %189 {approx = true} : vector<8x1xf32> -> vector<8x1xf32>
    %191 = vector.broadcast %190 : vector<8x1xf32> to vector<8x8xf32>
    %192 = arith.mulf %187, %191 : vector<8x8xf32>
    %cst_71 = arith.constant dense<0.000000e+00> : vector<8x8xf32>
    %193 = tpu.matmul %192, %178, %cst_71 {dimension_numbers = #tpu.dot_dimension_numbers<[1], [0], [0], [1], [0, 0, 1, 1], [], []>} : vector<8x8xf32>, vector<8x8xf32>, vector<8x8xf32> -> vector<8x8xf32>
    %194 = vector.extract_strided_slice %131 {offsets = [0, 24], sizes = [8, 8], strides = [1, 1]} : vector<8x32xf32> to vector<8x8xf32>
    %195 = vector.extract_strided_slice %138 {offsets = [0, 24], sizes = [8, 8], strides = [1, 1]} : vector<8x32xf32> to vector<8x8xf32>
    %196 = vector.extract_strided_slice %139 {offsets = [0, 24], sizes = [8, 8], strides = [1, 1]} : vector<8x32xf32> to vector<8x8xf32>
    %197 = tpu.transpose %195, [1, 0] : vector<8x8xf32> -> vector<8x8xf32>
    %cst_72 = arith.constant dense<0.000000e+00> : vector<8x8xf32>
    %198 = tpu.matmul %194, %197, %cst_72 {dimension_numbers = #tpu.dot_dimension_numbers<[1], [0], [0], [1], [0, 0, 1, 1], [], []>} : vector<8x8xf32>, vector<8x8xf32>, vector<8x8xf32> -> vector<8x8xf32>
    %cst_73 = arith.constant 0.353553385 : f32
    %199 = vector.broadcast %cst_73 : f32 to vector<8x8xf32>
    %200 = arith.mulf %198, %199 : vector<8x8xf32>
    %cst_74 = arith.constant dense<0xFF800000> : vector<8xf32>
    %201 = vector.multi_reduction <maximumf>, %200, %cst_74 [1] : vector<8x8xf32> to vector<8xf32>
    %202 = vector.shape_cast %201 : vector<8xf32> to vector<8x1xf32>
    %203 = vector.broadcast %202 : vector<8x1xf32> to vector<8x8xf32>
    %204 = arith.subf %200, %203 : vector<8x8xf32>
    %205 = math.exp %204 : vector<8x8xf32>
    %cst_75 = arith.constant dense<0.000000e+00> : vector<8xf32>
    %206 = vector.multi_reduction <add>, %205, %cst_75 [1] : vector<8x8xf32> to vector<8xf32>
    %207 = vector.shape_cast %206 : vector<8xf32> to vector<8x1xf32>
    %208 = tpu.reciprocal %207 {approx = true} : vector<8x1xf32> -> vector<8x1xf32>
    %209 = vector.broadcast %208 : vector<8x1xf32> to vector<8x8xf32>
    %210 = arith.mulf %205, %209 : vector<8x8xf32>
    %cst_76 = arith.constant dense<0.000000e+00> : vector<8x8xf32>
    %211 = tpu.matmul %210, %196, %cst_76 {dimension_numbers = #tpu.dot_dimension_numbers<[1], [0], [0], [1], [0, 0, 1, 1], [], []>} : vector<8x8xf32>, vector<8x8xf32>, vector<8x8xf32> -> vector<8x8xf32>
    %212 = tpu.concatenate %157, %175, %193, %211 in 1 : vector<8x8xf32>, vector<8x8xf32>, vector<8x8xf32>, vector<8x8xf32> -> vector<8x32xf32>
    %213 = arith.truncf %212 : vector<8x32xf32> to vector<8x32xbf16>
    %c0_77 = arith.constant 0 : index
    %c0_78 = arith.constant 0 : index
    %214 = vector.load %arg13[%c0_77, %c0_78] : memref<32x32xbf16, #tpu.memory_space<vmem>>, vector<32x32xbf16>
    %cst_79 = arith.constant dense<0.000000e+00> : vector<8x32xf32>
    %215 = tpu.matmul %213, %214, %cst_79 {dimension_numbers = #tpu.dot_dimension_numbers<[1], [0], [0], [1], [0, 0, 1, 1], [], []>} : vector<8x32xbf16>, vector<32x32xbf16>, vector<8x32xf32> -> vector<8x32xf32>
    %c0_80 = arith.constant 0 : index
    %c0_81 = arith.constant 0 : index
    %216 = vector.load %arg14[%c0_80, %c0_81] : memref<1x32xf32, #tpu.memory_space<vmem>>, vector<1x32xf32>
    %217 = vector.broadcast %216 : vector<1x32xf32> to vector<8x32xf32>
    %218 = arith.addf %215, %217 : vector<8x32xf32>
    %219 = arith.addf %218, %125 : vector<8x32xf32>
    %c0_82 = arith.constant 0 : index
    %c0_83 = arith.constant 0 : index
    %220 = vector.load %arg15[%c0_82, %c0_83] : memref<1x32xf32, #tpu.memory_space<vmem>>, vector<1x32xf32>
    %c0_84 = arith.constant 0 : index
    %c0_85 = arith.constant 0 : index
    %221 = vector.load %arg16[%c0_84, %c0_85] : memref<1x32xf32, #tpu.memory_space<vmem>>, vector<1x32xf32>
    %cst_86 = arith.constant dense<0.000000e+00> : vector<8xf32>
    %222 = vector.multi_reduction <add>, %219, %cst_86 [1] : vector<8x32xf32> to vector<8xf32>
    %223 = vector.shape_cast %222 : vector<8xf32> to vector<8x1xf32>
    %cst_87 = arith.constant 3.200000e+01 : f32
    %224 = vector.broadcast %cst_87 : f32 to vector<8x1xf32>
    %225 = arith.divf %223, %224 : vector<8x1xf32>
    %226 = vector.broadcast %225 : vector<8x1xf32> to vector<8x32xf32>
    %227 = arith.subf %219, %226 : vector<8x32xf32>
    %228 = arith.mulf %227, %227 : vector<8x32xf32>
    %cst_88 = arith.constant dense<0.000000e+00> : vector<8xf32>
    %229 = vector.multi_reduction <add>, %228, %cst_88 [1] : vector<8x32xf32> to vector<8xf32>
    %230 = vector.shape_cast %229 : vector<8xf32> to vector<8x1xf32>
    %cst_89 = arith.constant 3.200000e+01 : f32
    %231 = vector.broadcast %cst_89 : f32 to vector<8x1xf32>
    %232 = arith.divf %230, %231 : vector<8x1xf32>
    %cst_90 = arith.constant 9.99999974E-6 : f32
    %233 = vector.broadcast %cst_90 : f32 to vector<8x1xf32>
    %234 = arith.addf %232, %233 : vector<8x1xf32>
    %235 = math.rsqrt %234 : vector<8x1xf32>
    %236 = vector.broadcast %235 : vector<8x1xf32> to vector<8x32xf32>
    %237 = arith.mulf %227, %236 : vector<8x32xf32>
    %238 = vector.broadcast %220 : vector<1x32xf32> to vector<8x32xf32>
    %239 = arith.mulf %237, %238 : vector<8x32xf32>
    %240 = vector.broadcast %221 : vector<1x32xf32> to vector<8x32xf32>
    %241 = arith.addf %239, %240 : vector<8x32xf32>
    %242 = arith.truncf %241 : vector<8x32xf32> to vector<8x32xbf16>
    %c0_91 = arith.constant 0 : index
    %c0_92 = arith.constant 0 : index
    %243 = vector.load %arg17[%c0_91, %c0_92] : memref<32x128xbf16, #tpu.memory_space<vmem>>, vector<32x128xbf16>
    %cst_93 = arith.constant dense<0.000000e+00> : vector<8x128xf32>
    %244 = tpu.matmul %242, %243, %cst_93 {dimension_numbers = #tpu.dot_dimension_numbers<[1], [0], [0], [1], [0, 0, 1, 1], [], []>} : vector<8x32xbf16>, vector<32x128xbf16>, vector<8x128xf32> -> vector<8x128xf32>
    %c0_94 = arith.constant 0 : index
    %c0_95 = arith.constant 0 : index
    %245 = vector.load %arg18[%c0_94, %c0_95] : memref<1x128xf32, #tpu.memory_space<vmem>>, vector<1x128xf32>
    %246 = vector.broadcast %245 : vector<1x128xf32> to vector<8x128xf32>
    %247 = arith.addf %244, %246 : vector<8x128xf32>
    %cst_96 = arith.constant 0.000000e+00 : f32
    %248 = vector.broadcast %cst_96 : f32 to vector<8x128xf32>
    %249 = arith.maximumf %247, %248 : vector<8x128xf32>
    %250 = arith.truncf %249 : vector<8x128xf32> to vector<8x128xbf16>
    %c0_97 = arith.constant 0 : index
    %c0_98 = arith.constant 0 : index
    %251 = vector.load %arg19[%c0_97, %c0_98] : memref<128x32xbf16, #tpu.memory_space<vmem>>, vector<128x32xbf16>
    %cst_99 = arith.constant dense<0.000000e+00> : vector<8x32xf32>
    %252 = tpu.matmul %250, %251, %cst_99 {dimension_numbers = #tpu.dot_dimension_numbers<[1], [0], [0], [1], [0, 0, 1, 1], [], []>} : vector<8x128xbf16>, vector<128x32xbf16>, vector<8x32xf32> -> vector<8x32xf32>
    %c0_100 = arith.constant 0 : index
    %c0_101 = arith.constant 0 : index
    %253 = vector.load %arg20[%c0_100, %c0_101] : memref<1x32xf32, #tpu.memory_space<vmem>>, vector<1x32xf32>
    %254 = vector.broadcast %253 : vector<1x32xf32> to vector<8x32xf32>
    %255 = arith.addf %252, %254 : vector<8x32xf32>
    %256 = arith.addf %255, %241 : vector<8x32xf32>
    %c0_102 = arith.constant 0 : index
    %c0_103 = arith.constant 0 : index
    %257 = vector.load %arg21[%c0_102, %c0_103] : memref<1x32xf32, #tpu.memory_space<vmem>>, vector<1x32xf32>
    %c0_104 = arith.constant 0 : index
    %c0_105 = arith.constant 0 : index
    %258 = vector.load %arg22[%c0_104, %c0_105] : memref<1x32xf32, #tpu.memory_space<vmem>>, vector<1x32xf32>
    %cst_106 = arith.constant dense<0.000000e+00> : vector<8xf32>
    %259 = vector.multi_reduction <add>, %256, %cst_106 [1] : vector<8x32xf32> to vector<8xf32>
    %260 = vector.shape_cast %259 : vector<8xf32> to vector<8x1xf32>
    %cst_107 = arith.constant 3.200000e+01 : f32
    %261 = vector.broadcast %cst_107 : f32 to vector<8x1xf32>
    %262 = arith.divf %260, %261 : vector<8x1xf32>
    %263 = vector.broadcast %262 : vector<8x1xf32> to vector<8x32xf32>
    %264 = arith.subf %256, %263 : vector<8x32xf32>
    %265 = arith.mulf %264, %264 : vector<8x32xf32>
    %cst_108 = arith.constant dense<0.000000e+00> : vector<8xf32>
    %266 = vector.multi_reduction <add>, %265, %cst_108 [1] : vector<8x32xf32> to vector<8xf32>
    %267 = vector.shape_cast %266 : vector<8xf32> to vector<8x1xf32>
    %cst_109 = arith.constant 3.200000e+01 : f32
    %268 = vector.broadcast %cst_109 : f32 to vector<8x1xf32>
    %269 = arith.divf %267, %268 : vector<8x1xf32>
    %cst_110 = arith.constant 9.99999974E-6 : f32
    %270 = vector.broadcast %cst_110 : f32 to vector<8x1xf32>
    %271 = arith.addf %269, %270 : vector<8x1xf32>
    %272 = math.rsqrt %271 : vector<8x1xf32>
    %273 = vector.broadcast %272 : vector<8x1xf32> to vector<8x32xf32>
    %274 = arith.mulf %264, %273 : vector<8x32xf32>
    %275 = vector.broadcast %257 : vector<1x32xf32> to vector<8x32xf32>
    %276 = arith.mulf %274, %275 : vector<8x32xf32>
    %277 = vector.broadcast %258 : vector<1x32xf32> to vector<8x32xf32>
    %278 = arith.addf %276, %277 : vector<8x32xf32>
    %c0_111 = arith.constant 0 : index
    %c0_112 = arith.constant 0 : index
    %c0_113 = arith.constant 0 : index
    %279 = vector.load %arg23[%c0_111, %c0_112, %c0_113] : memref<1x8x32xf32, #tpu.memory_space<vmem>>, vector<1x8x32xf32>
    %280 = vector.shape_cast %279 : vector<1x8x32xf32> to vector<8x32xf32>
    %281 = vector.shape_cast %278 : vector<8x32xf32> to vector<1x8x32xf32>
    tpu.vector_store %arg23[%c0_111, %c0_112, %c0_113], %281 {strides = array<i32>} : memref<1x8x32xf32, #tpu.memory_space<vmem>>, vector<1x8x32xf32>,
    return
  }
  func.func @transform_0(%arg0: i32) -> (i32, i32, i32) {
    %c0_i32 = arith.constant 0 : i32
    %c0_i32_0 = arith.constant 0 : i32
    %c0_i32_1 = arith.constant 0 : i32
    return %arg0, %c0_i32, %c0_i32_0 : i32, i32, i32
  }
  func.func @transform_1(%arg0: i32) -> (i32, i32, i32) {
    %c0_i32 = arith.constant 0 : i32
    %c0_i32_0 = arith.constant 0 : i32
    %c0_i32_1 = arith.constant 0 : i32
    return %arg0, %c0_i32, %c0_i32_0 : i32, i32, i32
  }
  func.func @transform_2(%arg0: i32) -> (i32, i32) {
    %c0_i32 = arith.constant 0 : i32
    %c0_i32_0 = arith.constant 0 : i32
    %c0_i32_1 = arith.constant 0 : i32
    return %c0_i32, %c0_i32_0 : i32, i32
  }
  func.func @transform_3(%arg0: i32) -> (i32, i32) {
    %c0_i32 = arith.constant 0 : i32
    %c0_i32_0 = arith.constant 0 : i32
    %c0_i32_1 = arith.constant 0 : i32
    return %c0_i32, %c0_i32_0 : i32, i32
  }
  func.func @transform_4(%arg0: i32) -> (i32, i32) {
    %c0_i32 = arith.constant 0 : i32
    %c0_i32_0 = arith.constant 0 : i32
    %c0_i32_1 = arith.constant 0 : i32
    return %c0_i32, %c0_i32_0 : i32, i32
  }
  func.func @transform_5(%arg0: i32) -> (i32, i32) {
    %c0_i32 = arith.constant 0 : i32
    %c0_i32_0 = arith.constant 0 : i32
    %c0_i32_1 = arith.constant 0 : i32
    return %c0_i32, %c0_i32_0 : i32, i32
  }
  func.func @transform_6(%arg0: i32) -> (i32, i32) {
    %c0_i32 = arith.constant 0 : i32
    %c0_i32_0 = arith.constant 0 : i32
    %c0_i32_1 = arith.constant 0 : i32
    return %c0_i32, %c0_i32_0 : i32, i32
  }
  func.func @transform_7(%arg0: i32) -> (i32, i32) {
    %c0_i32 = arith.constant 0 : i32
    %c0_i32_0 = arith.constant 0 : i32
    %c0_i32_1 = arith.constant 0 : i32
    return %c0_i32, %c0_i32_0 : i32, i32
  }
  func.func @transform_8(%arg0: i32) -> (i32, i32) {
    %c0_i32 = arith.constant 0 : i32
    %c0_i32_0 = arith.constant 0 : i32
    %c0_i32_1 = arith.constant 0 : i32
    return %c0_i32, %c0_i32_0 : i32, i32
  }
  func.func @transform_9(%arg0: i32) -> (i32, i32) {
    %c0_i32 = arith.constant 0 : i32
    %c0_i32_0 = arith.constant 0 : i32
    %c0_i32_1 = arith.constant 0 : i32
    return %c0_i32, %c0_i32_0 : i32, i32
  }
  func.func @transform_10(%arg0: i32) -> (i32, i32) {
    %c0_i32 = arith.constant 0 : i32
    %c0_i32_0 = arith.constant 0 : i32
    %c0_i32_1 = arith.constant 0 : i32
    return %c0_i32, %c0_i32_0 : i32, i32
  }
  func.func @transform_11(%arg0: i32) -> (i32, i32) {
    %c0_i32 = arith.constant 0 : i32
    %c0_i32_0 = arith.constant 0 : i32
    %c0_i32_1 = arith.constant 0 : i32
    return %c0_i32, %c0_i32_0 : i32, i32
  }
  func.func @transform_12(%arg0: i32) -> (i32, i32) {
    %c0_i32 = arith.constant 0 : i32
    %c0_i32_0 = arith.constant 0 : i32
    %c0_i32_1 = arith.constant 0 : i32
    return %c0_i32, %c0_i32_0 : i32, i32
  }
  func.func @transform_13(%arg0: i32) -> (i32, i32) {
    %c0_i32 = arith.constant 0 : i32
    %c0_i32_0 = arith.constant 0 : i32
    %c0_i32_1 = arith.constant 0 : i32
    return %c0_i32, %c0_i32_0 : i32, i32
  }
  func.func @transform_14(%arg0: i32) -> (i32, i32) {
    %c0_i32 = arith.constant 0 : i32
    %c0_i32_0 = arith.constant 0 : i32
    %c0_i32_1 = arith.constant 0 : i32
    return %c0_i32, %c0_i32_0 : i32, i32
  }
  func.func @transform_15(%arg0: i32) -> (i32, i32) {
    %c0_i32 = arith.constant 0 : i32
    %c0_i32_0 = arith.constant 0 : i32
    %c0_i32_1 = arith.constant 0 : i32
    return %c0_i32, %c0_i32_0 : i32, i32
  }
  func.func @transform_16(%arg0: i32) -> (i32, i32) {
    %c0_i32 = arith.constant 0 : i32
    %c0_i32_0 = arith.constant 0 : i32
    %c0_i32_1 = arith.constant 0 : i32
    return %c0_i32, %c0_i32_0 : i32, i32
  }
  func.func @transform_17(%arg0: i32) -> (i32, i32) {
    %c0_i32 = arith.constant 0 : i32
    %c0_i32_0 = arith.constant 0 : i32
    %c0_i32_1 = arith.constant 0 : i32
    return %c0_i32, %c0_i32_0 : i32, i32
  }
  func.func @transform_18(%arg0: i32) -> (i32, i32) {
    %c0_i32 = arith.constant 0 : i32
    %c0_i32_0 = arith.constant 0 : i32
    %c0_i32_1 = arith.constant 0 : i32
    return %c0_i32, %c0_i32_0 : i32, i32
  }
  func.func @transform_19(%arg0: i32) -> (i32, i32) {
    %c0_i32 = arith.constant 0 : i32
    %c0_i32_0 = arith.constant 0 : i32
    %c0_i32_1 = arith.constant 0 : i32
    return %c0_i32, %c0_i32_0 : i32, i32
  }
  func.func @transform_20(%arg0: i32) -> (i32, i32) {
    %c0_i32 = arith.constant 0 : i32
    %c0_i32_0 = arith.constant 0 : i32
    %c0_i32_1 = arith.constant 0 : i32
    return %c0_i32, %c0_i32_0 : i32, i32
  }
  func.func @transform_21(%arg0: i32) -> (i32, i32) {
    %c0_i32 = arith.constant 0 : i32
    %c0_i32_0 = arith.constant 0 : i32
    %c0_i32_1 = arith.constant 0 : i32
    return %c0_i32, %c0_i32_0 : i32, i32
  }
  func.func @transform_22(%arg0: i32) -> (i32, i32, i32) {
    %c0_i32 = arith.constant 0 : i32
    %c0_i32_0 = arith.constant 0 : i32
    %c0_i32_1 = arith.constant 0 : i32
    return %arg0, %c0_i32, %c0_i32_0 : i32, i32, i32
  }
}

module attributes {stable_mosaic.version = 11 : i64} {
  func.func @_decoder_layer_kernel(%arg0: i32, %arg1: memref<1x8x32xf32, #tpu.memory_space<vmem>>, %arg2: memref<1x8x32xf32, #tpu.memory_space<vmem>>, %arg3: memref<32x96xbf16, #tpu.memory_space<vmem>>, %arg4: memref<1x96xf32, #tpu.memory_space<vmem>>, %arg5: memref<32x32xbf16, #tpu.memory_space<vmem>>, %arg6: memref<1x32xf32, #tpu.memory_space<vmem>>, %arg7: memref<1x32xf32, #tpu.memory_space<vmem>>, %arg8: memref<1x32xf32, #tpu.memory_space<vmem>>, %arg9: memref<32x32xbf16, #tpu.memory_space<vmem>>, %arg10: memref<1x32xf32, #tpu.memory_space<vmem>>, %arg11: memref<32x64xbf16, #tpu.memory_space<vmem>>, %arg12: memref<1x64xf32, #tpu.memory_space<vmem>>, %arg13: memref<32x32xbf16, #tpu.memory_space<vmem>>, %arg14: memref<1x32xf32, #tpu.memory_space<vmem>>, %arg15: memref<1x32xf32, #tpu.memory_space<vmem>>, %arg16: memref<1x32xf32, #tpu.memory_space<vmem>>, %arg17: memref<32x128xbf16, #tpu.memory_space<vmem>>, %arg18: memref<1x128xf32, #tpu.memory_space<vmem>>, %arg19: memref<128x32xbf16, #tpu.memory_space<vmem>>, %arg20: memref<1x32xf32, #tpu.memory_space<vmem>>, %arg21: memref<1x32xf32, #tpu.memory_space<vmem>>, %arg22: memref<1x32xf32, #tpu.memory_space<vmem>>, %arg23: memref<1x8x32xf32, #tpu.memory_space<vmem>>) attributes {dimension_semantics = [#tpu.dimension_semantics<parallel>], iteration_bounds = array<i64: 2>, scalar_prefetch = 0 : i64, scratch_operands = 0 : i64, tpu.core_type = #tpu.core_type<tc>, window_params = [{transform_indices = @transform_0, window_bounds = array<i64: 1, 8, 32>}, {transform_indices = @transform_1, window_bounds = array<i64: 1, 8, 32>}, {pipeline_mode = #tpu.pipeline_mode<synchronous>, transform_indices = @transform_2, window_bounds = array<i64: 32, 96>}, {pipeline_mode = #tpu.pipeline_mode<synchronous>, transform_indices = @transform_3, window_bounds = array<i64: 1, 96>}, {pipeline_mode = #tpu.pipeline_mode<synchronous>, transform_indices = @transform_4, window_bounds = array<i64: 32, 32>}, {pipeline_mode = #tpu.pipeline_mode<synchronous>, transform_indices = @transform_5, window_bounds = array<i64: 1, 32>}, {pipeline_mode = #tpu.pipeline_mode<synchronous>, transform_indices = @transform_6, window_bounds = array<i64: 1, 32>}, {pipeline_mode = #tpu.pipeline_mode<synchronous>, transform_indices = @transform_7, window_bounds = array<i64: 1, 32>}, {pipeline_mode = #tpu.pipeline_mode<synchronous>, transform_indices = @transform_8, window_bounds = array<i64: 32, 32>}, {pipeline_mode = #tpu.pipeline_mode<synchronous>, transform_indices = @transform_9, window_bounds = array<i64: 1, 32>}, {pipeline_mode = #tpu.pipeline_mode<synchronous>, transform_indices = @transform_10, window_bounds = array<i64: 32, 64>}, {pipeline_mode = #tpu.pipeline_mode<synchronous>, transform_indices = @transform_11, window_bounds = array<i64: 1, 64>}, {pipeline_mode = #tpu.pipeline_mode<synchronous>, transform_indices = @transform_12, window_bounds = array<i64: 32, 32>}, {pipeline_mode = #tpu.pipeline_mode<synchronous>, transform_indices = @transform_13, window_bounds = array<i64: 1, 32>}, {pipeline_mode = #tpu.pipeline_mode<synchronous>, transform_indices = @transform_14, window_bounds = array<i64: 1, 32>}, {pipeline_mode = #tpu.pipeline_mode<synchronous>, transform_indices = @transform_15, window_bounds = array<i64: 1, 32>}, {pipeline_mode = #tpu.pipeline_mode<synchronous>, transform_indices = @transform_16, window_bounds = array<i64: 32, 128>}, {pipeline_mode = #tpu.pipeline_mode<synchronous>, transform_indices = @transform_17, window_bounds = array<i64: 1, 128>}, {pipeline_mode = #tpu.pipeline_mode<synchronous>, transform_indices = @transform_18, window_bounds = array<i64: 128, 32>}, {pipeline_mode = #tpu.pipeline_mode<synchronous>, transform_indices = @transform_19, window_bounds = array<i64: 1, 32>}, {pipeline_mode = #tpu.pipeline_mode<synchronous>, transform_indices = @transform_20, window_bounds = array<i64: 1, 32>}, {pipeline_mode = #tpu.pipeline_mode<synchronous>, transform_indices = @transform_21, window_bounds = array<i64: 1, 32>}, {transform_indices = @transform_22, window_bounds = array<i64: 1, 8, 32>}]} {
    %c0 = arith.constant 0 : index
    %c0_0 = arith.constant 0 : index
    %c0_1 = arith.constant 0 : index
    %0 = vector.load %arg1[%c0, %c0_0, %c0_1] : memref<1x8x32xf32, #tpu.memory_space<vmem>>, vector<1x8x32xf32>
    %1 = vector.shape_cast %0 : vector<1x8x32xf32> to vector<8x32xf32>
    %c0_2 = arith.constant 0 : index
    %c0_3 = arith.constant 0 : index
    %c0_4 = arith.constant 0 : index
    %2 = vector.load %arg2[%c0_2, %c0_3, %c0_4] : memref<1x8x32xf32, #tpu.memory_space<vmem>>, vector<1x8x32xf32>
    %3 = vector.shape_cast %2 : vector<1x8x32xf32> to vector<8x32xf32>
    %4 = arith.truncf %1 : vector<8x32xf32> to vector<8x32xbf16>
    %c0_5 = arith.constant 0 : index
    %c0_6 = arith.constant 0 : index
    %5 = vector.load %arg3[%c0_5, %c0_6] : memref<32x96xbf16, #tpu.memory_space<vmem>>, vector<32x96xbf16>
    %cst = arith.constant dense<0.000000e+00> : vector<8x96xf32>
    %6 = tpu.matmul %4, %5, %cst {dimension_numbers = #tpu.dot_dimension_numbers<[1], [0], [0], [1], [0, 0, 1, 1], [], []>} : vector<8x32xbf16>, vector<32x96xbf16>, vector<8x96xf32> -> vector<8x96xf32>
    %c0_7 = arith.constant 0 : index
    %c0_8 = arith.constant 0 : index
    %7 = vector.load %arg4[%c0_7, %c0_8] : memref<1x96xf32, #tpu.memory_space<vmem>>, vector<1x96xf32>
    %8 = vector.broadcast %7 : vector<1x96xf32> to vector<8x96xf32>
    %9 = arith.addf %6, %8 : vector<8x96xf32>
    %10 = vector.extract_strided_slice %9 {offsets = [0, 0], sizes = [8, 32], strides = [1, 1]} : vector<8x96xf32> to vector<8x32xf32>
    %11 = vector.extract_strided_slice %9 {offsets = [0, 32], sizes = [8, 32], strides = [1, 1]} : vector<8x96xf32> to vector<8x32xf32>
    %12 = vector.extract_strided_slice %9 {offsets = [0, 64], sizes = [8, 32], strides = [1, 1]} : vector<8x96xf32> to vector<8x32xf32>
    %13 = tpu.iota {dimensions = array<i32: 0>} : vector<8x8xi32>
    %14 = tpu.iota {dimensions = array<i32: 1>} : vector<8x8xi32>
    %15 = arith.cmpi sge, %13, %14 : vector<8x8xi32>
    %16 = vector.extract_strided_slice %10 {offsets = [0, 0], sizes = [8, 8], strides = [1, 1]} : vector<8x32xf32> to vector<8x8xf32>
    %17 = vector.extract_strided_slice %11 {offsets = [0, 0], sizes = [8, 8], strides = [1, 1]} : vector<8x32xf32> to vector<8x8xf32>
    %18 = vector.extract_strided_slice %12 {offsets = [0, 0], sizes = [8, 8], strides = [1, 1]} : vector<8x32xf32> to vector<8x8xf32>
    %19 = tpu.transpose %17, [1, 0] : vector<8x8xf32> -> vector<8x8xf32>
    %cst_9 = arith.constant dense<0.000000e+00> : vector<8x8xf32>
    %20 = tpu.matmul %16, %19, %cst_9 {dimension_numbers = #tpu.dot_dimension_numbers<[1], [0], [0], [1], [0, 0, 1, 1], [], []>} : vector<8x8xf32>, vector<8x8xf32>, vector<8x8xf32> -> vector<8x8xf32>
    %cst_10 = arith.constant 0.353553385 : f32
    %21 = vector.broadcast %cst_10 : f32 to vector<8x8xf32>
    %22 = arith.mulf %20, %21 : vector<8x8xf32>
    %cst_11 = arith.constant -1.000000e+09 : f32
    %23 = vector.broadcast %cst_11 : f32 to vector<8x8xf32>
    %24 = arith.select %15, %22, %23 : vector<8x8xi1>, vector<8x8xf32>
    %cst_12 = arith.constant dense<0xFF800000> : vector<8xf32>
    %25 = vector.multi_reduction <maximumf>, %24, %cst_12 [1] : vector<8x8xf32> to vector<8xf32>
    %26 = vector.shape_cast %25 : vector<8xf32> to vector<8x1xf32>
    %27 = vector.broadcast %26 : vector<8x1xf32> to vector<8x8xf32>
    %28 = arith.subf %24, %27 : vector<8x8xf32>
    %29 = math.exp %28 : vector<8x8xf32>
    %cst_13 = arith.constant dense<0.000000e+00> : vector<8xf32>
    %30 = vector.multi_reduction <add>, %29, %cst_13 [1] : vector<8x8xf32> to vector<8xf32>
    %31 = vector.shape_cast %30 : vector<8xf32> to vector<8x1xf32>
    %32 = tpu.reciprocal %31 {approx = true} : vector<8x1xf32> -> vector<8x1xf32>
    %33 = vector.broadcast %32 : vector<8x1xf32> to vector<8x8xf32>
    %34 = arith.mulf %29, %33 : vector<8x8xf32>
    %cst_14 = arith.constant dense<0.000000e+00> : vector<8x8xf32>
    %35 = tpu.matmul %34, %18, %cst_14 {dimension_numbers = #tpu.dot_dimension_numbers<[1], [0], [0], [1], [0, 0, 1, 1], [], []>} : vector<8x8xf32>, vector<8x8xf32>, vector<8x8xf32> -> vector<8x8xf32>
    %36 = vector.extract_strided_slice %10 {offsets = [0, 8], sizes = [8, 8], strides = [1, 1]} : vector<8x32xf32> to vector<8x8xf32>
    %37 = vector.extract_strided_slice %11 {offsets = [0, 8], sizes = [8, 8], strides = [1, 1]} : vector<8x32xf32> to vector<8x8xf32>
    %38 = vector.extract_strided_slice %12 {offsets = [0, 8], sizes = [8, 8], strides = [1, 1]} : vector<8x32xf32> to vector<8x8xf32>
    %39 = tpu.transpose %37, [1, 0] : vector<8x8xf32> -> vector<8x8xf32>
    %cst_15 = arith.constant dense<0.000000e+00> : vector<8x8xf32>
    %40 = tpu.matmul %36, %39, %cst_15 {dimension_numbers = #tpu.dot_dimension_numbers<[1], [0], [0], [1], [0, 0, 1, 1], [], []>} : vector<8x8xf32>, vector<8x8xf32>, vector<8x8xf32> -> vector<8x8xf32>
    %cst_16 = arith.constant 0.353553385 : f32
    %41 = vector.broadcast %cst_16 : f32 to vector<8x8xf32>
    %42 = arith.mulf %40, %41 : vector<8x8xf32>
    %cst_17 = arith.constant -1.000000e+09 : f32
    %43 = vector.broadcast %cst_17 : f32 to vector<8x8xf32>
    %44 = arith.select %15, %42, %43 : vector<8x8xi1>, vector<8x8xf32>
    %cst_18 = arith.constant dense<0xFF800000> : vector<8xf32>
    %45 = vector.multi_reduction <maximumf>, %44, %cst_18 [1] : vector<8x8xf32> to vector<8xf32>
    %46 = vector.shape_cast %45 : vector<8xf32> to vector<8x1xf32>
    %47 = vector.broadcast %46 : vector<8x1xf32> to vector<8x8xf32>
    %48 = arith.subf %44, %47 : vector<8x8xf32>
    %49 = math.exp %48 : vector<8x8xf32>
    %cst_19 = arith.constant dense<0.000000e+00> : vector<8xf32>
    %50 = vector.multi_reduction <add>, %49, %cst_19 [1] : vector<8x8xf32> to vector<8xf32>
    %51 = vector.shape_cast %50 : vector<8xf32> to vector<8x1xf32>
    %52 = tpu.reciprocal %51 {approx = true} : vector<8x1xf32> -> vector<8x1xf32>
    %53 = vector.broadcast %52 : vector<8x1xf32> to vector<8x8xf32>
    %54 = arith.mulf %49, %53 : vector<8x8xf32>
    %cst_20 = arith.constant dense<0.000000e+00> : vector<8x8xf32>
    %55 = tpu.matmul %54, %38, %cst_20 {dimension_numbers = #tpu.dot_dimension_numbers<[1], [0], [0], [1], [0, 0, 1, 1], [], []>} : vector<8x8xf32>, vector<8x8xf32>, vector<8x8xf32> -> vector<8x8xf32>
    %56 = vector.extract_strided_slice %10 {offsets = [0, 16], sizes = [8, 8], strides = [1, 1]} : vector<8x32xf32> to vector<8x8xf32>
    %57 = vector.extract_strided_slice %11 {offsets = [0, 16], sizes = [8, 8], strides = [1, 1]} : vector<8x32xf32> to vector<8x8xf32>
    %58 = vector.extract_strided_slice %12 {offsets = [0, 16], sizes = [8, 8], strides = [1, 1]} : vector<8x32xf32> to vector<8x8xf32>
    %59 = tpu.transpose %57, [1, 0] : vector<8x8xf32> -> vector<8x8xf32>
    %cst_21 = arith.constant dense<0.000000e+00> : vector<8x8xf32>
    %60 = tpu.matmul %56, %59, %cst_21 {dimension_numbers = #tpu.dot_dimension_numbers<[1], [0], [0], [1], [0, 0, 1, 1], [], []>} : vector<8x8xf32>, vector<8x8xf32>, vector<8x8xf32> -> vector<8x8xf32>
    %cst_22 = arith.constant 0.353553385 : f32
    %61 = vector.broadcast %cst_22 : f32 to vector<8x8xf32>
    %62 = arith.mulf %60, %61 : vector<8x8xf32>
    %cst_23 = arith.constant -1.000000e+09 : f32
    %63 = vector.broadcast %cst_23 : f32 to vector<8x8xf32>
    %64 = arith.select %15, %62, %63 : vector<8x8xi1>, vector<8x8xf32>
    %cst_24 = arith.constant dense<0xFF800000> : vector<8xf32>
    %65 = vector.multi_reduction <maximumf>, %64, %cst_24 [1] : vector<8x8xf32> to vector<8xf32>
    %66 = vector.shape_cast %65 : vector<8xf32> to vector<8x1xf32>
    %67 = vector.broadcast %66 : vector<8x1xf32> to vector<8x8xf32>
    %68 = arith.subf %64, %67 : vector<8x8xf32>
    %69 = math.exp %68 : vector<8x8xf32>
    %cst_25 = arith.constant dense<0.000000e+00> : vector<8xf32>
    %70 = vector.multi_reduction <add>, %69, %cst_25 [1] : vector<8x8xf32> to vector<8xf32>
    %71 = vector.shape_cast %70 : vector<8xf32> to vector<8x1xf32>
    %72 = tpu.reciprocal %71 {approx = true} : vector<8x1xf32> -> vector<8x1xf32>
    %73 = vector.broadcast %72 : vector<8x1xf32> to vector<8x8xf32>
    %74 = arith.mulf %69, %73 : vector<8x8xf32>
    %cst_26 = arith.constant dense<0.000000e+00> : vector<8x8xf32>
    %75 = tpu.matmul %74, %58, %cst_26 {dimension_numbers = #tpu.dot_dimension_numbers<[1], [0], [0], [1], [0, 0, 1, 1], [], []>} : vector<8x8xf32>, vector<8x8xf32>, vector<8x8xf32> -> vector<8x8xf32>
    %76 = vector.extract_strided_slice %10 {offsets = [0, 24], sizes = [8, 8], strides = [1, 1]} : vector<8x32xf32> to vector<8x8xf32>
    %77 = vector.extract_strided_slice %11 {offsets = [0, 24], sizes = [8, 8], strides = [1, 1]} : vector<8x32xf32> to vector<8x8xf32>
    %78 = vector.extract_strided_slice %12 {offsets = [0, 24], sizes = [8, 8], strides = [1, 1]} : vector<8x32xf32> to vector<8x8xf32>
    %79 = tpu.transpose %77, [1, 0] : vector<8x8xf32> -> vector<8x8xf32>
    %cst_27 = arith.constant dense<0.000000e+00> : vector<8x8xf32>
    %80 = tpu.matmul %76, %79, %cst_27 {dimension_numbers = #tpu.dot_dimension_numbers<[1], [0], [0], [1], [0, 0, 1, 1], [], []>} : vector<8x8xf32>, vector<8x8xf32>, vector<8x8xf32> -> vector<8x8xf32>
    %cst_28 = arith.constant 0.353553385 : f32
    %81 = vector.broadcast %cst_28 : f32 to vector<8x8xf32>
    %82 = arith.mulf %80, %81 : vector<8x8xf32>
    %cst_29 = arith.constant -1.000000e+09 : f32
    %83 = vector.broadcast %cst_29 : f32 to vector<8x8xf32>
    %84 = arith.select %15, %82, %83 : vector<8x8xi1>, vector<8x8xf32>
    %cst_30 = arith.constant dense<0xFF800000> : vector<8xf32>
    %85 = vector.multi_reduction <maximumf>, %84, %cst_30 [1] : vector<8x8xf32> to vector<8xf32>
    %86 = vector.shape_cast %85 : vector<8xf32> to vector<8x1xf32>
    %87 = vector.broadcast %86 : vector<8x1xf32> to vector<8x8xf32>
    %88 = arith.subf %84, %87 : vector<8x8xf32>
    %89 = math.exp %88 : vector<8x8xf32>
    %cst_31 = arith.constant dense<0.000000e+00> : vector<8xf32>
    %90 = vector.multi_reduction <add>, %89, %cst_31 [1] : vector<8x8xf32> to vector<8xf32>
    %91 = vector.shape_cast %90 : vector<8xf32> to vector<8x1xf32>
    %92 = tpu.reciprocal %91 {approx = true} : vector<8x1xf32> -> vector<8x1xf32>
    %93 = vector.broadcast %92 : vector<8x1xf32> to vector<8x8xf32>
    %94 = arith.mulf %89, %93 : vector<8x8xf32>
    %cst_32 = arith.constant dense<0.000000e+00> : vector<8x8xf32>
    %95 = tpu.matmul %94, %78, %cst_32 {dimension_numbers = #tpu.dot_dimension_numbers<[1], [0], [0], [1], [0, 0, 1, 1], [], []>} : vector<8x8xf32>, vector<8x8xf32>, vector<8x8xf32> -> vector<8x8xf32>
    %96 = tpu.concatenate %35, %55, %75, %95 in 1 : vector<8x8xf32>, vector<8x8xf32>, vector<8x8xf32>, vector<8x8xf32> -> vector<8x32xf32>
    %97 = arith.truncf %96 : vector<8x32xf32> to vector<8x32xbf16>
    %c0_33 = arith.constant 0 : index
    %c0_34 = arith.constant 0 : index
    %98 = vector.load %arg5[%c0_33, %c0_34] : memref<32x32xbf16, #tpu.memory_space<vmem>>, vector<32x32xbf16>
    %cst_35 = arith.constant dense<0.000000e+00> : vector<8x32xf32>
    %99 = tpu.matmul %97, %98, %cst_35 {dimension_numbers = #tpu.dot_dimension_numbers<[1], [0], [0], [1], [0, 0, 1, 1], [], []>} : vector<8x32xbf16>, vector<32x32xbf16>, vector<8x32xf32> -> vector<8x32xf32>
    %c0_36 = arith.constant 0 : index
    %c0_37 = arith.constant 0 : index
    %100 = vector.load %arg6[%c0_36, %c0_37] : memref<1x32xf32, #tpu.memory_space<vmem>>, vector<1x32xf32>
    %101 = vector.broadcast %100 : vector<1x32xf32> to vector<8x32xf32>
    %102 = arith.addf %99, %101 : vector<8x32xf32>
    %103 = arith.addf %1, %102 : vector<8x32xf32>
    %c0_38 = arith.constant 0 : index
    %c0_39 = arith.constant 0 : index
    %104 = vector.load %arg7[%c0_38, %c0_39] : memref<1x32xf32, #tpu.memory_space<vmem>>, vector<1x32xf32>
    %c0_40 = arith.constant 0 : index
    %c0_41 = arith.constant 0 : index
    %105 = vector.load %arg8[%c0_40, %c0_41] : memref<1x32xf32, #tpu.memory_space<vmem>>, vector<1x32xf32>
    %cst_42 = arith.constant dense<0.000000e+00> : vector<8xf32>
    %106 = vector.multi_reduction <add>, %103, %cst_42 [1] : vector<8x32xf32> to vector<8xf32>
    %107 = vector.shape_cast %106 : vector<8xf32> to vector<8x1xf32>
    %cst_43 = arith.constant 3.200000e+01 : f32
    %108 = vector.broadcast %cst_43 : f32 to vector<8x1xf32>
    %109 = arith.divf %107, %108 : vector<8x1xf32>
    %110 = vector.broadcast %109 : vector<8x1xf32> to vector<8x32xf32>
    %111 = arith.subf %103, %110 : vector<8x32xf32>
    %112 = arith.mulf %111, %111 : vector<8x32xf32>
    %cst_44 = arith.constant dense<0.000000e+00> : vector<8xf32>
    %113 = vector.multi_reduction <add>, %112, %cst_44 [1] : vector<8x32xf32> to vector<8xf32>
    %114 = vector.shape_cast %113 : vector<8xf32> to vector<8x1xf32>
    %cst_45 = arith.constant 3.200000e+01 : f32
    %115 = vector.broadcast %cst_45 : f32 to vector<8x1xf32>
    %116 = arith.divf %114, %115 : vector<8x1xf32>
    %cst_46 = arith.constant 9.99999974E-6 : f32
    %117 = vector.broadcast %cst_46 : f32 to vector<8x1xf32>
    %118 = arith.addf %116, %117 : vector<8x1xf32>
    %119 = math.rsqrt %118 : vector<8x1xf32>
    %120 = vector.broadcast %119 : vector<8x1xf32> to vector<8x32xf32>
    %121 = arith.mulf %111, %120 : vector<8x32xf32>
    %122 = vector.broadcast %104 : vector<1x32xf32> to vector<8x32xf32>
    %123 = arith.mulf %121, %122 : vector<8x32xf32>
    %124 = vector.broadcast %105 : vector<1x32xf32> to vector<8x32xf32>
    %125 = arith.addf %123, %124 : vector<8x32xf32>
    %126 = arith.truncf %125 : vector<8x32xf32> to vector<8x32xbf16>
    %c0_47 = arith.constant 0 : index
    %c0_48 = arith.constant 0 : index
    %127 = vector.load %arg9[%c0_47, %c0_48] : memref<32x32xbf16, #tpu.memory_space<vmem>>, vector<32x32xbf16>
    %cst_49 = arith.constant dense<0.000000e+00> : vector<8x32xf32>
    %128 = tpu.matmul %126, %127, %cst_49 {dimension_numbers = #tpu.dot_dimension_numbers<[1], [0], [0], [1], [0, 0, 1, 1], [], []>} : vector<8x32xbf16>, vector<32x32xbf16>, vector<8x32xf32> -> vector<8x32xf32>
    %c0_50 = arith.constant 0 : index
    %c0_51 = arith.constant 0 : index
    %129 = vector.load %arg10[%c0_50, %c0_51] : memref<1x32xf32, #tpu.memory_space<vmem>>, vector<1x32xf32>
    %130 = vector.broadcast %129 : vector<1x32xf32> to vector<8x32xf32>
    %131 = arith.addf %128, %130 : vector<8x32xf32>
    %132 = arith.truncf %3 : vector<8x32xf32> to vector<8x32xbf16>
    %c0_52 = arith.constant 0 : index
    %c0_53 = arith.constant 0 : index
    %133 = vector.load %arg11[%c0_52, %c0_53] : memref<32x64xbf16, #tpu.memory_space<vmem>>, vector<32x64xbf16>
    %cst_54 = arith.constant dense<0.000000e+00> : vector<8x64xf32>
    %134 = tpu.matmul %132, %133, %cst_54 {dimension_numbers = #tpu.dot_dimension_numbers<[1], [0], [0], [1], [0, 0, 1, 1], [], []>} : vector<8x32xbf16>, vector<32x64xbf16>, vector<8x64xf32> -> vector<8x64xf32>
    %c0_55 = arith.constant 0 : index
    %c0_56 = arith.constant 0 : index
    %135 = vector.load %arg12[%c0_55, %c0_56] : memref<1x64xf32, #tpu.memory_space<vmem>>, vector<1x64xf32>
    %136 = vector.broadcast %135 : vector<1x64xf32> to vector<8x64xf32>
    %137 = arith.addf %134, %136 : vector<8x64xf32>
    %138 = vector.extract_strided_slice %137 {offsets = [0, 0], sizes = [8, 32], strides = [1, 1]} : vector<8x64xf32> to vector<8x32xf32>
    %139 = vector.extract_strided_slice %137 {offsets = [0, 32], sizes = [8, 32], strides = [1, 1]} : vector<8x64xf32> to vector<8x32xf32>
    %140 = vector.extract_strided_slice %131 {offsets = [0, 0], sizes = [8, 8], strides = [1, 1]} : vector<8x32xf32> to vector<8x8xf32>
    %141 = vector.extract_strided_slice %138 {offsets = [0, 0], sizes = [8, 8], strides = [1, 1]} : vector<8x32xf32> to vector<8x8xf32>
    %142 = vector.extract_strided_slice %139 {offsets = [0, 0], sizes = [8, 8], strides = [1, 1]} : vector<8x32xf32> to vector<8x8xf32>
    %143 = tpu.transpose %141, [1, 0] : vector<8x8xf32> -> vector<8x8xf32>
    %cst_57 = arith.constant dense<0.000000e+00> : vector<8x8xf32>
    %144 = tpu.matmul %140, %143, %cst_57 {dimension_numbers = #tpu.dot_dimension_numbers<[1], [0], [0], [1], [0, 0, 1, 1], [], []>} : vector<8x8xf32>, vector<8x8xf32>, vector<8x8xf32> -> vector<8x8xf32>
    %cst_58 = arith.constant 0.353553385 : f32
    %145 = vector.broadcast %cst_58 : f32 to vector<8x8xf32>
    %146 = arith.mulf %144, %145 : vector<8x8xf32>
    %cst_59 = arith.constant dense<0xFF800000> : vector<8xf32>
    %147 = vector.multi_reduction <maximumf>, %146, %cst_59 [1] : vector<8x8xf32> to vector<8xf32>
    %148 = vector.shape_cast %147 : vector<8xf32> to vector<8x1xf32>
    %149 = vector.broadcast %148 : vector<8x1xf32> to vector<8x8xf32>
    %150 = arith.subf %146, %149 : vector<8x8xf32>
    %151 = math.exp %150 : vector<8x8xf32>
    %cst_60 = arith.constant dense<0.000000e+00> : vector<8xf32>
    %152 = vector.multi_reduction <add>, %151, %cst_60 [1] : vector<8x8xf32> to vector<8xf32>
    %153 = vector.shape_cast %152 : vector<8xf32> to vector<8x1xf32>
    %154 = tpu.reciprocal %153 {approx = true} : vector<8x1xf32> -> vector<8x1xf32>
    %155 = vector.broadcast %154 : vector<8x1xf32> to vector<8x8xf32>
    %156 = arith.mulf %151, %155 : vector<8x8xf32>
    %cst_61 = arith.constant dense<0.000000e+00> : vector<8x8xf32>
    %157 = tpu.matmul %156, %142, %cst_61 {dimension_numbers = #tpu.dot_dimension_numbers<[1], [0], [0], [1], [0, 0, 1, 1], [], []>} : vector<8x8xf32>, vector<8x8xf32>, vector<8x8xf32> -> vector<8x8xf32>
    %158 = vector.extract_strided_slice %131 {offsets = [0, 8], sizes = [8, 8], strides = [1, 1]} : vector<8x32xf32> to vector<8x8xf32>
    %159 = vector.extract_strided_slice %138 {offsets = [0, 8], sizes = [8, 8], strides = [1, 1]} : vector<8x32xf32> to vector<8x8xf32>
    %160 = vector.extract_strided_slice %139 {offsets = [0, 8], sizes = [8, 8], strides = [1, 1]} : vector<8x32xf32> to vector<8x8xf32>
    %161 = tpu.transpose %159, [1, 0] : vector<8x8xf32> -> vector<8x8xf32>
    %cst_62 = arith.constant dense<0.000000e+00> : vector<8x8xf32>
    %162 = tpu.matmul %158, %161, %cst_62 {dimension_numbers = #tpu.dot_dimension_numbers<[1], [0], [0], [1], [0, 0, 1, 1], [], []>} : vector<8x8xf32>, vector<8x8xf32>, vector<8x8xf32> -> vector<8x8xf32>
    %cst_63 = arith.constant 0.353553385 : f32
    %163 = vector.broadcast %cst_63 : f32 to vector<8x8xf32>
    %164 = arith.mulf %162, %163 : vector<8x8xf32>
    %cst_64 = arith.constant dense<0xFF800000> : vector<8xf32>
    %165 = vector.multi_reduction <maximumf>, %164, %cst_64 [1] : vector<8x8xf32> to vector<8xf32>
    %166 = vector.shape_cast %165 : vector<8xf32> to vector<8x1xf32>
    %167 = vector.broadcast %166 : vector<8x1xf32> to vector<8x8xf32>
    %168 = arith.subf %164, %167 : vector<8x8xf32>
    %169 = math.exp %168 : vector<8x8xf32>
    %cst_65 = arith.constant dense<0.000000e+00> : vector<8xf32>
    %170 = vector.multi_reduction <add>, %169, %cst_65 [1] : vector<8x8xf32> to vector<8xf32>
    %171 = vector.shape_cast %170 : vector<8xf32> to vector<8x1xf32>
    %172 = tpu.reciprocal %171 {approx = true} : vector<8x1xf32> -> vector<8x1xf32>
    %173 = vector.broadcast %172 : vector<8x1xf32> to vector<8x8xf32>
    %174 = arith.mulf %169, %173 : vector<8x8xf32>
    %cst_66 = arith.constant dense<0.000000e+00> : vector<8x8xf32>
    %175 = tpu.matmul %174, %160, %cst_66 {dimension_numbers = #tpu.dot_dimension_numbers<[1], [0], [0], [1], [0, 0, 1, 1], [], []>} : vector<8x8xf32>, vector<8x8xf32>, vector<8x8xf32> -> vector<8x8xf32>
    %176 = vector.extract_strided_slice %131 {offsets = [0, 16], sizes = [8, 8], strides = [1, 1]} : vector<8x32xf32> to vector<8x8xf32>
    %177 = vector.extract_strided_slice %138 {offsets = [0, 16], sizes = [8, 8], strides = [1, 1]} : vector<8x32xf32> to vector<8x8xf32>
    %178 = vector.extract_strided_slice %139 {offsets = [0, 16], sizes = [8, 8], strides = [1, 1]} : vector<8x32xf32> to vector<8x8xf32>
    %179 = tpu.transpose %177, [1, 0] : vector<8x8xf32> -> vector<8x8xf32>
    %cst_67 = arith.constant dense<0.000000e+00> : vector<8x8xf32>
    %180 = tpu.matmul %176, %179, %cst_67 {dimension_numbers = #tpu.dot_dimension_numbers<[1], [0], [0], [1], [0, 0, 1, 1], [], []>} : vector<8x8xf32>, vector<8x8xf32>, vector<8x8xf32> -> vector<8x8xf32>
    %cst_68 = arith.constant 0.353553385 : f32
    %181 = vector.broadcast %cst_68 : f32 to vector<8x8xf32>
    %182 = arith.mulf %180, %181 : vector<8x8xf32>
    %cst_69 = arith.constant dense<0xFF800000> : vector<8xf32>
    %183 = vector.multi_reduction <maximumf>, %182, %cst_69 [1] : vector<8x8xf32> to vector<8xf32>
    %184 = vector.shape_cast %183 : vector<8xf32> to vector<8x1xf32>
    %185 = vector.broadcast %184 : vector<8x1xf32> to vector<8x8xf32>
    %186 = arith.subf %182, %185 : vector<8x8xf32>
    %187 = math.exp %186 : vector<8x8xf32>
    %cst_70 = arith.constant dense<0.000000e+00> : vector<8xf32>
    %188 = vector.multi_reduction <add>, %187, %cst_70 [1] : vector<8x8xf32> to vector<8xf32>
    %189 = vector.shape_cast %188 : vector<8xf32> to vector<8x1xf32>
    %190 = tpu.reciprocal %189 {approx = true} : vector<8x1xf32> -> vector<8x1xf32>
    %191 = vector.broadcast %190 : vector<8x1xf32> to vector<8x8xf32>
    %192 = arith.mulf %187, %191 : vector<8x8xf32>
    %cst_71 = arith.constant dense<0.000000e+00> : vector<8x8xf32>
    %193 = tpu.matmul %192, %178, %cst_71 {dimension_numbers = #tpu.dot_dimension_numbers<[1], [0], [0], [1], [0, 0, 1, 1], [], []>} : vector<8x8xf32>, vector<8x8xf32>, vector<8x8xf32> -> vector<8x8xf32>
    %194 = vector.extract_strided_slice %131 {offsets = [0, 24], sizes = [8, 8], strides = [1, 1]} : vector<8x32xf32> to vector<8x8xf32>
    %195 = vector.extract_strided_slice %138 {offsets = [0, 24], sizes = [8, 8], strides = [1, 1]} : vector<8x32xf32> to vector<8x8xf32>
    %196 = vector.extract_strided_slice %139 {offsets = [0, 24], sizes = [8, 8], strides = [1, 1]} : vector<8x32xf32> to vector<8x8xf32>
    %197 = tpu.transpose %195, [1, 0] : vector<8x8xf32> -> vector<8x8xf32>
    %cst_72 = arith.constant dense<0.000000e+00> : vector<8x8xf32>
    %198 = tpu.matmul %194, %197, %cst_72 {dimension_numbers = #tpu.dot_dimension_numbers<[1], [0], [0], [1], [0, 0, 1, 1], [], []>} : vector<8x8xf32>, vector<8x8xf32>, vector<8x8xf32> -> vector<8x8xf32>
    %cst_73 = arith.constant 0.353553385 : f32
    %199 = vector.broadcast %cst_73 : f32 to vector<8x8xf32>
    %200 = arith.mulf %198, %199 : vector<8x8xf32>
    %cst_74 = arith.constant dense<0xFF800000> : vector<8xf32>
    %201 = vector.multi_reduction <maximumf>, %200, %cst_74 [1] : vector<8x8xf32> to vector<8xf32>
    %202 = vector.shape_cast %201 : vector<8xf32> to vector<8x1xf32>
    %203 = vector.broadcast %202 : vector<8x1xf32> to vector<8x8xf32>
    %204 = arith.subf %200, %203 : vector<8x8xf32>
    %205 = math.exp %204 : vector<8x8xf32>
    %cst_75 = arith.constant dense<0.000000e+00> : vector<8xf32>
    %206 = vector.multi_reduction <add>, %205, %cst_75 [1] : vector<8x8xf32> to vector<8xf32>
    %207 = vector.shape_cast %206 : vector<8xf32> to vector<8x1xf32>
    %208 = tpu.reciprocal %207 {approx = true} : vector<8x1xf32> -> vector<8x1xf32>
    %209 = vector.broadcast %208 : vector<8x1xf32> to vector<8x8xf32>
    %210 = arith.mulf %205, %209 : vector<8x8xf32>
    %cst_76 = arith.constant dense<0.000000e+00> : vector<8x8xf32>
    %211 = tpu.matmul %210, %196, %cst_76 {dimension_numbers = #tpu.dot_dimension_numbers<[1], [0], [0], [1], [0, 0, 1, 1], [], []>} : vector<8x8xf32>, vector<8x8xf32>, vector<8x8xf32> -> vector<8x8xf32>
    %212 = tpu.concatenate %157, %175, %193, %211 in 1 : vector<8x8xf32>, vector<8x8xf32>, vector<8x8xf32>, vector<8x8xf32> -> vector<8x32xf32>
    %213 = arith.truncf %212 : vector<8x32xf32> to vector<8x32xbf16>
    %c0_77 = arith.constant 0 : index
    %c0_78 = arith.constant 0 : index
    %214 = vector.load %arg13[%c0_77, %c0_78] : memref<32x32xbf16, #tpu.memory_space<vmem>>, vector<32x32xbf16>
    %cst_79 = arith.constant dense<0.000000e+00> : vector<8x32xf32>
    %215 = tpu.matmul %213, %214, %cst_79 {dimension_numbers = #tpu.dot_dimension_numbers<[1], [0], [0], [1], [0, 0, 1, 1], [], []>} : vector<8x32xbf16>, vector<32x32xbf16>, vector<8x32xf32> -> vector<8x32xf32>
    %c0_80 = arith.constant 0 : index
    %c0_81 = arith.constant 0 : index
    %216 = vector.load %arg14[%c0_80, %c0_81] : memref<1x32xf32, #tpu.memory_space<vmem>>, vector<1x32xf32>
    %217 = vector.broadcast %216 : vector<1x32xf32> to vector<8x32xf32>
    %218 = arith.addf %215, %217 : vector<8x32xf32>
    %219 = arith.addf %218, %125 : vector<8x32xf32>
    %c0_82 = arith.constant 0 : index
    %c0_83 = arith.constant 0 : index
    %220 = vector.load %arg15[%c0_82, %c0_83] : memref<1x32xf32, #tpu.memory_space<vmem>>, vector<1x32xf32>
    %c0_84 = arith.constant 0 : index
    %c0_85 = arith.constant 0 : index
    %221 = vector.load %arg16[%c0_84, %c0_85] : memref<1x32xf32, #tpu.memory_space<vmem>>, vector<1x32xf32>
    %cst_86 = arith.constant dense<0.000000e+00> : vector<8xf32>
    %222 = vector.multi_reduction <add>, %219, %cst_86 [1] : vector<8x32xf32> to vector<8xf32>
    %223 = vector.shape_cast %222 : vector<8xf32> to vector<8x1xf32>
    %cst_87 = arith.constant 3.200000e+01 : f32
    %224 = vector.broadcast %cst_87 : f32 to vector<8x1xf32>
    %225 = arith.divf %223, %224 : vector<8x1xf32>
    %226 = vector.broadcast %225 : vector<8x1xf32> to vector<8x32xf32>
    %227 = arith.subf %219, %226 : vector<8x32xf32>
    %228 = arith.mulf %227, %227 : vector<8x32xf32>
    %cst_88 = arith.constant dense<0.000000e+00> : vector<8xf32>
    %229 = vector.multi_reduction <add>, %228, %cst_88 [1] : vector<8x32xf32> to vector<8xf32>
    %230 = vector.shape_cast %229 : vector<8xf32> to vector<8x1xf32>
    %cst_89 = arith.constant 3.200000e+01 : f32
    %231 = vector.broadcast %cst_89 : f32 to vector<8x1xf32>
    %232 = arith.divf %230, %231 : vector<8x1xf32>
    %cst_90 = arith.constant 9.99999974E-6 : f32
    %233 = vector.broadcast %cst_90 : f32 to vector<8x1xf32>
    %234 = arith.addf %232, %233 : vector<8x1xf32>
    %235 = math.rsqrt %234 : vector<8x1xf32>
    %236 = vector.broadcast %235 : vector<8x1xf32> to vector<8x32xf32>
    %237 = arith.mulf %227, %236 : vector<8x32xf32>
    %238 = vector.broadcast %220 : vector<1x32xf32> to vector<8x32xf32>
    %239 = arith.mulf %237, %238 : vector<8x32xf32>
    %240 = vector.broadcast %221 : vector<1x32xf32> to vector<8x32xf32>
    %241 = arith.addf %239, %240 : vector<8x32xf32>
    %242 = arith.truncf %241 : vector<8x32xf32> to vector<8x32xbf16>
    %c0_91 = arith.constant 0 : index
    %c0_92 = arith.constant 0 : index
    %243 = vector.load %arg17[%c0_91, %c0_92] : memref<32x128xbf16, #tpu.memory_space<vmem>>, vector<32x128xbf16>
    %cst_93 = arith.constant dense<0.000000e+00> : vector<8x128xf32>
    %244 = tpu.matmul %242, %243, %cst_93 {dimension_numbers = #tpu.dot_dimension_numbers<[1], [0], [0], [1], [0, 0, 1, 1], [], []>} : vector<8x32xbf16>, vector<32x128xbf16>, vector<8x128xf32> -> vector<8x128xf32>
    %c0_94 = arith.constant 0 : index
    %c0_95 = arith.constant 0 : index
    %245 = vector.load %arg18[%c0_94, %c0_95] : memref<1x128xf32, #tpu.memory_space<vmem>>, vector<1x128xf32>
    %246 = vector.broadcast %245 : vector<1x128xf32> to vector<8x128xf32>
    %247 = arith.addf %244, %246 : vector<8x128xf32>
    %cst_96 = arith.constant 0.000000e+00 : f32
    %248 = vector.broadcast %cst_96 : f32 to vector<8x128xf32>
    %249 = arith.maximumf %247, %248 : vector<8x128xf32>
    %250 = arith.truncf %249 : vector<8x128xf32> to vector<8x128xbf16>
    %c0_97 = arith.constant 0 : index
    %c0_98 = arith.constant 0 : index
    %251 = vector.load %arg19[%c0_97, %c0_98] : memref<128x32xbf16, #tpu.memory_space<vmem>>, vector<128x32xbf16>
    %cst_99 = arith.constant dense<0.000000e+00> : vector<8x32xf32>
    %252 = tpu.matmul %250, %251, %cst_99 {dimension_numbers = #tpu.dot_dimension_numbers<[1], [0], [0], [1], [0, 0, 1, 1], [], []>} : vector<8x128xbf16>, vector<128x32xbf16>, vector<8x32xf32> -> vector<8x32xf32>
    %c0_100 = arith.constant 0 : index
    %c0_101 = arith.constant 0 : index
    %253 = vector.load %arg20[%c0_100, %c0_101] : memref<1x32xf32, #tpu.memory_space<vmem>>, vector<1x32xf32>
    %254 = vector.broadcast %253 : vector<1x32xf32> to vector<8x32xf32>
    %255 = arith.addf %252, %254 : vector<8x32xf32>
    %256 = arith.addf %255, %241 : vector<8x32xf32>
    %c0_102 = arith.constant 0 : index
    %c0_103 = arith.constant 0 : index
    %257 = vector.load %arg21[%c0_102, %c0_103] : memref<1x32xf32, #tpu.memory_space<vmem>>, vector<1x32xf32>
    %c0_104 = arith.constant 0 : index
    %c0_105 = arith.constant 0 : index
    %258 = vector.load %arg22[%c0_104, %c0_105] : memref<1x32xf32, #tpu.memory_space<vmem>>, vector<1x32xf32>
    %cst_106 = arith.constant dense<0.000000e+00> : vector<8xf32>
    %259 = vector.multi_reduction <add>, %256, %cst_106 [1] : vector<8x32xf32> to vector<8xf32>
    %260 = vector.shape_cast %259 : vector<8xf32> to vector<8x1xf32>
    %cst_107 = arith.constant 3.200000e+01 : f32
    %261 = vector.broadcast %cst_107 : f32 to vector<8x1xf32>
    %262 = arith.divf %260, %261 : vector<8x1xf32>
    %263 = vector.broadcast %262 : vector<8x1xf32> to vector<8x32xf32>
    %264 = arith.subf %256, %263 : vector<8x32xf32>
    %265 = arith.mulf %264, %264 : vector<8x32xf32>
    %cst_108 = arith.constant dense<0.000000e+00> : vector<8xf32>
    %266 = vector.multi_reduction <add>, %265, %cst_108 [1] : vector<8x32xf32> to vector<8xf32>
    %267 = vector.shape_cast %266 : vector<8xf32> to vector<8x1xf32>
    %cst_109 = arith.constant 3.200000e+01 : f32
    %268 = vector.broadcast %cst_109 : f32 to vector<8x1xf32>
    %269 = arith.divf %267, %268 : vector<8x1xf32>
    %cst_110 = arith.constant 9.99999974E-6 : f32
    %270 = vector.broadcast %cst_110 : f32 to vector<8x1xf32>
    %271 = arith.addf %269, %270 : vector<8x1xf32>
    %272 = math.rsqrt %271 : vector<8x1xf32>
    %273 = vector.broadcast %272 : vector<8x1xf32> to vector<8x32xf32>
    %274 = arith.mulf %264, %273 : vector<8x32xf32>
    %275 = vector.broadcast %257 : vector<1x32xf32> to vector<8x32xf32>
    %276 = arith.mulf %274, %275 : vector<8x32xf32>
    %277 = vector.broadcast %258 : vector<1x32xf32> to vector<8x32xf32>
    %278 = arith.addf %276, %277 : vector<8x32xf32>
    %c0_111 = arith.constant 0 : index
    %c0_112 = arith.constant 0 : index
    %c0_113 = arith.constant 0 : index
    %279 = vector.load %arg23[%c0_111, %c0_112, %c0_113] : memref<1x8x32xf32, #tpu.memory_space<vmem>>, vector<1x8x32xf32>
    %280 = vector.shape_cast %279 : vector<1x8x32xf32> to vector<8x32xf32>
    %281 = vector.shape_cast %278 : vector<8x32xf32> to vector<1x8x32xf32>
    tpu.vector_store %arg23[%c0_111, %c0_112, %c0_113], %281 {strides = array<i32>} : memref<1x8x32xf32, #tpu.memory_space<vmem>>, vector<1x8x32xf32>,
    return
  }
  func.func @transform_0(%arg0: i32) -> (i32, i32, i32) {
    %c0_i32 = arith.constant 0 : i32
    %c0_i32_0 = arith.constant 0 : i32
    %c0_i32_1 = arith.constant 0 : i32
    return %arg0, %c0_i32, %c0_i32_0 : i32, i32, i32
  }
  func.func @transform_1(%arg0: i32) -> (i32, i32, i32) {
    %c0_i32 = arith.constant 0 : i32
    %c0_i32_0 = arith.constant 0 : i32
    %c0_i32_1 = arith.constant 0 : i32
    return %arg0, %c0_i32, %c0_i32_0 : i32, i32, i32
  }
  func.func @transform_2(%arg0: i32) -> (i32, i32) {
    %c0_i32 = arith.constant 0 : i32
    %c0_i32_0 = arith.constant 0 : i32
    %c0_i32_1 = arith.constant 0 : i32
    return %c0_i32, %c0_i32_0 : i32, i32
  }
  func.func @transform_3(%arg0: i32) -> (i32, i32) {
    %c0_i32 = arith.constant 0 : i32
    %c0_i32_0 = arith.constant 0 : i32
    %c0_i32_1 = arith.constant 0 : i32
    return %c0_i32, %c0_i32_0 : i32, i32
  }
  func.func @transform_4(%arg0: i32) -> (i32, i32) {
    %c0_i32 = arith.constant 0 : i32
    %c0_i32_0 = arith.constant 0 : i32
    %c0_i32_1 = arith.constant 0 : i32
    return %c0_i32, %c0_i32_0 : i32, i32
  }
  func.func @transform_5(%arg0: i32) -> (i32, i32) {
    %c0_i32 = arith.constant 0 : i32
    %c0_i32_0 = arith.constant 0 : i32
    %c0_i32_1 = arith.constant 0 : i32
    return %c0_i32, %c0_i32_0 : i32, i32
  }
  func.func @transform_6(%arg0: i32) -> (i32, i32) {
    %c0_i32 = arith.constant 0 : i32
    %c0_i32_0 = arith.constant 0 : i32
    %c0_i32_1 = arith.constant 0 : i32
    return %c0_i32, %c0_i32_0 : i32, i32
  }
  func.func @transform_7(%arg0: i32) -> (i32, i32) {
    %c0_i32 = arith.constant 0 : i32
    %c0_i32_0 = arith.constant 0 : i32
    %c0_i32_1 = arith.constant 0 : i32
    return %c0_i32, %c0_i32_0 : i32, i32
  }
  func.func @transform_8(%arg0: i32) -> (i32, i32) {
    %c0_i32 = arith.constant 0 : i32
    %c0_i32_0 = arith.constant 0 : i32
    %c0_i32_1 = arith.constant 0 : i32
    return %c0_i32, %c0_i32_0 : i32, i32
  }
  func.func @transform_9(%arg0: i32) -> (i32, i32) {
    %c0_i32 = arith.constant 0 : i32
    %c0_i32_0 = arith.constant 0 : i32
    %c0_i32_1 = arith.constant 0 : i32
    return %c0_i32, %c0_i32_0 : i32, i32
  }
  func.func @transform_10(%arg0: i32) -> (i32, i32) {
    %c0_i32 = arith.constant 0 : i32
    %c0_i32_0 = arith.constant 0 : i32
    %c0_i32_1 = arith.constant 0 : i32
    return %c0_i32, %c0_i32_0 : i32, i32
  }
  func.func @transform_11(%arg0: i32) -> (i32, i32) {
    %c0_i32 = arith.constant 0 : i32
    %c0_i32_0 = arith.constant 0 : i32
    %c0_i32_1 = arith.constant 0 : i32
    return %c0_i32, %c0_i32_0 : i32, i32
  }
  func.func @transform_12(%arg0: i32) -> (i32, i32) {
    %c0_i32 = arith.constant 0 : i32
    %c0_i32_0 = arith.constant 0 : i32
    %c0_i32_1 = arith.constant 0 : i32
    return %c0_i32, %c0_i32_0 : i32, i32
  }
  func.func @transform_13(%arg0: i32) -> (i32, i32) {
    %c0_i32 = arith.constant 0 : i32
    %c0_i32_0 = arith.constant 0 : i32
    %c0_i32_1 = arith.constant 0 : i32
    return %c0_i32, %c0_i32_0 : i32, i32
  }
  func.func @transform_14(%arg0: i32) -> (i32, i32) {
    %c0_i32 = arith.constant 0 : i32
    %c0_i32_0 = arith.constant 0 : i32
    %c0_i32_1 = arith.constant 0 : i32
    return %c0_i32, %c0_i32_0 : i32, i32
  }
  func.func @transform_15(%arg0: i32) -> (i32, i32) {
    %c0_i32 = arith.constant 0 : i32
    %c0_i32_0 = arith.constant 0 : i32
    %c0_i32_1 = arith.constant 0 : i32
    return %c0_i32, %c0_i32_0 : i32, i32
  }
  func.func @transform_16(%arg0: i32) -> (i32, i32) {
    %c0_i32 = arith.constant 0 : i32
    %c0_i32_0 = arith.constant 0 : i32
    %c0_i32_1 = arith.constant 0 : i32
    return %c0_i32, %c0_i32_0 : i32, i32
  }
  func.func @transform_17(%arg0: i32) -> (i32, i32) {
    %c0_i32 = arith.constant 0 : i32
    %c0_i32_0 = arith.constant 0 : i32
    %c0_i32_1 = arith.constant 0 : i32
    return %c0_i32, %c0_i32_0 : i32, i32
  }
  func.func @transform_18(%arg0: i32) -> (i32, i32) {
    %c0_i32 = arith.constant 0 : i32
    %c0_i32_0 = arith.constant 0 : i32
    %c0_i32_1 = arith.constant 0 : i32
    return %c0_i32, %c0_i32_0 : i32, i32
  }
  func.func @transform_19(%arg0: i32) -> (i32, i32) {
    %c0_i32 = arith.constant 0 : i32
    %c0_i32_0 = arith.constant 0 : i32
    %c0_i32_1 = arith.constant 0 : i32
    return %c0_i32, %c0_i32_0 : i32, i32
  }
  func.func @transform_20(%arg0: i32) -> (i32, i32) {
    %c0_i32 = arith.constant 0 : i32
    %c0_i32_0 = arith.constant 0 : i32
    %c0_i32_1 = arith.constant 0 : i32
    return %c0_i32, %c0_i32_0 : i32, i32
  }
  func.func @transform_21(%arg0: i32) -> (i32, i32) {
    %c0_i32 = arith.constant 0 : i32
    %c0_i32_0 = arith.constant 0 : i32
    %c0_i32_1 = arith.constant 0 : i32
    return %c0_i32, %c0_i32_0 : i32, i32
  }
  func.func @transform_22(%arg0: i32) -> (i32, i32, i32) {
    %c0_i32 = arith.constant 0 : i32
    %c0_i32_0 = arith.constant 0 : i32
    %c0_i32_1 = arith.constant 0 : i32
    return %arg0, %c0_i32, %c0_i32_0 : i32, i32, i32
  }
}

</mosaic_0001>

<llo_original>
// kernel: decoder_forward.5
$region0: #{decoder_forward.5}
  #allocation0 [shape = 'u32[]', space=smem, size = 0x4, offset = 0x4, fixed_abs, tag = 'smem constant byte address 0x4 - core index']
  #allocation1 [shape = 'u32[144,128]{1,0:T(1,128)}', space=vmem, size = 0x12000, scoped, tag = 'internal scratch']
  %s0 = inlined_call_operand.vmem [shape: f32[16,32], index: 0, kind: input, shape index: {}]
  %s1 = inlined_call_operand.vmem [shape: bf16[32,128], index: 1, kind: input, shape index: {}]
  %s2 = inlined_call_operand.vmem [shape: f32[1,128], index: 2, kind: input, shape index: {}]
  %s3 = inlined_call_operand.vmem [shape: f32[16,128], index: 3, kind: output, shape index: {}]
  %s4 = sld [smem:[#allocation0]]
  $region45: #{decoder_forward.5} parent=0
    _
  %s6 = ssub.s32 1, %s4
  %s7 = scalar_select 0, %s6, %s4
  loop: start=0, step=1, limit=4
  $region2: #{decoder_forward.5} parent=0 // loop_pre_header
    _
  $region3: #{decoder_forward.5} parent=0 // loop_header
    %s9 = sphi 0, %s13
    %p10 = scmp.ge.s32.totalorder %s9, 4
    %s19 = sphi 0, %s21
    %s22 = sphi 0, %s19
    %s23 = sphi 0, %s22
    %s39 = sphi 0, %s23
    %s43 = sphi 0, %s43
    %s45 = sphi 0, %s43
    %s46 = sphi 0, %s45
    %s60 = sphi 0, %s46
    %s64 = sphi 0, %s64
    %s66 = sphi 0, %s64
    %s67 = sphi 0, %s66
    %s81 = sphi 0, %s67
    %s87 = sphi 0, %s89
    %s90 = sphi 0, %s87
    %s91 = sphi 0, %s90
    %s107 = sphi 0, %s91
  $region4: #{decoder_forward.5} parent=0 // loop_header_branch
    %12 = sbr.rel (%p10) target = $region8
  $region5: #{decoder_forward.5} parent=0 // loop_body
    %s14 = ssub.s32 %s9, 1
    %s15 = ssub.s32 %s9, 2
    %s16 = sadd.s32 %s9, 1
    %s17 = ssub.s32 %s9, %s16
    %p18 = scmp.eq.s32.totalorder %s17, 0
    %s20 = sadd.s32 %s19, 1
    %s21 = scalar_select %p18, %s19, %s20
    %p24 = pneg %p18
    %p25 = scmp.eq.s32.totalorder %s9, 1
    %p26 = por %p24, %p25
    %p27 = scmp.ne.s32.totalorder %s19, %s22
    %p28 = scmp.eq.s32.totalorder %s9, 0
    %p29 = por %p27, %p28
    %p30 = scmp.ne.s32.totalorder %s19, %s22
    %p31 = scmp.eq.s32.totalorder %s14, 1
    %p32 = por %p30, %p31
    %p33 = scmp.ne.s32.totalorder %s22, %s23
    %p34 = scmp.eq.s32.totalorder %s14, 0
    %p35 = por %p33, %p34
    %p36 = scmp.ne.s32.totalorder %s22, %s23
    %p37 = scmp.eq.s32.totalorder %s15, 1
    %p38 = por %p36, %p37
    %p40 = scmp.ne.s32.totalorder %s23, %s39
    %p41 = scmp.eq.s32.totalorder %s15, 0
    %p42 = por %p40, %p41
    %s44 = sadd.s32 %s43, 1
    %p47 = scmp.eq.s32.totalorder %s9, 1
    %p48 = scmp.ne.s32.totalorder %s43, %s45
    %p49 = scmp.eq.s32.totalorder %s9, 0
    %p50 = por %p48, %p49
    %p51 = scmp.ne.s32.totalorder %s43, %s45
    %p52 = scmp.eq.s32.totalorder %s14, 1
    %p53 = por %p51, %p52
    %p54 = scmp.ne.s32.totalorder %s45, %s46
    %p55 = scmp.eq.s32.totalorder %s14, 0
    %p56 = por %p54, %p55
    %p57 = scmp.ne.s32.totalorder %s45, %s46
    %p58 = scmp.eq.s32.totalorder %s15, 1
    %p59 = por %p57, %p58
    %p61 = scmp.ne.s32.totalorder %s46, %s60
    %p62 = scmp.eq.s32.totalorder %s15, 0
    %p63 = por %p61, %p62
    %s65 = sadd.s32 %s64, 1
    %p68 = scmp.eq.s32.totalorder %s9, 1
    %p69 = scmp.ne.s32.totalorder %s64, %s66
    %p70 = scmp.eq.s32.totalorder %s9, 0
    %p71 = por %p69, %p70
    %p72 = scmp.ne.s32.totalorder %s64, %s66
    %p73 = scmp.eq.s32.totalorder %s14, 1
    %p74 = por %p72, %p73
    %p75 = scmp.ne.s32.totalorder %s66, %s67
    %p76 = scmp.eq.s32.totalorder %s14, 0
    %p77 = por %p75, %p76
    %p78 = scmp.ne.s32.totalorder %s66, %s67
    %p79 = scmp.eq.s32.totalorder %s15, 1
    %p80 = por %p78, %p79
    %p82 = scmp.ne.s32.totalorder %s67, %s81
    %p83 = scmp.eq.s32.totalorder %s15, 0
    %p84 = por %p82, %p83
    %s85 = ssub.s32 %s9, %s16
    %p86 = scmp.eq.s32.totalorder %s85, 0
    %s88 = sadd.s32 %s87, 1
    %s89 = scalar_select %p86, %s87, %s88
    %p92 = pneg %p86
    %p93 = scmp.eq.s32.totalorder %s9, 1
    %p94 = por %p92, %p93
    %p95 = scmp.ne.s32.totalorder %s87, %s90
    %p96 = scmp.eq.s32.totalorder %s9, 0
    %p97 = por %p95, %p96
    %p98 = scmp.ne.s32.totalorder %s87, %s90
    %p99 = scmp.eq.s32.totalorder %s14, 1
    %p100 = por %p98, %p99
    %p101 = scmp.ne.s32.totalorder %s90, %s91
    %p102 = scmp.eq.s32.totalorder %s14, 0
    %p103 = por %p101, %p102
    %p104 = scmp.ne.s32.totalorder %s90, %s91
    %p105 = scmp.eq.s32.totalorder %s15, 1
    %p106 = por %p104, %p105
    %p108 = scmp.ne.s32.totalorder %s91, %s107
    %p109 = scmp.eq.s32.totalorder %s15, 0
    %p110 = por %p108, %p109
    %p111 = scmp.le.s32.totalorder 1, %s9
    %p112 = scmp.lt.s32.totalorder %s9, 3
    %p113 = pnand %p111, %p112
    %p114 = pneg %p113
    // Predicated region
    $region9: #{decoder_forward.5} parent=5 // pred_check
      _
    $region10: #{decoder_forward.5} parent=5 // pred_check_branch
      %116 = sbr.rel (%p113) target = $region12
    $region11: #{decoder_forward.5} parent=5 // pred_region
      %s117 = ssub.s32 %s9, 1
      // Predicated region
      $region13: #{decoder_forward.5} parent=11 // pred_check
        %p118 = pneg %p56
      $region14: #{decoder_forward.5} parent=11 // pred_check_branch
        %120 = sbr.rel (%p118) target = $region16
      $region15: #{decoder_forward.5} parent=11 // pred_region
        _
      $region16: #{decoder_forward.5} parent=11 // pred_fallthru
        _
      // Predicated region
      $region17: #{decoder_forward.5} parent=11 // pred_check
        %p121 = pneg %p77
      $region18: #{decoder_forward.5} parent=11 // pred_check_branch
        %123 = sbr.rel (%p121) target = $region20
      $region19: #{decoder_forward.5} parent=11 // pred_region
        _
      $region20: #{decoder_forward.5} parent=11 // pred_fallthru
        _
    $region12: #{decoder_forward.5} parent=5 // pred_fallthru
      _
    %p124 = scmp.lt.s32.totalorder %s9, 2
    // Predicated region
    $region21: #{decoder_forward.5} parent=5 // pred_check
      %p125 = pneg %p124
    $region22: #{decoder_forward.5} parent=5 // pred_check_branch
      %127 = sbr.rel (%p125) target = $region24
    $region23: #{decoder_forward.5} parent=5 // pred_region
      // Predicated region
      $region25: #{decoder_forward.5} parent=23 // pred_check
        %p128 = pneg %p29
      $region26: #{decoder_forward.5} parent=23 // pred_check_branch
        %130 = sbr.rel (%p128) target = $region28
      $region27: #{decoder_forward.5} parent=23 // pred_region
        %p131 = scmp.lt.s32.totalorder %s9, 1
        %s132 = scalar_select %p131, %s9, 1
        %s133 = smul.addr %s132, 8
        %s134 = scalar_lea.vmem %s0, %s133
      $region28: #{decoder_forward.5} parent=23 // pred_fallthru
        _
    $region24: #{decoder_forward.5} parent=5 // pred_fallthru
      _
    %p135 = scmp.le.s32.totalorder 1, %s9
    %p136 = scmp.lt.s32.totalorder %s9, 3
    %p137 = pnand %p135, %p136
    %p138 = pneg %p137
    // Predicated region
    $region29: #{decoder_forward.5} parent=5 // pred_check
      _
    $region30: #{decoder_forward.5} parent=5 // pred_check_branch
      %140 = sbr.rel (%p137) target = $region32
    $region31: #{decoder_forward.5} parent=5 // pred_region
      %s141 = ssub.s32 %s9, 1
      %p142 = scmp.lt.s32.totalorder %s14, 1
      %s143 = scalar_select %p142, %s14, 1
      %s144 = smul.addr %s143, 8
      %s145 = scalar_lea.vmem %s0, %s144
      %p146 = pneg %p35
      %p147 = pneg %p32
      %p148 = pneg %p56
      %p149 = pneg %p53
      %p150 = pneg %p77
      %p151 = pneg %p74
      %p152 = pneg %p103
      %p153 = pneg %p100
      %p154 = scmp.lt.s32.totalorder %s14, 1
      %s155 = scalar_select %p154, %s14, 1
      %s156 = smul.addr %s155, 8
      %s157 = scalar_lea.vmem %s3, %s156
      %p158 = scmp.lt.s32.totalorder %s14, 1
      %s159 = scalar_select %p158, %s14, 1
      %s160 = smul.addr %s159, 8
      %s161 = scalar_lea.vmem %s0, %s160
      %p162 = scmp.lt.s32.totalorder %s14, 1
      %s163 = scalar_select %p162, %s14, 1
      %s164 = smul.addr %s163, 8
      %s165 = scalar_lea.vmem %s3, %s164
      %v167 = vld [vmem:[%s161] sm:$0xff]
      %v168 = vpack.c.bf16 %v167, %v167
      %v169 = vld [vmem:[%s1] sm:$0xf]
      %v170 = vld [vmem:[%s1 + $0x4] sm:$0xf]
      %v171 = vld [vmem:[%s1 + $0x8] sm:$0xf]
      %v172 = vld [vmem:[%s1 + $0xc] sm:$0xf]
      %v173 = vld [vmem:[%s2] sm:$0x1]
      %v175 = vlaneseq
      %v176 = vshrl.u32 %v175, 7
      %v177 = vsub.s32 0, %v176
      %v178 = vrot.slane %v173, %v177
      %v184 = vunpack.c.l.b16 %v169
      %v185 = vunpack.c.l.b16 %v170
      %v186 = vunpack.c.l.b16 %v171
      %v187 = vunpack.c.l.b16 %v172
      %v188 = vpack.c.b16 %v185, %v184
      %v189 = vpack.c.b16 %v187, %v186
      %vm192 = vcmask 261120
      %v194 = vsel %vm192, %v168, 0
      %196 = vmatprep.subr.bf16.mxu0 0
      %197 = vmatpush1.bf16.msra.mxu0 %v188
      %198 = vmatprep.subr.bf16.mxu0 0
      %199 = vmatpush1.bf16.msra.mxu0 %v189
      %200 = vmatprep.subr.bf16.mxu0 0
      %201 = vmatpush1.bf16.msra.mxu0 0
      %202 = vmatprep.subr.bf16.mxu0 0
      %203 = vmatpush1.bf16.msra.mxu0 0
      %204 = vmatprep.subr.bf16.mxu0 0
      %205 = vmatpush1.bf16.msra.mxu0 0
      %206 = vmatprep.subr.bf16.mxu0 0
      %207 = vmatpush1.bf16.msra.mxu0 0
      %208 = vmatprep.subr.bf16.mxu0 0
      %209 = vmatpush1.bf16.msra.mxu0 0
      %210 = vmatprep.subr.bf16.mxu0 0
      %211 = vmatpush1.bf16.msra.mxu0 0
      %212 = vmatprep.subr.bf16.mxu0 0
      %213 = vmatpush1.bf16.msra.mxu0 0
      %214 = vmatprep.subr.bf16.mxu0 0
      %215 = vmatpush1.bf16.msra.mxu0 0
      %216 = vmatprep.subr.bf16.mxu0 0
      %217 = vmatpush1.bf16.msra.mxu0 0
      %218 = vmatprep.subr.bf16.mxu0 0
      %219 = vmatpush1.bf16.msra.mxu0 0
      %220 = vmatprep.subr.bf16.mxu0 0
      %221 = vmatpush1.bf16.msra.mxu0 0
      %222 = vmatprep.subr.bf16.mxu0 0
      %223 = vmatpush1.bf16.msra.mxu0 0
      %224 = vmatprep.subr.bf16.mxu0 0
      %225 = vmatpush1.bf16.msra.mxu0 0
      %226 = vmatprep.subr.bf16.mxu0 0
      %227 = vmatpush1.bf16.msra.mxu0 0
      %228 = vmatprep.mubr.bf16.mxu0 0
      %229 = vmatmul.mubr.bf16.gmra.mrb[0].mxu0 %v194
      %v230 = vpop.f32.mrb[0].mxu0
      %v231 = vadd.f32 %v178, %v230
      %v232 = vpop.f32.mrb[0].mxu0
      %v233 = vpop.f32.mrb[0].mxu0
      %v234 = vpop.f32.mrb[0].mxu0
      %235 = vdwg.mxu0
      %236 = vst [vmem:[%s165] sm:$0xff] %v231
      %p237 = scmp.lt.s32.totalorder %s14, 1
      %s238 = scalar_select %p237, %s14, 1
      %s239 = smul.addr %s238, 8
      %s240 = scalar_lea.vmem %s3, %s239
      // Predicated region
      $region33: #{decoder_forward.5} parent=31 // pred_check
        %p241 = pneg %p100
      $region34: #{decoder_forward.5} parent=31 // pred_check_branch
        %243 = sbr.rel (%p241) target = $region36
      $region35: #{decoder_forward.5} parent=31 // pred_region
        _
      $region36: #{decoder_forward.5} parent=31 // pred_fallthru
        _
    $region32: #{decoder_forward.5} parent=5 // pred_fallthru
      _
    %p244 = scmp.le.s32.totalorder 2, %s9
    // Predicated region
    $region37: #{decoder_forward.5} parent=5 // pred_check
      %p245 = pneg %p244
    $region38: #{decoder_forward.5} parent=5 // pred_check_branch
      %247 = sbr.rel (%p245) target = $region40
    $region39: #{decoder_forward.5} parent=5 // pred_region
      %s248 = ssub.s32 %s9, 2
      // Predicated region
      $region41: #{decoder_forward.5} parent=39 // pred_check
        %p249 = pneg %p106
      $region42: #{decoder_forward.5} parent=39 // pred_check_branch
        %251 = sbr.rel (%p249) target = $region44
      $region43: #{decoder_forward.5} parent=39 // pred_region
        %p252 = scmp.lt.s32.totalorder %s15, 1
        %s253 = scalar_select %p252, %s15, 1
        %s254 = smul.addr %s253, 8
        %s255 = scalar_lea.vmem %s3, %s254
      $region44: #{decoder_forward.5} parent=39 // pred_fallthru
        _
    $region40: #{decoder_forward.5} parent=5 // pred_fallthru
      _
  $region6: #{decoder_forward.5} parent=0 // loop_footer
    %s13 = sadd.s32 1, %s9
  $region7: #{decoder_forward.5} parent=0 // loop_footer_branch
    %8 = sbr.rel target = $region3
  $region8: #{decoder_forward.5} parent=0 // loop_exit
    _

// kernel: decoder_forward.3
$region0: #{decoder_forward.3}
  #allocation0 [shape = 'u32[]', space=smem, size = 0x4, offset = 0x4, fixed_abs, tag = 'smem constant byte address 0x4 - core index']
  #allocation1 [shape = 'u32[144,128]{1,0:T(1,128)}', space=vmem, size = 0x12000, scoped, tag = 'internal scratch']
  %s0 = inlined_call_operand.vmem [shape: f32[2,8,32], index: 0, kind: input, shape index: {}]
  %s1 = inlined_call_operand.vmem [shape: f32[2,8,32], index: 1, kind: input, shape index: {}]
  %s2 = inlined_call_operand.vmem [shape: bf16[32,96], index: 2, kind: input, shape index: {}]
  %s3 = inlined_call_operand.vmem [shape: f32[1,96], index: 3, kind: input, shape index: {}]
  %s4 = inlined_call_operand.vmem [shape: bf16[32,32], index: 4, kind: input, shape index: {}]
  %s5 = inlined_call_operand.vmem [shape: f32[1,32], index: 5, kind: input, shape index: {}]
  %s6 = inlined_call_operand.vmem [shape: f32[1,32], index: 6, kind: input, shape index: {}]
  %s7 = inlined_call_operand.vmem [shape: f32[1,32], index: 7, kind: input, shape index: {}]
  %s8 = inlined_call_operand.vmem [shape: bf16[32,32], index: 8, kind: input, shape index: {}]
  %s9 = inlined_call_operand.vmem [shape: f32[1,32], index: 9, kind: input, shape index: {}]
  %s10 = inlined_call_operand.vmem [shape: bf16[32,64], index: 10, kind: input, shape index: {}]
  %s11 = inlined_call_operand.vmem [shape: f32[1,64], index: 11, kind: input, shape index: {}]
  %s12 = inlined_call_operand.vmem [shape: bf16[32,32], index: 12, kind: input, shape index: {}]
  %s13 = inlined_call_operand.vmem [shape: f32[1,32], index: 13, kind: input, shape index: {}]
  %s14 = inlined_call_operand.vmem [shape: f32[1,32], index: 14, kind: input, shape index: {}]
  %s15 = inlined_call_operand.vmem [shape: f32[1,32], index: 15, kind: input, shape index: {}]
  %s16 = inlined_call_operand.vmem [shape: bf16[32,128], index: 16, kind: input, shape index: {}]
  %s17 = inlined_call_operand.vmem [shape: f32[1,128], index: 17, kind: input, shape index: {}]
  %s18 = inlined_call_operand.vmem [shape: bf16[128,32], index: 18, kind: input, shape index: {}]
  %s19 = inlined_call_operand.vmem [shape: f32[1,32], index: 19, kind: input, shape index: {}]
  %s20 = inlined_call_operand.vmem [shape: f32[1,32], index: 20, kind: input, shape index: {}]
  %s21 = inlined_call_operand.vmem [shape: f32[1,32], index: 21, kind: input, shape index: {}]
  %s22 = inlined_call_operand.vmem [shape: f32[2,8,32], index: 22, kind: output, shape index: {}]
  %s23 = sld [smem:[#allocation0]]
  $region121: #{decoder_forward.3} parent=0
    _
  %s25 = ssub.s32 1, %s23
  %s26 = scalar_select 0, %s25, %s23
  loop: start=0, step=1, limit=4
  $region2: #{decoder_forward.3} parent=0 // loop_pre_header
    _
  $region3: #{decoder_forward.3} parent=0 // loop_header
    %s28 = sphi 0, %s32
    %p29 = scmp.ge.s32.totalorder %s28, 4
    %s38 = sphi 0, %s40
    %s41 = sphi 0, %s38
    %s42 = sphi 0, %s41
    %s58 = sphi 0, %s42
    %s64 = sphi 0, %s66
    %s67 = sphi 0, %s64
    %s68 = sphi 0, %s67
    %s84 = sphi 0, %s68
    %s88 = sphi 0, %s88
    %s90 = sphi 0, %s88
    %s91 = sphi 0, %s90
    %s105 = sphi 0, %s91
    %s109 = sphi 0, %s109
    %s111 = sphi 0, %s109
    %s112 = sphi 0, %s111
    %s126 = sphi 0, %s112
    %s130 = sphi 0, %s130
    %s132 = sphi 0, %s130
    %s133 = sphi 0, %s132
    %s147 = sphi 0, %s133
    %s151 = sphi 0, %s151
    %s153 = sphi 0, %s151
    %s154 = sphi 0, %s153
    %s168 = sphi 0, %s154
    %s172 = sphi 0, %s172
    %s174 = sphi 0, %s172
    %s175 = sphi 0, %s174
    %s189 = sphi 0, %s175
    %s193 = sphi 0, %s193
    %s195 = sphi 0, %s193
    %s196 = sphi 0, %s195
    %s210 = sphi 0, %s196
    %s214 = sphi 0, %s214
    %s216 = sphi 0, %s214
    %s217 = sphi 0, %s216
    %s231 = sphi 0, %s217
    %s235 = sphi 0, %s235
    %s237 = sphi 0, %s235
    %s238 = sphi 0, %s237
    %s252 = sphi 0, %s238
    %s256 = sphi 0, %s256
    %s258 = sphi 0, %s256
    %s259 = sphi 0, %s258
    %s273 = sphi 0, %s259
    %s277 = sphi 0, %s277
    %s279 = sphi 0, %s277
    %s280 = sphi 0, %s279
    %s294 = sphi 0, %s280
    %s298 = sphi 0, %s298
    %s300 = sphi 0, %s298
    %s301 = sphi 0, %s300
    %s315 = sphi 0, %s301
    %s319 = sphi 0, %s319
    %s321 = sphi 0, %s319
    %s322 = sphi 0, %s321
    %s336 = sphi 0, %s322
    %s340 = sphi 0, %s340
    %s342 = sphi 0, %s340
    %s343 = sphi 0, %s342
    %s357 = sphi 0, %s343
    %s361 = sphi 0, %s361
    %s363 = sphi 0, %s361
    %s364 = sphi 0, %s363
    %s378 = sphi 0, %s364
    %s382 = sphi 0, %s382
    %s384 = sphi 0, %s382
    %s385 = sphi 0, %s384
    %s399 = sphi 0, %s385
    %s403 = sphi 0, %s403
    %s405 = sphi 0, %s403
    %s406 = sphi 0, %s405
    %s420 = sphi 0, %s406
    %s424 = sphi 0, %s424
    %s426 = sphi 0, %s424
    %s427 = sphi 0, %s426
    %s441 = sphi 0, %s427
    %s445 = sphi 0, %s445
    %s447 = sphi 0, %s445
    %s448 = sphi 0, %s447
    %s462 = sphi 0, %s448
    %s466 = sphi 0, %s466
    %s468 = sphi 0, %s466
    %s469 = sphi 0, %s468
    %s483 = sphi 0, %s469
    %s487 = sphi 0, %s487
    %s489 = sphi 0, %s487
    %s490 = sphi 0, %s489
    %s504 = sphi 0, %s490
    %s510 = sphi 0, %s512
    %s513 = sphi 0, %s510
    %s514 = sphi 0, %s513
    %s530 = sphi 0, %s514
  $region4: #{decoder_forward.3} parent=0 // loop_header_branch
    %31 = sbr.rel (%p29) target = $region8
  $region5: #{decoder_forward.3} parent=0 // loop_body
    %s33 = ssub.s32 %s28, 1
    %s34 = ssub.s32 %s28, 2
    %s35 = sadd.s32 %s28, 1
    %s36 = ssub.s32 %s28, %s35
    %p37 = scmp.eq.s32.totalorder %s36, 0
    %s39 = sadd.s32 %s38, 1
    %s40 = scalar_select %p37, %s38, %s39
    %p43 = pneg %p37
    %p44 = scmp.eq.s32.totalorder %s28, 1
    %p45 = por %p43, %p44
    %p46 = scmp.ne.s32.totalorder %s38, %s41
    %p47 = scmp.eq.s32.totalorder %s28, 0
    %p48 = por %p46, %p47
    %p49 = scmp.ne.s32.totalorder %s38, %s41
    %p50 = scmp.eq.s32.totalorder %s33, 1
    %p51 = por %p49, %p50
    %p52 = scmp.ne.s32.totalorder %s41, %s42
    %p53 = scmp.eq.s32.totalorder %s33, 0
    %p54 = por %p52, %p53
    %p55 = scmp.ne.s32.totalorder %s41, %s42
    %p56 = scmp.eq.s32.totalorder %s34, 1
    %p57 = por %p55, %p56
    %p59 = scmp.ne.s32.totalorder %s42, %s58
    %p60 = scmp.eq.s32.totalorder %s34, 0
    %p61 = por %p59, %p60
    %s62 = ssub.s32 %s28, %s35
    %p63 = scmp.eq.s32.totalorder %s62, 0
    %s65 = sadd.s32 %s64, 1
    %s66 = scalar_select %p63, %s64, %s65
    %p69 = pneg %p63
    %p70 = scmp.eq.s32.totalorder %s28, 1
    %p71 = por %p69, %p70
    %p72 = scmp.ne.s32.totalorder %s64, %s67
    %p73 = scmp.eq.s32.totalorder %s28, 0
    %p74 = por %p72, %p73
    %p75 = scmp.ne.s32.totalorder %s64, %s67
    %p76 = scmp.eq.s32.totalorder %s33, 1
    %p77 = por %p75, %p76
    %p78 = scmp.ne.s32.totalorder %s67, %s68
    %p79 = scmp.eq.s32.totalorder %s33, 0
    %p80 = por %p78, %p79
    %p81 = scmp.ne.s32.totalorder %s67, %s68
    %p82 = scmp.eq.s32.totalorder %s34, 1
    %p83 = por %p81, %p82
    %p85 = scmp.ne.s32.totalorder %s68, %s84
    %p86 = scmp.eq.s32.totalorder %s34, 0
    %p87 = por %p85, %p86
    %s89 = sadd.s32 %s88, 1
    %p92 = scmp.eq.s32.totalorder %s28, 1
    %p93 = scmp.ne.s32.totalorder %s88, %s90
    %p94 = scmp.eq.s32.totalorder %s28, 0
    %p95 = por %p93, %p94
    %p96 = scmp.ne.s32.totalorder %s88, %s90
    %p97 = scmp.eq.s32.totalorder %s33, 1
    %p98 = por %p96, %p97
    %p99 = scmp.ne.s32.totalorder %s90, %s91
    %p100 = scmp.eq.s32.totalorder %s33, 0
    %p101 = por %p99, %p100
    %p102 = scmp.ne.s32.totalorder %s90, %s91
    %p103 = scmp.eq.s32.totalorder %s34, 1
    %p104 = por %p102, %p103
    %p106 = scmp.ne.s32.totalorder %s91, %s105
    %p107 = scmp.eq.s32.totalorder %s34, 0
    %p108 = por %p106, %p107
    %s110 = sadd.s32 %s109, 1
    %p113 = scmp.eq.s32.totalorder %s28, 1
    %p114 = scmp.ne.s32.totalorder %s109, %s111
    %p115 = scmp.eq.s32.totalorder %s28, 0
    %p116 = por %p114, %p115
    %p117 = scmp.ne.s32.totalorder %s109, %s111
    %p118 = scmp.eq.s32.totalorder %s33, 1
    %p119 = por %p117, %p118
    %p120 = scmp.ne.s32.totalorder %s111, %s112
    %p121 = scmp.eq.s32.totalorder %s33, 0
    %p122 = por %p120, %p121
    %p123 = scmp.ne.s32.totalorder %s111, %s112
    %p124 = scmp.eq.s32.totalorder %s34, 1
    %p125 = por %p123, %p124
    %p127 = scmp.ne.s32.totalorder %s112, %s126
    %p128 = scmp.eq.s32.totalorder %s34, 0
    %p129 = por %p127, %p128
    %s131 = sadd.s32 %s130, 1
    %p134 = scmp.eq.s32.totalorder %s28, 1
    %p135 = scmp.ne.s32.totalorder %s130, %s132
    %p136 = scmp.eq.s32.totalorder %s28, 0
    %p137 = por %p135, %p136
    %p138 = scmp.ne.s32.totalorder %s130, %s132
    %p139 = scmp.eq.s32.totalorder %s33, 1
    %p140 = por %p138, %p139
    %p141 = scmp.ne.s32.totalorder %s132, %s133
    %p142 = scmp.eq.s32.totalorder %s33, 0
    %p143 = por %p141, %p142
    %p144 = scmp.ne.s32.totalorder %s132, %s133
    %p145 = scmp.eq.s32.totalorder %s34, 1
    %p146 = por %p144, %p145
    %p148 = scmp.ne.s32.totalorder %s133, %s147
    %p149 = scmp.eq.s32.totalorder %s34, 0
    %p150 = por %p148, %p149
    %s152 = sadd.s32 %s151, 1
    %p155 = scmp.eq.s32.totalorder %s28, 1
    %p156 = scmp.ne.s32.totalorder %s151, %s153
    %p157 = scmp.eq.s32.totalorder %s28, 0
    %p158 = por %p156, %p157
    %p159 = scmp.ne.s32.totalorder %s151, %s153
    %p160 = scmp.eq.s32.totalorder %s33, 1
    %p161 = por %p159, %p160
    %p162 = scmp.ne.s32.totalorder %s153, %s154
    %p163 = scmp.eq.s32.totalorder %s33, 0
    %p164 = por %p162, %p163
    %p165 = scmp.ne.s32.totalorder %s153, %s154
    %p166 = scmp.eq.s32.totalorder %s34, 1
    %p167 = por %p165, %p166
    %p169 = scmp.ne.s32.totalorder %s154, %s168
    %p170 = scmp.eq.s32.totalorder %s34, 0
    %p171 = por %p169, %p170
    %s173 = sadd.s32 %s172, 1
    %p176 = scmp.eq.s32.totalorder %s28, 1
    %p177 = scmp.ne.s32.totalorder %s172, %s174
    %p178 = scmp.eq.s32.totalorder %s28, 0
    %p179 = por %p177, %p178
    %p180 = scmp.ne.s32.totalorder %s172, %s174
    %p181 = scmp.eq.s32.totalorder %s33, 1
    %p182 = por %p180, %p181
    %p183 = scmp.ne.s32.totalorder %s174, %s175
    %p184 = scmp.eq.s32.totalorder %s33, 0
    %p185 = por %p183, %p184
    %p186 = scmp.ne.s32.totalorder %s174, %s175
    %p187 = scmp.eq.s32.totalorder %s34, 1
    %p188 = por %p186, %p187
    %p190 = scmp.ne.s32.totalorder %s175, %s189
    %p191 = scmp.eq.s32.totalorder %s34, 0
    %p192 = por %p190, %p191
    %s194 = sadd.s32 %s193, 1
    %p197 = scmp.eq.s32.totalorder %s28, 1
    %p198 = scmp.ne.s32.totalorder %s193, %s195
    %p199 = scmp.eq.s32.totalorder %s28, 0
    %p200 = por %p198, %p199
    %p201 = scmp.ne.s32.totalorder %s193, %s195
    %p202 = scmp.eq.s32.totalorder %s33, 1
    %p203 = por %p201, %p202
    %p204 = scmp.ne.s32.totalorder %s195, %s196
    %p205 = scmp.eq.s32.totalorder %s33, 0
    %p206 = por %p204, %p205
    %p207 = scmp.ne.s32.totalorder %s195, %s196
    %p208 = scmp.eq.s32.totalorder %s34, 1
    %p209 = por %p207, %p208
    %p211 = scmp.ne.s32.totalorder %s196, %s210
    %p212 = scmp.eq.s32.totalorder %s34, 0
    %p213 = por %p211, %p212
    %s215 = sadd.s32 %s214, 1
    %p218 = scmp.eq.s32.totalorder %s28, 1
    %p219 = scmp.ne.s32.totalorder %s214, %s216
    %p220 = scmp.eq.s32.totalorder %s28, 0
    %p221 = por %p219, %p220
    %p222 = scmp.ne.s32.totalorder %s214, %s216
    %p223 = scmp.eq.s32.totalorder %s33, 1
    %p224 = por %p222, %p223
    %p225 = scmp.ne.s32.totalorder %s216, %s217
    %p226 = scmp.eq.s32.totalorder %s33, 0
    %p227 = por %p225, %p226
    %p228 = scmp.ne.s32.totalorder %s216, %s217
    %p229 = scmp.eq.s32.totalorder %s34, 1
    %p230 = por %p228, %p229
    %p232 = scmp.ne.s32.totalorder %s217, %s231
    %p233 = scmp.eq.s32.totalorder %s34, 0
    %p234 = por %p232, %p233
    %s236 = sadd.s32 %s235, 1
    %p239 = scmp.eq.s32.totalorder %s28, 1
    %p240 = scmp.ne.s32.totalorder %s235, %s237
    %p241 = scmp.eq.s32.totalorder %s28, 0
    %p242 = por %p240, %p241
    %p243 = scmp.ne.s32.totalorder %s235, %s237
    %p244 = scmp.eq.s32.totalorder %s33, 1
    %p245 = por %p243, %p244
    %p246 = scmp.ne.s32.totalorder %s237, %s238
    %p247 = scmp.eq.s32.totalorder %s33, 0
    %p248 = por %p246, %p247
    %p249 = scmp.ne.s32.totalorder %s237, %s238
    %p250 = scmp.eq.s32.totalorder %s34, 1
    %p251 = por %p249, %p250
    %p253 = scmp.ne.s32.totalorder %s238, %s252
    %p254 = scmp.eq.s32.totalorder %s34, 0
    %p255 = por %p253, %p254
    %s257 = sadd.s32 %s256, 1
    %p260 = scmp.eq.s32.totalorder %s28, 1
    %p261 = scmp.ne.s32.totalorder %s256, %s258
    %p262 = scmp.eq.s32.totalorder %s28, 0
    %p263 = por %p261, %p262
    %p264 = scmp.ne.s32.totalorder %s256, %s258
    %p265 = scmp.eq.s32.totalorder %s33, 1
    %p266 = por %p264, %p265
    %p267 = scmp.ne.s32.totalorder %s258, %s259
    %p268 = scmp.eq.s32.totalorder %s33, 0
    %p269 = por %p267, %p268
    %p270 = scmp.ne.s32.totalorder %s258, %s259
    %p271 = scmp.eq.s32.totalorder %s34, 1
    %p272 = por %p270, %p271
    %p274 = scmp.ne.s32.totalorder %s259, %s273
    %p275 = scmp.eq.s32.totalorder %s34, 0
    %p276 = por %p274, %p275
    %s278 = sadd.s32 %s277, 1
    %p281 = scmp.eq.s32.totalorder %s28, 1
    %p282 = scmp.ne.s32.totalorder %s277, %s279
    %p283 = scmp.eq.s32.totalorder %s28, 0
    %p284 = por %p282, %p283
    %p285 = scmp.ne.s32.totalorder %s277, %s279
    %p286 = scmp.eq.s32.totalorder %s33, 1
    %p287 = por %p285, %p286
    %p288 = scmp.ne.s32.totalorder %s279, %s280
    %p289 = scmp.eq.s32.totalorder %s33, 0
    %p290 = por %p288, %p289
    %p291 = scmp.ne.s32.totalorder %s279, %s280
    %p292 = scmp.eq.s32.totalorder %s34, 1
    %p293 = por %p291, %p292
    %p295 = scmp.ne.s32.totalorder %s280, %s294
    %p296 = scmp.eq.s32.totalorder %s34, 0
    %p297 = por %p295, %p296
    %s299 = sadd.s32 %s298, 1
    %p302 = scmp.eq.s32.totalorder %s28, 1
    %p303 = scmp.ne.s32.totalorder %s298, %s300
    %p304 = scmp.eq.s32.totalorder %s28, 0
    %p305 = por %p303, %p304
    %p306 = scmp.ne.s32.totalorder %s298, %s300
    %p307 = scmp.eq.s32.totalorder %s33, 1
    %p308 = por %p306, %p307
    %p309 = scmp.ne.s32.totalorder %s300, %s301
    %p310 = scmp.eq.s32.totalorder %s33, 0
    %p311 = por %p309, %p310
    %p312 = scmp.ne.s32.totalorder %s300, %s301
    %p313 = scmp.eq.s32.totalorder %s34, 1
    %p314 = por %p312, %p313
    %p316 = scmp.ne.s32.totalorder %s301, %s315
    %p317 = scmp.eq.s32.totalorder %s34, 0
    %p318 = por %p316, %p317
    %s320 = sadd.s32 %s319, 1
    %p323 = scmp.eq.s32.totalorder %s28, 1
    %p324 = scmp.ne.s32.totalorder %s319, %s321
    %p325 = scmp.eq.s32.totalorder %s28, 0
    %p326 = por %p324, %p325
    %p327 = scmp.ne.s32.totalorder %s319, %s321
    %p328 = scmp.eq.s32.totalorder %s33, 1
    %p329 = por %p327, %p328
    %p330 = scmp.ne.s32.totalorder %s321, %s322
    %p331 = scmp.eq.s32.totalorder %s33, 0
    %p332 = por %p330, %p331
    %p333 = scmp.ne.s32.totalorder %s321, %s322
    %p334 = scmp.eq.s32.totalorder %s34, 1
    %p335 = por %p333, %p334
    %p337 = scmp.ne.s32.totalorder %s322, %s336
    %p338 = scmp.eq.s32.totalorder %s34, 0
    %p339 = por %p337, %p338
    %s341 = sadd.s32 %s340, 1
    %p344 = scmp.eq.s32.totalorder %s28, 1
    %p345 = scmp.ne.s32.totalorder %s340, %s342
    %p346 = scmp.eq.s32.totalorder %s28, 0
    %p347 = por %p345, %p346
    %p348 = scmp.ne.s32.totalorder %s340, %s342
    %p349 = scmp.eq.s32.totalorder %s33, 1
    %p350 = por %p348, %p349
    %p351 = scmp.ne.s32.totalorder %s342, %s343
    %p352 = scmp.eq.s32.totalorder %s33, 0
    %p353 = por %p351, %p352
    %p354 = scmp.ne.s32.totalorder %s342, %s343
    %p355 = scmp.eq.s32.totalorder %s34, 1
    %p356 = por %p354, %p355
    %p358 = scmp.ne.s32.totalorder %s343, %s357
    %p359 = scmp.eq.s32.totalorder %s34, 0
    %p360 = por %p358, %p359
    %s362 = sadd.s32 %s361, 1
    %p365 = scmp.eq.s32.totalorder %s28, 1
    %p366 = scmp.ne.s32.totalorder %s361, %s363
    %p367 = scmp.eq.s32.totalorder %s28, 0
    %p368 = por %p366, %p367
    %p369 = scmp.ne.s32.totalorder %s361, %s363
    %p370 = scmp.eq.s32.totalorder %s33, 1
    %p371 = por %p369, %p370
    %p372 = scmp.ne.s32.totalorder %s363, %s364
    %p373 = scmp.eq.s32.totalorder %s33, 0
    %p374 = por %p372, %p373
    %p375 = scmp.ne.s32.totalorder %s363, %s364
    %p376 = scmp.eq.s32.totalorder %s34, 1
    %p377 = por %p375, %p376
    %p379 = scmp.ne.s32.totalorder %s364, %s378
    %p380 = scmp.eq.s32.totalorder %s34, 0
    %p381 = por %p379, %p380
    %s383 = sadd.s32 %s382, 1
    %p386 = scmp.eq.s32.totalorder %s28, 1
    %p387 = scmp.ne.s32.totalorder %s382, %s384
    %p388 = scmp.eq.s32.totalorder %s28, 0
    %p389 = por %p387, %p388
    %p390 = scmp.ne.s32.totalorder %s382, %s384
    %p391 = scmp.eq.s32.totalorder %s33, 1
    %p392 = por %p390, %p391
    %p393 = scmp.ne.s32.totalorder %s384, %s385
    %p394 = scmp.eq.s32.totalorder %s33, 0
    %p395 = por %p393, %p394
    %p396 = scmp.ne.s32.totalorder %s384, %s385
    %p397 = scmp.eq.s32.totalorder %s34, 1
    %p398 = por %p396, %p397
    %p400 = scmp.ne.s32.totalorder %s385, %s399
    %p401 = scmp.eq.s32.totalorder %s34, 0
    %p402 = por %p400, %p401
    %s404 = sadd.s32 %s403, 1
    %p407 = scmp.eq.s32.totalorder %s28, 1
    %p408 = scmp.ne.s32.totalorder %s403, %s405
    %p409 = scmp.eq.s32.totalorder %s28, 0
    %p410 = por %p408, %p409
    %p411 = scmp.ne.s32.totalorder %s403, %s405
    %p412 = scmp.eq.s32.totalorder %s33, 1
    %p413 = por %p411, %p412
    %p414 = scmp.ne.s32.totalorder %s405, %s406
    %p415 = scmp.eq.s32.totalorder %s33, 0
    %p416 = por %p414, %p415
    %p417 = scmp.ne.s32.totalorder %s405, %s406
    %p418 = scmp.eq.s32.totalorder %s34, 1
    %p419 = por %p417, %p418
    %p421 = scmp.ne.s32.totalorder %s406, %s420
    %p422 = scmp.eq.s32.totalorder %s34, 0
    %p423 = por %p421, %p422
    %s425 = sadd.s32 %s424, 1
    %p428 = scmp.eq.s32.totalorder %s28, 1
    %p429 = scmp.ne.s32.totalorder %s424, %s426
    %p430 = scmp.eq.s32.totalorder %s28, 0
    %p431 = por %p429, %p430
    %p432 = scmp.ne.s32.totalorder %s424, %s426
    %p433 = scmp.eq.s32.totalorder %s33, 1
    %p434 = por %p432, %p433
    %p435 = scmp.ne.s32.totalorder %s426, %s427
    %p436 = scmp.eq.s32.totalorder %s33, 0
    %p437 = por %p435, %p436
    %p438 = scmp.ne.s32.totalorder %s426, %s427
    %p439 = scmp.eq.s32.totalorder %s34, 1
    %p440 = por %p438, %p439
    %p442 = scmp.ne.s32.totalorder %s427, %s441
    %p443 = scmp.eq.s32.totalorder %s34, 0
    %p444 = por %p442, %p443
    %s446 = sadd.s32 %s445, 1
    %p449 = scmp.eq.s32.totalorder %s28, 1
    %p450 = scmp.ne.s32.totalorder %s445, %s447
    %p451 = scmp.eq.s32.totalorder %s28, 0
    %p452 = por %p450, %p451
    %p453 = scmp.ne.s32.totalorder %s445, %s447
    %p454 = scmp.eq.s32.totalorder %s33, 1
    %p455 = por %p453, %p454
    %p456 = scmp.ne.s32.totalorder %s447, %s448
    %p457 = scmp.eq.s32.totalorder %s33, 0
    %p458 = por %p456, %p457
    %p459 = scmp.ne.s32.totalorder %s447, %s448
    %p460 = scmp.eq.s32.totalorder %s34, 1
    %p461 = por %p459, %p460
    %p463 = scmp.ne.s32.totalorder %s448, %s462
    %p464 = scmp.eq.s32.totalorder %s34, 0
    %p465 = por %p463, %p464
    %s467 = sadd.s32 %s466, 1
    %p470 = scmp.eq.s32.totalorder %s28, 1
    %p471 = scmp.ne.s32.totalorder %s466, %s468
    %p472 = scmp.eq.s32.totalorder %s28, 0
    %p473 = por %p471, %p472
    %p474 = scmp.ne.s32.totalorder %s466, %s468
    %p475 = scmp.eq.s32.totalorder %s33, 1
    %p476 = por %p474, %p475
    %p477 = scmp.ne.s32.totalorder %s468, %s469
    %p478 = scmp.eq.s32.totalorder %s33, 0
    %p479 = por %p477, %p478
    %p480 = scmp.ne.s32.totalorder %s468, %s469
    %p481 = scmp.eq.s32.totalorder %s34, 1
    %p482 = por %p480, %p481
    %p484 = scmp.ne.s32.totalorder %s469, %s483
    %p485 = scmp.eq.s32.totalorder %s34, 0
    %p486 = por %p484, %p485
    %s488 = sadd.s32 %s487, 1
    %p491 = scmp.eq.s32.totalorder %s28, 1
    %p492 = scmp.ne.s32.totalorder %s487, %s489
    %p493 = scmp.eq.s32.totalorder %s28, 0
    %p494 = por %p492, %p493
    %p495 = scmp.ne.s32.totalorder %s487, %s489
    %p496 = scmp.eq.s32.totalorder %s33, 1
    %p497 = por %p495, %p496
    %p498 = scmp.ne.s32.totalorder %s489, %s490
    %p499 = scmp.eq.s32.totalorder %s33, 0
    %p500 = por %p498, %p499
    %p501 = scmp.ne.s32.totalorder %s489, %s490
    %p502 = scmp.eq.s32.totalorder %s34, 1
    %p503 = por %p501, %p502
    %p505 = scmp.ne.s32.totalorder %s490, %s504
    %p506 = scmp.eq.s32.totalorder %s34, 0
    %p507 = por %p505, %p506
    %s508 = ssub.s32 %s28, %s35
    %p509 = scmp.eq.s32.totalorder %s508, 0
    %s511 = sadd.s32 %s510, 1
    %s512 = scalar_select %p509, %s510, %s511
    %p515 = pneg %p509
    %p516 = scmp.eq.s32.totalorder %s28, 1
    %p517 = por %p515, %p516
    %p518 = scmp.ne.s32.totalorder %s510, %s513
    %p519 = scmp.eq.s32.totalorder %s28, 0
    %p520 = por %p518, %p519
    %p521 = scmp.ne.s32.totalorder %s510, %s513
    %p522 = scmp.eq.s32.totalorder %s33, 1
    %p523 = por %p521, %p522
    %p524 = scmp.ne.s32.totalorder %s513, %s514
    %p525 = scmp.eq.s32.totalorder %s33, 0
    %p526 = por %p524, %p525
    %p527 = scmp.ne.s32.totalorder %s513, %s514
    %p528 = scmp.eq.s32.totalorder %s34, 1
    %p529 = por %p527, %p528
    %p531 = scmp.ne.s32.totalorder %s514, %s530
    %p532 = scmp.eq.s32.totalorder %s34, 0
    %p533 = por %p531, %p532
    %p534 = scmp.le.s32.totalorder 1, %s28
    %p535 = scmp.lt.s32.totalorder %s28, 3
    %p536 = pnand %p534, %p535
    %p537 = pneg %p536
    // Predicated region
    $region9: #{decoder_forward.3} parent=5 // pred_check
      _
    $region10: #{decoder_forward.3} parent=5 // pred_check_branch
      %539 = sbr.rel (%p536) target = $region12
    $region11: #{decoder_forward.3} parent=5 // pred_region
      %s540 = ssub.s32 %s28, 1
      // Predicated region
      $region13: #{decoder_forward.3} parent=11 // pred_check
        %p541 = pneg %p101
      $region14: #{decoder_forward.3} parent=11 // pred_check_branch
        %543 = sbr.rel (%p541) target = $region16
      $region15: #{decoder_forward.3} parent=11 // pred_region
        _
      $region16: #{decoder_forward.3} parent=11 // pred_fallthru
        _
      // Predicated region
      $region17: #{decoder_forward.3} parent=11 // pred_check
        %p544 = pneg %p122
      $region18: #{decoder_forward.3} parent=11 // pred_check_branch
        %546 = sbr.rel (%p544) target = $region20
      $region19: #{decoder_forward.3} parent=11 // pred_region
        _
      $region20: #{decoder_forward.3} parent=11 // pred_fallthru
        _
      // Predicated region
      $region21: #{decoder_forward.3} parent=11 // pred_check
        %p547 = pneg %p143
      $region22: #{decoder_forward.3} parent=11 // pred_check_branch
        %549 = sbr.rel (%p547) target = $region24
      $region23: #{decoder_forward.3} parent=11 // pred_region
        _
      $region24: #{decoder_forward.3} parent=11 // pred_fallthru
        _
      // Predicated region
      $region25: #{decoder_forward.3} parent=11 // pred_check
        %p550 = pneg %p164
      $region26: #{decoder_forward.3} parent=11 // pred_check_branch
        %552 = sbr.rel (%p550) target = $region28
      $region27: #{decoder_forward.3} parent=11 // pred_region
        _
      $region28: #{decoder_forward.3} parent=11 // pred_fallthru
        _
      // Predicated region
      $region29: #{decoder_forward.3} parent=11 // pred_check
        %p553 = pneg %p185
      $region30: #{decoder_forward.3} parent=11 // pred_check_branch
        %555 = sbr.rel (%p553) target = $region32
      $region31: #{decoder_forward.3} parent=11 // pred_region
        _
      $region32: #{decoder_forward.3} parent=11 // pred_fallthru
        _
      // Predicated region
      $region33: #{decoder_forward.3} parent=11 // pred_check
        %p556 = pneg %p206
      $region34: #{decoder_forward.3} parent=11 // pred_check_branch
        %558 = sbr.rel (%p556) target = $region36
      $region35: #{decoder_forward.3} parent=11 // pred_region
        _
      $region36: #{decoder_forward.3} parent=11 // pred_fallthru
        _
      // Predicated region
      $region37: #{decoder_forward.3} parent=11 // pred_check
        %p559 = pneg %p227
      $region38: #{decoder_forward.3} parent=11 // pred_check_branch
        %561 = sbr.rel (%p559) target = $region40
      $region39: #{decoder_forward.3} parent=11 // pred_region
        _
      $region40: #{decoder_forward.3} parent=11 // pred_fallthru
        _
      // Predicated region
      $region41: #{decoder_forward.3} parent=11 // pred_check
        %p562 = pneg %p248
      $region42: #{decoder_forward.3} parent=11 // pred_check_branch
        %564 = sbr.rel (%p562) target = $region44
      $region43: #{decoder_forward.3} parent=11 // pred_region
        _
      $region44: #{decoder_forward.3} parent=11 // pred_fallthru
        _
      // Predicated region
      $region45: #{decoder_forward.3} parent=11 // pred_check
        %p565 = pneg %p269
      $region46: #{decoder_forward.3} parent=11 // pred_check_branch
        %567 = sbr.rel (%p565) target = $region48
      $region47: #{decoder_forward.3} parent=11 // pred_region
        _
      $region48: #{decoder_forward.3} parent=11 // pred_fallthru
        _
      // Predicated region
      $region49: #{decoder_forward.3} parent=11 // pred_check
        %p568 = pneg %p290
      $region50: #{decoder_forward.3} parent=11 // pred_check_branch
        %570 = sbr.rel (%p568) target = $region52
      $region51: #{decoder_forward.3} parent=11 // pred_region
        _
      $region52: #{decoder_forward.3} parent=11 // pred_fallthru
        _
      // Predicated region
      $region53: #{decoder_forward.3} parent=11 // pred_check
        %p571 = pneg %p311
      $region54: #{decoder_forward.3} parent=11 // pred_check_branch
        %573 = sbr.rel (%p571) target = $region56
      $region55: #{decoder_forward.3} parent=11 // pred_region
        _
      $region56: #{decoder_forward.3} parent=11 // pred_fallthru
        _
      // Predicated region
      $region57: #{decoder_forward.3} parent=11 // pred_check
        %p574 = pneg %p332
      $region58: #{decoder_forward.3} parent=11 // pred_check_branch
        %576 = sbr.rel (%p574) target = $region60
      $region59: #{decoder_forward.3} parent=11 // pred_region
        _
      $region60: #{decoder_forward.3} parent=11 // pred_fallthru
        _
      // Predicated region
      $region61: #{decoder_forward.3} parent=11 // pred_check
        %p577 = pneg %p353
      $region62: #{decoder_forward.3} parent=11 // pred_check_branch
        %579 = sbr.rel (%p577) target = $region64
      $region63: #{decoder_forward.3} parent=11 // pred_region
        _
      $region64: #{decoder_forward.3} parent=11 // pred_fallthru
        _
      // Predicated region
      $region65: #{decoder_forward.3} parent=11 // pred_check
        %p580 = pneg %p374
      $region66: #{decoder_forward.3} parent=11 // pred_check_branch
        %582 = sbr.rel (%p580) target = $region68
      $region67: #{decoder_forward.3} parent=11 // pred_region
        _
      $region68: #{decoder_forward.3} parent=11 // pred_fallthru
        _
      // Predicated region
      $region69: #{decoder_forward.3} parent=11 // pred_check
        %p583 = pneg %p395
      $region70: #{decoder_forward.3} parent=11 // pred_check_branch
        %585 = sbr.rel (%p583) target = $region72
      $region71: #{decoder_forward.3} parent=11 // pred_region
        _
      $region72: #{decoder_forward.3} parent=11 // pred_fallthru
        _
      // Predicated region
      $region73: #{decoder_forward.3} parent=11 // pred_check
        %p586 = pneg %p416
      $region74: #{decoder_forward.3} parent=11 // pred_check_branch
        %588 = sbr.rel (%p586) target = $region76
      $region75: #{decoder_forward.3} parent=11 // pred_region
        _
      $region76: #{decoder_forward.3} parent=11 // pred_fallthru
        _
      // Predicated region
      $region77: #{decoder_forward.3} parent=11 // pred_check
        %p589 = pneg %p437
      $region78: #{decoder_forward.3} parent=11 // pred_check_branch
        %591 = sbr.rel (%p589) target = $region80
      $region79: #{decoder_forward.3} parent=11 // pred_region
        _
      $region80: #{decoder_forward.3} parent=11 // pred_fallthru
        _
      // Predicated region
      $region81: #{decoder_forward.3} parent=11 // pred_check
        %p592 = pneg %p458
      $region82: #{decoder_forward.3} parent=11 // pred_check_branch
        %594 = sbr.rel (%p592) target = $region84
      $region83: #{decoder_forward.3} parent=11 // pred_region
        _
      $region84: #{decoder_forward.3} parent=11 // pred_fallthru
        _
      // Predicated region
      $region85: #{decoder_forward.3} parent=11 // pred_check
        %p595 = pneg %p479
      $region86: #{decoder_forward.3} parent=11 // pred_check_branch
        %597 = sbr.rel (%p595) target = $region88
      $region87: #{decoder_forward.3} parent=11 // pred_region
        _
      $region88: #{decoder_forward.3} parent=11 // pred_fallthru
        _
      // Predicated region
      $region89: #{decoder_forward.3} parent=11 // pred_check
        %p598 = pneg %p500
      $region90: #{decoder_forward.3} parent=11 // pred_check_branch
        %600 = sbr.rel (%p598) target = $region92
      $region91: #{decoder_forward.3} parent=11 // pred_region
        _
      $region92: #{decoder_forward.3} parent=11 // pred_fallthru
        _
    $region12: #{decoder_forward.3} parent=5 // pred_fallthru
      _
    %p601 = scmp.lt.s32.totalorder %s28, 2
    // Predicated region
    $region93: #{decoder_forward.3} parent=5 // pred_check
      %p602 = pneg %p601
    $region94: #{decoder_forward.3} parent=5 // pred_check_branch
      %604 = sbr.rel (%p602) target = $region96
    $region95: #{decoder_forward.3} parent=5 // pred_region
      // Predicated region
      $region97: #{decoder_forward.3} parent=95 // pred_check
        %p605 = pneg %p48
      $region98: #{decoder_forward.3} parent=95 // pred_check_branch
        %607 = sbr.rel (%p605) target = $region100
      $region99: #{decoder_forward.3} parent=95 // pred_region
        %p608 = scmp.lt.s32.totalorder %s28, 1
        %s609 = scalar_select %p608, %s28, 1
        %s610 = smul.addr %s609, 8
        %s611 = scalar_lea.vmem %s0, %s610
      $region100: #{decoder_forward.3} parent=95 // pred_fallthru
        _
      // Predicated region
      $region101: #{decoder_forward.3} parent=95 // pred_check
        %p612 = pneg %p74
      $region102: #{decoder_forward.3} parent=95 // pred_check_branch
        %614 = sbr.rel (%p612) target = $region104
      $region103: #{decoder_forward.3} parent=95 // pred_region
        %p615 = scmp.lt.s32.totalorder %s28, 1
        %s616 = scalar_select %p615, %s28, 1
        %s617 = smul.addr %s616, 8
        %s618 = scalar_lea.vmem %s1, %s617
      $region104: #{decoder_forward.3} parent=95 // pred_fallthru
        _
    $region96: #{decoder_forward.3} parent=5 // pred_fallthru
      _
    %p619 = scmp.le.s32.totalorder 1, %s28
    %p620 = scmp.lt.s32.totalorder %s28, 3
    %p621 = pnand %p619, %p620
    %p622 = pneg %p621
    // Predicated region
    $region105: #{decoder_forward.3} parent=5 // pred_check
      _
    $region106: #{decoder_forward.3} parent=5 // pred_check_branch
      %624 = sbr.rel (%p621) target = $region108
    $region107: #{decoder_forward.3} parent=5 // pred_region
      %s625 = ssub.s32 %s28, 1
      %p626 = scmp.lt.s32.totalorder %s33, 1
      %s627 = scalar_select %p626, %s33, 1
      %s628 = smul.addr %s627, 8
      %s629 = scalar_lea.vmem %s0, %s628
      %p630 = pneg %p54
      %p631 = pneg %p51
      %p632 = scmp.lt.s32.totalorder %s33, 1
      %s633 = scalar_select %p632, %s33, 1
      %s634 = smul.addr %s633, 8
      %s635 = scalar_lea.vmem %s1, %s634
      %p636 = pneg %p80
      %p637 = pneg %p77
      %p638 = pneg %p101
      %p639 = pneg %p98
      %p640 = pneg %p122
      %p641 = pneg %p119
      %p642 = pneg %p143
      %p643 = pneg %p140
      %p644 = pneg %p164
      %p645 = pneg %p161
      %p646 = pneg %p185
      %p647 = pneg %p182
      %p648 = pneg %p206
      %p649 = pneg %p203
      %p650 = pneg %p227
      %p651 = pneg %p224
      %p652 = pneg %p248
      %p653 = pneg %p245
      %p654 = pneg %p269
      %p655 = pneg %p266
      %p656 = pneg %p290
      %p657 = pneg %p287
      %p658 = pneg %p311
      %p659 = pneg %p308
      %p660 = pneg %p332
      %p661 = pneg %p329
      %p662 = pneg %p353
      %p663 = pneg %p350
      %p664 = pneg %p374
      %p665 = pneg %p371
      %p666 = pneg %p395
      %p667 = pneg %p392
      %p668 = pneg %p416
      %p669 = pneg %p413
      %p670 = pneg %p437
      %p671 = pneg %p434
      %p672 = pneg %p458
      %p673 = pneg %p455
      %p674 = pneg %p479
      %p675 = pneg %p476
      %p676 = pneg %p500
      %p677 = pneg %p497
      %p678 = pneg %p526
      %p679 = pneg %p523
      %p680 = scmp.lt.s32.totalorder %s33, 1
      %s681 = scalar_select %p680, %s33, 1
      %s682 = smul.addr %s681, 8
      %s683 = scalar_lea.vmem %s22, %s682
      %p684 = scmp.lt.s32.totalorder %s33, 1
      %s685 = scalar_select %p684, %s33, 1
      %s686 = smul.addr %s685, 8
      %s687 = scalar_lea.vmem %s0, %s686
      %p688 = scmp.lt.s32.totalorder %s33, 1
      %s689 = scalar_select %p688, %s33, 1
      %s690 = smul.addr %s689, 8
      %s691 = scalar_lea.vmem %s1, %s690
      %p692 = scmp.lt.s32.totalorder %s33, 1
      %s693 = scalar_select %p692, %s33, 1
      %s694 = smul.addr %s693, 8
      %s695 = scalar_lea.vmem %s22, %s694
      %v697 = vld [vmem:[%s687] sm:$0xff]
      %v698 = vld [vmem:[%s691] sm:$0xff]
      %v699 = vpack.c.bf16 %v697, %v697
      %v700 = vld [vmem:[%s2] sm:$0xf]
      %v701 = vld [vmem:[%s2 + $0x4] sm:$0xf]
      %v702 = vld [vmem:[%s2 + $0x8] sm:$0xf]
      %v703 = vld [vmem:[%s2 + $0xc] sm:$0xf]
      %v704 = vld [vmem:[%s3] sm:$0x1]
      %v706 = vlaneseq
      %v707 = vshrl.u32 %v706, 7
      %v708 = vsub.s32 0, %v707
      %v709 = vrot.slane %v704, %v708
      %v715 = vunpack.c.l.b16 %v700
      %v716 = vunpack.c.l.b16 %v701
      %v717 = vunpack.c.l.b16 %v702
      %v718 = vunpack.c.l.b16 %v703
      %v719 = vpack.c.b16 %v716, %v715
      %v720 = vpack.c.b16 %v718, %v717
      %vm723 = vcmask 261120
      %v725 = vsel %vm723, %v699, 0
      %727 = vmatprep.subr.bf16.mxu0 0
      %728 = vmatpush1.bf16.msra.mxu0 %v719
      %729 = vmatprep.subr.bf16.mxu0 0
      %730 = vmatpush1.bf16.msra.mxu0 %v720
      %731 = vmatprep.subr.bf16.mxu0 0
      %732 = vmatpush1.bf16.msra.mxu0 0
      %733 = vmatprep.subr.bf16.mxu0 0
      %734 = vmatpush1.bf16.msra.mxu0 0
      %735 = vmatprep.subr.bf16.mxu0 0
      %736 = vmatpush1.bf16.msra.mxu0 0
      %737 = vmatprep.subr.bf16.mxu0 0
      %738 = vmatpush1.bf16.msra.mxu0 0
      %739 = vmatprep.subr.bf16.mxu0 0
      %740 = vmatpush1.bf16.msra.mxu0 0
      %741 = vmatprep.subr.bf16.mxu0 0
      %742 = vmatpush1.bf16.msra.mxu0 0
      %743 = vmatprep.subr.bf16.mxu0 0
      %744 = vmatpush1.bf16.msra.mxu0 0
      %745 = vmatprep.subr.bf16.mxu0 0
      %746 = vmatpush1.bf16.msra.mxu0 0
      %747 = vmatprep.subr.bf16.mxu0 0
      %748 = vmatpush1.bf16.msra.mxu0 0
      %749 = vmatprep.subr.bf16.mxu0 0
      %750 = vmatpush1.bf16.msra.mxu0 0
      %751 = vmatprep.subr.bf16.mxu0 0
      %752 = vmatpush1.bf16.msra.mxu0 0
      %753 = vmatprep.subr.bf16.mxu0 0
      %754 = vmatpush1.bf16.msra.mxu0 0
      %755 = vmatprep.subr.bf16.mxu0 0
      %756 = vmatpush1.bf16.msra.mxu0 0
      %757 = vmatprep.subr.bf16.mxu0 0
      %758 = vmatpush1.bf16.msra.mxu0 0
      %759 = vmatprep.mubr.bf16.mxu0 0
      %760 = vmatmul.mubr.bf16.gmra.mrb[0].mxu0 %v725
      %v761 = vpop.f32.mrb[0].mxu0
      %v762 = vadd.f32 %v709, %v761
      %v763 = vpop.f32.mrb[0].mxu0
      %v764 = vpop.f32.mrb[0].mxu0
      %v765 = vpop.f32.mrb[0].mxu0
      %766 = vdwg.mxu0
      %v767 = vlaneseq
      %v768 = vshrl.u32 %v767, 7
      %v769 = vlaneseq
      %v770 = vand.u32 %v769, 127
      %vm771 = vcmp.ge.s32.totalorder %v768, %v770
      %773 = vrot.lane.b32.xlu0 %v762, 96
      %v774 = vpop.permute.xlu0 %773
      %vm775 = vcmask 64512
      %v776 = vsel %vm775, %v762, 0
      %v778 = vsel %vm775, %v774, 0
      %780 = vmatprep.subr.mxu0 0.0
      %781 = vmatpush1.xpose.msra.mxu0 %v778
      %782 = vmatprep.subr.mxu0 0.0
      %783 = vmatpush1.xpose.msra.mxu0 0.0
      %784 = vmatprep.subr.mxu0 0.0
      %785 = vmatpush1.xpose.msra.mxu0 0.0
      %786 = vmatprep.subr.mxu0 0.0
      %787 = vmatpush1.xpose.msra.mxu0 0.0
      %788 = vmatprep.subr.mxu0 0.0
      %789 = vmatpush1.xpose.msra.mxu0 0.0
      %790 = vmatprep.subr.mxu0 0.0
      %791 = vmatpush1.xpose.msra.mxu0 0.0
      %792 = vmatprep.subr.mxu0 0.0
      %793 = vmatpush1.xpose.msra.mxu0 0.0
      %794 = vmatprep.subr.mxu0 0.0
      %795 = vmatpush1.xpose.msra.mxu0 0.0
      %796 = vmatprep.subr.mxu0 0.0
      %797 = vmatpush1.xpose.msra.mxu0 0.0
      %798 = vmatprep.subr.mxu0 0.0
      %799 = vmatpush1.xpose.msra.mxu0 0.0
      %800 = vmatprep.subr.mxu0 0.0
      %801 = vmatpush1.xpose.msra.mxu0 0.0
      %802 = vmatprep.subr.mxu0 0.0
      %803 = vmatpush1.xpose.msra.mxu0 0.0
      %804 = vmatprep.subr.mxu0 0.0
      %805 = vmatpush1.xpose.msra.mxu0 0.0
      %806 = vmatprep.subr.mxu0 0.0
      %807 = vmatpush1.xpose.msra.mxu0 0.0
      %808 = vmatprep.subr.mxu0 0.0
      %809 = vmatpush1.xpose.msra.mxu0 0.0
      %810 = vmatprep.subr.mxu0 0.0
      %811 = vmatpush1.xpose.msra.mxu0 0.0
      %812 = vmatprep.subr.mxu0 0.0
      %813 = vmatpush1.xpose.msra.mxu0 0.0
      %814 = vmatprep.subr.mxu0 0.0
      %815 = vmatpush1.xpose.msra.mxu0 0.0
      %816 = vmatprep.subr.mxu0 0.0
      %817 = vmatpush1.xpose.msra.mxu0 0.0
      %818 = vmatprep.subr.mxu0 0.0
      %819 = vmatpush1.xpose.msra.mxu0 0.0
      %820 = vmatprep.subr.mxu0 0.0
      %821 = vmatpush1.xpose.msra.mxu0 0.0
      %822 = vmatprep.subr.mxu0 0.0
      %823 = vmatpush1.xpose.msra.mxu0 0.0
      %824 = vmatprep.subr.mxu0 0.0
      %825 = vmatpush1.xpose.msra.mxu0 0.0
      %826 = vmatprep.subr.mxu0 0.0
      %827 = vmatpush1.xpose.msra.mxu0 0.0
      %828 = vmatprep.subr.mxu0 0.0
      %829 = vmatpush1.xpose.msra.mxu0 0.0
      %830 = vmatprep.subr.mxu0 0.0
      %831 = vmatpush1.xpose.msra.mxu0 0.0
      %832 = vmatprep.subr.mxu0 0.0
      %833 = vmatpush1.xpose.msra.mxu0 0.0
      %834 = vmatprep.subr.mxu0 0.0
      %835 = vmatpush1.xpose.msra.mxu0 0.0
      %836 = vmatprep.subr.mxu0 0.0
      %837 = vmatpush1.xpose.msra.mxu0 0.0
      %838 = vmatprep.subr.mxu0 0.0
      %839 = vmatpush1.xpose.msra.mxu0 0.0
      %840 = vmatprep.subr.mxu0 0.0
      %841 = vmatpush1.xpose.msra.mxu0 0.0
      %842 = vmatprep.subr.mxu0 0.0
      %843 = vmatpush1.xpose.msra.mxu0 0.0
      %844 = vmatprep.mubr.f32.mxu0 0.0
      %845 = vmatmul.mubr.f32.gmra.mrb[0].mxu0 %v776
      %v846 = vpop.f32.mrb[0].mxu0
      %v847 = vadd.f32 0.0, %v846
      %v848 = vpop.f32.mrb[0].mxu0
      %849 = vdwg.mxu0
      %v850 = vmul.f32 %v847, 0.35355338
      %v851 = vsel %vm771, %v850, -1e+09
      %v852 = vsel %vm775, %v851, -inf
      %853 = vmax.xlane.f32.xlu0 %v852
      %v854 = vpop.xlane.xlu0 %853
      %v855 = vsub.f32 %v851, %v854
      %v856 = vmul.f32 %v855, 1.442695
      %v857 = vpow.pop %v856
      %v858 = vsel %vm775, %v857, 0.0
      %859 = vadd.xlane.f32.xlu0 %v858
      %v860 = vpop.xlane.xlu0 %859
      %v861 = vrcp.pop %v860
      %v862 = vmul.f32 %v857, %v861
      %863 = vrot.lane.b32.xlu0 %v762, 64
      %v864 = vpop.permute.xlu0 %863
      %v867 = vsel %vm775, %v862, 0
      %869 = vmatprep.subr.mxu0 0.0
      %870 = vmatpush1.msra.mxu0 %v864
      %871 = vmatprep.subr.mxu0 0.0
      %872 = vmatpush1.msra.mxu0 0.0
      %873 = vmatprep.subr.mxu0 0.0
      %874 = vmatpush1.msra.mxu0 0.0
      %875 = vmatprep.subr.mxu0 0.0
      %876 = vmatpush1.msra.mxu0 0.0
      %877 = vmatprep.subr.mxu0 0.0
      %878 = vmatpush1.msra.mxu0 0.0
      %879 = vmatprep.subr.mxu0 0.0
      %880 = vmatpush1.msra.mxu0 0.0
      %881 = vmatprep.subr.mxu0 0.0
      %882 = vmatpush1.msra.mxu0 0.0
      %883 = vmatprep.subr.mxu0 0.0
      %884 = vmatpush1.msra.mxu0 0.0
      %885 = vmatprep.subr.mxu0 0.0
      %886 = vmatpush1.msra.mxu0 0.0
      %887 = vmatprep.subr.mxu0 0.0
      %888 = vmatpush1.msra.mxu0 0.0
      %889 = vmatprep.subr.mxu0 0.0
      %890 = vmatpush1.msra.mxu0 0.0
      %891 = vmatprep.subr.mxu0 0.0
      %892 = vmatpush1.msra.mxu0 0.0
      %893 = vmatprep.subr.mxu0 0.0
      %894 = vmatpush1.msra.mxu0 0.0
      %895 = vmatprep.subr.mxu0 0.0
      %896 = vmatpush1.msra.mxu0 0.0
      %897 = vmatprep.subr.mxu0 0.0
      %898 = vmatpush1.msra.mxu0 0.0
      %899 = vmatprep.subr.mxu0 0.0
      %900 = vmatpush1.msra.mxu0 0.0
      %901 = vmatprep.subr.mxu0 0.0
      %902 = vmatpush1.msra.mxu0 0.0
      %903 = vmatprep.subr.mxu0 0.0
      %904 = vmatpush1.msra.mxu0 0.0
      %905 = vmatprep.subr.mxu0 0.0
      %906 = vmatpush1.msra.mxu0 0.0
      %907 = vmatprep.subr.mxu0 0.0
      %908 = vmatpush1.msra.mxu0 0.0
      %909 = vmatprep.subr.mxu0 0.0
      %910 = vmatpush1.msra.mxu0 0.0
      %911 = vmatprep.subr.mxu0 0.0
      %912 = vmatpush1.msra.mxu0 0.0
      %913 = vmatprep.subr.mxu0 0.0
      %914 = vmatpush1.msra.mxu0 0.0
      %915 = vmatprep.subr.mxu0 0.0
      %916 = vmatpush1.msra.mxu0 0.0
      %917 = vmatprep.subr.mxu0 0.0
      %918 = vmatpush1.msra.mxu0 0.0
      %919 = vmatprep.subr.mxu0 0.0
      %920 = vmatpush1.msra.mxu0 0.0
      %921 = vmatprep.subr.mxu0 0.0
      %922 = vmatpush1.msra.mxu0 0.0
      %923 = vmatprep.subr.mxu0 0.0
      %924 = vmatpush1.msra.mxu0 0.0
      %925 = vmatprep.subr.mxu0 0.0
      %926 = vmatpush1.msra.mxu0 0.0
      %927 = vmatprep.subr.mxu0 0.0
      %928 = vmatpush1.msra.mxu0 0.0
      %929 = vmatprep.subr.mxu0 0.0
      %930 = vmatpush1.msra.mxu0 0.0
      %931 = vmatprep.subr.mxu0 0.0
      %932 = vmatpush1.msra.mxu0 0.0
      %933 = vmatprep.mubr.f32.mxu0 0.0
      %934 = vmatmul.mubr.f32.gmra.mrb[0].mxu0 %v867
      %v935 = vpop.f32.mrb[0].mxu0
      %v936 = vadd.f32 0.0, %v935
      %v937 = vpop.f32.mrb[0].mxu0
      %938 = vdwg.mxu0
      %939 = vrot.lane.b32.xlu0 %v762, 120
      %v940 = vpop.permute.xlu0 %939
      %941 = vrot.lane.b32.xlu0 %v762, 88
      %v942 = vpop.permute.xlu0 %941
      %v943 = vsel %vm775, %v940, 0
      %v945 = vsel %vm775, %v942, 0
      %947 = vmatprep.subr.mxu0 0.0
      %948 = vmatpush1.xpose.msra.mxu0 %v945
      %949 = vmatprep.subr.mxu0 0.0
      %950 = vmatpush1.xpose.msra.mxu0 0.0
      %951 = vmatprep.subr.mxu0 0.0
      %952 = vmatpush1.xpose.msra.mxu0 0.0
      %953 = vmatprep.subr.mxu0 0.0
      %954 = vmatpush1.xpose.msra.mxu0 0.0
      %955 = vmatprep.subr.mxu0 0.0
      %956 = vmatpush1.xpose.msra.mxu0 0.0
      %957 = vmatprep.subr.mxu0 0.0
      %958 = vmatpush1.xpose.msra.mxu0 0.0
      %959 = vmatprep.subr.mxu0 0.0
      %960 = vmatpush1.xpose.msra.mxu0 0.0
      %961 = vmatprep.subr.mxu0 0.0
      %962 = vmatpush1.xpose.msra.mxu0 0.0
      %963 = vmatprep.subr.mxu0 0.0
      %964 = vmatpush1.xpose.msra.mxu0 0.0
      %965 = vmatprep.subr.mxu0 0.0
      %966 = vmatpush1.xpose.msra.mxu0 0.0
      %967 = vmatprep.subr.mxu0 0.0
      %968 = vmatpush1.xpose.msra.mxu0 0.0
      %969 = vmatprep.subr.mxu0 0.0
      %970 = vmatpush1.xpose.msra.mxu0 0.0
      %971 = vmatprep.subr.mxu0 0.0
      %972 = vmatpush1.xpose.msra.mxu0 0.0
      %973 = vmatprep.subr.mxu0 0.0
      %974 = vmatpush1.xpose.msra.mxu0 0.0
      %975 = vmatprep.subr.mxu0 0.0
      %976 = vmatpush1.xpose.msra.mxu0 0.0
      %977 = vmatprep.subr.mxu0 0.0
      %978 = vmatpush1.xpose.msra.mxu0 0.0
      %979 = vmatprep.subr.mxu0 0.0
      %980 = vmatpush1.xpose.msra.mxu0 0.0
      %981 = vmatprep.subr.mxu0 0.0
      %982 = vmatpush1.xpose.msra.mxu0 0.0
      %983 = vmatprep.subr.mxu0 0.0
      %984 = vmatpush1.xpose.msra.mxu0 0.0
      %985 = vmatprep.subr.mxu0 0.0
      %986 = vmatpush1.xpose.msra.mxu0 0.0
      %987 = vmatprep.subr.mxu0 0.0
      %988 = vmatpush1.xpose.msra.mxu0 0.0
      %989 = vmatprep.subr.mxu0 0.0
      %990 = vmatpush1.xpose.msra.mxu0 0.0
      %991 = vmatprep.subr.mxu0 0.0
      %992 = vmatpush1.xpose.msra.mxu0 0.0
      %993 = vmatprep.subr.mxu0 0.0
      %994 = vmatpush1.xpose.msra.mxu0 0.0
      %995 = vmatprep.subr.mxu0 0.0
      %996 = vmatpush1.xpose.msra.mxu0 0.0
      %997 = vmatprep.subr.mxu0 0.0
      %998 = vmatpush1.xpose.msra.mxu0 0.0
      %999 = vmatprep.subr.mxu0 0.0
      %1000 = vmatpush1.xpose.msra.mxu0 0.0
      %1001 = vmatprep.subr.mxu0 0.0
      %1002 = vmatpush1.xpose.msra.mxu0 0.0
      %1003 = vmatprep.subr.mxu0 0.0
      %1004 = vmatpush1.xpose.msra.mxu0 0.0
      %1005 = vmatprep.subr.mxu0 0.0
      %1006 = vmatpush1.xpose.msra.mxu0 0.0
      %1007 = vmatprep.subr.mxu0 0.0
      %1008 = vmatpush1.xpose.msra.mxu0 0.0
      %1009 = vmatprep.subr.mxu0 0.0
      %1010 = vmatpush1.xpose.msra.mxu0 0.0
      %1011 = vmatprep.mubr.f32.mxu0 0.0
      %1012 = vmatmul.mubr.f32.gmra.mrb[0].mxu0 %v943
      %v1013 = vpop.f32.mrb[0].mxu0
      %v1014 = vadd.f32 0.0, %v1013
      %v1015 = vpop.f32.mrb[0].mxu0
      %1016 = vdwg.mxu0
      %v1017 = vmul.f32 %v1014, 0.35355338
      %v1018 = vsel %vm771, %v1017, -1e+09
      %v1019 = vsel %vm775, %v1018, -inf
      %1020 = vmax.xlane.f32.xlu0 %v1019
      %v1021 = vpop.xlane.xlu0 %1020
      %v1022 = vsub.f32 %v1018, %v1021
      %v1023 = vmul.f32 %v1022, 1.442695
      %v1024 = vpow.pop %v1023
      %v1025 = vsel %vm775, %v1024, 0.0
      %1026 = vadd.xlane.f32.xlu0 %v1025
      %v1027 = vpop.xlane.xlu0 %1026
      %v1028 = vrcp.pop %v1027
      %v1029 = vmul.f32 %v1024, %v1028
      %1030 = vrot.lane.b32.xlu0 %v762, 56
      %v1031 = vpop.permute.xlu0 %1030
      %v1034 = vsel %vm775, %v1029, 0
      %1036 = vmatprep.subr.mxu0 0.0
      %1037 = vmatpush1.msra.mxu0 %v1031
      %1038 = vmatprep.subr.mxu0 0.0
      %1039 = vmatpush1.msra.mxu0 0.0
      %1040 = vmatprep.subr.mxu0 0.0
      %1041 = vmatpush1.msra.mxu0 0.0
      %1042 = vmatprep.subr.mxu0 0.0
      %1043 = vmatpush1.msra.mxu0 0.0
      %1044 = vmatprep.subr.mxu0 0.0
      %1045 = vmatpush1.msra.mxu0 0.0
      %1046 = vmatprep.subr.mxu0 0.0
      %1047 = vmatpush1.msra.mxu0 0.0
      %1048 = vmatprep.subr.mxu0 0.0
      %1049 = vmatpush1.msra.mxu0 0.0
      %1050 = vmatprep.subr.mxu0 0.0
      %1051 = vmatpush1.msra.mxu0 0.0
      %1052 = vmatprep.subr.mxu0 0.0
      %1053 = vmatpush1.msra.mxu0 0.0
      %1054 = vmatprep.subr.mxu0 0.0
      %1055 = vmatpush1.msra.mxu0 0.0
      %1056 = vmatprep.subr.mxu0 0.0
      %1057 = vmatpush1.msra.mxu0 0.0
      %1058 = vmatprep.subr.mxu0 0.0
      %1059 = vmatpush1.msra.mxu0 0.0
      %1060 = vmatprep.subr.mxu0 0.0
      %1061 = vmatpush1.msra.mxu0 0.0
      %1062 = vmatprep.subr.mxu0 0.0
      %1063 = vmatpush1.msra.mxu0 0.0
      %1064 = vmatprep.subr.mxu0 0.0
      %1065 = vmatpush1.msra.mxu0 0.0
      %1066 = vmatprep.subr.mxu0 0.0
      %1067 = vmatpush1.msra.mxu0 0.0
      %1068 = vmatprep.subr.mxu0 0.0
      %1069 = vmatpush1.msra.mxu0 0.0
      %1070 = vmatprep.subr.mxu0 0.0
      %1071 = vmatpush1.msra.mxu0 0.0
      %1072 = vmatprep.subr.mxu0 0.0
      %1073 = vmatpush1.msra.mxu0 0.0
      %1074 = vmatprep.subr.mxu0 0.0
      %1075 = vmatpush1.msra.mxu0 0.0
      %1076 = vmatprep.subr.mxu0 0.0
      %1077 = vmatpush1.msra.mxu0 0.0
      %1078 = vmatprep.subr.mxu0 0.0
      %1079 = vmatpush1.msra.mxu0 0.0
      %1080 = vmatprep.subr.mxu0 0.0
      %1081 = vmatpush1.msra.mxu0 0.0
      %1082 = vmatprep.subr.mxu0 0.0
      %1083 = vmatpush1.msra.mxu0 0.0
      %1084 = vmatprep.subr.mxu0 0.0
      %1085 = vmatpush1.msra.mxu0 0.0
      %1086 = vmatprep.subr.mxu0 0.0
      %1087 = vmatpush1.msra.mxu0 0.0
      %1088 = vmatprep.subr.mxu0 0.0
      %1089 = vmatpush1.msra.mxu0 0.0
      %1090 = vmatprep.subr.mxu0 0.0
      %1091 = vmatpush1.msra.mxu0 0.0
      %1092 = vmatprep.subr.mxu0 0.0
      %1093 = vmatpush1.msra.mxu0 0.0
      %1094 = vmatprep.subr.mxu0 0.0
      %1095 = vmatpush1.msra.mxu0 0.0
      %1096 = vmatprep.subr.mxu0 0.0
      %1097 = vmatpush1.msra.mxu0 0.0
      %1098 = vmatprep.subr.mxu0 0.0
      %1099 = vmatpush1.msra.mxu0 0.0
      %1100 = vmatprep.mubr.f32.mxu0 0.0
      %1101 = vmatmul.mubr.f32.gmra.mrb[0].mxu0 %v1034
      %v1102 = vpop.f32.mrb[0].mxu0
      %v1103 = vadd.f32 0.0, %v1102
      %v1104 = vpop.f32.mrb[0].mxu0
      %1105 = vdwg.mxu0
      %1106 = vrot.lane.b32.xlu0 %v762, 112
      %v1107 = vpop.permute.xlu0 %1106
      %1108 = vrot.lane.b32.xlu0 %v762, 80
      %v1109 = vpop.permute.xlu0 %1108
      %v1110 = vsel %vm775, %v1107, 0
      %v1112 = vsel %vm775, %v1109, 0
      %1114 = vmatprep.subr.mxu0 0.0
      %1115 = vmatpush1.xpose.msra.mxu0 %v1112
      %1116 = vmatprep.subr.mxu0 0.0
      %1117 = vmatpush1.xpose.msra.mxu0 0.0
      %1118 = vmatprep.subr.mxu0 0.0
      %1119 = vmatpush1.xpose.msra.mxu0 0.0
      %1120 = vmatprep.subr.mxu0 0.0
      %1121 = vmatpush1.xpose.msra.mxu0 0.0
      %1122 = vmatprep.subr.mxu0 0.0
      %1123 = vmatpush1.xpose.msra.mxu0 0.0
      %1124 = vmatprep.subr.mxu0 0.0
      %1125 = vmatpush1.xpose.msra.mxu0 0.0
      %1126 = vmatprep.subr.mxu0 0.0
      %1127 = vmatpush1.xpose.msra.mxu0 0.0
      %1128 = vmatprep.subr.mxu0 0.0
      %1129 = vmatpush1.xpose.msra.mxu0 0.0
      %1130 = vmatprep.subr.mxu0 0.0
      %1131 = vmatpush1.xpose.msra.mxu0 0.0
      %1132 = vmatprep.subr.mxu0 0.0
      %1133 = vmatpush1.xpose.msra.mxu0 0.0
      %1134 = vmatprep.subr.mxu0 0.0
      %1135 = vmatpush1.xpose.msra.mxu0 0.0
      %1136 = vmatprep.subr.mxu0 0.0
      %1137 = vmatpush1.xpose.msra.mxu0 0.0
      %1138 = vmatprep.subr.mxu0 0.0
      %1139 = vmatpush1.xpose.msra.mxu0 0.0
      %1140 = vmatprep.subr.mxu0 0.0
      %1141 = vmatpush1.xpose.msra.mxu0 0.0
      %1142 = vmatprep.subr.mxu0 0.0
      %1143 = vmatpush1.xpose.msra.mxu0 0.0
      %1144 = vmatprep.subr.mxu0 0.0
      %1145 = vmatpush1.xpose.msra.mxu0 0.0
      %1146 = vmatprep.subr.mxu0 0.0
      %1147 = vmatpush1.xpose.msra.mxu0 0.0
      %1148 = vmatprep.subr.mxu0 0.0
      %1149 = vmatpush1.xpose.msra.mxu0 0.0
      %1150 = vmatprep.subr.mxu0 0.0
      %1151 = vmatpush1.xpose.msra.mxu0 0.0
      %1152 = vmatprep.subr.mxu0 0.0
      %1153 = vmatpush1.xpose.msra.mxu0 0.0
      %1154 = vmatprep.subr.mxu0 0.0
      %1155 = vmatpush1.xpose.msra.mxu0 0.0
      %1156 = vmatprep.subr.mxu0 0.0
      %1157 = vmatpush1.xpose.msra.mxu0 0.0
      %1158 = vmatprep.subr.mxu0 0.0
      %1159 = vmatpush1.xpose.msra.mxu0 0.0
      %1160 = vmatprep.subr.mxu0 0.0
      %1161 = vmatpush1.xpose.msra.mxu0 0.0
      %1162 = vmatprep.subr.mxu0 0.0
      %1163 = vmatpush1.xpose.msra.mxu0 0.0
      %1164 = vmatprep.subr.mxu0 0.0
      %1165 = vmatpush1.xpose.msra.mxu0 0.0
      %1166 = vmatprep.subr.mxu0 0.0
      %1167 = vmatpush1.xpose.msra.mxu0 0.0
      %1168 = vmatprep.subr.mxu0 0.0
      %1169 = vmatpush1.xpose.msra.mxu0 0.0
      %1170 = vmatprep.subr.mxu0 0.0
      %1171 = vmatpush1.xpose.msra.mxu0 0.0
      %1172 = vmatprep.subr.mxu0 0.0
      %1173 = vmatpush1.xpose.msra.mxu0 0.0
      %1174 = vmatprep.subr.mxu0 0.0
      %1175 = vmatpush1.xpose.msra.mxu0 0.0
      %1176 = vmatprep.subr.mxu0 0.0
      %1177 = vmatpush1.xpose.msra.mxu0 0.0
      %1178 = vmatprep.mubr.f32.mxu0 0.0
      %1179 = vmatmul.mubr.f32.gmra.mrb[0].mxu0 %v1110
      %v1180 = vpop.f32.mrb[0].mxu0
      %v1181 = vadd.f32 0.0, %v1180
      %v1182 = vpop.f32.mrb[0].mxu0
      %1183 = vdwg.mxu0
      %v1184 = vmul.f32 %v1181, 0.35355338
      %v1185 = vsel %vm771, %v1184, -1e+09
      %v1186 = vsel %vm775, %v1185, -inf
      %1187 = vmax.xlane.f32.xlu0 %v1186
      %v1188 = vpop.xlane.xlu0 %1187
      %v1189 = vsub.f32 %v1185, %v1188
      %v1190 = vmul.f32 %v1189, 1.442695
      %v1191 = vpow.pop %v1190
      %v1192 = vsel %vm775, %v1191, 0.0
      %1193 = vadd.xlane.f32.xlu0 %v1192
      %v1194 = vpop.xlane.xlu0 %1193
      %v1195 = vrcp.pop %v1194
      %v1196 = vmul.f32 %v1191, %v1195
      %1197 = vrot.lane.b32.xlu0 %v762, 48
      %v1198 = vpop.permute.xlu0 %1197
      %v1201 = vsel %vm775, %v1196, 0
      %1203 = vmatprep.subr.mxu0 0.0
      %1204 = vmatpush1.msra.mxu0 %v1198
      %1205 = vmatprep.subr.mxu0 0.0
      %1206 = vmatpush1.msra.mxu0 0.0
      %1207 = vmatprep.subr.mxu0 0.0
      %1208 = vmatpush1.msra.mxu0 0.0
      %1209 = vmatprep.subr.mxu0 0.0
      %1210 = vmatpush1.msra.mxu0 0.0
      %1211 = vmatprep.subr.mxu0 0.0
      %1212 = vmatpush1.msra.mxu0 0.0
      %1213 = vmatprep.subr.mxu0 0.0
      %1214 = vmatpush1.msra.mxu0 0.0
      %1215 = vmatprep.subr.mxu0 0.0
      %1216 = vmatpush1.msra.mxu0 0.0
      %1217 = vmatprep.subr.mxu0 0.0
      %1218 = vmatpush1.msra.mxu0 0.0
      %1219 = vmatprep.subr.mxu0 0.0
      %1220 = vmatpush1.msra.mxu0 0.0
      %1221 = vmatprep.subr.mxu0 0.0
      %1222 = vmatpush1.msra.mxu0 0.0
      %1223 = vmatprep.subr.mxu0 0.0
      %1224 = vmatpush1.msra.mxu0 0.0
      %1225 = vmatprep.subr.mxu0 0.0
      %1226 = vmatpush1.msra.mxu0 0.0
      %1227 = vmatprep.subr.mxu0 0.0
      %1228 = vmatpush1.msra.mxu0 0.0
      %1229 = vmatprep.subr.mxu0 0.0
      %1230 = vmatpush1.msra.mxu0 0.0
      %1231 = vmatprep.subr.mxu0 0.0
      %1232 = vmatpush1.msra.mxu0 0.0
      %1233 = vmatprep.subr.mxu0 0.0
      %1234 = vmatpush1.msra.mxu0 0.0
      %1235 = vmatprep.subr.mxu0 0.0
      %1236 = vmatpush1.msra.mxu0 0.0
      %1237 = vmatprep.subr.mxu0 0.0
      %1238 = vmatpush1.msra.mxu0 0.0
      %1239 = vmatprep.subr.mxu0 0.0
      %1240 = vmatpush1.msra.mxu0 0.0
      %1241 = vmatprep.subr.mxu0 0.0
      %1242 = vmatpush1.msra.mxu0 0.0
      %1243 = vmatprep.subr.mxu0 0.0
      %1244 = vmatpush1.msra.mxu0 0.0
      %1245 = vmatprep.subr.mxu0 0.0
      %1246 = vmatpush1.msra.mxu0 0.0
      %1247 = vmatprep.subr.mxu0 0.0
      %1248 = vmatpush1.msra.mxu0 0.0
      %1249 = vmatprep.subr.mxu0 0.0
      %1250 = vmatpush1.msra.mxu0 0.0
      %1251 = vmatprep.subr.mxu0 0.0
      %1252 = vmatpush1.msra.mxu0 0.0
      %1253 = vmatprep.subr.mxu0 0.0
      %1254 = vmatpush1.msra.mxu0 0.0
      %1255 = vmatprep.subr.mxu0 0.0
      %1256 = vmatpush1.msra.mxu0 0.0
      %1257 = vmatprep.subr.mxu0 0.0
      %1258 = vmatpush1.msra.mxu0 0.0
      %1259 = vmatprep.subr.mxu0 0.0
      %1260 = vmatpush1.msra.mxu0 0.0
      %1261 = vmatprep.subr.mxu0 0.0
      %1262 = vmatpush1.msra.mxu0 0.0
      %1263 = vmatprep.subr.mxu0 0.0
      %1264 = vmatpush1.msra.mxu0 0.0
      %1265 = vmatprep.subr.mxu0 0.0
      %1266 = vmatpush1.msra.mxu0 0.0
      %1267 = vmatprep.mubr.f32.mxu0 0.0
      %1268 = vmatmul.mubr.f32.gmra.mrb[0].mxu0 %v1201
      %v1269 = vpop.f32.mrb[0].mxu0
      %v1270 = vadd.f32 0.0, %v1269
      %v1271 = vpop.f32.mrb[0].mxu0
      %1272 = vdwg.mxu0
      %1273 = vrot.lane.b32.xlu0 %v762, 104
      %v1274 = vpop.permute.xlu0 %1273
      %1275 = vrot.lane.b32.xlu0 %v762, 72
      %v1276 = vpop.permute.xlu0 %1275
      %v1277 = vsel %vm775, %v1274, 0
      %v1279 = vsel %vm775, %v1276, 0
      %1281 = vmatprep.subr.mxu0 0.0
      %1282 = vmatpush1.xpose.msra.mxu0 %v1279
      %1283 = vmatprep.subr.mxu0 0.0
      %1284 = vmatpush1.xpose.msra.mxu0 0.0
      %1285 = vmatprep.subr.mxu0 0.0
      %1286 = vmatpush1.xpose.msra.mxu0 0.0
      %1287 = vmatprep.subr.mxu0 0.0
      %1288 = vmatpush1.xpose.msra.mxu0 0.0
      %1289 = vmatprep.subr.mxu0 0.0
      %1290 = vmatpush1.xpose.msra.mxu0 0.0
      %1291 = vmatprep.subr.mxu0 0.0
      %1292 = vmatpush1.xpose.msra.mxu0 0.0
      %1293 = vmatprep.subr.mxu0 0.0
      %1294 = vmatpush1.xpose.msra.mxu0 0.0
      %1295 = vmatprep.subr.mxu0 0.0
      %1296 = vmatpush1.xpose.msra.mxu0 0.0
      %1297 = vmatprep.subr.mxu0 0.0
      %1298 = vmatpush1.xpose.msra.mxu0 0.0
      %1299 = vmatprep.subr.mxu0 0.0
      %1300 = vmatpush1.xpose.msra.mxu0 0.0
      %1301 = vmatprep.subr.mxu0 0.0
      %1302 = vmatpush1.xpose.msra.mxu0 0.0
      %1303 = vmatprep.subr.mxu0 0.0
      %1304 = vmatpush1.xpose.msra.mxu0 0.0
      %1305 = vmatprep.subr.mxu0 0.0
      %1306 = vmatpush1.xpose.msra.mxu0 0.0
      %1307 = vmatprep.subr.mxu0 0.0
      %1308 = vmatpush1.xpose.msra.mxu0 0.0
      %1309 = vmatprep.subr.mxu0 0.0
      %1310 = vmatpush1.xpose.msra.mxu0 0.0
      %1311 = vmatprep.subr.mxu0 0.0
      %1312 = vmatpush1.xpose.msra.mxu0 0.0
      %1313 = vmatprep.subr.mxu0 0.0
      %1314 = vmatpush1.xpose.msra.mxu0 0.0
      %1315 = vmatprep.subr.mxu0 0.0
      %1316 = vmatpush1.xpose.msra.mxu0 0.0
      %1317 = vmatprep.subr.mxu0 0.0
      %1318 = vmatpush1.xpose.msra.mxu0 0.0
      %1319 = vmatprep.subr.mxu0 0.0
      %1320 = vmatpush1.xpose.msra.mxu0 0.0
      %1321 = vmatprep.subr.mxu0 0.0
      %1322 = vmatpush1.xpose.msra.mxu0 0.0
      %1323 = vmatprep.subr.mxu0 0.0
      %1324 = vmatpush1.xpose.msra.mxu0 0.0
      %1325 = vmatprep.subr.mxu0 0.0
      %1326 = vmatpush1.xpose.msra.mxu0 0.0
      %1327 = vmatprep.subr.mxu0 0.0
      %1328 = vmatpush1.xpose.msra.mxu0 0.0
      %1329 = vmatprep.subr.mxu0 0.0
      %1330 = vmatpush1.xpose.msra.mxu0 0.0
      %1331 = vmatprep.subr.mxu0 0.0
      %1332 = vmatpush1.xpose.msra.mxu0 0.0
      %1333 = vmatprep.subr.mxu0 0.0
      %1334 = vmatpush1.xpose.msra.mxu0 0.0
      %1335 = vmatprep.subr.mxu0 0.0
      %1336 = vmatpush1.xpose.msra.mxu0 0.0
      %1337 = vmatprep.subr.mxu0 0.0
      %1338 = vmatpush1.xpose.msra.mxu0 0.0
      %1339 = vmatprep.subr.mxu0 0.0
      %1340 = vmatpush1.xpose.msra.mxu0 0.0
      %1341 = vmatprep.subr.mxu0 0.0
      %1342 = vmatpush1.xpose.msra.mxu0 0.0
      %1343 = vmatprep.subr.mxu0 0.0
      %1344 = vmatpush1.xpose.msra.mxu0 0.0
      %1345 = vmatprep.mubr.f32.mxu0 0.0
      %1346 = vmatmul.mubr.f32.gmra.mrb[0].mxu0 %v1277
      %v1347 = vpop.f32.mrb[0].mxu0
      %v1348 = vadd.f32 0.0, %v1347
      %v1349 = vpop.f32.mrb[0].mxu0
      %1350 = vdwg.mxu0
      %v1351 = vmul.f32 %v1348, 0.35355338
      %v1352 = vsel %vm771, %v1351, -1e+09
      %v1353 = vsel %vm775, %v1352, -inf
      %1354 = vmax.xlane.f32.xlu0 %v1353
      %v1355 = vpop.xlane.xlu0 %1354
      %v1356 = vsub.f32 %v1352, %v1355
      %v1357 = vmul.f32 %v1356, 1.442695
      %v1358 = vpow.pop %v1357
      %v1359 = vsel %vm775, %v1358, 0.0
      %1360 = vadd.xlane.f32.xlu0 %v1359
      %v1361 = vpop.xlane.xlu0 %1360
      %v1362 = vrcp.pop %v1361
      %v1363 = vmul.f32 %v1358, %v1362
      %1364 = vrot.lane.b32.xlu0 %v762, 40
      %v1365 = vpop.permute.xlu0 %1364
      %v1368 = vsel %vm775, %v1363, 0
      %1370 = vmatprep.subr.mxu0 0.0
      %1371 = vmatpush1.msra.mxu0 %v1365
      %1372 = vmatprep.subr.mxu0 0.0
      %1373 = vmatpush1.msra.mxu0 0.0
      %1374 = vmatprep.subr.mxu0 0.0
      %1375 = vmatpush1.msra.mxu0 0.0
      %1376 = vmatprep.subr.mxu0 0.0
      %1377 = vmatpush1.msra.mxu0 0.0
      %1378 = vmatprep.subr.mxu0 0.0
      %1379 = vmatpush1.msra.mxu0 0.0
      %1380 = vmatprep.subr.mxu0 0.0
      %1381 = vmatpush1.msra.mxu0 0.0
      %1382 = vmatprep.subr.mxu0 0.0
      %1383 = vmatpush1.msra.mxu0 0.0
      %1384 = vmatprep.subr.mxu0 0.0
      %1385 = vmatpush1.msra.mxu0 0.0
      %1386 = vmatprep.subr.mxu0 0.0
      %1387 = vmatpush1.msra.mxu0 0.0
      %1388 = vmatprep.subr.mxu0 0.0
      %1389 = vmatpush1.msra.mxu0 0.0
      %1390 = vmatprep.subr.mxu0 0.0
      %1391 = vmatpush1.msra.mxu0 0.0
      %1392 = vmatprep.subr.mxu0 0.0
      %1393 = vmatpush1.msra.mxu0 0.0
      %1394 = vmatprep.subr.mxu0 0.0
      %1395 = vmatpush1.msra.mxu0 0.0
      %1396 = vmatprep.subr.mxu0 0.0
      %1397 = vmatpush1.msra.mxu0 0.0
      %1398 = vmatprep.subr.mxu0 0.0
      %1399 = vmatpush1.msra.mxu0 0.0
      %1400 = vmatprep.subr.mxu0 0.0
      %1401 = vmatpush1.msra.mxu0 0.0
      %1402 = vmatprep.subr.mxu0 0.0
      %1403 = vmatpush1.msra.mxu0 0.0
      %1404 = vmatprep.subr.mxu0 0.0
      %1405 = vmatpush1.msra.mxu0 0.0
      %1406 = vmatprep.subr.mxu0 0.0
      %1407 = vmatpush1.msra.mxu0 0.0
      %1408 = vmatprep.subr.mxu0 0.0
      %1409 = vmatpush1.msra.mxu0 0.0
      %1410 = vmatprep.subr.mxu0 0.0
      %1411 = vmatpush1.msra.mxu0 0.0
      %1412 = vmatprep.subr.mxu0 0.0
      %1413 = vmatpush1.msra.mxu0 0.0
      %1414 = vmatprep.subr.mxu0 0.0
      %1415 = vmatpush1.msra.mxu0 0.0
      %1416 = vmatprep.subr.mxu0 0.0
      %1417 = vmatpush1.msra.mxu0 0.0
      %1418 = vmatprep.subr.mxu0 0.0
      %1419 = vmatpush1.msra.mxu0 0.0
      %1420 = vmatprep.subr.mxu0 0.0
      %1421 = vmatpush1.msra.mxu0 0.0
      %1422 = vmatprep.subr.mxu0 0.0
      %1423 = vmatpush1.msra.mxu0 0.0
      %1424 = vmatprep.subr.mxu0 0.0
      %1425 = vmatpush1.msra.mxu0 0.0
      %1426 = vmatprep.subr.mxu0 0.0
      %1427 = vmatpush1.msra.mxu0 0.0
      %1428 = vmatprep.subr.mxu0 0.0
      %1429 = vmatpush1.msra.mxu0 0.0
      %1430 = vmatprep.subr.mxu0 0.0
      %1431 = vmatpush1.msra.mxu0 0.0
      %1432 = vmatprep.subr.mxu0 0.0
      %1433 = vmatpush1.msra.mxu0 0.0
      %1434 = vmatprep.mubr.f32.mxu0 0.0
      %1435 = vmatmul.mubr.f32.gmra.mrb[0].mxu0 %v1368
      %v1436 = vpop.f32.mrb[0].mxu0
      %v1437 = vadd.f32 0.0, %v1436
      %v1438 = vpop.f32.mrb[0].mxu0
      %1439 = vdwg.mxu0
      %1441 = vrot.lane.b32.xlu0 %v1103, 8
      %v1442 = vpop.permute.xlu0 %1441
      %1445 = vrot.lane.b32.xlu0 %v1270, 16
      %v1446 = vpop.permute.xlu0 %1445
      %1449 = vrot.lane.b32.xlu0 %v1437, 24
      %v1450 = vpop.permute.xlu0 %1449
      %v1452 = vsel %vm775, %v936, %v1442
      %vm1453 = vcmask 130048
      %v1454 = vsel %vm1453, %v1452, %v1446
      %vm1455 = vcmask 195584
      %v1456 = vsel %vm1455, %v1454, %v1450
      %v1457 = vpack.c.bf16 %v1456, %v1456
      %v1458 = vld [vmem:[%s4] sm:$0xf]
      %v1459 = vld [vmem:[%s4 + $0x4] sm:$0xf]
      %v1460 = vld [vmem:[%s4 + $0x8] sm:$0xf]
      %v1461 = vld [vmem:[%s4 + $0xc] sm:$0xf]
      %v1462 = vld [vmem:[%s5] sm:$0x1]
      %v1464 = vlaneseq
      %v1465 = vshrl.u32 %v1464, 7
      %v1466 = vsub.s32 0, %v1465
      %v1467 = vrot.slane %v1462, %v1466
      %v1473 = vunpack.c.l.b16 %v1458
      %v1474 = vunpack.c.l.b16 %v1459
      %v1475 = vunpack.c.l.b16 %v1460
      %v1476 = vunpack.c.l.b16 %v1461
      %v1477 = vpack.c.b16 %v1474, %v1473
      %v1478 = vpack.c.b16 %v1476, %v1475
      %v1482 = vsel %vm723, %v1457, 0
      %1484 = vmatprep.subr.bf16.mxu0 0
      %1485 = vmatpush1.bf16.msra.mxu0 %v1477
      %1486 = vmatprep.subr.bf16.mxu0 0
      %1487 = vmatpush1.bf16.msra.mxu0 %v1478
      %1488 = vmatprep.subr.bf16.mxu0 0
      %1489 = vmatpush1.bf16.msra.mxu0 0
      %1490 = vmatprep.subr.bf16.mxu0 0
      %1491 = vmatpush1.bf16.msra.mxu0 0
      %1492 = vmatprep.subr.bf16.mxu0 0
      %1493 = vmatpush1.bf16.msra.mxu0 0
      %1494 = vmatprep.subr.bf16.mxu0 0
      %1495 = vmatpush1.bf16.msra.mxu0 0
      %1496 = vmatprep.subr.bf16.mxu0 0
      %1497 = vmatpush1.bf16.msra.mxu0 0
      %1498 = vmatprep.subr.bf16.mxu0 0
      %1499 = vmatpush1.bf16.msra.mxu0 0
      %1500 = vmatprep.subr.bf16.mxu0 0
      %1501 = vmatpush1.bf16.msra.mxu0 0
      %1502 = vmatprep.subr.bf16.mxu0 0
      %1503 = vmatpush1.bf16.msra.mxu0 0
      %1504 = vmatprep.subr.bf16.mxu0 0
      %1505 = vmatpush1.bf16.msra.mxu0 0
      %1506 = vmatprep.subr.bf16.mxu0 0
      %1507 = vmatpush1.bf16.msra.mxu0 0
      %1508 = vmatprep.subr.bf16.mxu0 0
      %1509 = vmatpush1.bf16.msra.mxu0 0
      %1510 = vmatprep.subr.bf16.mxu0 0
      %1511 = vmatpush1.bf16.msra.mxu0 0
      %1512 = vmatprep.subr.bf16.mxu0 0
      %1513 = vmatpush1.bf16.msra.mxu0 0
      %1514 = vmatprep.subr.bf16.mxu0 0
      %1515 = vmatpush1.bf16.msra.mxu0 0
      %1516 = vmatprep.mubr.bf16.mxu0 0
      %1517 = vmatmul.mubr.bf16.gmra.mrb[0].mxu0 %v1482
      %v1518 = vpop.f32.mrb[0].mxu0
      %v1519 = vadd.f32 %v1467, %v1518
      %v1520 = vpop.f32.mrb[0].mxu0
      %v1521 = vpop.f32.mrb[0].mxu0
      %v1522 = vpop.f32.mrb[0].mxu0
      %1523 = vdwg.mxu0
      %v1524 = vadd.f32 %v697, %v1519
      %v1525 = vld [vmem:[%s6] sm:$0x1]
      %v1526 = vld [vmem:[%s7] sm:$0x1]
      %v1527 = vsel %vm723, %v1524, 0.0
      %1528 = vadd.xlane.f32.xlu0 %v1527
      %v1529 = vpop.xlane.xlu0 %1528
      %v1530 = vrcp.pop 32.0
      %v1531 = vmul.f32 %v1529, %v1530
      %v1532 = vsub.f32 %v1524, %v1531
      %v1533 = vmul.f32 %v1532, %v1532
      %v1534 = vsel %vm723, %v1533, 0.0
      %1535 = vadd.xlane.f32.xlu0 %v1534
      %v1536 = vpop.xlane.xlu0 %1535
      %v1537 = vmul.f32 %v1536, %v1530
      %v1538 = vadd.f32 %v1537, 1e-05
      %v1539 = vrsqrt.pop %v1538
      %v1540 = vmul.f32 %v1532, %v1539
      %v1542 = vlaneseq
      %v1543 = vshrl.u32 %v1542, 7
      %v1544 = vsub.s32 0, %v1543
      %v1545 = vrot.slane %v1525, %v1544
      %v1547 = vmul.f32 %v1540, %v1545
      %v1549 = vlaneseq
      %v1550 = vshrl.u32 %v1549, 7
      %v1551 = vsub.s32 0, %v1550
      %v1552 = vrot.slane %v1526, %v1551
      %v1554 = vadd.f32 %v1547, %v1552
      %v1555 = vpack.c.bf16 %v1554, %v1554
      %v1556 = vld [vmem:[%s8] sm:$0xf]
      %v1557 = vld [vmem:[%s8 + $0x4] sm:$0xf]
      %v1558 = vld [vmem:[%s8 + $0x8] sm:$0xf]
      %v1559 = vld [vmem:[%s8 + $0xc] sm:$0xf]
      %v1560 = vld [vmem:[%s9] sm:$0x1]
      %v1562 = vlaneseq
      %v1563 = vshrl.u32 %v1562, 7
      %v1564 = vsub.s32 0, %v1563
      %v1565 = vrot.slane %v1560, %v1564
      %v1571 = vunpack.c.l.b16 %v1556
      %v1572 = vunpack.c.l.b16 %v1557
      %v1573 = vunpack.c.l.b16 %v1558
      %v1574 = vunpack.c.l.b16 %v1559
      %v1575 = vpack.c.b16 %v1572, %v1571
      %v1576 = vpack.c.b16 %v1574, %v1573
      %v1580 = vsel %vm723, %v1555, 0
      %1582 = vmatprep.subr.bf16.mxu0 0
      %1583 = vmatpush1.bf16.msra.mxu0 %v1575
      %1584 = vmatprep.subr.bf16.mxu0 0
      %1585 = vmatpush1.bf16.msra.mxu0 %v1576
      %1586 = vmatprep.subr.bf16.mxu0 0
      %1587 = vmatpush1.bf16.msra.mxu0 0
      %1588 = vmatprep.subr.bf16.mxu0 0
      %1589 = vmatpush1.bf16.msra.mxu0 0
      %1590 = vmatprep.subr.bf16.mxu0 0
      %1591 = vmatpush1.bf16.msra.mxu0 0
      %1592 = vmatprep.subr.bf16.mxu0 0
      %1593 = vmatpush1.bf16.msra.mxu0 0
      %1594 = vmatprep.subr.bf16.mxu0 0
      %1595 = vmatpush1.bf16.msra.mxu0 0
      %1596 = vmatprep.subr.bf16.mxu0 0
      %1597 = vmatpush1.bf16.msra.mxu0 0
      %1598 = vmatprep.subr.bf16.mxu0 0
      %1599 = vmatpush1.bf16.msra.mxu0 0
      %1600 = vmatprep.subr.bf16.mxu0 0
      %1601 = vmatpush1.bf16.msra.mxu0 0
      %1602 = vmatprep.subr.bf16.mxu0 0
      %1603 = vmatpush1.bf16.msra.mxu0 0
      %1604 = vmatprep.subr.bf16.mxu0 0
      %1605 = vmatpush1.bf16.msra.mxu0 0
      %1606 = vmatprep.subr.bf16.mxu0 0
      %1607 = vmatpush1.bf16.msra.mxu0 0
      %1608 = vmatprep.subr.bf16.mxu0 0
      %1609 = vmatpush1.bf16.msra.mxu0 0
      %1610 = vmatprep.subr.bf16.mxu0 0
      %1611 = vmatpush1.bf16.msra.mxu0 0
      %1612 = vmatprep.subr.bf16.mxu0 0
      %1613 = vmatpush1.bf16.msra.mxu0 0
      %1614 = vmatprep.mubr.bf16.mxu0 0
      %1615 = vmatmul.mubr.bf16.gmra.mrb[0].mxu0 %v1580
      %v1616 = vpop.f32.mrb[0].mxu0
      %v1617 = vadd.f32 %v1565, %v1616
      %v1618 = vpop.f32.mrb[0].mxu0
      %v1619 = vpop.f32.mrb[0].mxu0
      %v1620 = vpop.f32.mrb[0].mxu0
      %1621 = vdwg.mxu0
      %v1622 = vpack.c.bf16 %v698, %v698
      %v1623 = vld [vmem:[%s10] sm:$0xf]
      %v1624 = vld [vmem:[%s10 + $0x4] sm:$0xf]
      %v1625 = vld [vmem:[%s10 + $0x8] sm:$0xf]
      %v1626 = vld [vmem:[%s10 + $0xc] sm:$0xf]
      %v1627 = vld [vmem:[%s11] sm:$0x1]
      %v1629 = vlaneseq
      %v1630 = vshrl.u32 %v1629, 7
      %v1631 = vsub.s32 0, %v1630
      %v1632 = vrot.slane %v1627, %v1631
      %v1638 = vunpack.c.l.b16 %v1623
      %v1639 = vunpack.c.l.b16 %v1624
      %v1640 = vunpack.c.l.b16 %v1625
      %v1641 = vunpack.c.l.b16 %v1626
      %v1642 = vpack.c.b16 %v1639, %v1638
      %v1643 = vpack.c.b16 %v1641, %v1640
      %v1647 = vsel %vm723, %v1622, 0
      %1649 = vmatprep.subr.bf16.mxu0 0
      %1650 = vmatpush1.bf16.msra.mxu0 %v1642
      %1651 = vmatprep.subr.bf16.mxu0 0
      %1652 = vmatpush1.bf16.msra.mxu0 %v1643
      %1653 = vmatprep.subr.bf16.mxu0 0
      %1654 = vmatpush1.bf16.msra.mxu0 0
      %1655 = vmatprep.subr.bf16.mxu0 0
      %1656 = vmatpush1.bf16.msra.mxu0 0
      %1657 = vmatprep.subr.bf16.mxu0 0
      %1658 = vmatpush1.bf16.msra.mxu0 0
      %1659 = vmatprep.subr.bf16.mxu0 0
      %1660 = vmatpush1.bf16.msra.mxu0 0
      %1661 = vmatprep.subr.bf16.mxu0 0
      %1662 = vmatpush1.bf16.msra.mxu0 0
      %1663 = vmatprep.subr.bf16.mxu0 0
      %1664 = vmatpush1.bf16.msra.mxu0 0
      %1665 = vmatprep.subr.bf16.mxu0 0
      %1666 = vmatpush1.bf16.msra.mxu0 0
      %1667 = vmatprep.subr.bf16.mxu0 0
      %1668 = vmatpush1.bf16.msra.mxu0 0
      %1669 = vmatprep.subr.bf16.mxu0 0
      %1670 = vmatpush1.bf16.msra.mxu0 0
      %1671 = vmatprep.subr.bf16.mxu0 0
      %1672 = vmatpush1.bf16.msra.mxu0 0
      %1673 = vmatprep.subr.bf16.mxu0 0
      %1674 = vmatpush1.bf16.msra.mxu0 0
      %1675 = vmatprep.subr.bf16.mxu0 0
      %1676 = vmatpush1.bf16.msra.mxu0 0
      %1677 = vmatprep.subr.bf16.mxu0 0
      %1678 = vmatpush1.bf16.msra.mxu0 0
      %1679 = vmatprep.subr.bf16.mxu0 0
      %1680 = vmatpush1.bf16.msra.mxu0 0
      %1681 = vmatprep.mubr.bf16.mxu0 0
      %1682 = vmatmul.mubr.bf16.gmra.mrb[0].mxu0 %v1647
      %v1683 = vpop.f32.mrb[0].mxu0
      %v1684 = vadd.f32 %v1632, %v1683
      %v1685 = vpop.f32.mrb[0].mxu0
      %v1686 = vpop.f32.mrb[0].mxu0
      %v1687 = vpop.f32.mrb[0].mxu0
      %1688 = vdwg.mxu0
      %v1690 = vsel %vm775, %v1617, 0
      %v1693 = vsel %vm775, %v1684, 0
      %1695 = vmatprep.subr.mxu0 0.0
      %1696 = vmatpush1.xpose.msra.mxu0 %v1693
      %1697 = vmatprep.subr.mxu0 0.0
      %1698 = vmatpush1.xpose.msra.mxu0 0.0
      %1699 = vmatprep.subr.mxu0 0.0
      %1700 = vmatpush1.xpose.msra.mxu0 0.0
      %1701 = vmatprep.subr.mxu0 0.0
      %1702 = vmatpush1.xpose.msra.mxu0 0.0
      %1703 = vmatprep.subr.mxu0 0.0
      %1704 = vmatpush1.xpose.msra.mxu0 0.0
      %1705 = vmatprep.subr.mxu0 0.0
      %1706 = vmatpush1.xpose.msra.mxu0 0.0
      %1707 = vmatprep.subr.mxu0 0.0
      %1708 = vmatpush1.xpose.msra.mxu0 0.0
      %1709 = vmatprep.subr.mxu0 0.0
      %1710 = vmatpush1.xpose.msra.mxu0 0.0
      %1711 = vmatprep.subr.mxu0 0.0
      %1712 = vmatpush1.xpose.msra.mxu0 0.0
      %1713 = vmatprep.subr.mxu0 0.0
      %1714 = vmatpush1.xpose.msra.mxu0 0.0
      %1715 = vmatprep.subr.mxu0 0.0
      %1716 = vmatpush1.xpose.msra.mxu0 0.0
      %1717 = vmatprep.subr.mxu0 0.0
      %1718 = vmatpush1.xpose.msra.mxu0 0.0
      %1719 = vmatprep.subr.mxu0 0.0
      %1720 = vmatpush1.xpose.msra.mxu0 0.0
      %1721 = vmatprep.subr.mxu0 0.0
      %1722 = vmatpush1.xpose.msra.mxu0 0.0
      %1723 = vmatprep.subr.mxu0 0.0
      %1724 = vmatpush1.xpose.msra.mxu0 0.0
      %1725 = vmatprep.subr.mxu0 0.0
      %1726 = vmatpush1.xpose.msra.mxu0 0.0
      %1727 = vmatprep.subr.mxu0 0.0
      %1728 = vmatpush1.xpose.msra.mxu0 0.0
      %1729 = vmatprep.subr.mxu0 0.0
      %1730 = vmatpush1.xpose.msra.mxu0 0.0
      %1731 = vmatprep.subr.mxu0 0.0
      %1732 = vmatpush1.xpose.msra.mxu0 0.0
      %1733 = vmatprep.subr.mxu0 0.0
      %1734 = vmatpush1.xpose.msra.mxu0 0.0
      %1735 = vmatprep.subr.mxu0 0.0
      %1736 = vmatpush1.xpose.msra.mxu0 0.0
      %1737 = vmatprep.subr.mxu0 0.0
      %1738 = vmatpush1.xpose.msra.mxu0 0.0
      %1739 = vmatprep.subr.mxu0 0.0
      %1740 = vmatpush1.xpose.msra.mxu0 0.0
      %1741 = vmatprep.subr.mxu0 0.0
      %1742 = vmatpush1.xpose.msra.mxu0 0.0
      %1743 = vmatprep.subr.mxu0 0.0
      %1744 = vmatpush1.xpose.msra.mxu0 0.0
      %1745 = vmatprep.subr.mxu0 0.0
      %1746 = vmatpush1.xpose.msra.mxu0 0.0
      %1747 = vmatprep.subr.mxu0 0.0
      %1748 = vmatpush1.xpose.msra.mxu0 0.0
      %1749 = vmatprep.subr.mxu0 0.0
      %1750 = vmatpush1.xpose.msra.mxu0 0.0
      %1751 = vmatprep.subr.mxu0 0.0
      %1752 = vmatpush1.xpose.msra.mxu0 0.0
      %1753 = vmatprep.subr.mxu0 0.0
      %1754 = vmatpush1.xpose.msra.mxu0 0.0
      %1755 = vmatprep.subr.mxu0 0.0
      %1756 = vmatpush1.xpose.msra.mxu0 0.0
      %1757 = vmatprep.subr.mxu0 0.0
      %1758 = vmatpush1.xpose.msra.mxu0 0.0
      %1759 = vmatprep.mubr.f32.mxu0 0.0
      %1760 = vmatmul.mubr.f32.gmra.mrb[0].mxu0 %v1690
      %v1761 = vpop.f32.mrb[0].mxu0
      %v1762 = vadd.f32 0.0, %v1761
      %v1763 = vpop.f32.mrb[0].mxu0
      %1764 = vdwg.mxu0
      %v1765 = vmul.f32 %v1762, 0.35355338
      %v1766 = vsel %vm775, %v1765, -inf
      %1767 = vmax.xlane.f32.xlu0 %v1766
      %v1768 = vpop.xlane.xlu0 %1767
      %v1769 = vsub.f32 %v1765, %v1768
      %v1770 = vmul.f32 %v1769, 1.442695
      %v1771 = vpow.pop %v1770
      %v1772 = vsel %vm775, %v1771, 0.0
      %1773 = vadd.xlane.f32.xlu0 %v1772
      %v1774 = vpop.xlane.xlu0 %1773
      %v1775 = vrcp.pop %v1774
      %v1776 = vmul.f32 %v1771, %v1775
      %1777 = vrot.lane.b32.xlu0 %v1684, 96
      %v1778 = vpop.permute.xlu0 %1777
      %v1781 = vsel %vm775, %v1776, 0
      %1783 = vmatprep.subr.mxu0 0.0
      %1784 = vmatpush1.msra.mxu0 %v1778
      %1785 = vmatprep.subr.mxu0 0.0
      %1786 = vmatpush1.msra.mxu0 0.0
      %1787 = vmatprep.subr.mxu0 0.0
      %1788 = vmatpush1.msra.mxu0 0.0
      %1789 = vmatprep.subr.mxu0 0.0
      %1790 = vmatpush1.msra.mxu0 0.0
      %1791 = vmatprep.subr.mxu0 0.0
      %1792 = vmatpush1.msra.mxu0 0.0
      %1793 = vmatprep.subr.mxu0 0.0
      %1794 = vmatpush1.msra.mxu0 0.0
      %1795 = vmatprep.subr.mxu0 0.0
      %1796 = vmatpush1.msra.mxu0 0.0
      %1797 = vmatprep.subr.mxu0 0.0
      %1798 = vmatpush1.msra.mxu0 0.0
      %1799 = vmatprep.subr.mxu0 0.0
      %1800 = vmatpush1.msra.mxu0 0.0
      %1801 = vmatprep.subr.mxu0 0.0
      %1802 = vmatpush1.msra.mxu0 0.0
      %1803 = vmatprep.subr.mxu0 0.0
      %1804 = vmatpush1.msra.mxu0 0.0
      %1805 = vmatprep.subr.mxu0 0.0
      %1806 = vmatpush1.msra.mxu0 0.0
      %1807 = vmatprep.subr.mxu0 0.0
      %1808 = vmatpush1.msra.mxu0 0.0
      %1809 = vmatprep.subr.mxu0 0.0
      %1810 = vmatpush1.msra.mxu0 0.0
      %1811 = vmatprep.subr.mxu0 0.0
      %1812 = vmatpush1.msra.mxu0 0.0
      %1813 = vmatprep.subr.mxu0 0.0
      %1814 = vmatpush1.msra.mxu0 0.0
      %1815 = vmatprep.subr.mxu0 0.0
      %1816 = vmatpush1.msra.mxu0 0.0
      %1817 = vmatprep.subr.mxu0 0.0
      %1818 = vmatpush1.msra.mxu0 0.0
      %1819 = vmatprep.subr.mxu0 0.0
      %1820 = vmatpush1.msra.mxu0 0.0
      %1821 = vmatprep.subr.mxu0 0.0
      %1822 = vmatpush1.msra.mxu0 0.0
      %1823 = vmatprep.subr.mxu0 0.0
      %1824 = vmatpush1.msra.mxu0 0.0
      %1825 = vmatprep.subr.mxu0 0.0
      %1826 = vmatpush1.msra.mxu0 0.0
      %1827 = vmatprep.subr.mxu0 0.0
      %1828 = vmatpush1.msra.mxu0 0.0
      %1829 = vmatprep.subr.mxu0 0.0
      %1830 = vmatpush1.msra.mxu0 0.0
      %1831 = vmatprep.subr.mxu0 0.0
      %1832 = vmatpush1.msra.mxu0 0.0
      %1833 = vmatprep.subr.mxu0 0.0
      %1834 = vmatpush1.msra.mxu0 0.0
      %1835 = vmatprep.subr.mxu0 0.0
      %1836 = vmatpush1.msra.mxu0 0.0
      %1837 = vmatprep.subr.mxu0 0.0
      %1838 = vmatpush1.msra.mxu0 0.0
      %1839 = vmatprep.subr.mxu0 0.0
      %1840 = vmatpush1.msra.mxu0 0.0
      %1841 = vmatprep.subr.mxu0 0.0
      %1842 = vmatpush1.msra.mxu0 0.0
      %1843 = vmatprep.subr.mxu0 0.0
      %1844 = vmatpush1.msra.mxu0 0.0
      %1845 = vmatprep.subr.mxu0 0.0
      %1846 = vmatpush1.msra.mxu0 0.0
      %1847 = vmatprep.mubr.f32.mxu0 0.0
      %1848 = vmatmul.mubr.f32.gmra.mrb[0].mxu0 %v1781
      %v1849 = vpop.f32.mrb[0].mxu0
      %v1850 = vadd.f32 0.0, %v1849
      %v1851 = vpop.f32.mrb[0].mxu0
      %1852 = vdwg.mxu0
      %1853 = vrot.lane.b32.xlu0 %v1617, 120
      %v1854 = vpop.permute.xlu0 %1853
      %1855 = vrot.lane.b32.xlu0 %v1684, 120
      %v1856 = vpop.permute.xlu0 %1855
      %v1857 = vsel %vm775, %v1854, 0
      %v1859 = vsel %vm775, %v1856, 0
      %1861 = vmatprep.subr.mxu0 0.0
      %1862 = vmatpush1.xpose.msra.mxu0 %v1859
      %1863 = vmatprep.subr.mxu0 0.0
      %1864 = vmatpush1.xpose.msra.mxu0 0.0
      %1865 = vmatprep.subr.mxu0 0.0
      %1866 = vmatpush1.xpose.msra.mxu0 0.0
      %1867 = vmatprep.subr.mxu0 0.0
      %1868 = vmatpush1.xpose.msra.mxu0 0.0
      %1869 = vmatprep.subr.mxu0 0.0
      %1870 = vmatpush1.xpose.msra.mxu0 0.0
      %1871 = vmatprep.subr.mxu0 0.0
      %1872 = vmatpush1.xpose.msra.mxu0 0.0
      %1873 = vmatprep.subr.mxu0 0.0
      %1874 = vmatpush1.xpose.msra.mxu0 0.0
      %1875 = vmatprep.subr.mxu0 0.0
      %1876 = vmatpush1.xpose.msra.mxu0 0.0
      %1877 = vmatprep.subr.mxu0 0.0
      %1878 = vmatpush1.xpose.msra.mxu0 0.0
      %1879 = vmatprep.subr.mxu0 0.0
      %1880 = vmatpush1.xpose.msra.mxu0 0.0
      %1881 = vmatprep.subr.mxu0 0.0
      %1882 = vmatpush1.xpose.msra.mxu0 0.0
      %1883 = vmatprep.subr.mxu0 0.0
      %1884 = vmatpush1.xpose.msra.mxu0 0.0
      %1885 = vmatprep.subr.mxu0 0.0
      %1886 = vmatpush1.xpose.msra.mxu0 0.0
      %1887 = vmatprep.subr.mxu0 0.0
      %1888 = vmatpush1.xpose.msra.mxu0 0.0
      %1889 = vmatprep.subr.mxu0 0.0
      %1890 = vmatpush1.xpose.msra.mxu0 0.0
      %1891 = vmatprep.subr.mxu0 0.0
      %1892 = vmatpush1.xpose.msra.mxu0 0.0
      %1893 = vmatprep.subr.mxu0 0.0
      %1894 = vmatpush1.xpose.msra.mxu0 0.0
      %1895 = vmatprep.subr.mxu0 0.0
      %1896 = vmatpush1.xpose.msra.mxu0 0.0
      %1897 = vmatprep.subr.mxu0 0.0
      %1898 = vmatpush1.xpose.msra.mxu0 0.0
      %1899 = vmatprep.subr.mxu0 0.0
      %1900 = vmatpush1.xpose.msra.mxu0 0.0
      %1901 = vmatprep.subr.mxu0 0.0
      %1902 = vmatpush1.xpose.msra.mxu0 0.0
      %1903 = vmatprep.subr.mxu0 0.0
      %1904 = vmatpush1.xpose.msra.mxu0 0.0
      %1905 = vmatprep.subr.mxu0 0.0
      %1906 = vmatpush1.xpose.msra.mxu0 0.0
      %1907 = vmatprep.subr.mxu0 0.0
      %1908 = vmatpush1.xpose.msra.mxu0 0.0
      %1909 = vmatprep.subr.mxu0 0.0
      %1910 = vmatpush1.xpose.msra.mxu0 0.0
      %1911 = vmatprep.subr.mxu0 0.0
      %1912 = vmatpush1.xpose.msra.mxu0 0.0
      %1913 = vmatprep.subr.mxu0 0.0
      %1914 = vmatpush1.xpose.msra.mxu0 0.0
      %1915 = vmatprep.subr.mxu0 0.0
      %1916 = vmatpush1.xpose.msra.mxu0 0.0
      %1917 = vmatprep.subr.mxu0 0.0
      %1918 = vmatpush1.xpose.msra.mxu0 0.0
      %1919 = vmatprep.subr.mxu0 0.0
      %1920 = vmatpush1.xpose.msra.mxu0 0.0
      %1921 = vmatprep.subr.mxu0 0.0
      %1922 = vmatpush1.xpose.msra.mxu0 0.0
      %1923 = vmatprep.subr.mxu0 0.0
      %1924 = vmatpush1.xpose.msra.mxu0 0.0
      %1925 = vmatprep.mubr.f32.mxu0 0.0
      %1926 = vmatmul.mubr.f32.gmra.mrb[0].mxu0 %v1857
      %v1927 = vpop.f32.mrb[0].mxu0
      %v1928 = vadd.f32 0.0, %v1927
      %v1929 = vpop.f32.mrb[0].mxu0
      %1930 = vdwg.mxu0
      %v1931 = vmul.f32 %v1928, 0.35355338
      %v1932 = vsel %vm775, %v1931, -inf
      %1933 = vmax.xlane.f32.xlu0 %v1932
      %v1934 = vpop.xlane.xlu0 %1933
      %v1935 = vsub.f32 %v1931, %v1934
      %v1936 = vmul.f32 %v1935, 1.442695
      %v1937 = vpow.pop %v1936
      %v1938 = vsel %vm775, %v1937, 0.0
      %1939 = vadd.xlane.f32.xlu0 %v1938
      %v1940 = vpop.xlane.xlu0 %1939
      %v1941 = vrcp.pop %v1940
      %v1942 = vmul.f32 %v1937, %v1941
      %1943 = vrot.lane.b32.xlu0 %v1684, 88
      %v1944 = vpop.permute.xlu0 %1943
      %v1947 = vsel %vm775, %v1942, 0
      %1949 = vmatprep.subr.mxu0 0.0
      %1950 = vmatpush1.msra.mxu0 %v1944
      %1951 = vmatprep.subr.mxu0 0.0
      %1952 = vmatpush1.msra.mxu0 0.0
      %1953 = vmatprep.subr.mxu0 0.0
      %1954 = vmatpush1.msra.mxu0 0.0
      %1955 = vmatprep.subr.mxu0 0.0
      %1956 = vmatpush1.msra.mxu0 0.0
      %1957 = vmatprep.subr.mxu0 0.0
      %1958 = vmatpush1.msra.mxu0 0.0
      %1959 = vmatprep.subr.mxu0 0.0
      %1960 = vmatpush1.msra.mxu0 0.0
      %1961 = vmatprep.subr.mxu0 0.0
      %1962 = vmatpush1.msra.mxu0 0.0
      %1963 = vmatprep.subr.mxu0 0.0
      %1964 = vmatpush1.msra.mxu0 0.0
      %1965 = vmatprep.subr.mxu0 0.0
      %1966 = vmatpush1.msra.mxu0 0.0
      %1967 = vmatprep.subr.mxu0 0.0
      %1968 = vmatpush1.msra.mxu0 0.0
      %1969 = vmatprep.subr.mxu0 0.0
      %1970 = vmatpush1.msra.mxu0 0.0
      %1971 = vmatprep.subr.mxu0 0.0
      %1972 = vmatpush1.msra.mxu0 0.0
      %1973 = vmatprep.subr.mxu0 0.0
      %1974 = vmatpush1.msra.mxu0 0.0
      %1975 = vmatprep.subr.mxu0 0.0
      %1976 = vmatpush1.msra.mxu0 0.0
      %1977 = vmatprep.subr.mxu0 0.0
      %1978 = vmatpush1.msra.mxu0 0.0
      %1979 = vmatprep.subr.mxu0 0.0
      %1980 = vmatpush1.msra.mxu0 0.0
      %1981 = vmatprep.subr.mxu0 0.0
      %1982 = vmatpush1.msra.mxu0 0.0
      %1983 = vmatprep.subr.mxu0 0.0
      %1984 = vmatpush1.msra.mxu0 0.0
      %1985 = vmatprep.subr.mxu0 0.0
      %1986 = vmatpush1.msra.mxu0 0.0
      %1987 = vmatprep.subr.mxu0 0.0
      %1988 = vmatpush1.msra.mxu0 0.0
      %1989 = vmatprep.subr.mxu0 0.0
      %1990 = vmatpush1.msra.mxu0 0.0
      %1991 = vmatprep.subr.mxu0 0.0
      %1992 = vmatpush1.msra.mxu0 0.0
      %1993 = vmatprep.subr.mxu0 0.0
      %1994 = vmatpush1.msra.mxu0 0.0
      %1995 = vmatprep.subr.mxu0 0.0
      %1996 = vmatpush1.msra.mxu0 0.0
      %1997 = vmatprep.subr.mxu0 0.0
      %1998 = vmatpush1.msra.mxu0 0.0
      %1999 = vmatprep.subr.mxu0 0.0
      %2000 = vmatpush1.msra.mxu0 0.0
      %2001 = vmatprep.subr.mxu0 0.0
      %2002 = vmatpush1.msra.mxu0 0.0
      %2003 = vmatprep.subr.mxu0 0.0
      %2004 = vmatpush1.msra.mxu0 0.0
      %2005 = vmatprep.subr.mxu0 0.0
      %2006 = vmatpush1.msra.mxu0 0.0
      %2007 = vmatprep.subr.mxu0 0.0
      %2008 = vmatpush1.msra.mxu0 0.0
      %2009 = vmatprep.subr.mxu0 0.0
      %2010 = vmatpush1.msra.mxu0 0.0
      %2011 = vmatprep.subr.mxu0 0.0
      %2012 = vmatpush1.msra.mxu0 0.0
      %2013 = vmatprep.mubr.f32.mxu0 0.0
      %2014 = vmatmul.mubr.f32.gmra.mrb[0].mxu0 %v1947
      %v2015 = vpop.f32.mrb[0].mxu0
      %v2016 = vadd.f32 0.0, %v2015
      %v2017 = vpop.f32.mrb[0].mxu0
      %2018 = vdwg.mxu0
      %2019 = vrot.lane.b32.xlu0 %v1617, 112
      %v2020 = vpop.permute.xlu0 %2019
      %2021 = vrot.lane.b32.xlu0 %v1684, 112
      %v2022 = vpop.permute.xlu0 %2021
      %v2023 = vsel %vm775, %v2020, 0
      %v2025 = vsel %vm775, %v2022, 0
      %2027 = vmatprep.subr.mxu0 0.0
      %2028 = vmatpush1.xpose.msra.mxu0 %v2025
      %2029 = vmatprep.subr.mxu0 0.0
      %2030 = vmatpush1.xpose.msra.mxu0 0.0
      %2031 = vmatprep.subr.mxu0 0.0
      %2032 = vmatpush1.xpose.msra.mxu0 0.0
      %2033 = vmatprep.subr.mxu0 0.0
      %2034 = vmatpush1.xpose.msra.mxu0 0.0
      %2035 = vmatprep.subr.mxu0 0.0
      %2036 = vmatpush1.xpose.msra.mxu0 0.0
      %2037 = vmatprep.subr.mxu0 0.0
      %2038 = vmatpush1.xpose.msra.mxu0 0.0
      %2039 = vmatprep.subr.mxu0 0.0
      %2040 = vmatpush1.xpose.msra.mxu0 0.0
      %2041 = vmatprep.subr.mxu0 0.0
      %2042 = vmatpush1.xpose.msra.mxu0 0.0
      %2043 = vmatprep.subr.mxu0 0.0
      %2044 = vmatpush1.xpose.msra.mxu0 0.0
      %2045 = vmatprep.subr.mxu0 0.0
      %2046 = vmatpush1.xpose.msra.mxu0 0.0
      %2047 = vmatprep.subr.mxu0 0.0
      %2048 = vmatpush1.xpose.msra.mxu0 0.0
      %2049 = vmatprep.subr.mxu0 0.0
      %2050 = vmatpush1.xpose.msra.mxu0 0.0
      %2051 = vmatprep.subr.mxu0 0.0
      %2052 = vmatpush1.xpose.msra.mxu0 0.0
      %2053 = vmatprep.subr.mxu0 0.0
      %2054 = vmatpush1.xpose.msra.mxu0 0.0
      %2055 = vmatprep.subr.mxu0 0.0
      %2056 = vmatpush1.xpose.msra.mxu0 0.0
      %2057 = vmatprep.subr.mxu0 0.0
      %2058 = vmatpush1.xpose.msra.mxu0 0.0
      %2059 = vmatprep.subr.mxu0 0.0
      %2060 = vmatpush1.xpose.msra.mxu0 0.0
      %2061 = vmatprep.subr.mxu0 0.0
      %2062 = vmatpush1.xpose.msra.mxu0 0.0
      %2063 = vmatprep.subr.mxu0 0.0
      %2064 = vmatpush1.xpose.msra.mxu0 0.0
      %2065 = vmatprep.subr.mxu0 0.0
      %2066 = vmatpush1.xpose.msra.mxu0 0.0
      %2067 = vmatprep.subr.mxu0 0.0
      %2068 = vmatpush1.xpose.msra.mxu0 0.0
      %2069 = vmatprep.subr.mxu0 0.0
      %2070 = vmatpush1.xpose.msra.mxu0 0.0
      %2071 = vmatprep.subr.mxu0 0.0
      %2072 = vmatpush1.xpose.msra.mxu0 0.0
      %2073 = vmatprep.subr.mxu0 0.0
      %2074 = vmatpush1.xpose.msra.mxu0 0.0
      %2075 = vmatprep.subr.mxu0 0.0
      %2076 = vmatpush1.xpose.msra.mxu0 0.0
      %2077 = vmatprep.subr.mxu0 0.0
      %2078 = vmatpush1.xpose.msra.mxu0 0.0
      %2079 = vmatprep.subr.mxu0 0.0
      %2080 = vmatpush1.xpose.msra.mxu0 0.0
      %2081 = vmatprep.subr.mxu0 0.0
      %2082 = vmatpush1.xpose.msra.mxu0 0.0
      %2083 = vmatprep.subr.mxu0 0.0
      %2084 = vmatpush1.xpose.msra.mxu0 0.0
      %2085 = vmatprep.subr.mxu0 0.0
      %2086 = vmatpush1.xpose.msra.mxu0 0.0
      %2087 = vmatprep.subr.mxu0 0.0
      %2088 = vmatpush1.xpose.msra.mxu0 0.0
      %2089 = vmatprep.subr.mxu0 0.0
      %2090 = vmatpush1.xpose.msra.mxu0 0.0
      %2091 = vmatprep.mubr.f32.mxu0 0.0
      %2092 = vmatmul.mubr.f32.gmra.mrb[0].mxu0 %v2023
      %v2093 = vpop.f32.mrb[0].mxu0
      %v2094 = vadd.f32 0.0, %v2093
      %v2095 = vpop.f32.mrb[0].mxu0
      %2096 = vdwg.mxu0
      %v2097 = vmul.f32 %v2094, 0.35355338
      %v2098 = vsel %vm775, %v2097, -inf
      %2099 = vmax.xlane.f32.xlu0 %v2098
      %v2100 = vpop.xlane.xlu0 %2099
      %v2101 = vsub.f32 %v2097, %v2100
      %v2102 = vmul.f32 %v2101, 1.442695
      %v2103 = vpow.pop %v2102
      %v2104 = vsel %vm775, %v2103, 0.0
      %2105 = vadd.xlane.f32.xlu0 %v2104
      %v2106 = vpop.xlane.xlu0 %2105
      %v2107 = vrcp.pop %v2106
      %v2108 = vmul.f32 %v2103, %v2107
      %2109 = vrot.lane.b32.xlu0 %v1684, 80
      %v2110 = vpop.permute.xlu0 %2109
      %v2113 = vsel %vm775, %v2108, 0
      %2115 = vmatprep.subr.mxu0 0.0
      %2116 = vmatpush1.msra.mxu0 %v2110
      %2117 = vmatprep.subr.mxu0 0.0
      %2118 = vmatpush1.msra.mxu0 0.0
      %2119 = vmatprep.subr.mxu0 0.0
      %2120 = vmatpush1.msra.mxu0 0.0
      %2121 = vmatprep.subr.mxu0 0.0
      %2122 = vmatpush1.msra.mxu0 0.0
      %2123 = vmatprep.subr.mxu0 0.0
      %2124 = vmatpush1.msra.mxu0 0.0
      %2125 = vmatprep.subr.mxu0 0.0
      %2126 = vmatpush1.msra.mxu0 0.0
      %2127 = vmatprep.subr.mxu0 0.0
      %2128 = vmatpush1.msra.mxu0 0.0
      %2129 = vmatprep.subr.mxu0 0.0
      %2130 = vmatpush1.msra.mxu0 0.0
      %2131 = vmatprep.subr.mxu0 0.0
      %2132 = vmatpush1.msra.mxu0 0.0
      %2133 = vmatprep.subr.mxu0 0.0
      %2134 = vmatpush1.msra.mxu0 0.0
      %2135 = vmatprep.subr.mxu0 0.0
      %2136 = vmatpush1.msra.mxu0 0.0
      %2137 = vmatprep.subr.mxu0 0.0
      %2138 = vmatpush1.msra.mxu0 0.0
      %2139 = vmatprep.subr.mxu0 0.0
      %2140 = vmatpush1.msra.mxu0 0.0
      %2141 = vmatprep.subr.mxu0 0.0
      %2142 = vmatpush1.msra.mxu0 0.0
      %2143 = vmatprep.subr.mxu0 0.0
      %2144 = vmatpush1.msra.mxu0 0.0
      %2145 = vmatprep.subr.mxu0 0.0
      %2146 = vmatpush1.msra.mxu0 0.0
      %2147 = vmatprep.subr.mxu0 0.0
      %2148 = vmatpush1.msra.mxu0 0.0
      %2149 = vmatprep.subr.mxu0 0.0
      %2150 = vmatpush1.msra.mxu0 0.0
      %2151 = vmatprep.subr.mxu0 0.0
      %2152 = vmatpush1.msra.mxu0 0.0
      %2153 = vmatprep.subr.mxu0 0.0
      %2154 = vmatpush1.msra.mxu0 0.0
      %2155 = vmatprep.subr.mxu0 0.0
      %2156 = vmatpush1.msra.mxu0 0.0
      %2157 = vmatprep.subr.mxu0 0.0
      %2158 = vmatpush1.msra.mxu0 0.0
      %2159 = vmatprep.subr.mxu0 0.0
      %2160 = vmatpush1.msra.mxu0 0.0
      %2161 = vmatprep.subr.mxu0 0.0
      %2162 = vmatpush1.msra.mxu0 0.0
      %2163 = vmatprep.subr.mxu0 0.0
      %2164 = vmatpush1.msra.mxu0 0.0
      %2165 = vmatprep.subr.mxu0 0.0
      %2166 = vmatpush1.msra.mxu0 0.0
      %2167 = vmatprep.subr.mxu0 0.0
      %2168 = vmatpush1.msra.mxu0 0.0
      %2169 = vmatprep.subr.mxu0 0.0
      %2170 = vmatpush1.msra.mxu0 0.0
      %2171 = vmatprep.subr.mxu0 0.0
      %2172 = vmatpush1.msra.mxu0 0.0
      %2173 = vmatprep.subr.mxu0 0.0
      %2174 = vmatpush1.msra.mxu0 0.0
      %2175 = vmatprep.subr.mxu0 0.0
      %2176 = vmatpush1.msra.mxu0 0.0
      %2177 = vmatprep.subr.mxu0 0.0
      %2178 = vmatpush1.msra.mxu0 0.0
      %2179 = vmatprep.mubr.f32.mxu0 0.0
      %2180 = vmatmul.mubr.f32.gmra.mrb[0].mxu0 %v2113
      %v2181 = vpop.f32.mrb[0].mxu0
      %v2182 = vadd.f32 0.0, %v2181
      %v2183 = vpop.f32.mrb[0].mxu0
      %2184 = vdwg.mxu0
      %2185 = vrot.lane.b32.xlu0 %v1617, 104
      %v2186 = vpop.permute.xlu0 %2185
      %2187 = vrot.lane.b32.xlu0 %v1684, 104
      %v2188 = vpop.permute.xlu0 %2187
      %v2189 = vsel %vm775, %v2186, 0
      %v2191 = vsel %vm775, %v2188, 0
      %2193 = vmatprep.subr.mxu0 0.0
      %2194 = vmatpush1.xpose.msra.mxu0 %v2191
      %2195 = vmatprep.subr.mxu0 0.0
      %2196 = vmatpush1.xpose.msra.mxu0 0.0
      %2197 = vmatprep.subr.mxu0 0.0
      %2198 = vmatpush1.xpose.msra.mxu0 0.0
      %2199 = vmatprep.subr.mxu0 0.0
      %2200 = vmatpush1.xpose.msra.mxu0 0.0
      %2201 = vmatprep.subr.mxu0 0.0
      %2202 = vmatpush1.xpose.msra.mxu0 0.0
      %2203 = vmatprep.subr.mxu0 0.0
      %2204 = vmatpush1.xpose.msra.mxu0 0.0
      %2205 = vmatprep.subr.mxu0 0.0
      %2206 = vmatpush1.xpose.msra.mxu0 0.0
      %2207 = vmatprep.subr.mxu0 0.0
      %2208 = vmatpush1.xpose.msra.mxu0 0.0
      %2209 = vmatprep.subr.mxu0 0.0
      %2210 = vmatpush1.xpose.msra.mxu0 0.0
      %2211 = vmatprep.subr.mxu0 0.0
      %2212 = vmatpush1.xpose.msra.mxu0 0.0
      %2213 = vmatprep.subr.mxu0 0.0
      %2214 = vmatpush1.xpose.msra.mxu0 0.0
      %2215 = vmatprep.subr.mxu0 0.0
      %2216 = vmatpush1.xpose.msra.mxu0 0.0
      %2217 = vmatprep.subr.mxu0 0.0
      %2218 = vmatpush1.xpose.msra.mxu0 0.0
      %2219 = vmatprep.subr.mxu0 0.0
      %2220 = vmatpush1.xpose.msra.mxu0 0.0
      %2221 = vmatprep.subr.mxu0 0.0
      %2222 = vmatpush1.xpose.msra.mxu0 0.0
      %2223 = vmatprep.subr.mxu0 0.0
      %2224 = vmatpush1.xpose.msra.mxu0 0.0
      %2225 = vmatprep.subr.mxu0 0.0
      %2226 = vmatpush1.xpose.msra.mxu0 0.0
      %2227 = vmatprep.subr.mxu0 0.0
      %2228 = vmatpush1.xpose.msra.mxu0 0.0
      %2229 = vmatprep.subr.mxu0 0.0
      %2230 = vmatpush1.xpose.msra.mxu0 0.0
      %2231 = vmatprep.subr.mxu0 0.0
      %2232 = vmatpush1.xpose.msra.mxu0 0.0
      %2233 = vmatprep.subr.mxu0 0.0
      %2234 = vmatpush1.xpose.msra.mxu0 0.0
      %2235 = vmatprep.subr.mxu0 0.0
      %2236 = vmatpush1.xpose.msra.mxu0 0.0
      %2237 = vmatprep.subr.mxu0 0.0
      %2238 = vmatpush1.xpose.msra.mxu0 0.0
      %2239 = vmatprep.subr.mxu0 0.0
      %2240 = vmatpush1.xpose.msra.mxu0 0.0
      %2241 = vmatprep.subr.mxu0 0.0
      %2242 = vmatpush1.xpose.msra.mxu0 0.0
      %2243 = vmatprep.subr.mxu0 0.0
      %2244 = vmatpush1.xpose.msra.mxu0 0.0
      %2245 = vmatprep.subr.mxu0 0.0
      %2246 = vmatpush1.xpose.msra.mxu0 0.0
      %2247 = vmatprep.subr.mxu0 0.0
      %2248 = vmatpush1.xpose.msra.mxu0 0.0
      %2249 = vmatprep.subr.mxu0 0.0
      %2250 = vmatpush1.xpose.msra.mxu0 0.0
      %2251 = vmatprep.subr.mxu0 0.0
      %2252 = vmatpush1.xpose.msra.mxu0 0.0
      %2253 = vmatprep.subr.mxu0 0.0
      %2254 = vmatpush1.xpose.msra.mxu0 0.0
      %2255 = vmatprep.subr.mxu0 0.0
      %2256 = vmatpush1.xpose.msra.mxu0 0.0
      %2257 = vmatprep.mubr.f32.mxu0 0.0
      %2258 = vmatmul.mubr.f32.gmra.mrb[0].mxu0 %v2189
      %v2259 = vpop.f32.mrb[0].mxu0
      %v2260 = vadd.f32 0.0, %v2259
      %v2261 = vpop.f32.mrb[0].mxu0
      %2262 = vdwg.mxu0
      %v2263 = vmul.f32 %v2260, 0.35355338
      %v2264 = vsel %vm775, %v2263, -inf
      %2265 = vmax.xlane.f32.xlu0 %v2264
      %v2266 = vpop.xlane.xlu0 %2265
      %v2267 = vsub.f32 %v2263, %v2266
      %v2268 = vmul.f32 %v2267, 1.442695
      %v2269 = vpow.pop %v2268
      %v2270 = vsel %vm775, %v2269, 0.0
      %2271 = vadd.xlane.f32.xlu0 %v2270
      %v2272 = vpop.xlane.xlu0 %2271
      %v2273 = vrcp.pop %v2272
      %v2274 = vmul.f32 %v2269, %v2273
      %2275 = vrot.lane.b32.xlu0 %v1684, 72
      %v2276 = vpop.permute.xlu0 %2275
      %v2279 = vsel %vm775, %v2274, 0
      %2281 = vmatprep.subr.mxu0 0.0
      %2282 = vmatpush1.msra.mxu0 %v2276
      %2283 = vmatprep.subr.mxu0 0.0
      %2284 = vmatpush1.msra.mxu0 0.0
      %2285 = vmatprep.subr.mxu0 0.0
      %2286 = vmatpush1.msra.mxu0 0.0
      %2287 = vmatprep.subr.mxu0 0.0
      %2288 = vmatpush1.msra.mxu0 0.0
      %2289 = vmatprep.subr.mxu0 0.0
      %2290 = vmatpush1.msra.mxu0 0.0
      %2291 = vmatprep.subr.mxu0 0.0
      %2292 = vmatpush1.msra.mxu0 0.0
      %2293 = vmatprep.subr.mxu0 0.0
      %2294 = vmatpush1.msra.mxu0 0.0
      %2295 = vmatprep.subr.mxu0 0.0
      %2296 = vmatpush1.msra.mxu0 0.0
      %2297 = vmatprep.subr.mxu0 0.0
      %2298 = vmatpush1.msra.mxu0 0.0
      %2299 = vmatprep.subr.mxu0 0.0
      %2300 = vmatpush1.msra.mxu0 0.0
      %2301 = vmatprep.subr.mxu0 0.0
      %2302 = vmatpush1.msra.mxu0 0.0
      %2303 = vmatprep.subr.mxu0 0.0
      %2304 = vmatpush1.msra.mxu0 0.0
      %2305 = vmatprep.subr.mxu0 0.0
      %2306 = vmatpush1.msra.mxu0 0.0
      %2307 = vmatprep.subr.mxu0 0.0
      %2308 = vmatpush1.msra.mxu0 0.0
      %2309 = vmatprep.subr.mxu0 0.0
      %2310 = vmatpush1.msra.mxu0 0.0
      %2311 = vmatprep.subr.mxu0 0.0
      %2312 = vmatpush1.msra.mxu0 0.0
      %2313 = vmatprep.subr.mxu0 0.0
      %2314 = vmatpush1.msra.mxu0 0.0
      %2315 = vmatprep.subr.mxu0 0.0
      %2316 = vmatpush1.msra.mxu0 0.0
      %2317 = vmatprep.subr.mxu0 0.0
      %2318 = vmatpush1.msra.mxu0 0.0
      %2319 = vmatprep.subr.mxu0 0.0
      %2320 = vmatpush1.msra.mxu0 0.0
      %2321 = vmatprep.subr.mxu0 0.0
      %2322 = vmatpush1.msra.mxu0 0.0
      %2323 = vmatprep.subr.mxu0 0.0
      %2324 = vmatpush1.msra.mxu0 0.0
      %2325 = vmatprep.subr.mxu0 0.0
      %2326 = vmatpush1.msra.mxu0 0.0
      %2327 = vmatprep.subr.mxu0 0.0
      %2328 = vmatpush1.msra.mxu0 0.0
      %2329 = vmatprep.subr.mxu0 0.0
      %2330 = vmatpush1.msra.mxu0 0.0
      %2331 = vmatprep.subr.mxu0 0.0
      %2332 = vmatpush1.msra.mxu0 0.0
      %2333 = vmatprep.subr.mxu0 0.0
      %2334 = vmatpush1.msra.mxu0 0.0
      %2335 = vmatprep.subr.mxu0 0.0
      %2336 = vmatpush1.msra.mxu0 0.0
      %2337 = vmatprep.subr.mxu0 0.0
      %2338 = vmatpush1.msra.mxu0 0.0
      %2339 = vmatprep.subr.mxu0 0.0
      %2340 = vmatpush1.msra.mxu0 0.0
      %2341 = vmatprep.subr.mxu0 0.0
      %2342 = vmatpush1.msra.mxu0 0.0
      %2343 = vmatprep.subr.mxu0 0.0
      %2344 = vmatpush1.msra.mxu0 0.0
      %2345 = vmatprep.mubr.f32.mxu0 0.0
      %2346 = vmatmul.mubr.f32.gmra.mrb[0].mxu0 %v2279
      %v2347 = vpop.f32.mrb[0].mxu0
      %v2348 = vadd.f32 0.0, %v2347
      %v2349 = vpop.f32.mrb[0].mxu0
      %2350 = vdwg.mxu0
      %2352 = vrot.lane.b32.xlu0 %v2016, 8
      %v2353 = vpop.permute.xlu0 %2352
      %2356 = vrot.lane.b32.xlu0 %v2182, 16
      %v2357 = vpop.permute.xlu0 %2356
      %2360 = vrot.lane.b32.xlu0 %v2348, 24
      %v2361 = vpop.permute.xlu0 %2360
      %v2363 = vsel %vm775, %v1850, %v2353
      %v2364 = vsel %vm1453, %v2363, %v2357
      %v2365 = vsel %vm1455, %v2364, %v2361
      %v2366 = vpack.c.bf16 %v2365, %v2365
      %v2367 = vld [vmem:[%s12] sm:$0xf]
      %v2368 = vld [vmem:[%s12 + $0x4] sm:$0xf]
      %v2369 = vld [vmem:[%s12 + $0x8] sm:$0xf]
      %v2370 = vld [vmem:[%s12 + $0xc] sm:$0xf]
      %v2371 = vld [vmem:[%s13] sm:$0x1]
      %v2373 = vlaneseq
      %v2374 = vshrl.u32 %v2373, 7
      %v2375 = vsub.s32 0, %v2374
      %v2376 = vrot.slane %v2371, %v2375
      %v2382 = vunpack.c.l.b16 %v2367
      %v2383 = vunpack.c.l.b16 %v2368
      %v2384 = vunpack.c.l.b16 %v2369
      %v2385 = vunpack.c.l.b16 %v2370
      %v2386 = vpack.c.b16 %v2383, %v2382
      %v2387 = vpack.c.b16 %v2385, %v2384
      %v2391 = vsel %vm723, %v2366, 0
      %2393 = vmatprep.subr.bf16.mxu0 0
      %2394 = vmatpush1.bf16.msra.mxu0 %v2386
      %2395 = vmatprep.subr.bf16.mxu0 0
      %2396 = vmatpush1.bf16.msra.mxu0 %v2387
      %2397 = vmatprep.subr.bf16.mxu0 0
      %2398 = vmatpush1.bf16.msra.mxu0 0
      %2399 = vmatprep.subr.bf16.mxu0 0
      %2400 = vmatpush1.bf16.msra.mxu0 0
      %2401 = vmatprep.subr.bf16.mxu0 0
      %2402 = vmatpush1.bf16.msra.mxu0 0
      %2403 = vmatprep.subr.bf16.mxu0 0
      %2404 = vmatpush1.bf16.msra.mxu0 0
      %2405 = vmatprep.subr.bf16.mxu0 0
      %2406 = vmatpush1.bf16.msra.mxu0 0
      %2407 = vmatprep.subr.bf16.mxu0 0
      %2408 = vmatpush1.bf16.msra.mxu0 0
      %2409 = vmatprep.subr.bf16.mxu0 0
      %2410 = vmatpush1.bf16.msra.mxu0 0
      %2411 = vmatprep.subr.bf16.mxu0 0
      %2412 = vmatpush1.bf16.msra.mxu0 0
      %2413 = vmatprep.subr.bf16.mxu0 0
      %2414 = vmatpush1.bf16.msra.mxu0 0
      %2415 = vmatprep.subr.bf16.mxu0 0
      %2416 = vmatpush1.bf16.msra.mxu0 0
      %2417 = vmatprep.subr.bf16.mxu0 0
      %2418 = vmatpush1.bf16.msra.mxu0 0
      %2419 = vmatprep.subr.bf16.mxu0 0
      %2420 = vmatpush1.bf16.msra.mxu0 0
      %2421 = vmatprep.subr.bf16.mxu0 0
      %2422 = vmatpush1.bf16.msra.mxu0 0
      %2423 = vmatprep.subr.bf16.mxu0 0
      %2424 = vmatpush1.bf16.msra.mxu0 0
      %2425 = vmatprep.mubr.bf16.mxu0 0
      %2426 = vmatmul.mubr.bf16.gmra.mrb[0].mxu0 %v2391
      %v2427 = vpop.f32.mrb[0].mxu0
      %v2428 = vadd.f32 %v2376, %v2427
      %v2429 = vpop.f32.mrb[0].mxu0
      %v2430 = vpop.f32.mrb[0].mxu0
      %v2431 = vpop.f32.mrb[0].mxu0
      %2432 = vdwg.mxu0
      %v2433 = vadd.f32 %v2428, %v1554
      %v2434 = vld [vmem:[%s14] sm:$0x1]
      %v2435 = vld [vmem:[%s15] sm:$0x1]
      %v2436 = vsel %vm723, %v2433, 0.0
      %2437 = vadd.xlane.f32.xlu0 %v2436
      %v2438 = vpop.xlane.xlu0 %2437
      %v2439 = vmul.f32 %v2438, %v1530
      %v2440 = vsub.f32 %v2433, %v2439
      %v2441 = vmul.f32 %v2440, %v2440
      %v2442 = vsel %vm723, %v2441, 0.0
      %2443 = vadd.xlane.f32.xlu0 %v2442
      %v2444 = vpop.xlane.xlu0 %2443
      %v2445 = vmul.f32 %v2444, %v1530
      %v2446 = vadd.f32 %v2445, 1e-05
      %v2447 = vrsqrt.pop %v2446
      %v2448 = vmul.f32 %v2440, %v2447
      %v2450 = vlaneseq
      %v2451 = vshrl.u32 %v2450, 7
      %v2452 = vsub.s32 0, %v2451
      %v2453 = vrot.slane %v2434, %v2452
      %v2455 = vmul.f32 %v2448, %v2453
      %v2457 = vlaneseq
      %v2458 = vshrl.u32 %v2457, 7
      %v2459 = vsub.s32 0, %v2458
      %v2460 = vrot.slane %v2435, %v2459
      %v2462 = vadd.f32 %v2455, %v2460
      %v2463 = vpack.c.bf16 %v2462, %v2462
      %v2464 = vld [vmem:[%s16] sm:$0xf]
      %v2465 = vld [vmem:[%s16 + $0x4] sm:$0xf]
      %v2466 = vld [vmem:[%s16 + $0x8] sm:$0xf]
      %v2467 = vld [vmem:[%s16 + $0xc] sm:$0xf]
      %v2468 = vld [vmem:[%s17] sm:$0x1]
      %v2470 = vlaneseq
      %v2471 = vshrl.u32 %v2470, 7
      %v2472 = vsub.s32 0, %v2471
      %v2473 = vrot.slane %v2468, %v2472
      %v2479 = vunpack.c.l.b16 %v2464
      %v2480 = vunpack.c.l.b16 %v2465
      %v2481 = vunpack.c.l.b16 %v2466
      %v2482 = vunpack.c.l.b16 %v2467
      %v2483 = vpack.c.b16 %v2480, %v2479
      %v2484 = vpack.c.b16 %v2482, %v2481
      %v2488 = vsel %vm723, %v2463, 0
      %2490 = vmatprep.subr.bf16.mxu0 0
      %2491 = vmatpush1.bf16.msra.mxu0 %v2483
      %2492 = vmatprep.subr.bf16.mxu0 0
      %2493 = vmatpush1.bf16.msra.mxu0 %v2484
      %2494 = vmatprep.subr.bf16.mxu0 0
      %2495 = vmatpush1.bf16.msra.mxu0 0
      %2496 = vmatprep.subr.bf16.mxu0 0
      %2497 = vmatpush1.bf16.msra.mxu0 0
      %2498 = vmatprep.subr.bf16.mxu0 0
      %2499 = vmatpush1.bf16.msra.mxu0 0
      %2500 = vmatprep.subr.bf16.mxu0 0
      %2501 = vmatpush1.bf16.msra.mxu0 0
      %2502 = vmatprep.subr.bf16.mxu0 0
      %2503 = vmatpush1.bf16.msra.mxu0 0
      %2504 = vmatprep.subr.bf16.mxu0 0
      %2505 = vmatpush1.bf16.msra.mxu0 0
      %2506 = vmatprep.subr.bf16.mxu0 0
      %2507 = vmatpush1.bf16.msra.mxu0 0
      %2508 = vmatprep.subr.bf16.mxu0 0
      %2509 = vmatpush1.bf16.msra.mxu0 0
      %2510 = vmatprep.subr.bf16.mxu0 0
      %2511 = vmatpush1.bf16.msra.mxu0 0
      %2512 = vmatprep.subr.bf16.mxu0 0
      %2513 = vmatpush1.bf16.msra.mxu0 0
      %2514 = vmatprep.subr.bf16.mxu0 0
      %2515 = vmatpush1.bf16.msra.mxu0 0
      %2516 = vmatprep.subr.bf16.mxu0 0
      %2517 = vmatpush1.bf16.msra.mxu0 0
      %2518 = vmatprep.subr.bf16.mxu0 0
      %2519 = vmatpush1.bf16.msra.mxu0 0
      %2520 = vmatprep.subr.bf16.mxu0 0
      %2521 = vmatpush1.bf16.msra.mxu0 0
      %2522 = vmatprep.mubr.bf16.mxu0 0
      %2523 = vmatmul.mubr.bf16.gmra.mrb[0].mxu0 %v2488
      %v2524 = vpop.f32.mrb[0].mxu0
      %v2525 = vadd.f32 %v2473, %v2524
      %v2526 = vpop.f32.mrb[0].mxu0
      %v2527 = vpop.f32.mrb[0].mxu0
      %v2528 = vpop.f32.mrb[0].mxu0
      %2529 = vdwg.mxu0
      %v2530 = vmax.f32 %v2525, 0.0
      %v2531 = vpack.c.bf16 %v2530, %v2530
      %v2532 = vld [vmem:[%s18] sm:$0xf]
      %v2533 = vld [vmem:[%s18 + $0x4] sm:$0xf]
      %v2534 = vld [vmem:[%s18 + $0x8] sm:$0xf]
      %v2535 = vld [vmem:[%s18 + $0xc] sm:$0xf]
      %v2536 = vld [vmem:[%s18 + $0x10] sm:$0xf]
      %v2537 = vld [vmem:[%s18 + $0x14] sm:$0xf]
      %v2538 = vld [vmem:[%s18 + $0x18] sm:$0xf]
      %v2539 = vld [vmem:[%s18 + $0x1c] sm:$0xf]
      %v2540 = vld [vmem:[%s18 + $0x20] sm:$0xf]
      %v2541 = vld [vmem:[%s18 + $0x24] sm:$0xf]
      %v2542 = vld [vmem:[%s18 + $0x28] sm:$0xf]
      %v2543 = vld [vmem:[%s18 + $0x2c] sm:$0xf]
      %v2544 = vld [vmem:[%s18 + $0x30] sm:$0xf]
      %v2545 = vld [vmem:[%s18 + $0x34] sm:$0xf]
      %v2546 = vld [vmem:[%s18 + $0x38] sm:$0xf]
      %v2547 = vld [vmem:[%s18 + $0x3c] sm:$0xf]
      %v2548 = vld [vmem:[%s19] sm:$0x1]
      %v2550 = vlaneseq
      %v2551 = vshrl.u32 %v2550, 7
      %v2552 = vsub.s32 0, %v2551
      %v2553 = vrot.slane %v2548, %v2552
      %v2571 = vunpack.c.l.b16 %v2532
      %v2572 = vunpack.c.l.b16 %v2533
      %v2573 = vunpack.c.l.b16 %v2534
      %v2574 = vunpack.c.l.b16 %v2535
      %v2575 = vunpack.c.l.b16 %v2536
      %v2576 = vunpack.c.l.b16 %v2537
      %v2577 = vunpack.c.l.b16 %v2538
      %v2578 = vunpack.c.l.b16 %v2539
      %v2579 = vunpack.c.l.b16 %v2540
      %v2580 = vunpack.c.l.b16 %v2541
      %v2581 = vunpack.c.l.b16 %v2542
      %v2582 = vunpack.c.l.b16 %v2543
      %v2583 = vunpack.c.l.b16 %v2544
      %v2584 = vunpack.c.l.b16 %v2545
      %v2585 = vunpack.c.l.b16 %v2546
      %v2586 = vunpack.c.l.b16 %v2547
      %v2587 = vpack.c.b16 %v2572, %v2571
      %v2588 = vpack.c.b16 %v2574, %v2573
      %v2589 = vpack.c.b16 %v2576, %v2575
      %v2590 = vpack.c.b16 %v2578, %v2577
      %v2591 = vpack.c.b16 %v2580, %v2579
      %v2592 = vpack.c.b16 %v2582, %v2581
      %v2593 = vpack.c.b16 %v2584, %v2583
      %v2594 = vpack.c.b16 %v2586, %v2585
      %2603 = vmatprep.subr.bf16.mxu0 0
      %2604 = vmatpush1.bf16.msra.mxu0 %v2587
      %2605 = vmatprep.subr.bf16.mxu0 0
      %2606 = vmatpush1.bf16.msra.mxu0 %v2588
      %2607 = vmatprep.subr.bf16.mxu0 0
      %2608 = vmatpush1.bf16.msra.mxu0 %v2589
      %2609 = vmatprep.subr.bf16.mxu0 0
      %2610 = vmatpush1.bf16.msra.mxu0 %v2590
      %2611 = vmatprep.subr.bf16.mxu0 0
      %2612 = vmatpush1.bf16.msra.mxu0 %v2591
      %2613 = vmatprep.subr.bf16.mxu0 0
      %2614 = vmatpush1.bf16.msra.mxu0 %v2592
      %2615 = vmatprep.subr.bf16.mxu0 0
      %2616 = vmatpush1.bf16.msra.mxu0 %v2593
      %2617 = vmatprep.subr.bf16.mxu0 0
      %2618 = vmatpush1.bf16.msra.mxu0 %v2594
      %2619 = vmatprep.subr.bf16.mxu0 0
      %2620 = vmatpush1.bf16.msra.mxu0 0
      %2621 = vmatprep.subr.bf16.mxu0 0
      %2622 = vmatpush1.bf16.msra.mxu0 0
      %2623 = vmatprep.subr.bf16.mxu0 0
      %2624 = vmatpush1.bf16.msra.mxu0 0
      %2625 = vmatprep.subr.bf16.mxu0 0
      %2626 = vmatpush1.bf16.msra.mxu0 0
      %2627 = vmatprep.subr.bf16.mxu0 0
      %2628 = vmatpush1.bf16.msra.mxu0 0
      %2629 = vmatprep.subr.bf16.mxu0 0
      %2630 = vmatpush1.bf16.msra.mxu0 0
      %2631 = vmatprep.subr.bf16.mxu0 0
      %2632 = vmatpush1.bf16.msra.mxu0 0
      %2633 = vmatprep.subr.bf16.mxu0 0
      %2634 = vmatpush1.bf16.msra.mxu0 0
      %2635 = vmatprep.mubr.bf16.mxu0 0
      %2636 = vmatmul.mubr.bf16.gmra.mrb[0].mxu0 %v2531
      %v2637 = vpop.f32.mrb[0].mxu0
      %v2638 = vadd.f32 %v2553, %v2637
      %v2639 = vpop.f32.mrb[0].mxu0
      %v2640 = vpop.f32.mrb[0].mxu0
      %v2641 = vpop.f32.mrb[0].mxu0
      %2642 = vdwg.mxu0
      %v2643 = vadd.f32 %v2638, %v2462
      %v2644 = vld [vmem:[%s20] sm:$0x1]
      %v2645 = vld [vmem:[%s21] sm:$0x1]
      %v2646 = vsel %vm723, %v2643, 0.0
      %2647 = vadd.xlane.f32.xlu0 %v2646
      %v2648 = vpop.xlane.xlu0 %2647
      %v2649 = vmul.f32 %v2648, %v1530
      %v2650 = vsub.f32 %v2643, %v2649
      %v2651 = vmul.f32 %v2650, %v2650
      %v2652 = vsel %vm723, %v2651, 0.0
      %2653 = vadd.xlane.f32.xlu0 %v2652
      %v2654 = vpop.xlane.xlu0 %2653
      %v2655 = vmul.f32 %v2654, %v1530
      %v2656 = vadd.f32 %v2655, 1e-05
      %v2657 = vrsqrt.pop %v2656
      %v2658 = vmul.f32 %v2650, %v2657
      %v2660 = vlaneseq
      %v2661 = vshrl.u32 %v2660, 7
      %v2662 = vsub.s32 0, %v2661
      %v2663 = vrot.slane %v2644, %v2662
      %v2665 = vmul.f32 %v2658, %v2663
      %v2667 = vlaneseq
      %v2668 = vshrl.u32 %v2667, 7
      %v2669 = vsub.s32 0, %v2668
      %v2670 = vrot.slane %v2645, %v2669
      %v2672 = vadd.f32 %v2665, %v2670
      %2673 = vst.msk [vmem:[%s695] sm:$0xff] %vm723, %v2672
      %p2674 = scmp.lt.s32.totalorder %s33, 1
      %s2675 = scalar_select %p2674, %s33, 1
      %s2676 = smul.addr %s2675, 8
      %s2677 = scalar_lea.vmem %s22, %s2676
      // Predicated region
      $region109: #{decoder_forward.3} parent=107 // pred_check
        %p2678 = pneg %p523
      $region110: #{decoder_forward.3} parent=107 // pred_check_branch
        %2680 = sbr.rel (%p2678) target = $region112
      $region111: #{decoder_forward.3} parent=107 // pred_region
        _
      $region112: #{decoder_forward.3} parent=107 // pred_fallthru
        _
    $region108: #{decoder_forward.3} parent=5 // pred_fallthru
      _
    %p2681 = scmp.le.s32.totalorder 2, %s28
    // Predicated region
    $region113: #{decoder_forward.3} parent=5 // pred_check
      %p2682 = pneg %p2681
    $region114: #{decoder_forward.3} parent=5 // pred_check_branch
      %2684 = sbr.rel (%p2682) target = $region116
    $region115: #{decoder_forward.3} parent=5 // pred_region
      %s2685 = ssub.s32 %s28, 2
      // Predicated region
      $region117: #{decoder_forward.3} parent=115 // pred_check
        %p2686 = pneg %p529
      $region118: #{decoder_forward.3} parent=115 // pred_check_branch
        %2688 = sbr.rel (%p2686) target = $region120
      $region119: #{decoder_forward.3} parent=115 // pred_region
        %p2689 = scmp.lt.s32.totalorder %s34, 1
        %s2690 = scalar_select %p2689, %s34, 1
        %s2691 = smul.addr %s2690, 8
        %s2692 = scalar_lea.vmem %s22, %s2691
      $region120: #{decoder_forward.3} parent=115 // pred_fallthru
        _
    $region116: #{decoder_forward.3} parent=5 // pred_fallthru
      _
  $region6: #{decoder_forward.3} parent=0 // loop_footer
    %s32 = sadd.s32 1, %s28
  $region7: #{decoder_forward.3} parent=0 // loop_footer_branch
    %27 = sbr.rel target = $region3
  $region8: #{decoder_forward.3} parent=0 // loop_exit
    _

// kernel: decoder_forward.4
$region0: #{decoder_forward.4}
  #allocation0 [shape = 'u32[]', space=smem, size = 0x4, offset = 0x4, fixed_abs, tag = 'smem constant byte address 0x4 - core index']
  #allocation1 [shape = 'u32[144,128]{1,0:T(1,128)}', space=vmem, size = 0x12000, scoped, tag = 'internal scratch']
  %s0 = inlined_call_operand.vmem [shape: f32[2,8,32], index: 0, kind: input, shape index: {}]
  %s1 = inlined_call_operand.vmem [shape: f32[2,8,32], index: 1, kind: input, shape index: {}]
  %s2 = inlined_call_operand.vmem [shape: bf16[32,96], index: 2, kind: input, shape index: {}]
  %s3 = inlined_call_operand.vmem [shape: f32[1,96], index: 3, kind: input, shape index: {}]
  %s4 = inlined_call_operand.vmem [shape: bf16[32,32], index: 4, kind: input, shape index: {}]
  %s5 = inlined_call_operand.vmem [shape: f32[1,32], index: 5, kind: input, shape index: {}]
  %s6 = inlined_call_operand.vmem [shape: f32[1,32], index: 6, kind: input, shape index: {}]
  %s7 = inlined_call_operand.vmem [shape: f32[1,32], index: 7, kind: input, shape index: {}]
  %s8 = inlined_call_operand.vmem [shape: bf16[32,32], index: 8, kind: input, shape index: {}]
  %s9 = inlined_call_operand.vmem [shape: f32[1,32], index: 9, kind: input, shape index: {}]
  %s10 = inlined_call_operand.vmem [shape: bf16[32,64], index: 10, kind: input, shape index: {}]
  %s11 = inlined_call_operand.vmem [shape: f32[1,64], index: 11, kind: input, shape index: {}]
  %s12 = inlined_call_operand.vmem [shape: bf16[32,32], index: 12, kind: input, shape index: {}]
  %s13 = inlined_call_operand.vmem [shape: f32[1,32], index: 13, kind: input, shape index: {}]
  %s14 = inlined_call_operand.vmem [shape: f32[1,32], index: 14, kind: input, shape index: {}]
  %s15 = inlined_call_operand.vmem [shape: f32[1,32], index: 15, kind: input, shape index: {}]
  %s16 = inlined_call_operand.vmem [shape: bf16[32,128], index: 16, kind: input, shape index: {}]
  %s17 = inlined_call_operand.vmem [shape: f32[1,128], index: 17, kind: input, shape index: {}]
  %s18 = inlined_call_operand.vmem [shape: bf16[128,32], index: 18, kind: input, shape index: {}]
  %s19 = inlined_call_operand.vmem [shape: f32[1,32], index: 19, kind: input, shape index: {}]
  %s20 = inlined_call_operand.hbm [shape: f32[1,32], index: 20, kind: input, shape index: {}]
  %s21 = inlined_call_operand.hbm [shape: f32[1,32], index: 21, kind: input, shape index: {}]
  %s22 = inlined_call_operand.vmem [shape: f32[2,8,32], index: 22, kind: output, shape index: {}]
  %s23 = sld [smem:[#allocation0]]
  $region129: #{decoder_forward.4} parent=0
    _
  %s25 = ssub.s32 1, %s23
  %s26 = scalar_select 0, %s25, %s23
  $region1: #{decoder_forward.4} parent=0
    #allocation2 [shape = 'u8[512]{0}', space=vmem, size = 0x400, scoped, tag = 'input window, operand 20, single buffered']
    #allocation3 [shape = 's32[2]{0}', space=sflag, size = 0x8, scoped, tag = 'scoped memory for decoder_forward.4']
    #allocation4 [shape = 'u8[512]{0}', space=vmem, size = 0x400, scoped, tag = 'input window, operand 21, single buffered']
    #allocation5 [shape = 's32[1]{0}', space=sflag, size = 0x4, scoped, tag = 'scoped memory for decoder_forward.4']
    %27 = vsyncpa [#allocation3], 0
    %28 = vsyncpa [#allocation5], 0
    loop: start=0, step=1, limit=4
    $region2: #{decoder_forward.4} parent=1 // loop_pre_header
      _
    $region3: #{decoder_forward.4} parent=1 // loop_header
      %s30 = sphi 0, %s34
      %p31 = scmp.ge.s32.totalorder %s30, 4
      %s40 = sphi 0, %s42
      %s43 = sphi 0, %s40
      %s44 = sphi 0, %s43
      %s60 = sphi 0, %s44
      %s66 = sphi 0, %s68
      %s69 = sphi 0, %s66
      %s70 = sphi 0, %s69
      %s86 = sphi 0, %s70
      %s90 = sphi 0, %s90
      %s92 = sphi 0, %s90
      %s93 = sphi 0, %s92
      %s107 = sphi 0, %s93
      %s111 = sphi 0, %s111
      %s113 = sphi 0, %s111
      %s114 = sphi 0, %s113
      %s128 = sphi 0, %s114
      %s132 = sphi 0, %s132
      %s134 = sphi 0, %s132
      %s135 = sphi 0, %s134
      %s149 = sphi 0, %s135
      %s153 = sphi 0, %s153
      %s155 = sphi 0, %s153
      %s156 = sphi 0, %s155
      %s170 = sphi 0, %s156
      %s174 = sphi 0, %s174
      %s176 = sphi 0, %s174
      %s177 = sphi 0, %s176
      %s191 = sphi 0, %s177
      %s195 = sphi 0, %s195
      %s197 = sphi 0, %s195
      %s198 = sphi 0, %s197
      %s212 = sphi 0, %s198
      %s216 = sphi 0, %s216
      %s218 = sphi 0, %s216
      %s219 = sphi 0, %s218
      %s233 = sphi 0, %s219
      %s237 = sphi 0, %s237
      %s239 = sphi 0, %s237
      %s240 = sphi 0, %s239
      %s254 = sphi 0, %s240
      %s258 = sphi 0, %s258
      %s260 = sphi 0, %s258
      %s261 = sphi 0, %s260
      %s275 = sphi 0, %s261
      %s279 = sphi 0, %s279
      %s281 = sphi 0, %s279
      %s282 = sphi 0, %s281
      %s296 = sphi 0, %s282
      %s300 = sphi 0, %s300
      %s302 = sphi 0, %s300
      %s303 = sphi 0, %s302
      %s317 = sphi 0, %s303
      %s321 = sphi 0, %s321
      %s323 = sphi 0, %s321
      %s324 = sphi 0, %s323
      %s338 = sphi 0, %s324
      %s342 = sphi 0, %s342
      %s344 = sphi 0, %s342
      %s345 = sphi 0, %s344
      %s359 = sphi 0, %s345
      %s363 = sphi 0, %s363
      %s365 = sphi 0, %s363
      %s366 = sphi 0, %s365
      %s380 = sphi 0, %s366
      %s384 = sphi 0, %s384
      %s386 = sphi 0, %s384
      %s387 = sphi 0, %s386
      %s401 = sphi 0, %s387
      %s405 = sphi 0, %s405
      %s407 = sphi 0, %s405
      %s408 = sphi 0, %s407
      %s422 = sphi 0, %s408
      %s426 = sphi 0, %s426
      %s428 = sphi 0, %s426
      %s429 = sphi 0, %s428
      %s443 = sphi 0, %s429
      %s447 = sphi 0, %s447
      %s449 = sphi 0, %s447
      %s450 = sphi 0, %s449
      %s464 = sphi 0, %s450
      %s468 = sphi 0, %s468
      %s470 = sphi 0, %s468
      %s471 = sphi 0, %s470
      %s485 = sphi 0, %s471
      %s489 = sphi 0, %s489
      %s491 = sphi 0, %s489
      %s492 = sphi 0, %s491
      %s506 = sphi 0, %s492
      %s512 = sphi 0, %s514
      %s515 = sphi 0, %s512
      %s516 = sphi 0, %s515
      %s532 = sphi 0, %s516
    $region4: #{decoder_forward.4} parent=1 // loop_header_branch
      %33 = sbr.rel (%p31) target = $region8
    $region5: #{decoder_forward.4} parent=1 // loop_body
      %s35 = ssub.s32 %s30, 1
      %s36 = ssub.s32 %s30, 2
      %s37 = sadd.s32 %s30, 1
      %s38 = ssub.s32 %s30, %s37
      %p39 = scmp.eq.s32.totalorder %s38, 0
      %s41 = sadd.s32 %s40, 1
      %s42 = scalar_select %p39, %s40, %s41
      %p45 = pneg %p39
      %p46 = scmp.eq.s32.totalorder %s30, 1
      %p47 = por %p45, %p46
      %p48 = scmp.ne.s32.totalorder %s40, %s43
      %p49 = scmp.eq.s32.totalorder %s30, 0
      %p50 = por %p48, %p49
      %p51 = scmp.ne.s32.totalorder %s40, %s43
      %p52 = scmp.eq.s32.totalorder %s35, 1
      %p53 = por %p51, %p52
      %p54 = scmp.ne.s32.totalorder %s43, %s44
      %p55 = scmp.eq.s32.totalorder %s35, 0
      %p56 = por %p54, %p55
      %p57 = scmp.ne.s32.totalorder %s43, %s44
      %p58 = scmp.eq.s32.totalorder %s36, 1
      %p59 = por %p57, %p58
      %p61 = scmp.ne.s32.totalorder %s44, %s60
      %p62 = scmp.eq.s32.totalorder %s36, 0
      %p63 = por %p61, %p62
      %s64 = ssub.s32 %s30, %s37
      %p65 = scmp.eq.s32.totalorder %s64, 0
      %s67 = sadd.s32 %s66, 1
      %s68 = scalar_select %p65, %s66, %s67
      %p71 = pneg %p65
      %p72 = scmp.eq.s32.totalorder %s30, 1
      %p73 = por %p71, %p72
      %p74 = scmp.ne.s32.totalorder %s66, %s69
      %p75 = scmp.eq.s32.totalorder %s30, 0
      %p76 = por %p74, %p75
      %p77 = scmp.ne.s32.totalorder %s66, %s69
      %p78 = scmp.eq.s32.totalorder %s35, 1
      %p79 = por %p77, %p78
      %p80 = scmp.ne.s32.totalorder %s69, %s70
      %p81 = scmp.eq.s32.totalorder %s35, 0
      %p82 = por %p80, %p81
      %p83 = scmp.ne.s32.totalorder %s69, %s70
      %p84 = scmp.eq.s32.totalorder %s36, 1
      %p85 = por %p83, %p84
      %p87 = scmp.ne.s32.totalorder %s70, %s86
      %p88 = scmp.eq.s32.totalorder %s36, 0
      %p89 = por %p87, %p88
      %s91 = sadd.s32 %s90, 1
      %p94 = scmp.eq.s32.totalorder %s30, 1
      %p95 = scmp.ne.s32.totalorder %s90, %s92
      %p96 = scmp.eq.s32.totalorder %s30, 0
      %p97 = por %p95, %p96
      %p98 = scmp.ne.s32.totalorder %s90, %s92
      %p99 = scmp.eq.s32.totalorder %s35, 1
      %p100 = por %p98, %p99
      %p101 = scmp.ne.s32.totalorder %s92, %s93
      %p102 = scmp.eq.s32.totalorder %s35, 0
      %p103 = por %p101, %p102
      %p104 = scmp.ne.s32.totalorder %s92, %s93
      %p105 = scmp.eq.s32.totalorder %s36, 1
      %p106 = por %p104, %p105
      %p108 = scmp.ne.s32.totalorder %s93, %s107
      %p109 = scmp.eq.s32.totalorder %s36, 0
      %p110 = por %p108, %p109
      %s112 = sadd.s32 %s111, 1
      %p115 = scmp.eq.s32.totalorder %s30, 1
      %p116 = scmp.ne.s32.totalorder %s111, %s113
      %p117 = scmp.eq.s32.totalorder %s30, 0
      %p118 = por %p116, %p117
      %p119 = scmp.ne.s32.totalorder %s111, %s113
      %p120 = scmp.eq.s32.totalorder %s35, 1
      %p121 = por %p119, %p120
      %p122 = scmp.ne.s32.totalorder %s113, %s114
      %p123 = scmp.eq.s32.totalorder %s35, 0
      %p124 = por %p122, %p123
      %p125 = scmp.ne.s32.totalorder %s113, %s114
      %p126 = scmp.eq.s32.totalorder %s36, 1
      %p127 = por %p125, %p126
      %p129 = scmp.ne.s32.totalorder %s114, %s128
      %p130 = scmp.eq.s32.totalorder %s36, 0
      %p131 = por %p129, %p130
      %s133 = sadd.s32 %s132, 1
      %p136 = scmp.eq.s32.totalorder %s30, 1
      %p137 = scmp.ne.s32.totalorder %s132, %s134
      %p138 = scmp.eq.s32.totalorder %s30, 0
      %p139 = por %p137, %p138
      %p140 = scmp.ne.s32.totalorder %s132, %s134
      %p141 = scmp.eq.s32.totalorder %s35, 1
      %p142 = por %p140, %p141
      %p143 = scmp.ne.s32.totalorder %s134, %s135
      %p144 = scmp.eq.s32.totalorder %s35, 0
      %p145 = por %p143, %p144
      %p146 = scmp.ne.s32.totalorder %s134, %s135
      %p147 = scmp.eq.s32.totalorder %s36, 1
      %p148 = por %p146, %p147
      %p150 = scmp.ne.s32.totalorder %s135, %s149
      %p151 = scmp.eq.s32.totalorder %s36, 0
      %p152 = por %p150, %p151
      %s154 = sadd.s32 %s153, 1
      %p157 = scmp.eq.s32.totalorder %s30, 1
      %p158 = scmp.ne.s32.totalorder %s153, %s155
      %p159 = scmp.eq.s32.totalorder %s30, 0
      %p160 = por %p158, %p159
      %p161 = scmp.ne.s32.totalorder %s153, %s155
      %p162 = scmp.eq.s32.totalorder %s35, 1
      %p163 = por %p161, %p162
      %p164 = scmp.ne.s32.totalorder %s155, %s156
      %p165 = scmp.eq.s32.totalorder %s35, 0
      %p166 = por %p164, %p165
      %p167 = scmp.ne.s32.totalorder %s155, %s156
      %p168 = scmp.eq.s32.totalorder %s36, 1
      %p169 = por %p167, %p168
      %p171 = scmp.ne.s32.totalorder %s156, %s170
      %p172 = scmp.eq.s32.totalorder %s36, 0
      %p173 = por %p171, %p172
      %s175 = sadd.s32 %s174, 1
      %p178 = scmp.eq.s32.totalorder %s30, 1
      %p179 = scmp.ne.s32.totalorder %s174, %s176
      %p180 = scmp.eq.s32.totalorder %s30, 0
      %p181 = por %p179, %p180
      %p182 = scmp.ne.s32.totalorder %s174, %s176
      %p183 = scmp.eq.s32.totalorder %s35, 1
      %p184 = por %p182, %p183
      %p185 = scmp.ne.s32.totalorder %s176, %s177
      %p186 = scmp.eq.s32.totalorder %s35, 0
      %p187 = por %p185, %p186
      %p188 = scmp.ne.s32.totalorder %s176, %s177
      %p189 = scmp.eq.s32.totalorder %s36, 1
      %p190 = por %p188, %p189
      %p192 = scmp.ne.s32.totalorder %s177, %s191
      %p193 = scmp.eq.s32.totalorder %s36, 0
      %p194 = por %p192, %p193
      %s196 = sadd.s32 %s195, 1
      %p199 = scmp.eq.s32.totalorder %s30, 1
      %p200 = scmp.ne.s32.totalorder %s195, %s197
      %p201 = scmp.eq.s32.totalorder %s30, 0
      %p202 = por %p200, %p201
      %p203 = scmp.ne.s32.totalorder %s195, %s197
      %p204 = scmp.eq.s32.totalorder %s35, 1
      %p205 = por %p203, %p204
      %p206 = scmp.ne.s32.totalorder %s197, %s198
      %p207 = scmp.eq.s32.totalorder %s35, 0
      %p208 = por %p206, %p207
      %p209 = scmp.ne.s32.totalorder %s197, %s198
      %p210 = scmp.eq.s32.totalorder %s36, 1
      %p211 = por %p209, %p210
      %p213 = scmp.ne.s32.totalorder %s198, %s212
      %p214 = scmp.eq.s32.totalorder %s36, 0
      %p215 = por %p213, %p214
      %s217 = sadd.s32 %s216, 1
      %p220 = scmp.eq.s32.totalorder %s30, 1
      %p221 = scmp.ne.s32.totalorder %s216, %s218
      %p222 = scmp.eq.s32.totalorder %s30, 0
      %p223 = por %p221, %p222
      %p224 = scmp.ne.s32.totalorder %s216, %s218
      %p225 = scmp.eq.s32.totalorder %s35, 1
      %p226 = por %p224, %p225
      %p227 = scmp.ne.s32.totalorder %s218, %s219
      %p228 = scmp.eq.s32.totalorder %s35, 0
      %p229 = por %p227, %p228
      %p230 = scmp.ne.s32.totalorder %s218, %s219
      %p231 = scmp.eq.s32.totalorder %s36, 1
      %p232 = por %p230, %p231
      %p234 = scmp.ne.s32.totalorder %s219, %s233
      %p235 = scmp.eq.s32.totalorder %s36, 0
      %p236 = por %p234, %p235
      %s238 = sadd.s32 %s237, 1
      %p241 = scmp.eq.s32.totalorder %s30, 1
      %p242 = scmp.ne.s32.totalorder %s237, %s239
      %p243 = scmp.eq.s32.totalorder %s30, 0
      %p244 = por %p242, %p243
      %p245 = scmp.ne.s32.totalorder %s237, %s239
      %p246 = scmp.eq.s32.totalorder %s35, 1
      %p247 = por %p245, %p246
      %p248 = scmp.ne.s32.totalorder %s239, %s240
      %p249 = scmp.eq.s32.totalorder %s35, 0
      %p250 = por %p248, %p249
      %p251 = scmp.ne.s32.totalorder %s239, %s240
      %p252 = scmp.eq.s32.totalorder %s36, 1
      %p253 = por %p251, %p252
      %p255 = scmp.ne.s32.totalorder %s240, %s254
      %p256 = scmp.eq.s32.totalorder %s36, 0
      %p257 = por %p255, %p256
      %s259 = sadd.s32 %s258, 1
      %p262 = scmp.eq.s32.totalorder %s30, 1
      %p263 = scmp.ne.s32.totalorder %s258, %s260
      %p264 = scmp.eq.s32.totalorder %s30, 0
      %p265 = por %p263, %p264
      %p266 = scmp.ne.s32.totalorder %s258, %s260
      %p267 = scmp.eq.s32.totalorder %s35, 1
      %p268 = por %p266, %p267
      %p269 = scmp.ne.s32.totalorder %s260, %s261
      %p270 = scmp.eq.s32.totalorder %s35, 0
      %p271 = por %p269, %p270
      %p272 = scmp.ne.s32.totalorder %s260, %s261
      %p273 = scmp.eq.s32.totalorder %s36, 1
      %p274 = por %p272, %p273
      %p276 = scmp.ne.s32.totalorder %s261, %s275
      %p277 = scmp.eq.s32.totalorder %s36, 0
      %p278 = por %p276, %p277
      %s280 = sadd.s32 %s279, 1
      %p283 = scmp.eq.s32.totalorder %s30, 1
      %p284 = scmp.ne.s32.totalorder %s279, %s281
      %p285 = scmp.eq.s32.totalorder %s30, 0
      %p286 = por %p284, %p285
      %p287 = scmp.ne.s32.totalorder %s279, %s281
      %p288 = scmp.eq.s32.totalorder %s35, 1
      %p289 = por %p287, %p288
      %p290 = scmp.ne.s32.totalorder %s281, %s282
      %p291 = scmp.eq.s32.totalorder %s35, 0
      %p292 = por %p290, %p291
      %p293 = scmp.ne.s32.totalorder %s281, %s282
      %p294 = scmp.eq.s32.totalorder %s36, 1
      %p295 = por %p293, %p294
      %p297 = scmp.ne.s32.totalorder %s282, %s296
      %p298 = scmp.eq.s32.totalorder %s36, 0
      %p299 = por %p297, %p298
      %s301 = sadd.s32 %s300, 1
      %p304 = scmp.eq.s32.totalorder %s30, 1
      %p305 = scmp.ne.s32.totalorder %s300, %s302
      %p306 = scmp.eq.s32.totalorder %s30, 0
      %p307 = por %p305, %p306
      %p308 = scmp.ne.s32.totalorder %s300, %s302
      %p309 = scmp.eq.s32.totalorder %s35, 1
      %p310 = por %p308, %p309
      %p311 = scmp.ne.s32.totalorder %s302, %s303
      %p312 = scmp.eq.s32.totalorder %s35, 0
      %p313 = por %p311, %p312
      %p314 = scmp.ne.s32.totalorder %s302, %s303
      %p315 = scmp.eq.s32.totalorder %s36, 1
      %p316 = por %p314, %p315
      %p318 = scmp.ne.s32.totalorder %s303, %s317
      %p319 = scmp.eq.s32.totalorder %s36, 0
      %p320 = por %p318, %p319
      %s322 = sadd.s32 %s321, 1
      %p325 = scmp.eq.s32.totalorder %s30, 1
      %p326 = scmp.ne.s32.totalorder %s321, %s323
      %p327 = scmp.eq.s32.totalorder %s30, 0
      %p328 = por %p326, %p327
      %p329 = scmp.ne.s32.totalorder %s321, %s323
      %p330 = scmp.eq.s32.totalorder %s35, 1
      %p331 = por %p329, %p330
      %p332 = scmp.ne.s32.totalorder %s323, %s324
      %p333 = scmp.eq.s32.totalorder %s35, 0
      %p334 = por %p332, %p333
      %p335 = scmp.ne.s32.totalorder %s323, %s324
      %p336 = scmp.eq.s32.totalorder %s36, 1
      %p337 = por %p335, %p336
      %p339 = scmp.ne.s32.totalorder %s324, %s338
      %p340 = scmp.eq.s32.totalorder %s36, 0
      %p341 = por %p339, %p340
      %s343 = sadd.s32 %s342, 1
      %p346 = scmp.eq.s32.totalorder %s30, 1
      %p347 = scmp.ne.s32.totalorder %s342, %s344
      %p348 = scmp.eq.s32.totalorder %s30, 0
      %p349 = por %p347, %p348
      %p350 = scmp.ne.s32.totalorder %s342, %s344
      %p351 = scmp.eq.s32.totalorder %s35, 1
      %p352 = por %p350, %p351
      %p353 = scmp.ne.s32.totalorder %s344, %s345
      %p354 = scmp.eq.s32.totalorder %s35, 0
      %p355 = por %p353, %p354
      %p356 = scmp.ne.s32.totalorder %s344, %s345
      %p357 = scmp.eq.s32.totalorder %s36, 1
      %p358 = por %p356, %p357
      %p360 = scmp.ne.s32.totalorder %s345, %s359
      %p361 = scmp.eq.s32.totalorder %s36, 0
      %p362 = por %p360, %p361
      %s364 = sadd.s32 %s363, 1
      %p367 = scmp.eq.s32.totalorder %s30, 1
      %p368 = scmp.ne.s32.totalorder %s363, %s365
      %p369 = scmp.eq.s32.totalorder %s30, 0
      %p370 = por %p368, %p369
      %p371 = scmp.ne.s32.totalorder %s363, %s365
      %p372 = scmp.eq.s32.totalorder %s35, 1
      %p373 = por %p371, %p372
      %p374 = scmp.ne.s32.totalorder %s365, %s366
      %p375 = scmp.eq.s32.totalorder %s35, 0
      %p376 = por %p374, %p375
      %p377 = scmp.ne.s32.totalorder %s365, %s366
      %p378 = scmp.eq.s32.totalorder %s36, 1
      %p379 = por %p377, %p378
      %p381 = scmp.ne.s32.totalorder %s366, %s380
      %p382 = scmp.eq.s32.totalorder %s36, 0
      %p383 = por %p381, %p382
      %s385 = sadd.s32 %s384, 1
      %p388 = scmp.eq.s32.totalorder %s30, 1
      %p389 = scmp.ne.s32.totalorder %s384, %s386
      %p390 = scmp.eq.s32.totalorder %s30, 0
      %p391 = por %p389, %p390
      %p392 = scmp.ne.s32.totalorder %s384, %s386
      %p393 = scmp.eq.s32.totalorder %s35, 1
      %p394 = por %p392, %p393
      %p395 = scmp.ne.s32.totalorder %s386, %s387
      %p396 = scmp.eq.s32.totalorder %s35, 0
      %p397 = por %p395, %p396
      %p398 = scmp.ne.s32.totalorder %s386, %s387
      %p399 = scmp.eq.s32.totalorder %s36, 1
      %p400 = por %p398, %p399
      %p402 = scmp.ne.s32.totalorder %s387, %s401
      %p403 = scmp.eq.s32.totalorder %s36, 0
      %p404 = por %p402, %p403
      %s406 = sadd.s32 %s405, 1
      %p409 = scmp.eq.s32.totalorder %s30, 1
      %p410 = scmp.ne.s32.totalorder %s405, %s407
      %p411 = scmp.eq.s32.totalorder %s30, 0
      %p412 = por %p410, %p411
      %p413 = scmp.ne.s32.totalorder %s405, %s407
      %p414 = scmp.eq.s32.totalorder %s35, 1
      %p415 = por %p413, %p414
      %p416 = scmp.ne.s32.totalorder %s407, %s408
      %p417 = scmp.eq.s32.totalorder %s35, 0
      %p418 = por %p416, %p417
      %p419 = scmp.ne.s32.totalorder %s407, %s408
      %p420 = scmp.eq.s32.totalorder %s36, 1
      %p421 = por %p419, %p420
      %p423 = scmp.ne.s32.totalorder %s408, %s422
      %p424 = scmp.eq.s32.totalorder %s36, 0
      %p425 = por %p423, %p424
      %s427 = sadd.s32 %s426, 1
      %p430 = scmp.eq.s32.totalorder %s30, 1
      %p431 = scmp.ne.s32.totalorder %s426, %s428
      %p432 = scmp.eq.s32.totalorder %s30, 0
      %p433 = por %p431, %p432
      %p434 = scmp.ne.s32.totalorder %s426, %s428
      %p435 = scmp.eq.s32.totalorder %s35, 1
      %p436 = por %p434, %p435
      %p437 = scmp.ne.s32.totalorder %s428, %s429
      %p438 = scmp.eq.s32.totalorder %s35, 0
      %p439 = por %p437, %p438
      %p440 = scmp.ne.s32.totalorder %s428, %s429
      %p441 = scmp.eq.s32.totalorder %s36, 1
      %p442 = por %p440, %p441
      %p444 = scmp.ne.s32.totalorder %s429, %s443
      %p445 = scmp.eq.s32.totalorder %s36, 0
      %p446 = por %p444, %p445
      %s448 = sadd.s32 %s447, 1
      %p451 = scmp.eq.s32.totalorder %s30, 1
      %p452 = scmp.ne.s32.totalorder %s447, %s449
      %p453 = scmp.eq.s32.totalorder %s30, 0
      %p454 = por %p452, %p453
      %p455 = scmp.ne.s32.totalorder %s447, %s449
      %p456 = scmp.eq.s32.totalorder %s35, 1
      %p457 = por %p455, %p456
      %p458 = scmp.ne.s32.totalorder %s449, %s450
      %p459 = scmp.eq.s32.totalorder %s35, 0
      %p460 = por %p458, %p459
      %p461 = scmp.ne.s32.totalorder %s449, %s450
      %p462 = scmp.eq.s32.totalorder %s36, 1
      %p463 = por %p461, %p462
      %p465 = scmp.ne.s32.totalorder %s450, %s464
      %p466 = scmp.eq.s32.totalorder %s36, 0
      %p467 = por %p465, %p466
      %s469 = sadd.s32 %s468, 1
      %p472 = scmp.eq.s32.totalorder %s30, 1
      %p473 = scmp.ne.s32.totalorder %s468, %s470
      %p474 = scmp.eq.s32.totalorder %s30, 0
      %p475 = por %p473, %p474
      %p476 = scmp.ne.s32.totalorder %s468, %s470
      %p477 = scmp.eq.s32.totalorder %s35, 1
      %p478 = por %p476, %p477
      %p479 = scmp.ne.s32.totalorder %s470, %s471
      %p480 = scmp.eq.s32.totalorder %s35, 0
      %p481 = por %p479, %p480
      %p482 = scmp.ne.s32.totalorder %s470, %s471
      %p483 = scmp.eq.s32.totalorder %s36, 1
      %p484 = por %p482, %p483
      %p486 = scmp.ne.s32.totalorder %s471, %s485
      %p487 = scmp.eq.s32.totalorder %s36, 0
      %p488 = por %p486, %p487
      %s490 = sadd.s32 %s489, 1
      %p493 = scmp.eq.s32.totalorder %s30, 1
      %p494 = scmp.ne.s32.totalorder %s489, %s491
      %p495 = scmp.eq.s32.totalorder %s30, 0
      %p496 = por %p494, %p495
      %p497 = scmp.ne.s32.totalorder %s489, %s491
      %p498 = scmp.eq.s32.totalorder %s35, 1
      %p499 = por %p497, %p498
      %p500 = scmp.ne.s32.totalorder %s491, %s492
      %p501 = scmp.eq.s32.totalorder %s35, 0
      %p502 = por %p500, %p501
      %p503 = scmp.ne.s32.totalorder %s491, %s492
      %p504 = scmp.eq.s32.totalorder %s36, 1
      %p505 = por %p503, %p504
      %p507 = scmp.ne.s32.totalorder %s492, %s506
      %p508 = scmp.eq.s32.totalorder %s36, 0
      %p509 = por %p507, %p508
      %s510 = ssub.s32 %s30, %s37
      %p511 = scmp.eq.s32.totalorder %s510, 0
      %s513 = sadd.s32 %s512, 1
      %s514 = scalar_select %p511, %s512, %s513
      %p517 = pneg %p511
      %p518 = scmp.eq.s32.totalorder %s30, 1
      %p519 = por %p517, %p518
      %p520 = scmp.ne.s32.totalorder %s512, %s515
      %p521 = scmp.eq.s32.totalorder %s30, 0
      %p522 = por %p520, %p521
      %p523 = scmp.ne.s32.totalorder %s512, %s515
      %p524 = scmp.eq.s32.totalorder %s35, 1
      %p525 = por %p523, %p524
      %p526 = scmp.ne.s32.totalorder %s515, %s516
      %p527 = scmp.eq.s32.totalorder %s35, 0
      %p528 = por %p526, %p527
      %p529 = scmp.ne.s32.totalorder %s515, %s516
      %p530 = scmp.eq.s32.totalorder %s36, 1
      %p531 = por %p529, %p530
      %p533 = scmp.ne.s32.totalorder %s516, %s532
      %p534 = scmp.eq.s32.totalorder %s36, 0
      %p535 = por %p533, %p534
      %p536 = scmp.le.s32.totalorder 1, %s30
      %p537 = scmp.lt.s32.totalorder %s30, 3
      %p538 = pnand %p536, %p537
      %p539 = pneg %p538
      // Predicated region
      $region9: #{decoder_forward.4} parent=5 // pred_check
        _
      $region10: #{decoder_forward.4} parent=5 // pred_check_branch
        %541 = sbr.rel (%p538) target = $region12
      $region11: #{decoder_forward.4} parent=5 // pred_region
        %s542 = ssub.s32 %s30, 1
        // Predicated region
        $region13: #{decoder_forward.4} parent=11 // pred_check
          %p543 = pneg %p103
        $region14: #{decoder_forward.4} parent=11 // pred_check_branch
          %545 = sbr.rel (%p543) target = $region16
        $region15: #{decoder_forward.4} parent=11 // pred_region
          _
        $region16: #{decoder_forward.4} parent=11 // pred_fallthru
          _
        // Predicated region
        $region17: #{decoder_forward.4} parent=11 // pred_check
          %p546 = pneg %p124
        $region18: #{decoder_forward.4} parent=11 // pred_check_branch
          %548 = sbr.rel (%p546) target = $region20
        $region19: #{decoder_forward.4} parent=11 // pred_region
          _
        $region20: #{decoder_forward.4} parent=11 // pred_fallthru
          _
        // Predicated region
        $region21: #{decoder_forward.4} parent=11 // pred_check
          %p549 = pneg %p145
        $region22: #{decoder_forward.4} parent=11 // pred_check_branch
          %551 = sbr.rel (%p549) target = $region24
        $region23: #{decoder_forward.4} parent=11 // pred_region
          _
        $region24: #{decoder_forward.4} parent=11 // pred_fallthru
          _
        // Predicated region
        $region25: #{decoder_forward.4} parent=11 // pred_check
          %p552 = pneg %p166
        $region26: #{decoder_forward.4} parent=11 // pred_check_branch
          %554 = sbr.rel (%p552) target = $region28
        $region27: #{decoder_forward.4} parent=11 // pred_region
          _
        $region28: #{decoder_forward.4} parent=11 // pred_fallthru
          _
        // Predicated region
        $region29: #{decoder_forward.4} parent=11 // pred_check
          %p555 = pneg %p187
        $region30: #{decoder_forward.4} parent=11 // pred_check_branch
          %557 = sbr.rel (%p555) target = $region32
        $region31: #{decoder_forward.4} parent=11 // pred_region
          _
        $region32: #{decoder_forward.4} parent=11 // pred_fallthru
          _
        // Predicated region
        $region33: #{decoder_forward.4} parent=11 // pred_check
          %p558 = pneg %p208
        $region34: #{decoder_forward.4} parent=11 // pred_check_branch
          %560 = sbr.rel (%p558) target = $region36
        $region35: #{decoder_forward.4} parent=11 // pred_region
          _
        $region36: #{decoder_forward.4} parent=11 // pred_fallthru
          _
        // Predicated region
        $region37: #{decoder_forward.4} parent=11 // pred_check
          %p561 = pneg %p229
        $region38: #{decoder_forward.4} parent=11 // pred_check_branch
          %563 = sbr.rel (%p561) target = $region40
        $region39: #{decoder_forward.4} parent=11 // pred_region
          _
        $region40: #{decoder_forward.4} parent=11 // pred_fallthru
          _
        // Predicated region
        $region41: #{decoder_forward.4} parent=11 // pred_check
          %p564 = pneg %p250
        $region42: #{decoder_forward.4} parent=11 // pred_check_branch
          %566 = sbr.rel (%p564) target = $region44
        $region43: #{decoder_forward.4} parent=11 // pred_region
          _
        $region44: #{decoder_forward.4} parent=11 // pred_fallthru
          _
        // Predicated region
        $region45: #{decoder_forward.4} parent=11 // pred_check
          %p567 = pneg %p271
        $region46: #{decoder_forward.4} parent=11 // pred_check_branch
          %569 = sbr.rel (%p567) target = $region48
        $region47: #{decoder_forward.4} parent=11 // pred_region
          _
        $region48: #{decoder_forward.4} parent=11 // pred_fallthru
          _
        // Predicated region
        $region49: #{decoder_forward.4} parent=11 // pred_check
          %p570 = pneg %p292
        $region50: #{decoder_forward.4} parent=11 // pred_check_branch
          %572 = sbr.rel (%p570) target = $region52
        $region51: #{decoder_forward.4} parent=11 // pred_region
          _
        $region52: #{decoder_forward.4} parent=11 // pred_fallthru
          _
        // Predicated region
        $region53: #{decoder_forward.4} parent=11 // pred_check
          %p573 = pneg %p313
        $region54: #{decoder_forward.4} parent=11 // pred_check_branch
          %575 = sbr.rel (%p573) target = $region56
        $region55: #{decoder_forward.4} parent=11 // pred_region
          _
        $region56: #{decoder_forward.4} parent=11 // pred_fallthru
          _
        // Predicated region
        $region57: #{decoder_forward.4} parent=11 // pred_check
          %p576 = pneg %p334
        $region58: #{decoder_forward.4} parent=11 // pred_check_branch
          %578 = sbr.rel (%p576) target = $region60
        $region59: #{decoder_forward.4} parent=11 // pred_region
          _
        $region60: #{decoder_forward.4} parent=11 // pred_fallthru
          _
        // Predicated region
        $region61: #{decoder_forward.4} parent=11 // pred_check
          %p579 = pneg %p355
        $region62: #{decoder_forward.4} parent=11 // pred_check_branch
          %581 = sbr.rel (%p579) target = $region64
        $region63: #{decoder_forward.4} parent=11 // pred_region
          _
        $region64: #{decoder_forward.4} parent=11 // pred_fallthru
          _
        // Predicated region
        $region65: #{decoder_forward.4} parent=11 // pred_check
          %p582 = pneg %p376
        $region66: #{decoder_forward.4} parent=11 // pred_check_branch
          %584 = sbr.rel (%p582) target = $region68
        $region67: #{decoder_forward.4} parent=11 // pred_region
          _
        $region68: #{decoder_forward.4} parent=11 // pred_fallthru
          _
        // Predicated region
        $region69: #{decoder_forward.4} parent=11 // pred_check
          %p585 = pneg %p397
        $region70: #{decoder_forward.4} parent=11 // pred_check_branch
          %587 = sbr.rel (%p585) target = $region72
        $region71: #{decoder_forward.4} parent=11 // pred_region
          _
        $region72: #{decoder_forward.4} parent=11 // pred_fallthru
          _
        // Predicated region
        $region73: #{decoder_forward.4} parent=11 // pred_check
          %p588 = pneg %p418
        $region74: #{decoder_forward.4} parent=11 // pred_check_branch
          %590 = sbr.rel (%p588) target = $region76
        $region75: #{decoder_forward.4} parent=11 // pred_region
          _
        $region76: #{decoder_forward.4} parent=11 // pred_fallthru
          _
        // Predicated region
        $region77: #{decoder_forward.4} parent=11 // pred_check
          %p591 = pneg %p439
        $region78: #{decoder_forward.4} parent=11 // pred_check_branch
          %593 = sbr.rel (%p591) target = $region80
        $region79: #{decoder_forward.4} parent=11 // pred_region
          _
        $region80: #{decoder_forward.4} parent=11 // pred_fallthru
          _
        // Predicated region
        $region81: #{decoder_forward.4} parent=11 // pred_check
          %p594 = pneg %p460
        $region82: #{decoder_forward.4} parent=11 // pred_check_branch
          %596 = sbr.rel (%p594) target = $region84
        $region83: #{decoder_forward.4} parent=11 // pred_region
          _
        $region84: #{decoder_forward.4} parent=11 // pred_fallthru
          _
        // Predicated region
        $region85: #{decoder_forward.4} parent=11 // pred_check
          %p597 = pneg %p481
        $region86: #{decoder_forward.4} parent=11 // pred_check_branch
          %599 = sbr.rel (%p597) target = $region88
        $region87: #{decoder_forward.4} parent=11 // pred_region
          %s601 = ssub.s32 16, 16
          %602 = vsyncadd [#allocation3], %s601
          %s604 = sshll.u32 [#allocation2], 4
          %s605 = int_to_ptr.vmem [resolvable:$true] %s604
          %607 = dma.hbm_to_vmem [thread:$0]  %s20, 16, %s605, [#allocation3]
        $region88: #{decoder_forward.4} parent=11 // pred_fallthru
          _
        // Predicated region
        $region89: #{decoder_forward.4} parent=11 // pred_check
          %p608 = pneg %p502
        $region90: #{decoder_forward.4} parent=11 // pred_check_branch
          %610 = sbr.rel (%p608) target = $region92
        $region91: #{decoder_forward.4} parent=11 // pred_region
          %s612 = ssub.s32 16, 16
          %613 = vsyncadd [#allocation5], %s612
          %s615 = sshll.u32 [#allocation4], 4
          %s616 = int_to_ptr.vmem [resolvable:$true] %s615
          %618 = dma.hbm_to_vmem [thread:$0]  %s21, 16, %s616, [#allocation5]
        $region92: #{decoder_forward.4} parent=11 // pred_fallthru
          _
      $region12: #{decoder_forward.4} parent=5 // pred_fallthru
        _
      %p619 = scmp.lt.s32.totalorder %s30, 2
      // Predicated region
      $region93: #{decoder_forward.4} parent=5 // pred_check
        %p620 = pneg %p619
      $region94: #{decoder_forward.4} parent=5 // pred_check_branch
        %622 = sbr.rel (%p620) target = $region96
      $region95: #{decoder_forward.4} parent=5 // pred_region
        // Predicated region
        $region97: #{decoder_forward.4} parent=95 // pred_check
          %p623 = pneg %p50
        $region98: #{decoder_forward.4} parent=95 // pred_check_branch
          %625 = sbr.rel (%p623) target = $region100
        $region99: #{decoder_forward.4} parent=95 // pred_region
          %p626 = scmp.lt.s32.totalorder %s30, 1
          %s627 = scalar_select %p626, %s30, 1
          %s628 = smul.addr %s627, 8
          %s629 = scalar_lea.vmem %s0, %s628
        $region100: #{decoder_forward.4} parent=95 // pred_fallthru
          _
        // Predicated region
        $region101: #{decoder_forward.4} parent=95 // pred_check
          %p630 = pneg %p76
        $region102: #{decoder_forward.4} parent=95 // pred_check_branch
          %632 = sbr.rel (%p630) target = $region104
        $region103: #{decoder_forward.4} parent=95 // pred_region
          %p633 = scmp.lt.s32.totalorder %s30, 1
          %s634 = scalar_select %p633, %s30, 1
          %s635 = smul.addr %s634, 8
          %s636 = scalar_lea.vmem %s1, %s635
        $region104: #{decoder_forward.4} parent=95 // pred_fallthru
          _
      $region96: #{decoder_forward.4} parent=5 // pred_fallthru
        _
      %p637 = scmp.le.s32.totalorder 1, %s30
      %p638 = scmp.lt.s32.totalorder %s30, 3
      %p639 = pnand %p637, %p638
      %p640 = pneg %p639
      // Predicated region
      $region105: #{decoder_forward.4} parent=5 // pred_check
        _
      $region106: #{decoder_forward.4} parent=5 // pred_check_branch
        %642 = sbr.rel (%p639) target = $region108
      $region107: #{decoder_forward.4} parent=5 // pred_region
        %s643 = ssub.s32 %s30, 1
        // Predicated region
        $region109: #{decoder_forward.4} parent=107 // pred_check
          %p644 = pneg %p481
        $region110: #{decoder_forward.4} parent=107 // pred_check_branch
          %646 = sbr.rel (%p644) target = $region112
        $region111: #{decoder_forward.4} parent=107 // pred_region
          %647 = dma.done [#allocation3], 16
        $region112: #{decoder_forward.4} parent=107 // pred_fallthru
          _
        // Predicated region
        $region113: #{decoder_forward.4} parent=107 // pred_check
          %p648 = pneg %p502
        $region114: #{decoder_forward.4} parent=107 // pred_check_branch
          %650 = sbr.rel (%p648) target = $region116
        $region115: #{decoder_forward.4} parent=107 // pred_region
          %651 = dma.done [#allocation5], 16
        $region116: #{decoder_forward.4} parent=107 // pred_fallthru
          _
        %p652 = scmp.lt.s32.totalorder %s35, 1
        %s653 = scalar_select %p652, %s35, 1
        %s654 = smul.addr %s653, 8
        %s655 = scalar_lea.vmem %s0, %s654
        %p656 = pneg %p56
        %p657 = pneg %p53
        %p658 = scmp.lt.s32.totalorder %s35, 1
        %s659 = scalar_select %p658, %s35, 1
        %s660 = smul.addr %s659, 8
        %s661 = scalar_lea.vmem %s1, %s660
        %p662 = pneg %p82
        %p663 = pneg %p79
        %p664 = pneg %p103
        %p665 = pneg %p100
        %p666 = pneg %p124
        %p667 = pneg %p121
        %p668 = pneg %p145
        %p669 = pneg %p142
        %p670 = pneg %p166
        %p671 = pneg %p163
        %p672 = pneg %p187
        %p673 = pneg %p184
        %p674 = pneg %p208
        %p675 = pneg %p205
        %p676 = pneg %p229
        %p677 = pneg %p226
        %p678 = pneg %p250
        %p679 = pneg %p247
        %p680 = pneg %p271
        %p681 = pneg %p268
        %p682 = pneg %p292
        %p683 = pneg %p289
        %p684 = pneg %p313
        %p685 = pneg %p310
        %p686 = pneg %p334
        %p687 = pneg %p331
        %p688 = pneg %p355
        %p689 = pneg %p352
        %p690 = pneg %p376
        %p691 = pneg %p373
        %p692 = pneg %p397
        %p693 = pneg %p394
        %p694 = pneg %p418
        %p695 = pneg %p415
        %p696 = pneg %p439
        %p697 = pneg %p436
        %p698 = pneg %p460
        %p699 = pneg %p457
        %p700 = pneg %p481
        %p701 = pneg %p478
        %p702 = pneg %p502
        %p703 = pneg %p499
        %p704 = pneg %p528
        %p705 = pneg %p525
        %p706 = scmp.lt.s32.totalorder %s35, 1
        %s707 = scalar_select %p706, %s35, 1
        %s708 = smul.addr %s707, 8
        %s709 = scalar_lea.vmem %s22, %s708
        %p710 = scmp.lt.s32.totalorder %s35, 1
        %s711 = scalar_select %p710, %s35, 1
        %s712 = smul.addr %s711, 8
        %s713 = scalar_lea.vmem %s0, %s712
        %p714 = scmp.lt.s32.totalorder %s35, 1
        %s715 = scalar_select %p714, %s35, 1
        %s716 = smul.addr %s715, 8
        %s717 = scalar_lea.vmem %s1, %s716
        %p718 = scmp.lt.s32.totalorder %s35, 1
        %s719 = scalar_select %p718, %s35, 1
        %s720 = smul.addr %s719, 8
        %s721 = scalar_lea.vmem %s22, %s720
        %v723 = vld [vmem:[%s713] sm:$0xff]
        %v724 = vld [vmem:[%s717] sm:$0xff]
        %v725 = vpack.c.bf16 %v723, %v723
        %v726 = vld [vmem:[%s2] sm:$0xf]
        %v727 = vld [vmem:[%s2 + $0x4] sm:$0xf]
        %v728 = vld [vmem:[%s2 + $0x8] sm:$0xf]
        %v729 = vld [vmem:[%s2 + $0xc] sm:$0xf]
        %v730 = vld [vmem:[%s3] sm:$0x1]
        %v732 = vlaneseq
        %v733 = vshrl.u32 %v732, 7
        %v734 = vsub.s32 0, %v733
        %v735 = vrot.slane %v730, %v734
        %v741 = vunpack.c.l.b16 %v726
        %v742 = vunpack.c.l.b16 %v727
        %v743 = vunpack.c.l.b16 %v728
        %v744 = vunpack.c.l.b16 %v729
        %v745 = vpack.c.b16 %v742, %v741
        %v746 = vpack.c.b16 %v744, %v743
        %vm749 = vcmask 261120
        %v751 = vsel %vm749, %v725, 0
        %753 = vmatprep.subr.bf16.mxu0 0
        %754 = vmatpush1.bf16.msra.mxu0 %v745
        %755 = vmatprep.subr.bf16.mxu0 0
        %756 = vmatpush1.bf16.msra.mxu0 %v746
        %757 = vmatprep.subr.bf16.mxu0 0
        %758 = vmatpush1.bf16.msra.mxu0 0
        %759 = vmatprep.subr.bf16.mxu0 0
        %760 = vmatpush1.bf16.msra.mxu0 0
        %761 = vmatprep.subr.bf16.mxu0 0
        %762 = vmatpush1.bf16.msra.mxu0 0
        %763 = vmatprep.subr.bf16.mxu0 0
        %764 = vmatpush1.bf16.msra.mxu0 0
        %765 = vmatprep.subr.bf16.mxu0 0
        %766 = vmatpush1.bf16.msra.mxu0 0
        %767 = vmatprep.subr.bf16.mxu0 0
        %768 = vmatpush1.bf16.msra.mxu0 0
        %769 = vmatprep.subr.bf16.mxu0 0
        %770 = vmatpush1.bf16.msra.mxu0 0
        %771 = vmatprep.subr.bf16.mxu0 0
        %772 = vmatpush1.bf16.msra.mxu0 0
        %773 = vmatprep.subr.bf16.mxu0 0
        %774 = vmatpush1.bf16.msra.mxu0 0
        %775 = vmatprep.subr.bf16.mxu0 0
        %776 = vmatpush1.bf16.msra.mxu0 0
        %777 = vmatprep.subr.bf16.mxu0 0
        %778 = vmatpush1.bf16.msra.mxu0 0
        %779 = vmatprep.subr.bf16.mxu0 0
        %780 = vmatpush1.bf16.msra.mxu0 0
        %781 = vmatprep.subr.bf16.mxu0 0
        %782 = vmatpush1.bf16.msra.mxu0 0
        %783 = vmatprep.subr.bf16.mxu0 0
        %784 = vmatpush1.bf16.msra.mxu0 0
        %785 = vmatprep.mubr.bf16.mxu0 0
        %786 = vmatmul.mubr.bf16.gmra.mrb[0].mxu0 %v751
        %v787 = vpop.f32.mrb[0].mxu0
        %v788 = vadd.f32 %v735, %v787
        %v789 = vpop.f32.mrb[0].mxu0
        %v790 = vpop.f32.mrb[0].mxu0
        %v791 = vpop.f32.mrb[0].mxu0
        %792 = vdwg.mxu0
        %v793 = vlaneseq
        %v794 = vshrl.u32 %v793, 7
        %v795 = vlaneseq
        %v796 = vand.u32 %v795, 127
        %vm797 = vcmp.ge.s32.totalorder %v794, %v796
        %799 = vrot.lane.b32.xlu0 %v788, 96
        %v800 = vpop.permute.xlu0 %799
        %vm801 = vcmask 64512
        %v802 = vsel %vm801, %v788, 0
        %v804 = vsel %vm801, %v800, 0
        %806 = vmatprep.subr.mxu0 0.0
        %807 = vmatpush1.xpose.msra.mxu0 %v804
        %808 = vmatprep.subr.mxu0 0.0
        %809 = vmatpush1.xpose.msra.mxu0 0.0
        %810 = vmatprep.subr.mxu0 0.0
        %811 = vmatpush1.xpose.msra.mxu0 0.0
        %812 = vmatprep.subr.mxu0 0.0
        %813 = vmatpush1.xpose.msra.mxu0 0.0
        %814 = vmatprep.subr.mxu0 0.0
        %815 = vmatpush1.xpose.msra.mxu0 0.0
        %816 = vmatprep.subr.mxu0 0.0
        %817 = vmatpush1.xpose.msra.mxu0 0.0
        %818 = vmatprep.subr.mxu0 0.0
        %819 = vmatpush1.xpose.msra.mxu0 0.0
        %820 = vmatprep.subr.mxu0 0.0
        %821 = vmatpush1.xpose.msra.mxu0 0.0
        %822 = vmatprep.subr.mxu0 0.0
        %823 = vmatpush1.xpose.msra.mxu0 0.0
        %824 = vmatprep.subr.mxu0 0.0
        %825 = vmatpush1.xpose.msra.mxu0 0.0
        %826 = vmatprep.subr.mxu0 0.0
        %827 = vmatpush1.xpose.msra.mxu0 0.0
        %828 = vmatprep.subr.mxu0 0.0
        %829 = vmatpush1.xpose.msra.mxu0 0.0
        %830 = vmatprep.subr.mxu0 0.0
        %831 = vmatpush1.xpose.msra.mxu0 0.0
        %832 = vmatprep.subr.mxu0 0.0
        %833 = vmatpush1.xpose.msra.mxu0 0.0
        %834 = vmatprep.subr.mxu0 0.0
        %835 = vmatpush1.xpose.msra.mxu0 0.0
        %836 = vmatprep.subr.mxu0 0.0
        %837 = vmatpush1.xpose.msra.mxu0 0.0
        %838 = vmatprep.subr.mxu0 0.0
        %839 = vmatpush1.xpose.msra.mxu0 0.0
        %840 = vmatprep.subr.mxu0 0.0
        %841 = vmatpush1.xpose.msra.mxu0 0.0
        %842 = vmatprep.subr.mxu0 0.0
        %843 = vmatpush1.xpose.msra.mxu0 0.0
        %844 = vmatprep.subr.mxu0 0.0
        %845 = vmatpush1.xpose.msra.mxu0 0.0
        %846 = vmatprep.subr.mxu0 0.0
        %847 = vmatpush1.xpose.msra.mxu0 0.0
        %848 = vmatprep.subr.mxu0 0.0
        %849 = vmatpush1.xpose.msra.mxu0 0.0
        %850 = vmatprep.subr.mxu0 0.0
        %851 = vmatpush1.xpose.msra.mxu0 0.0
        %852 = vmatprep.subr.mxu0 0.0
        %853 = vmatpush1.xpose.msra.mxu0 0.0
        %854 = vmatprep.subr.mxu0 0.0
        %855 = vmatpush1.xpose.msra.mxu0 0.0
        %856 = vmatprep.subr.mxu0 0.0
        %857 = vmatpush1.xpose.msra.mxu0 0.0
        %858 = vmatprep.subr.mxu0 0.0
        %859 = vmatpush1.xpose.msra.mxu0 0.0
        %860 = vmatprep.subr.mxu0 0.0
        %861 = vmatpush1.xpose.msra.mxu0 0.0
        %862 = vmatprep.subr.mxu0 0.0
        %863 = vmatpush1.xpose.msra.mxu0 0.0
        %864 = vmatprep.subr.mxu0 0.0
        %865 = vmatpush1.xpose.msra.mxu0 0.0
        %866 = vmatprep.subr.mxu0 0.0
        %867 = vmatpush1.xpose.msra.mxu0 0.0
        %868 = vmatprep.subr.mxu0 0.0
        %869 = vmatpush1.xpose.msra.mxu0 0.0
        %870 = vmatprep.mubr.f32.mxu0 0.0
        %871 = vmatmul.mubr.f32.gmra.mrb[0].mxu0 %v802
        %v872 = vpop.f32.mrb[0].mxu0
        %v873 = vadd.f32 0.0, %v872
        %v874 = vpop.f32.mrb[0].mxu0
        %875 = vdwg.mxu0
        %v876 = vmul.f32 %v873, 0.35355338
        %v877 = vsel %vm797, %v876, -1e+09
        %v878 = vsel %vm801, %v877, -inf
        %879 = vmax.xlane.f32.xlu0 %v878
        %v880 = vpop.xlane.xlu0 %879
        %v881 = vsub.f32 %v877, %v880
        %v882 = vmul.f32 %v881, 1.442695
        %v883 = vpow.pop %v882
        %v884 = vsel %vm801, %v883, 0.0
        %885 = vadd.xlane.f32.xlu0 %v884
        %v886 = vpop.xlane.xlu0 %885
        %v887 = vrcp.pop %v886
        %v888 = vmul.f32 %v883, %v887
        %889 = vrot.lane.b32.xlu0 %v788, 64
        %v890 = vpop.permute.xlu0 %889
        %v893 = vsel %vm801, %v888, 0
        %895 = vmatprep.subr.mxu0 0.0
        %896 = vmatpush1.msra.mxu0 %v890
        %897 = vmatprep.subr.mxu0 0.0
        %898 = vmatpush1.msra.mxu0 0.0
        %899 = vmatprep.subr.mxu0 0.0
        %900 = vmatpush1.msra.mxu0 0.0
        %901 = vmatprep.subr.mxu0 0.0
        %902 = vmatpush1.msra.mxu0 0.0
        %903 = vmatprep.subr.mxu0 0.0
        %904 = vmatpush1.msra.mxu0 0.0
        %905 = vmatprep.subr.mxu0 0.0
        %906 = vmatpush1.msra.mxu0 0.0
        %907 = vmatprep.subr.mxu0 0.0
        %908 = vmatpush1.msra.mxu0 0.0
        %909 = vmatprep.subr.mxu0 0.0
        %910 = vmatpush1.msra.mxu0 0.0
        %911 = vmatprep.subr.mxu0 0.0
        %912 = vmatpush1.msra.mxu0 0.0
        %913 = vmatprep.subr.mxu0 0.0
        %914 = vmatpush1.msra.mxu0 0.0
        %915 = vmatprep.subr.mxu0 0.0
        %916 = vmatpush1.msra.mxu0 0.0
        %917 = vmatprep.subr.mxu0 0.0
        %918 = vmatpush1.msra.mxu0 0.0
        %919 = vmatprep.subr.mxu0 0.0
        %920 = vmatpush1.msra.mxu0 0.0
        %921 = vmatprep.subr.mxu0 0.0
        %922 = vmatpush1.msra.mxu0 0.0
        %923 = vmatprep.subr.mxu0 0.0
        %924 = vmatpush1.msra.mxu0 0.0
        %925 = vmatprep.subr.mxu0 0.0
        %926 = vmatpush1.msra.mxu0 0.0
        %927 = vmatprep.subr.mxu0 0.0
        %928 = vmatpush1.msra.mxu0 0.0
        %929 = vmatprep.subr.mxu0 0.0
        %930 = vmatpush1.msra.mxu0 0.0
        %931 = vmatprep.subr.mxu0 0.0
        %932 = vmatpush1.msra.mxu0 0.0
        %933 = vmatprep.subr.mxu0 0.0
        %934 = vmatpush1.msra.mxu0 0.0
        %935 = vmatprep.subr.mxu0 0.0
        %936 = vmatpush1.msra.mxu0 0.0
        %937 = vmatprep.subr.mxu0 0.0
        %938 = vmatpush1.msra.mxu0 0.0
        %939 = vmatprep.subr.mxu0 0.0
        %940 = vmatpush1.msra.mxu0 0.0
        %941 = vmatprep.subr.mxu0 0.0
        %942 = vmatpush1.msra.mxu0 0.0
        %943 = vmatprep.subr.mxu0 0.0
        %944 = vmatpush1.msra.mxu0 0.0
        %945 = vmatprep.subr.mxu0 0.0
        %946 = vmatpush1.msra.mxu0 0.0
        %947 = vmatprep.subr.mxu0 0.0
        %948 = vmatpush1.msra.mxu0 0.0
        %949 = vmatprep.subr.mxu0 0.0
        %950 = vmatpush1.msra.mxu0 0.0
        %951 = vmatprep.subr.mxu0 0.0
        %952 = vmatpush1.msra.mxu0 0.0
        %953 = vmatprep.subr.mxu0 0.0
        %954 = vmatpush1.msra.mxu0 0.0
        %955 = vmatprep.subr.mxu0 0.0
        %956 = vmatpush1.msra.mxu0 0.0
        %957 = vmatprep.subr.mxu0 0.0
        %958 = vmatpush1.msra.mxu0 0.0
        %959 = vmatprep.mubr.f32.mxu0 0.0
        %960 = vmatmul.mubr.f32.gmra.mrb[0].mxu0 %v893
        %v961 = vpop.f32.mrb[0].mxu0
        %v962 = vadd.f32 0.0, %v961
        %v963 = vpop.f32.mrb[0].mxu0
        %964 = vdwg.mxu0
        %965 = vrot.lane.b32.xlu0 %v788, 120
        %v966 = vpop.permute.xlu0 %965
        %967 = vrot.lane.b32.xlu0 %v788, 88
        %v968 = vpop.permute.xlu0 %967
        %v969 = vsel %vm801, %v966, 0
        %v971 = vsel %vm801, %v968, 0
        %973 = vmatprep.subr.mxu0 0.0
        %974 = vmatpush1.xpose.msra.mxu0 %v971
        %975 = vmatprep.subr.mxu0 0.0
        %976 = vmatpush1.xpose.msra.mxu0 0.0
        %977 = vmatprep.subr.mxu0 0.0
        %978 = vmatpush1.xpose.msra.mxu0 0.0
        %979 = vmatprep.subr.mxu0 0.0
        %980 = vmatpush1.xpose.msra.mxu0 0.0
        %981 = vmatprep.subr.mxu0 0.0
        %982 = vmatpush1.xpose.msra.mxu0 0.0
        %983 = vmatprep.subr.mxu0 0.0
        %984 = vmatpush1.xpose.msra.mxu0 0.0
        %985 = vmatprep.subr.mxu0 0.0
        %986 = vmatpush1.xpose.msra.mxu0 0.0
        %987 = vmatprep.subr.mxu0 0.0
        %988 = vmatpush1.xpose.msra.mxu0 0.0
        %989 = vmatprep.subr.mxu0 0.0
        %990 = vmatpush1.xpose.msra.mxu0 0.0
        %991 = vmatprep.subr.mxu0 0.0
        %992 = vmatpush1.xpose.msra.mxu0 0.0
        %993 = vmatprep.subr.mxu0 0.0
        %994 = vmatpush1.xpose.msra.mxu0 0.0
        %995 = vmatprep.subr.mxu0 0.0
        %996 = vmatpush1.xpose.msra.mxu0 0.0
        %997 = vmatprep.subr.mxu0 0.0
        %998 = vmatpush1.xpose.msra.mxu0 0.0
        %999 = vmatprep.subr.mxu0 0.0
        %1000 = vmatpush1.xpose.msra.mxu0 0.0
        %1001 = vmatprep.subr.mxu0 0.0
        %1002 = vmatpush1.xpose.msra.mxu0 0.0
        %1003 = vmatprep.subr.mxu0 0.0
        %1004 = vmatpush1.xpose.msra.mxu0 0.0
        %1005 = vmatprep.subr.mxu0 0.0
        %1006 = vmatpush1.xpose.msra.mxu0 0.0
        %1007 = vmatprep.subr.mxu0 0.0
        %1008 = vmatpush1.xpose.msra.mxu0 0.0
        %1009 = vmatprep.subr.mxu0 0.0
        %1010 = vmatpush1.xpose.msra.mxu0 0.0
        %1011 = vmatprep.subr.mxu0 0.0
        %1012 = vmatpush1.xpose.msra.mxu0 0.0
        %1013 = vmatprep.subr.mxu0 0.0
        %1014 = vmatpush1.xpose.msra.mxu0 0.0
        %1015 = vmatprep.subr.mxu0 0.0
        %1016 = vmatpush1.xpose.msra.mxu0 0.0
        %1017 = vmatprep.subr.mxu0 0.0
        %1018 = vmatpush1.xpose.msra.mxu0 0.0
        %1019 = vmatprep.subr.mxu0 0.0
        %1020 = vmatpush1.xpose.msra.mxu0 0.0
        %1021 = vmatprep.subr.mxu0 0.0
        %1022 = vmatpush1.xpose.msra.mxu0 0.0
        %1023 = vmatprep.subr.mxu0 0.0
        %1024 = vmatpush1.xpose.msra.mxu0 0.0
        %1025 = vmatprep.subr.mxu0 0.0
        %1026 = vmatpush1.xpose.msra.mxu0 0.0
        %1027 = vmatprep.subr.mxu0 0.0
        %1028 = vmatpush1.xpose.msra.mxu0 0.0
        %1029 = vmatprep.subr.mxu0 0.0
        %1030 = vmatpush1.xpose.msra.mxu0 0.0
        %1031 = vmatprep.subr.mxu0 0.0
        %1032 = vmatpush1.xpose.msra.mxu0 0.0
        %1033 = vmatprep.subr.mxu0 0.0
        %1034 = vmatpush1.xpose.msra.mxu0 0.0
        %1035 = vmatprep.subr.mxu0 0.0
        %1036 = vmatpush1.xpose.msra.mxu0 0.0
        %1037 = vmatprep.mubr.f32.mxu0 0.0
        %1038 = vmatmul.mubr.f32.gmra.mrb[0].mxu0 %v969
        %v1039 = vpop.f32.mrb[0].mxu0
        %v1040 = vadd.f32 0.0, %v1039
        %v1041 = vpop.f32.mrb[0].mxu0
        %1042 = vdwg.mxu0
        %v1043 = vmul.f32 %v1040, 0.35355338
        %v1044 = vsel %vm797, %v1043, -1e+09
        %v1045 = vsel %vm801, %v1044, -inf
        %1046 = vmax.xlane.f32.xlu0 %v1045
        %v1047 = vpop.xlane.xlu0 %1046
        %v1048 = vsub.f32 %v1044, %v1047
        %v1049 = vmul.f32 %v1048, 1.442695
        %v1050 = vpow.pop %v1049
        %v1051 = vsel %vm801, %v1050, 0.0
        %1052 = vadd.xlane.f32.xlu0 %v1051
        %v1053 = vpop.xlane.xlu0 %1052
        %v1054 = vrcp.pop %v1053
        %v1055 = vmul.f32 %v1050, %v1054
        %1056 = vrot.lane.b32.xlu0 %v788, 56
        %v1057 = vpop.permute.xlu0 %1056
        %v1060 = vsel %vm801, %v1055, 0
        %1062 = vmatprep.subr.mxu0 0.0
        %1063 = vmatpush1.msra.mxu0 %v1057
        %1064 = vmatprep.subr.mxu0 0.0
        %1065 = vmatpush1.msra.mxu0 0.0
        %1066 = vmatprep.subr.mxu0 0.0
        %1067 = vmatpush1.msra.mxu0 0.0
        %1068 = vmatprep.subr.mxu0 0.0
        %1069 = vmatpush1.msra.mxu0 0.0
        %1070 = vmatprep.subr.mxu0 0.0
        %1071 = vmatpush1.msra.mxu0 0.0
        %1072 = vmatprep.subr.mxu0 0.0
        %1073 = vmatpush1.msra.mxu0 0.0
        %1074 = vmatprep.subr.mxu0 0.0
        %1075 = vmatpush1.msra.mxu0 0.0
        %1076 = vmatprep.subr.mxu0 0.0
        %1077 = vmatpush1.msra.mxu0 0.0
        %1078 = vmatprep.subr.mxu0 0.0
        %1079 = vmatpush1.msra.mxu0 0.0
        %1080 = vmatprep.subr.mxu0 0.0
        %1081 = vmatpush1.msra.mxu0 0.0
        %1082 = vmatprep.subr.mxu0 0.0
        %1083 = vmatpush1.msra.mxu0 0.0
        %1084 = vmatprep.subr.mxu0 0.0
        %1085 = vmatpush1.msra.mxu0 0.0
        %1086 = vmatprep.subr.mxu0 0.0
        %1087 = vmatpush1.msra.mxu0 0.0
        %1088 = vmatprep.subr.mxu0 0.0
        %1089 = vmatpush1.msra.mxu0 0.0
        %1090 = vmatprep.subr.mxu0 0.0
        %1091 = vmatpush1.msra.mxu0 0.0
        %1092 = vmatprep.subr.mxu0 0.0
        %1093 = vmatpush1.msra.mxu0 0.0
        %1094 = vmatprep.subr.mxu0 0.0
        %1095 = vmatpush1.msra.mxu0 0.0
        %1096 = vmatprep.subr.mxu0 0.0
        %1097 = vmatpush1.msra.mxu0 0.0
        %1098 = vmatprep.subr.mxu0 0.0
        %1099 = vmatpush1.msra.mxu0 0.0
        %1100 = vmatprep.subr.mxu0 0.0
        %1101 = vmatpush1.msra.mxu0 0.0
        %1102 = vmatprep.subr.mxu0 0.0
        %1103 = vmatpush1.msra.mxu0 0.0
        %1104 = vmatprep.subr.mxu0 0.0
        %1105 = vmatpush1.msra.mxu0 0.0
        %1106 = vmatprep.subr.mxu0 0.0
        %1107 = vmatpush1.msra.mxu0 0.0
        %1108 = vmatprep.subr.mxu0 0.0
        %1109 = vmatpush1.msra.mxu0 0.0
        %1110 = vmatprep.subr.mxu0 0.0
        %1111 = vmatpush1.msra.mxu0 0.0
        %1112 = vmatprep.subr.mxu0 0.0
        %1113 = vmatpush1.msra.mxu0 0.0
        %1114 = vmatprep.subr.mxu0 0.0
        %1115 = vmatpush1.msra.mxu0 0.0
        %1116 = vmatprep.subr.mxu0 0.0
        %1117 = vmatpush1.msra.mxu0 0.0
        %1118 = vmatprep.subr.mxu0 0.0
        %1119 = vmatpush1.msra.mxu0 0.0
        %1120 = vmatprep.subr.mxu0 0.0
        %1121 = vmatpush1.msra.mxu0 0.0
        %1122 = vmatprep.subr.mxu0 0.0
        %1123 = vmatpush1.msra.mxu0 0.0
        %1124 = vmatprep.subr.mxu0 0.0
        %1125 = vmatpush1.msra.mxu0 0.0
        %1126 = vmatprep.mubr.f32.mxu0 0.0
        %1127 = vmatmul.mubr.f32.gmra.mrb[0].mxu0 %v1060
        %v1128 = vpop.f32.mrb[0].mxu0
        %v1129 = vadd.f32 0.0, %v1128
        %v1130 = vpop.f32.mrb[0].mxu0
        %1131 = vdwg.mxu0
        %1132 = vrot.lane.b32.xlu0 %v788, 112
        %v1133 = vpop.permute.xlu0 %1132
        %1134 = vrot.lane.b32.xlu0 %v788, 80
        %v1135 = vpop.permute.xlu0 %1134
        %v1136 = vsel %vm801, %v1133, 0
        %v1138 = vsel %vm801, %v1135, 0
        %1140 = vmatprep.subr.mxu0 0.0
        %1141 = vmatpush1.xpose.msra.mxu0 %v1138
        %1142 = vmatprep.subr.mxu0 0.0
        %1143 = vmatpush1.xpose.msra.mxu0 0.0
        %1144 = vmatprep.subr.mxu0 0.0
        %1145 = vmatpush1.xpose.msra.mxu0 0.0
        %1146 = vmatprep.subr.mxu0 0.0
        %1147 = vmatpush1.xpose.msra.mxu0 0.0
        %1148 = vmatprep.subr.mxu0 0.0
        %1149 = vmatpush1.xpose.msra.mxu0 0.0
        %1150 = vmatprep.subr.mxu0 0.0
        %1151 = vmatpush1.xpose.msra.mxu0 0.0
        %1152 = vmatprep.subr.mxu0 0.0
        %1153 = vmatpush1.xpose.msra.mxu0 0.0
        %1154 = vmatprep.subr.mxu0 0.0
        %1155 = vmatpush1.xpose.msra.mxu0 0.0
        %1156 = vmatprep.subr.mxu0 0.0
        %1157 = vmatpush1.xpose.msra.mxu0 0.0
        %1158 = vmatprep.subr.mxu0 0.0
        %1159 = vmatpush1.xpose.msra.mxu0 0.0
        %1160 = vmatprep.subr.mxu0 0.0
        %1161 = vmatpush1.xpose.msra.mxu0 0.0
        %1162 = vmatprep.subr.mxu0 0.0
        %1163 = vmatpush1.xpose.msra.mxu0 0.0
        %1164 = vmatprep.subr.mxu0 0.0
        %1165 = vmatpush1.xpose.msra.mxu0 0.0
        %1166 = vmatprep.subr.mxu0 0.0
        %1167 = vmatpush1.xpose.msra.mxu0 0.0
        %1168 = vmatprep.subr.mxu0 0.0
        %1169 = vmatpush1.xpose.msra.mxu0 0.0
        %1170 = vmatprep.subr.mxu0 0.0
        %1171 = vmatpush1.xpose.msra.mxu0 0.0
        %1172 = vmatprep.subr.mxu0 0.0
        %1173 = vmatpush1.xpose.msra.mxu0 0.0
        %1174 = vmatprep.subr.mxu0 0.0
        %1175 = vmatpush1.xpose.msra.mxu0 0.0
        %1176 = vmatprep.subr.mxu0 0.0
        %1177 = vmatpush1.xpose.msra.mxu0 0.0
        %1178 = vmatprep.subr.mxu0 0.0
        %1179 = vmatpush1.xpose.msra.mxu0 0.0
        %1180 = vmatprep.subr.mxu0 0.0
        %1181 = vmatpush1.xpose.msra.mxu0 0.0
        %1182 = vmatprep.subr.mxu0 0.0
        %1183 = vmatpush1.xpose.msra.mxu0 0.0
        %1184 = vmatprep.subr.mxu0 0.0
        %1185 = vmatpush1.xpose.msra.mxu0 0.0
        %1186 = vmatprep.subr.mxu0 0.0
        %1187 = vmatpush1.xpose.msra.mxu0 0.0
        %1188 = vmatprep.subr.mxu0 0.0
        %1189 = vmatpush1.xpose.msra.mxu0 0.0
        %1190 = vmatprep.subr.mxu0 0.0
        %1191 = vmatpush1.xpose.msra.mxu0 0.0
        %1192 = vmatprep.subr.mxu0 0.0
        %1193 = vmatpush1.xpose.msra.mxu0 0.0
        %1194 = vmatprep.subr.mxu0 0.0
        %1195 = vmatpush1.xpose.msra.mxu0 0.0
        %1196 = vmatprep.subr.mxu0 0.0
        %1197 = vmatpush1.xpose.msra.mxu0 0.0
        %1198 = vmatprep.subr.mxu0 0.0
        %1199 = vmatpush1.xpose.msra.mxu0 0.0
        %1200 = vmatprep.subr.mxu0 0.0
        %1201 = vmatpush1.xpose.msra.mxu0 0.0
        %1202 = vmatprep.subr.mxu0 0.0
        %1203 = vmatpush1.xpose.msra.mxu0 0.0
        %1204 = vmatprep.mubr.f32.mxu0 0.0
        %1205 = vmatmul.mubr.f32.gmra.mrb[0].mxu0 %v1136
        %v1206 = vpop.f32.mrb[0].mxu0
        %v1207 = vadd.f32 0.0, %v1206
        %v1208 = vpop.f32.mrb[0].mxu0
        %1209 = vdwg.mxu0
        %v1210 = vmul.f32 %v1207, 0.35355338
        %v1211 = vsel %vm797, %v1210, -1e+09
        %v1212 = vsel %vm801, %v1211, -inf
        %1213 = vmax.xlane.f32.xlu0 %v1212
        %v1214 = vpop.xlane.xlu0 %1213
        %v1215 = vsub.f32 %v1211, %v1214
        %v1216 = vmul.f32 %v1215, 1.442695
        %v1217 = vpow.pop %v1216
        %v1218 = vsel %vm801, %v1217, 0.0
        %1219 = vadd.xlane.f32.xlu0 %v1218
        %v1220 = vpop.xlane.xlu0 %1219
        %v1221 = vrcp.pop %v1220
        %v1222 = vmul.f32 %v1217, %v1221
        %1223 = vrot.lane.b32.xlu0 %v788, 48
        %v1224 = vpop.permute.xlu0 %1223
        %v1227 = vsel %vm801, %v1222, 0
        %1229 = vmatprep.subr.mxu0 0.0
        %1230 = vmatpush1.msra.mxu0 %v1224
        %1231 = vmatprep.subr.mxu0 0.0
        %1232 = vmatpush1.msra.mxu0 0.0
        %1233 = vmatprep.subr.mxu0 0.0
        %1234 = vmatpush1.msra.mxu0 0.0
        %1235 = vmatprep.subr.mxu0 0.0
        %1236 = vmatpush1.msra.mxu0 0.0
        %1237 = vmatprep.subr.mxu0 0.0
        %1238 = vmatpush1.msra.mxu0 0.0
        %1239 = vmatprep.subr.mxu0 0.0
        %1240 = vmatpush1.msra.mxu0 0.0
        %1241 = vmatprep.subr.mxu0 0.0
        %1242 = vmatpush1.msra.mxu0 0.0
        %1243 = vmatprep.subr.mxu0 0.0
        %1244 = vmatpush1.msra.mxu0 0.0
        %1245 = vmatprep.subr.mxu0 0.0
        %1246 = vmatpush1.msra.mxu0 0.0
        %1247 = vmatprep.subr.mxu0 0.0
        %1248 = vmatpush1.msra.mxu0 0.0
        %1249 = vmatprep.subr.mxu0 0.0
        %1250 = vmatpush1.msra.mxu0 0.0
        %1251 = vmatprep.subr.mxu0 0.0
        %1252 = vmatpush1.msra.mxu0 0.0
        %1253 = vmatprep.subr.mxu0 0.0
        %1254 = vmatpush1.msra.mxu0 0.0
        %1255 = vmatprep.subr.mxu0 0.0
        %1256 = vmatpush1.msra.mxu0 0.0
        %1257 = vmatprep.subr.mxu0 0.0
        %1258 = vmatpush1.msra.mxu0 0.0
        %1259 = vmatprep.subr.mxu0 0.0
        %1260 = vmatpush1.msra.mxu0 0.0
        %1261 = vmatprep.subr.mxu0 0.0
        %1262 = vmatpush1.msra.mxu0 0.0
        %1263 = vmatprep.subr.mxu0 0.0
        %1264 = vmatpush1.msra.mxu0 0.0
        %1265 = vmatprep.subr.mxu0 0.0
        %1266 = vmatpush1.msra.mxu0 0.0
        %1267 = vmatprep.subr.mxu0 0.0
        %1268 = vmatpush1.msra.mxu0 0.0
        %1269 = vmatprep.subr.mxu0 0.0
        %1270 = vmatpush1.msra.mxu0 0.0
        %1271 = vmatprep.subr.mxu0 0.0
        %1272 = vmatpush1.msra.mxu0 0.0
        %1273 = vmatprep.subr.mxu0 0.0
        %1274 = vmatpush1.msra.mxu0 0.0
        %1275 = vmatprep.subr.mxu0 0.0
        %1276 = vmatpush1.msra.mxu0 0.0
        %1277 = vmatprep.subr.mxu0 0.0
        %1278 = vmatpush1.msra.mxu0 0.0
        %1279 = vmatprep.subr.mxu0 0.0
        %1280 = vmatpush1.msra.mxu0 0.0
        %1281 = vmatprep.subr.mxu0 0.0
        %1282 = vmatpush1.msra.mxu0 0.0
        %1283 = vmatprep.subr.mxu0 0.0
        %1284 = vmatpush1.msra.mxu0 0.0
        %1285 = vmatprep.subr.mxu0 0.0
        %1286 = vmatpush1.msra.mxu0 0.0
        %1287 = vmatprep.subr.mxu0 0.0
        %1288 = vmatpush1.msra.mxu0 0.0
        %1289 = vmatprep.subr.mxu0 0.0
        %1290 = vmatpush1.msra.mxu0 0.0
        %1291 = vmatprep.subr.mxu0 0.0
        %1292 = vmatpush1.msra.mxu0 0.0
        %1293 = vmatprep.mubr.f32.mxu0 0.0
        %1294 = vmatmul.mubr.f32.gmra.mrb[0].mxu0 %v1227
        %v1295 = vpop.f32.mrb[0].mxu0
        %v1296 = vadd.f32 0.0, %v1295
        %v1297 = vpop.f32.mrb[0].mxu0
        %1298 = vdwg.mxu0
        %1299 = vrot.lane.b32.xlu0 %v788, 104
        %v1300 = vpop.permute.xlu0 %1299
        %1301 = vrot.lane.b32.xlu0 %v788, 72
        %v1302 = vpop.permute.xlu0 %1301
        %v1303 = vsel %vm801, %v1300, 0
        %v1305 = vsel %vm801, %v1302, 0
        %1307 = vmatprep.subr.mxu0 0.0
        %1308 = vmatpush1.xpose.msra.mxu0 %v1305
        %1309 = vmatprep.subr.mxu0 0.0
        %1310 = vmatpush1.xpose.msra.mxu0 0.0
        %1311 = vmatprep.subr.mxu0 0.0
        %1312 = vmatpush1.xpose.msra.mxu0 0.0
        %1313 = vmatprep.subr.mxu0 0.0
        %1314 = vmatpush1.xpose.msra.mxu0 0.0
        %1315 = vmatprep.subr.mxu0 0.0
        %1316 = vmatpush1.xpose.msra.mxu0 0.0
        %1317 = vmatprep.subr.mxu0 0.0
        %1318 = vmatpush1.xpose.msra.mxu0 0.0
        %1319 = vmatprep.subr.mxu0 0.0
        %1320 = vmatpush1.xpose.msra.mxu0 0.0
        %1321 = vmatprep.subr.mxu0 0.0
        %1322 = vmatpush1.xpose.msra.mxu0 0.0
        %1323 = vmatprep.subr.mxu0 0.0
        %1324 = vmatpush1.xpose.msra.mxu0 0.0
        %1325 = vmatprep.subr.mxu0 0.0
        %1326 = vmatpush1.xpose.msra.mxu0 0.0
        %1327 = vmatprep.subr.mxu0 0.0
        %1328 = vmatpush1.xpose.msra.mxu0 0.0
        %1329 = vmatprep.subr.mxu0 0.0
        %1330 = vmatpush1.xpose.msra.mxu0 0.0
        %1331 = vmatprep.subr.mxu0 0.0
        %1332 = vmatpush1.xpose.msra.mxu0 0.0
        %1333 = vmatprep.subr.mxu0 0.0
        %1334 = vmatpush1.xpose.msra.mxu0 0.0
        %1335 = vmatprep.subr.mxu0 0.0
        %1336 = vmatpush1.xpose.msra.mxu0 0.0
        %1337 = vmatprep.subr.mxu0 0.0
        %1338 = vmatpush1.xpose.msra.mxu0 0.0
        %1339 = vmatprep.subr.mxu0 0.0
        %1340 = vmatpush1.xpose.msra.mxu0 0.0
        %1341 = vmatprep.subr.mxu0 0.0
        %1342 = vmatpush1.xpose.msra.mxu0 0.0
        %1343 = vmatprep.subr.mxu0 0.0
        %1344 = vmatpush1.xpose.msra.mxu0 0.0
        %1345 = vmatprep.subr.mxu0 0.0
        %1346 = vmatpush1.xpose.msra.mxu0 0.0
        %1347 = vmatprep.subr.mxu0 0.0
        %1348 = vmatpush1.xpose.msra.mxu0 0.0
        %1349 = vmatprep.subr.mxu0 0.0
        %1350 = vmatpush1.xpose.msra.mxu0 0.0
        %1351 = vmatprep.subr.mxu0 0.0
        %1352 = vmatpush1.xpose.msra.mxu0 0.0
        %1353 = vmatprep.subr.mxu0 0.0
        %1354 = vmatpush1.xpose.msra.mxu0 0.0
        %1355 = vmatprep.subr.mxu0 0.0
        %1356 = vmatpush1.xpose.msra.mxu0 0.0
        %1357 = vmatprep.subr.mxu0 0.0
        %1358 = vmatpush1.xpose.msra.mxu0 0.0
        %1359 = vmatprep.subr.mxu0 0.0
        %1360 = vmatpush1.xpose.msra.mxu0 0.0
        %1361 = vmatprep.subr.mxu0 0.0
        %1362 = vmatpush1.xpose.msra.mxu0 0.0
        %1363 = vmatprep.subr.mxu0 0.0
        %1364 = vmatpush1.xpose.msra.mxu0 0.0
        %1365 = vmatprep.subr.mxu0 0.0
        %1366 = vmatpush1.xpose.msra.mxu0 0.0
        %1367 = vmatprep.subr.mxu0 0.0
        %1368 = vmatpush1.xpose.msra.mxu0 0.0
        %1369 = vmatprep.subr.mxu0 0.0
        %1370 = vmatpush1.xpose.msra.mxu0 0.0
        %1371 = vmatprep.mubr.f32.mxu0 0.0
        %1372 = vmatmul.mubr.f32.gmra.mrb[0].mxu0 %v1303
        %v1373 = vpop.f32.mrb[0].mxu0
        %v1374 = vadd.f32 0.0, %v1373
        %v1375 = vpop.f32.mrb[0].mxu0
        %1376 = vdwg.mxu0
        %v1377 = vmul.f32 %v1374, 0.35355338
        %v1378 = vsel %vm797, %v1377, -1e+09
        %v1379 = vsel %vm801, %v1378, -inf
        %1380 = vmax.xlane.f32.xlu0 %v1379
        %v1381 = vpop.xlane.xlu0 %1380
        %v1382 = vsub.f32 %v1378, %v1381
        %v1383 = vmul.f32 %v1382, 1.442695
        %v1384 = vpow.pop %v1383
        %v1385 = vsel %vm801, %v1384, 0.0
        %1386 = vadd.xlane.f32.xlu0 %v1385
        %v1387 = vpop.xlane.xlu0 %1386
        %v1388 = vrcp.pop %v1387
        %v1389 = vmul.f32 %v1384, %v1388
        %1390 = vrot.lane.b32.xlu0 %v788, 40
        %v1391 = vpop.permute.xlu0 %1390
        %v1394 = vsel %vm801, %v1389, 0
        %1396 = vmatprep.subr.mxu0 0.0
        %1397 = vmatpush1.msra.mxu0 %v1391
        %1398 = vmatprep.subr.mxu0 0.0
        %1399 = vmatpush1.msra.mxu0 0.0
        %1400 = vmatprep.subr.mxu0 0.0
        %1401 = vmatpush1.msra.mxu0 0.0
        %1402 = vmatprep.subr.mxu0 0.0
        %1403 = vmatpush1.msra.mxu0 0.0
        %1404 = vmatprep.subr.mxu0 0.0
        %1405 = vmatpush1.msra.mxu0 0.0
        %1406 = vmatprep.subr.mxu0 0.0
        %1407 = vmatpush1.msra.mxu0 0.0
        %1408 = vmatprep.subr.mxu0 0.0
        %1409 = vmatpush1.msra.mxu0 0.0
        %1410 = vmatprep.subr.mxu0 0.0
        %1411 = vmatpush1.msra.mxu0 0.0
        %1412 = vmatprep.subr.mxu0 0.0
        %1413 = vmatpush1.msra.mxu0 0.0
        %1414 = vmatprep.subr.mxu0 0.0
        %1415 = vmatpush1.msra.mxu0 0.0
        %1416 = vmatprep.subr.mxu0 0.0
        %1417 = vmatpush1.msra.mxu0 0.0
        %1418 = vmatprep.subr.mxu0 0.0
        %1419 = vmatpush1.msra.mxu0 0.0
        %1420 = vmatprep.subr.mxu0 0.0
        %1421 = vmatpush1.msra.mxu0 0.0
        %1422 = vmatprep.subr.mxu0 0.0
        %1423 = vmatpush1.msra.mxu0 0.0
        %1424 = vmatprep.subr.mxu0 0.0
        %1425 = vmatpush1.msra.mxu0 0.0
        %1426 = vmatprep.subr.mxu0 0.0
        %1427 = vmatpush1.msra.mxu0 0.0
        %1428 = vmatprep.subr.mxu0 0.0
        %1429 = vmatpush1.msra.mxu0 0.0
        %1430 = vmatprep.subr.mxu0 0.0
        %1431 = vmatpush1.msra.mxu0 0.0
        %1432 = vmatprep.subr.mxu0 0.0
        %1433 = vmatpush1.msra.mxu0 0.0
        %1434 = vmatprep.subr.mxu0 0.0
        %1435 = vmatpush1.msra.mxu0 0.0
        %1436 = vmatprep.subr.mxu0 0.0
        %1437 = vmatpush1.msra.mxu0 0.0
        %1438 = vmatprep.subr.mxu0 0.0
        %1439 = vmatpush1.msra.mxu0 0.0
        %1440 = vmatprep.subr.mxu0 0.0
        %1441 = vmatpush1.msra.mxu0 0.0
        %1442 = vmatprep.subr.mxu0 0.0
        %1443 = vmatpush1.msra.mxu0 0.0
        %1444 = vmatprep.subr.mxu0 0.0
        %1445 = vmatpush1.msra.mxu0 0.0
        %1446 = vmatprep.subr.mxu0 0.0
        %1447 = vmatpush1.msra.mxu0 0.0
        %1448 = vmatprep.subr.mxu0 0.0
        %1449 = vmatpush1.msra.mxu0 0.0
        %1450 = vmatprep.subr.mxu0 0.0
        %1451 = vmatpush1.msra.mxu0 0.0
        %1452 = vmatprep.subr.mxu0 0.0
        %1453 = vmatpush1.msra.mxu0 0.0
        %1454 = vmatprep.subr.mxu0 0.0
        %1455 = vmatpush1.msra.mxu0 0.0
        %1456 = vmatprep.subr.mxu0 0.0
        %1457 = vmatpush1.msra.mxu0 0.0
        %1458 = vmatprep.subr.mxu0 0.0
        %1459 = vmatpush1.msra.mxu0 0.0
        %1460 = vmatprep.mubr.f32.mxu0 0.0
        %1461 = vmatmul.mubr.f32.gmra.mrb[0].mxu0 %v1394
        %v1462 = vpop.f32.mrb[0].mxu0
        %v1463 = vadd.f32 0.0, %v1462
        %v1464 = vpop.f32.mrb[0].mxu0
        %1465 = vdwg.mxu0
        %1467 = vrot.lane.b32.xlu0 %v1129, 8
        %v1468 = vpop.permute.xlu0 %1467
        %1471 = vrot.lane.b32.xlu0 %v1296, 16
        %v1472 = vpop.permute.xlu0 %1471
        %1475 = vrot.lane.b32.xlu0 %v1463, 24
        %v1476 = vpop.permute.xlu0 %1475
        %v1478 = vsel %vm801, %v962, %v1468
        %vm1479 = vcmask 130048
        %v1480 = vsel %vm1479, %v1478, %v1472
        %vm1481 = vcmask 195584
        %v1482 = vsel %vm1481, %v1480, %v1476
        %v1483 = vpack.c.bf16 %v1482, %v1482
        %v1484 = vld [vmem:[%s4] sm:$0xf]
        %v1485 = vld [vmem:[%s4 + $0x4] sm:$0xf]
        %v1486 = vld [vmem:[%s4 + $0x8] sm:$0xf]
        %v1487 = vld [vmem:[%s4 + $0xc] sm:$0xf]
        %v1488 = vld [vmem:[%s5] sm:$0x1]
        %v1490 = vlaneseq
        %v1491 = vshrl.u32 %v1490, 7
        %v1492 = vsub.s32 0, %v1491
        %v1493 = vrot.slane %v1488, %v1492
        %v1499 = vunpack.c.l.b16 %v1484
        %v1500 = vunpack.c.l.b16 %v1485
        %v1501 = vunpack.c.l.b16 %v1486
        %v1502 = vunpack.c.l.b16 %v1487
        %v1503 = vpack.c.b16 %v1500, %v1499
        %v1504 = vpack.c.b16 %v1502, %v1501
        %v1508 = vsel %vm749, %v1483, 0
        %1510 = vmatprep.subr.bf16.mxu0 0
        %1511 = vmatpush1.bf16.msra.mxu0 %v1503
        %1512 = vmatprep.subr.bf16.mxu0 0
        %1513 = vmatpush1.bf16.msra.mxu0 %v1504
        %1514 = vmatprep.subr.bf16.mxu0 0
        %1515 = vmatpush1.bf16.msra.mxu0 0
        %1516 = vmatprep.subr.bf16.mxu0 0
        %1517 = vmatpush1.bf16.msra.mxu0 0
        %1518 = vmatprep.subr.bf16.mxu0 0
        %1519 = vmatpush1.bf16.msra.mxu0 0
        %1520 = vmatprep.subr.bf16.mxu0 0
        %1521 = vmatpush1.bf16.msra.mxu0 0
        %1522 = vmatprep.subr.bf16.mxu0 0
        %1523 = vmatpush1.bf16.msra.mxu0 0
        %1524 = vmatprep.subr.bf16.mxu0 0
        %1525 = vmatpush1.bf16.msra.mxu0 0
        %1526 = vmatprep.subr.bf16.mxu0 0
        %1527 = vmatpush1.bf16.msra.mxu0 0
        %1528 = vmatprep.subr.bf16.mxu0 0
        %1529 = vmatpush1.bf16.msra.mxu0 0
        %1530 = vmatprep.subr.bf16.mxu0 0
        %1531 = vmatpush1.bf16.msra.mxu0 0
        %1532 = vmatprep.subr.bf16.mxu0 0
        %1533 = vmatpush1.bf16.msra.mxu0 0
        %1534 = vmatprep.subr.bf16.mxu0 0
        %1535 = vmatpush1.bf16.msra.mxu0 0
        %1536 = vmatprep.subr.bf16.mxu0 0
        %1537 = vmatpush1.bf16.msra.mxu0 0
        %1538 = vmatprep.subr.bf16.mxu0 0
        %1539 = vmatpush1.bf16.msra.mxu0 0
        %1540 = vmatprep.subr.bf16.mxu0 0
        %1541 = vmatpush1.bf16.msra.mxu0 0
        %1542 = vmatprep.mubr.bf16.mxu0 0
        %1543 = vmatmul.mubr.bf16.gmra.mrb[0].mxu0 %v1508
        %v1544 = vpop.f32.mrb[0].mxu0
        %v1545 = vadd.f32 %v1493, %v1544
        %v1546 = vpop.f32.mrb[0].mxu0
        %v1547 = vpop.f32.mrb[0].mxu0
        %v1548 = vpop.f32.mrb[0].mxu0
        %1549 = vdwg.mxu0
        %v1550 = vadd.f32 %v723, %v1545
        %v1551 = vld [vmem:[%s6] sm:$0x1]
        %v1552 = vld [vmem:[%s7] sm:$0x1]
        %v1553 = vsel %vm749, %v1550, 0.0
        %1554 = vadd.xlane.f32.xlu0 %v1553
        %v1555 = vpop.xlane.xlu0 %1554
        %v1556 = vrcp.pop 32.0
        %v1557 = vmul.f32 %v1555, %v1556
        %v1558 = vsub.f32 %v1550, %v1557
        %v1559 = vmul.f32 %v1558, %v1558
        %v1560 = vsel %vm749, %v1559, 0.0
        %1561 = vadd.xlane.f32.xlu0 %v1560
        %v1562 = vpop.xlane.xlu0 %1561
        %v1563 = vmul.f32 %v1562, %v1556
        %v1564 = vadd.f32 %v1563, 1e-05
        %v1565 = vrsqrt.pop %v1564
        %v1566 = vmul.f32 %v1558, %v1565
        %v1568 = vlaneseq
        %v1569 = vshrl.u32 %v1568, 7
        %v1570 = vsub.s32 0, %v1569
        %v1571 = vrot.slane %v1551, %v1570
        %v1573 = vmul.f32 %v1566, %v1571
        %v1575 = vlaneseq
        %v1576 = vshrl.u32 %v1575, 7
        %v1577 = vsub.s32 0, %v1576
        %v1578 = vrot.slane %v1552, %v1577
        %v1580 = vadd.f32 %v1573, %v1578
        %v1581 = vpack.c.bf16 %v1580, %v1580
        %v1582 = vld [vmem:[%s8] sm:$0xf]
        %v1583 = vld [vmem:[%s8 + $0x4] sm:$0xf]
        %v1584 = vld [vmem:[%s8 + $0x8] sm:$0xf]
        %v1585 = vld [vmem:[%s8 + $0xc] sm:$0xf]
        %v1586 = vld [vmem:[%s9] sm:$0x1]
        %v1588 = vlaneseq
        %v1589 = vshrl.u32 %v1588, 7
        %v1590 = vsub.s32 0, %v1589
        %v1591 = vrot.slane %v1586, %v1590
        %v1597 = vunpack.c.l.b16 %v1582
        %v1598 = vunpack.c.l.b16 %v1583
        %v1599 = vunpack.c.l.b16 %v1584
        %v1600 = vunpack.c.l.b16 %v1585
        %v1601 = vpack.c.b16 %v1598, %v1597
        %v1602 = vpack.c.b16 %v1600, %v1599
        %v1606 = vsel %vm749, %v1581, 0
        %1608 = vmatprep.subr.bf16.mxu0 0
        %1609 = vmatpush1.bf16.msra.mxu0 %v1601
        %1610 = vmatprep.subr.bf16.mxu0 0
        %1611 = vmatpush1.bf16.msra.mxu0 %v1602
        %1612 = vmatprep.subr.bf16.mxu0 0
        %1613 = vmatpush1.bf16.msra.mxu0 0
        %1614 = vmatprep.subr.bf16.mxu0 0
        %1615 = vmatpush1.bf16.msra.mxu0 0
        %1616 = vmatprep.subr.bf16.mxu0 0
        %1617 = vmatpush1.bf16.msra.mxu0 0
        %1618 = vmatprep.subr.bf16.mxu0 0
        %1619 = vmatpush1.bf16.msra.mxu0 0
        %1620 = vmatprep.subr.bf16.mxu0 0
        %1621 = vmatpush1.bf16.msra.mxu0 0
        %1622 = vmatprep.subr.bf16.mxu0 0
        %1623 = vmatpush1.bf16.msra.mxu0 0
        %1624 = vmatprep.subr.bf16.mxu0 0
        %1625 = vmatpush1.bf16.msra.mxu0 0
        %1626 = vmatprep.subr.bf16.mxu0 0
        %1627 = vmatpush1.bf16.msra.mxu0 0
        %1628 = vmatprep.subr.bf16.mxu0 0
        %1629 = vmatpush1.bf16.msra.mxu0 0
        %1630 = vmatprep.subr.bf16.mxu0 0
        %1631 = vmatpush1.bf16.msra.mxu0 0
        %1632 = vmatprep.subr.bf16.mxu0 0
        %1633 = vmatpush1.bf16.msra.mxu0 0
        %1634 = vmatprep.subr.bf16.mxu0 0
        %1635 = vmatpush1.bf16.msra.mxu0 0
        %1636 = vmatprep.subr.bf16.mxu0 0
        %1637 = vmatpush1.bf16.msra.mxu0 0
        %1638 = vmatprep.subr.bf16.mxu0 0
        %1639 = vmatpush1.bf16.msra.mxu0 0
        %1640 = vmatprep.mubr.bf16.mxu0 0
        %1641 = vmatmul.mubr.bf16.gmra.mrb[0].mxu0 %v1606
        %v1642 = vpop.f32.mrb[0].mxu0
        %v1643 = vadd.f32 %v1591, %v1642
        %v1644 = vpop.f32.mrb[0].mxu0
        %v1645 = vpop.f32.mrb[0].mxu0
        %v1646 = vpop.f32.mrb[0].mxu0
        %1647 = vdwg.mxu0
        %v1648 = vpack.c.bf16 %v724, %v724
        %v1649 = vld [vmem:[%s10] sm:$0xf]
        %v1650 = vld [vmem:[%s10 + $0x4] sm:$0xf]
        %v1651 = vld [vmem:[%s10 + $0x8] sm:$0xf]
        %v1652 = vld [vmem:[%s10 + $0xc] sm:$0xf]
        %v1653 = vld [vmem:[%s11] sm:$0x1]
        %v1655 = vlaneseq
        %v1656 = vshrl.u32 %v1655, 7
        %v1657 = vsub.s32 0, %v1656
        %v1658 = vrot.slane %v1653, %v1657
        %v1664 = vunpack.c.l.b16 %v1649
        %v1665 = vunpack.c.l.b16 %v1650
        %v1666 = vunpack.c.l.b16 %v1651
        %v1667 = vunpack.c.l.b16 %v1652
        %v1668 = vpack.c.b16 %v1665, %v1664
        %v1669 = vpack.c.b16 %v1667, %v1666
        %v1673 = vsel %vm749, %v1648, 0
        %1675 = vmatprep.subr.bf16.mxu0 0
        %1676 = vmatpush1.bf16.msra.mxu0 %v1668
        %1677 = vmatprep.subr.bf16.mxu0 0
        %1678 = vmatpush1.bf16.msra.mxu0 %v1669
        %1679 = vmatprep.subr.bf16.mxu0 0
        %1680 = vmatpush1.bf16.msra.mxu0 0
        %1681 = vmatprep.subr.bf16.mxu0 0
        %1682 = vmatpush1.bf16.msra.mxu0 0
        %1683 = vmatprep.subr.bf16.mxu0 0
        %1684 = vmatpush1.bf16.msra.mxu0 0
        %1685 = vmatprep.subr.bf16.mxu0 0
        %1686 = vmatpush1.bf16.msra.mxu0 0
        %1687 = vmatprep.subr.bf16.mxu0 0
        %1688 = vmatpush1.bf16.msra.mxu0 0
        %1689 = vmatprep.subr.bf16.mxu0 0
        %1690 = vmatpush1.bf16.msra.mxu0 0
        %1691 = vmatprep.subr.bf16.mxu0 0
        %1692 = vmatpush1.bf16.msra.mxu0 0
        %1693 = vmatprep.subr.bf16.mxu0 0
        %1694 = vmatpush1.bf16.msra.mxu0 0
        %1695 = vmatprep.subr.bf16.mxu0 0
        %1696 = vmatpush1.bf16.msra.mxu0 0
        %1697 = vmatprep.subr.bf16.mxu0 0
        %1698 = vmatpush1.bf16.msra.mxu0 0
        %1699 = vmatprep.subr.bf16.mxu0 0
        %1700 = vmatpush1.bf16.msra.mxu0 0
        %1701 = vmatprep.subr.bf16.mxu0 0
        %1702 = vmatpush1.bf16.msra.mxu0 0
        %1703 = vmatprep.subr.bf16.mxu0 0
        %1704 = vmatpush1.bf16.msra.mxu0 0
        %1705 = vmatprep.subr.bf16.mxu0 0
        %1706 = vmatpush1.bf16.msra.mxu0 0
        %1707 = vmatprep.mubr.bf16.mxu0 0
        %1708 = vmatmul.mubr.bf16.gmra.mrb[0].mxu0 %v1673
        %v1709 = vpop.f32.mrb[0].mxu0
        %v1710 = vadd.f32 %v1658, %v1709
        %v1711 = vpop.f32.mrb[0].mxu0
        %v1712 = vpop.f32.mrb[0].mxu0
        %v1713 = vpop.f32.mrb[0].mxu0
        %1714 = vdwg.mxu0
        %v1716 = vsel %vm801, %v1643, 0
        %v1719 = vsel %vm801, %v1710, 0
        %1721 = vmatprep.subr.mxu0 0.0
        %1722 = vmatpush1.xpose.msra.mxu0 %v1719
        %1723 = vmatprep.subr.mxu0 0.0
        %1724 = vmatpush1.xpose.msra.mxu0 0.0
        %1725 = vmatprep.subr.mxu0 0.0
        %1726 = vmatpush1.xpose.msra.mxu0 0.0
        %1727 = vmatprep.subr.mxu0 0.0
        %1728 = vmatpush1.xpose.msra.mxu0 0.0
        %1729 = vmatprep.subr.mxu0 0.0
        %1730 = vmatpush1.xpose.msra.mxu0 0.0
        %1731 = vmatprep.subr.mxu0 0.0
        %1732 = vmatpush1.xpose.msra.mxu0 0.0
        %1733 = vmatprep.subr.mxu0 0.0
        %1734 = vmatpush1.xpose.msra.mxu0 0.0
        %1735 = vmatprep.subr.mxu0 0.0
        %1736 = vmatpush1.xpose.msra.mxu0 0.0
        %1737 = vmatprep.subr.mxu0 0.0
        %1738 = vmatpush1.xpose.msra.mxu0 0.0
        %1739 = vmatprep.subr.mxu0 0.0
        %1740 = vmatpush1.xpose.msra.mxu0 0.0
        %1741 = vmatprep.subr.mxu0 0.0
        %1742 = vmatpush1.xpose.msra.mxu0 0.0
        %1743 = vmatprep.subr.mxu0 0.0
        %1744 = vmatpush1.xpose.msra.mxu0 0.0
        %1745 = vmatprep.subr.mxu0 0.0
        %1746 = vmatpush1.xpose.msra.mxu0 0.0
        %1747 = vmatprep.subr.mxu0 0.0
        %1748 = vmatpush1.xpose.msra.mxu0 0.0
        %1749 = vmatprep.subr.mxu0 0.0
        %1750 = vmatpush1.xpose.msra.mxu0 0.0
        %1751 = vmatprep.subr.mxu0 0.0
        %1752 = vmatpush1.xpose.msra.mxu0 0.0
        %1753 = vmatprep.subr.mxu0 0.0
        %1754 = vmatpush1.xpose.msra.mxu0 0.0
        %1755 = vmatprep.subr.mxu0 0.0
        %1756 = vmatpush1.xpose.msra.mxu0 0.0
        %1757 = vmatprep.subr.mxu0 0.0
        %1758 = vmatpush1.xpose.msra.mxu0 0.0
        %1759 = vmatprep.subr.mxu0 0.0
        %1760 = vmatpush1.xpose.msra.mxu0 0.0
        %1761 = vmatprep.subr.mxu0 0.0
        %1762 = vmatpush1.xpose.msra.mxu0 0.0
        %1763 = vmatprep.subr.mxu0 0.0
        %1764 = vmatpush1.xpose.msra.mxu0 0.0
        %1765 = vmatprep.subr.mxu0 0.0
        %1766 = vmatpush1.xpose.msra.mxu0 0.0
        %1767 = vmatprep.subr.mxu0 0.0
        %1768 = vmatpush1.xpose.msra.mxu0 0.0
        %1769 = vmatprep.subr.mxu0 0.0
        %1770 = vmatpush1.xpose.msra.mxu0 0.0
        %1771 = vmatprep.subr.mxu0 0.0
        %1772 = vmatpush1.xpose.msra.mxu0 0.0
        %1773 = vmatprep.subr.mxu0 0.0
        %1774 = vmatpush1.xpose.msra.mxu0 0.0
        %1775 = vmatprep.subr.mxu0 0.0
        %1776 = vmatpush1.xpose.msra.mxu0 0.0
        %1777 = vmatprep.subr.mxu0 0.0
        %1778 = vmatpush1.xpose.msra.mxu0 0.0
        %1779 = vmatprep.subr.mxu0 0.0
        %1780 = vmatpush1.xpose.msra.mxu0 0.0
        %1781 = vmatprep.subr.mxu0 0.0
        %1782 = vmatpush1.xpose.msra.mxu0 0.0
        %1783 = vmatprep.subr.mxu0 0.0
        %1784 = vmatpush1.xpose.msra.mxu0 0.0
        %1785 = vmatprep.mubr.f32.mxu0 0.0
        %1786 = vmatmul.mubr.f32.gmra.mrb[0].mxu0 %v1716
        %v1787 = vpop.f32.mrb[0].mxu0
        %v1788 = vadd.f32 0.0, %v1787
        %v1789 = vpop.f32.mrb[0].mxu0
        %1790 = vdwg.mxu0
        %v1791 = vmul.f32 %v1788, 0.35355338
        %v1792 = vsel %vm801, %v1791, -inf
        %1793 = vmax.xlane.f32.xlu0 %v1792
        %v1794 = vpop.xlane.xlu0 %1793
        %v1795 = vsub.f32 %v1791, %v1794
        %v1796 = vmul.f32 %v1795, 1.442695
        %v1797 = vpow.pop %v1796
        %v1798 = vsel %vm801, %v1797, 0.0
        %1799 = vadd.xlane.f32.xlu0 %v1798
        %v1800 = vpop.xlane.xlu0 %1799
        %v1801 = vrcp.pop %v1800
        %v1802 = vmul.f32 %v1797, %v1801
        %1803 = vrot.lane.b32.xlu0 %v1710, 96
        %v1804 = vpop.permute.xlu0 %1803
        %v1807 = vsel %vm801, %v1802, 0
        %1809 = vmatprep.subr.mxu0 0.0
        %1810 = vmatpush1.msra.mxu0 %v1804
        %1811 = vmatprep.subr.mxu0 0.0
        %1812 = vmatpush1.msra.mxu0 0.0
        %1813 = vmatprep.subr.mxu0 0.0
        %1814 = vmatpush1.msra.mxu0 0.0
        %1815 = vmatprep.subr.mxu0 0.0
        %1816 = vmatpush1.msra.mxu0 0.0
        %1817 = vmatprep.subr.mxu0 0.0
        %1818 = vmatpush1.msra.mxu0 0.0
        %1819 = vmatprep.subr.mxu0 0.0
        %1820 = vmatpush1.msra.mxu0 0.0
        %1821 = vmatprep.subr.mxu0 0.0
        %1822 = vmatpush1.msra.mxu0 0.0
        %1823 = vmatprep.subr.mxu0 0.0
        %1824 = vmatpush1.msra.mxu0 0.0
        %1825 = vmatprep.subr.mxu0 0.0
        %1826 = vmatpush1.msra.mxu0 0.0
        %1827 = vmatprep.subr.mxu0 0.0
        %1828 = vmatpush1.msra.mxu0 0.0
        %1829 = vmatprep.subr.mxu0 0.0
        %1830 = vmatpush1.msra.mxu0 0.0
        %1831 = vmatprep.subr.mxu0 0.0
        %1832 = vmatpush1.msra.mxu0 0.0
        %1833 = vmatprep.subr.mxu0 0.0
        %1834 = vmatpush1.msra.mxu0 0.0
        %1835 = vmatprep.subr.mxu0 0.0
        %1836 = vmatpush1.msra.mxu0 0.0
        %1837 = vmatprep.subr.mxu0 0.0
        %1838 = vmatpush1.msra.mxu0 0.0
        %1839 = vmatprep.subr.mxu0 0.0
        %1840 = vmatpush1.msra.mxu0 0.0
        %1841 = vmatprep.subr.mxu0 0.0
        %1842 = vmatpush1.msra.mxu0 0.0
        %1843 = vmatprep.subr.mxu0 0.0
        %1844 = vmatpush1.msra.mxu0 0.0
        %1845 = vmatprep.subr.mxu0 0.0
        %1846 = vmatpush1.msra.mxu0 0.0
        %1847 = vmatprep.subr.mxu0 0.0
        %1848 = vmatpush1.msra.mxu0 0.0
        %1849 = vmatprep.subr.mxu0 0.0
        %1850 = vmatpush1.msra.mxu0 0.0
        %1851 = vmatprep.subr.mxu0 0.0
        %1852 = vmatpush1.msra.mxu0 0.0
        %1853 = vmatprep.subr.mxu0 0.0
        %1854 = vmatpush1.msra.mxu0 0.0
        %1855 = vmatprep.subr.mxu0 0.0
        %1856 = vmatpush1.msra.mxu0 0.0
        %1857 = vmatprep.subr.mxu0 0.0
        %1858 = vmatpush1.msra.mxu0 0.0
        %1859 = vmatprep.subr.mxu0 0.0
        %1860 = vmatpush1.msra.mxu0 0.0
        %1861 = vmatprep.subr.mxu0 0.0
        %1862 = vmatpush1.msra.mxu0 0.0
        %1863 = vmatprep.subr.mxu0 0.0
        %1864 = vmatpush1.msra.mxu0 0.0
        %1865 = vmatprep.subr.mxu0 0.0
        %1866 = vmatpush1.msra.mxu0 0.0
        %1867 = vmatprep.subr.mxu0 0.0
        %1868 = vmatpush1.msra.mxu0 0.0
        %1869 = vmatprep.subr.mxu0 0.0
        %1870 = vmatpush1.msra.mxu0 0.0
        %1871 = vmatprep.subr.mxu0 0.0
        %1872 = vmatpush1.msra.mxu0 0.0
        %1873 = vmatprep.mubr.f32.mxu0 0.0
        %1874 = vmatmul.mubr.f32.gmra.mrb[0].mxu0 %v1807
        %v1875 = vpop.f32.mrb[0].mxu0
        %v1876 = vadd.f32 0.0, %v1875
        %v1877 = vpop.f32.mrb[0].mxu0
        %1878 = vdwg.mxu0
        %1879 = vrot.lane.b32.xlu0 %v1643, 120
        %v1880 = vpop.permute.xlu0 %1879
        %1881 = vrot.lane.b32.xlu0 %v1710, 120
        %v1882 = vpop.permute.xlu0 %1881
        %v1883 = vsel %vm801, %v1880, 0
        %v1885 = vsel %vm801, %v1882, 0
        %1887 = vmatprep.subr.mxu0 0.0
        %1888 = vmatpush1.xpose.msra.mxu0 %v1885
        %1889 = vmatprep.subr.mxu0 0.0
        %1890 = vmatpush1.xpose.msra.mxu0 0.0
        %1891 = vmatprep.subr.mxu0 0.0
        %1892 = vmatpush1.xpose.msra.mxu0 0.0
        %1893 = vmatprep.subr.mxu0 0.0
        %1894 = vmatpush1.xpose.msra.mxu0 0.0
        %1895 = vmatprep.subr.mxu0 0.0
        %1896 = vmatpush1.xpose.msra.mxu0 0.0
        %1897 = vmatprep.subr.mxu0 0.0
        %1898 = vmatpush1.xpose.msra.mxu0 0.0
        %1899 = vmatprep.subr.mxu0 0.0
        %1900 = vmatpush1.xpose.msra.mxu0 0.0
        %1901 = vmatprep.subr.mxu0 0.0
        %1902 = vmatpush1.xpose.msra.mxu0 0.0
        %1903 = vmatprep.subr.mxu0 0.0
        %1904 = vmatpush1.xpose.msra.mxu0 0.0
        %1905 = vmatprep.subr.mxu0 0.0
        %1906 = vmatpush1.xpose.msra.mxu0 0.0
        %1907 = vmatprep.subr.mxu0 0.0
        %1908 = vmatpush1.xpose.msra.mxu0 0.0
        %1909 = vmatprep.subr.mxu0 0.0
        %1910 = vmatpush1.xpose.msra.mxu0 0.0
        %1911 = vmatprep.subr.mxu0 0.0
        %1912 = vmatpush1.xpose.msra.mxu0 0.0
        %1913 = vmatprep.subr.mxu0 0.0
        %1914 = vmatpush1.xpose.msra.mxu0 0.0
        %1915 = vmatprep.subr.mxu0 0.0
        %1916 = vmatpush1.xpose.msra.mxu0 0.0
        %1917 = vmatprep.subr.mxu0 0.0
        %1918 = vmatpush1.xpose.msra.mxu0 0.0
        %1919 = vmatprep.subr.mxu0 0.0
        %1920 = vmatpush1.xpose.msra.mxu0 0.0
        %1921 = vmatprep.subr.mxu0 0.0
        %1922 = vmatpush1.xpose.msra.mxu0 0.0
        %1923 = vmatprep.subr.mxu0 0.0
        %1924 = vmatpush1.xpose.msra.mxu0 0.0
        %1925 = vmatprep.subr.mxu0 0.0
        %1926 = vmatpush1.xpose.msra.mxu0 0.0
        %1927 = vmatprep.subr.mxu0 0.0
        %1928 = vmatpush1.xpose.msra.mxu0 0.0
        %1929 = vmatprep.subr.mxu0 0.0
        %1930 = vmatpush1.xpose.msra.mxu0 0.0
        %1931 = vmatprep.subr.mxu0 0.0
        %1932 = vmatpush1.xpose.msra.mxu0 0.0
        %1933 = vmatprep.subr.mxu0 0.0
        %1934 = vmatpush1.xpose.msra.mxu0 0.0
        %1935 = vmatprep.subr.mxu0 0.0
        %1936 = vmatpush1.xpose.msra.mxu0 0.0
        %1937 = vmatprep.subr.mxu0 0.0
        %1938 = vmatpush1.xpose.msra.mxu0 0.0
        %1939 = vmatprep.subr.mxu0 0.0
        %1940 = vmatpush1.xpose.msra.mxu0 0.0
        %1941 = vmatprep.subr.mxu0 0.0
        %1942 = vmatpush1.xpose.msra.mxu0 0.0
        %1943 = vmatprep.subr.mxu0 0.0
        %1944 = vmatpush1.xpose.msra.mxu0 0.0
        %1945 = vmatprep.subr.mxu0 0.0
        %1946 = vmatpush1.xpose.msra.mxu0 0.0
        %1947 = vmatprep.subr.mxu0 0.0
        %1948 = vmatpush1.xpose.msra.mxu0 0.0
        %1949 = vmatprep.subr.mxu0 0.0
        %1950 = vmatpush1.xpose.msra.mxu0 0.0
        %1951 = vmatprep.mubr.f32.mxu0 0.0
        %1952 = vmatmul.mubr.f32.gmra.mrb[0].mxu0 %v1883
        %v1953 = vpop.f32.mrb[0].mxu0
        %v1954 = vadd.f32 0.0, %v1953
        %v1955 = vpop.f32.mrb[0].mxu0
        %1956 = vdwg.mxu0
        %v1957 = vmul.f32 %v1954, 0.35355338
        %v1958 = vsel %vm801, %v1957, -inf
        %1959 = vmax.xlane.f32.xlu0 %v1958
        %v1960 = vpop.xlane.xlu0 %1959
        %v1961 = vsub.f32 %v1957, %v1960
        %v1962 = vmul.f32 %v1961, 1.442695
        %v1963 = vpow.pop %v1962
        %v1964 = vsel %vm801, %v1963, 0.0
        %1965 = vadd.xlane.f32.xlu0 %v1964
        %v1966 = vpop.xlane.xlu0 %1965
        %v1967 = vrcp.pop %v1966
        %v1968 = vmul.f32 %v1963, %v1967
        %1969 = vrot.lane.b32.xlu0 %v1710, 88
        %v1970 = vpop.permute.xlu0 %1969
        %v1973 = vsel %vm801, %v1968, 0
        %1975 = vmatprep.subr.mxu0 0.0
        %1976 = vmatpush1.msra.mxu0 %v1970
        %1977 = vmatprep.subr.mxu0 0.0
        %1978 = vmatpush1.msra.mxu0 0.0
        %1979 = vmatprep.subr.mxu0 0.0
        %1980 = vmatpush1.msra.mxu0 0.0
        %1981 = vmatprep.subr.mxu0 0.0
        %1982 = vmatpush1.msra.mxu0 0.0
        %1983 = vmatprep.subr.mxu0 0.0
        %1984 = vmatpush1.msra.mxu0 0.0
        %1985 = vmatprep.subr.mxu0 0.0
        %1986 = vmatpush1.msra.mxu0 0.0
        %1987 = vmatprep.subr.mxu0 0.0
        %1988 = vmatpush1.msra.mxu0 0.0
        %1989 = vmatprep.subr.mxu0 0.0
        %1990 = vmatpush1.msra.mxu0 0.0
        %1991 = vmatprep.subr.mxu0 0.0
        %1992 = vmatpush1.msra.mxu0 0.0
        %1993 = vmatprep.subr.mxu0 0.0
        %1994 = vmatpush1.msra.mxu0 0.0
        %1995 = vmatprep.subr.mxu0 0.0
        %1996 = vmatpush1.msra.mxu0 0.0
        %1997 = vmatprep.subr.mxu0 0.0
        %1998 = vmatpush1.msra.mxu0 0.0
        %1999 = vmatprep.subr.mxu0 0.0
        %2000 = vmatpush1.msra.mxu0 0.0
        %2001 = vmatprep.subr.mxu0 0.0
        %2002 = vmatpush1.msra.mxu0 0.0
        %2003 = vmatprep.subr.mxu0 0.0
        %2004 = vmatpush1.msra.mxu0 0.0
        %2005 = vmatprep.subr.mxu0 0.0
        %2006 = vmatpush1.msra.mxu0 0.0
        %2007 = vmatprep.subr.mxu0 0.0
        %2008 = vmatpush1.msra.mxu0 0.0
        %2009 = vmatprep.subr.mxu0 0.0
        %2010 = vmatpush1.msra.mxu0 0.0
        %2011 = vmatprep.subr.mxu0 0.0
        %2012 = vmatpush1.msra.mxu0 0.0
        %2013 = vmatprep.subr.mxu0 0.0
        %2014 = vmatpush1.msra.mxu0 0.0
        %2015 = vmatprep.subr.mxu0 0.0
        %2016 = vmatpush1.msra.mxu0 0.0
        %2017 = vmatprep.subr.mxu0 0.0
        %2018 = vmatpush1.msra.mxu0 0.0
        %2019 = vmatprep.subr.mxu0 0.0
        %2020 = vmatpush1.msra.mxu0 0.0
        %2021 = vmatprep.subr.mxu0 0.0
        %2022 = vmatpush1.msra.mxu0 0.0
        %2023 = vmatprep.subr.mxu0 0.0
        %2024 = vmatpush1.msra.mxu0 0.0
        %2025 = vmatprep.subr.mxu0 0.0
        %2026 = vmatpush1.msra.mxu0 0.0
        %2027 = vmatprep.subr.mxu0 0.0
        %2028 = vmatpush1.msra.mxu0 0.0
        %2029 = vmatprep.subr.mxu0 0.0
        %2030 = vmatpush1.msra.mxu0 0.0
        %2031 = vmatprep.subr.mxu0 0.0
        %2032 = vmatpush1.msra.mxu0 0.0
        %2033 = vmatprep.subr.mxu0 0.0
        %2034 = vmatpush1.msra.mxu0 0.0
        %2035 = vmatprep.subr.mxu0 0.0
        %2036 = vmatpush1.msra.mxu0 0.0
        %2037 = vmatprep.subr.mxu0 0.0
        %2038 = vmatpush1.msra.mxu0 0.0
        %2039 = vmatprep.mubr.f32.mxu0 0.0
        %2040 = vmatmul.mubr.f32.gmra.mrb[0].mxu0 %v1973
        %v2041 = vpop.f32.mrb[0].mxu0
        %v2042 = vadd.f32 0.0, %v2041
        %v2043 = vpop.f32.mrb[0].mxu0
        %2044 = vdwg.mxu0
        %2045 = vrot.lane.b32.xlu0 %v1643, 112
        %v2046 = vpop.permute.xlu0 %2045
        %2047 = vrot.lane.b32.xlu0 %v1710, 112
        %v2048 = vpop.permute.xlu0 %2047
        %v2049 = vsel %vm801, %v2046, 0
        %v2051 = vsel %vm801, %v2048, 0
        %2053 = vmatprep.subr.mxu0 0.0
        %2054 = vmatpush1.xpose.msra.mxu0 %v2051
        %2055 = vmatprep.subr.mxu0 0.0
        %2056 = vmatpush1.xpose.msra.mxu0 0.0
        %2057 = vmatprep.subr.mxu0 0.0
        %2058 = vmatpush1.xpose.msra.mxu0 0.0
        %2059 = vmatprep.subr.mxu0 0.0
        %2060 = vmatpush1.xpose.msra.mxu0 0.0
        %2061 = vmatprep.subr.mxu0 0.0
        %2062 = vmatpush1.xpose.msra.mxu0 0.0
        %2063 = vmatprep.subr.mxu0 0.0
        %2064 = vmatpush1.xpose.msra.mxu0 0.0
        %2065 = vmatprep.subr.mxu0 0.0
        %2066 = vmatpush1.xpose.msra.mxu0 0.0
        %2067 = vmatprep.subr.mxu0 0.0
        %2068 = vmatpush1.xpose.msra.mxu0 0.0
        %2069 = vmatprep.subr.mxu0 0.0
        %2070 = vmatpush1.xpose.msra.mxu0 0.0
        %2071 = vmatprep.subr.mxu0 0.0
        %2072 = vmatpush1.xpose.msra.mxu0 0.0
        %2073 = vmatprep.subr.mxu0 0.0
        %2074 = vmatpush1.xpose.msra.mxu0 0.0
        %2075 = vmatprep.subr.mxu0 0.0
        %2076 = vmatpush1.xpose.msra.mxu0 0.0
        %2077 = vmatprep.subr.mxu0 0.0
        %2078 = vmatpush1.xpose.msra.mxu0 0.0
        %2079 = vmatprep.subr.mxu0 0.0
        %2080 = vmatpush1.xpose.msra.mxu0 0.0
        %2081 = vmatprep.subr.mxu0 0.0
        %2082 = vmatpush1.xpose.msra.mxu0 0.0
        %2083 = vmatprep.subr.mxu0 0.0
        %2084 = vmatpush1.xpose.msra.mxu0 0.0
        %2085 = vmatprep.subr.mxu0 0.0
        %2086 = vmatpush1.xpose.msra.mxu0 0.0
        %2087 = vmatprep.subr.mxu0 0.0
        %2088 = vmatpush1.xpose.msra.mxu0 0.0
        %2089 = vmatprep.subr.mxu0 0.0
        %2090 = vmatpush1.xpose.msra.mxu0 0.0
        %2091 = vmatprep.subr.mxu0 0.0
        %2092 = vmatpush1.xpose.msra.mxu0 0.0
        %2093 = vmatprep.subr.mxu0 0.0
        %2094 = vmatpush1.xpose.msra.mxu0 0.0
        %2095 = vmatprep.subr.mxu0 0.0
        %2096 = vmatpush1.xpose.msra.mxu0 0.0
        %2097 = vmatprep.subr.mxu0 0.0
        %2098 = vmatpush1.xpose.msra.mxu0 0.0
        %2099 = vmatprep.subr.mxu0 0.0
        %2100 = vmatpush1.xpose.msra.mxu0 0.0
        %2101 = vmatprep.subr.mxu0 0.0
        %2102 = vmatpush1.xpose.msra.mxu0 0.0
        %2103 = vmatprep.subr.mxu0 0.0
        %2104 = vmatpush1.xpose.msra.mxu0 0.0
        %2105 = vmatprep.subr.mxu0 0.0
        %2106 = vmatpush1.xpose.msra.mxu0 0.0
        %2107 = vmatprep.subr.mxu0 0.0
        %2108 = vmatpush1.xpose.msra.mxu0 0.0
        %2109 = vmatprep.subr.mxu0 0.0
        %2110 = vmatpush1.xpose.msra.mxu0 0.0
        %2111 = vmatprep.subr.mxu0 0.0
        %2112 = vmatpush1.xpose.msra.mxu0 0.0
        %2113 = vmatprep.subr.mxu0 0.0
        %2114 = vmatpush1.xpose.msra.mxu0 0.0
        %2115 = vmatprep.subr.mxu0 0.0
        %2116 = vmatpush1.xpose.msra.mxu0 0.0
        %2117 = vmatprep.mubr.f32.mxu0 0.0
        %2118 = vmatmul.mubr.f32.gmra.mrb[0].mxu0 %v2049
        %v2119 = vpop.f32.mrb[0].mxu0
        %v2120 = vadd.f32 0.0, %v2119
        %v2121 = vpop.f32.mrb[0].mxu0
        %2122 = vdwg.mxu0
        %v2123 = vmul.f32 %v2120, 0.35355338
        %v2124 = vsel %vm801, %v2123, -inf
        %2125 = vmax.xlane.f32.xlu0 %v2124
        %v2126 = vpop.xlane.xlu0 %2125
        %v2127 = vsub.f32 %v2123, %v2126
        %v2128 = vmul.f32 %v2127, 1.442695
        %v2129 = vpow.pop %v2128
        %v2130 = vsel %vm801, %v2129, 0.0
        %2131 = vadd.xlane.f32.xlu0 %v2130
        %v2132 = vpop.xlane.xlu0 %2131
        %v2133 = vrcp.pop %v2132
        %v2134 = vmul.f32 %v2129, %v2133
        %2135 = vrot.lane.b32.xlu0 %v1710, 80
        %v2136 = vpop.permute.xlu0 %2135
        %v2139 = vsel %vm801, %v2134, 0
        %2141 = vmatprep.subr.mxu0 0.0
        %2142 = vmatpush1.msra.mxu0 %v2136
        %2143 = vmatprep.subr.mxu0 0.0
        %2144 = vmatpush1.msra.mxu0 0.0
        %2145 = vmatprep.subr.mxu0 0.0
        %2146 = vmatpush1.msra.mxu0 0.0
        %2147 = vmatprep.subr.mxu0 0.0
        %2148 = vmatpush1.msra.mxu0 0.0
        %2149 = vmatprep.subr.mxu0 0.0
        %2150 = vmatpush1.msra.mxu0 0.0
        %2151 = vmatprep.subr.mxu0 0.0
        %2152 = vmatpush1.msra.mxu0 0.0
        %2153 = vmatprep.subr.mxu0 0.0
        %2154 = vmatpush1.msra.mxu0 0.0
        %2155 = vmatprep.subr.mxu0 0.0
        %2156 = vmatpush1.msra.mxu0 0.0
        %2157 = vmatprep.subr.mxu0 0.0
        %2158 = vmatpush1.msra.mxu0 0.0
        %2159 = vmatprep.subr.mxu0 0.0
        %2160 = vmatpush1.msra.mxu0 0.0
        %2161 = vmatprep.subr.mxu0 0.0
        %2162 = vmatpush1.msra.mxu0 0.0
        %2163 = vmatprep.subr.mxu0 0.0
        %2164 = vmatpush1.msra.mxu0 0.0
        %2165 = vmatprep.subr.mxu0 0.0
        %2166 = vmatpush1.msra.mxu0 0.0
        %2167 = vmatprep.subr.mxu0 0.0
        %2168 = vmatpush1.msra.mxu0 0.0
        %2169 = vmatprep.subr.mxu0 0.0
        %2170 = vmatpush1.msra.mxu0 0.0
        %2171 = vmatprep.subr.mxu0 0.0
        %2172 = vmatpush1.msra.mxu0 0.0
        %2173 = vmatprep.subr.mxu0 0.0
        %2174 = vmatpush1.msra.mxu0 0.0
        %2175 = vmatprep.subr.mxu0 0.0
        %2176 = vmatpush1.msra.mxu0 0.0
        %2177 = vmatprep.subr.mxu0 0.0
        %2178 = vmatpush1.msra.mxu0 0.0
        %2179 = vmatprep.subr.mxu0 0.0
        %2180 = vmatpush1.msra.mxu0 0.0
        %2181 = vmatprep.subr.mxu0 0.0
        %2182 = vmatpush1.msra.mxu0 0.0
        %2183 = vmatprep.subr.mxu0 0.0
        %2184 = vmatpush1.msra.mxu0 0.0
        %2185 = vmatprep.subr.mxu0 0.0
        %2186 = vmatpush1.msra.mxu0 0.0
        %2187 = vmatprep.subr.mxu0 0.0
        %2188 = vmatpush1.msra.mxu0 0.0
        %2189 = vmatprep.subr.mxu0 0.0
        %2190 = vmatpush1.msra.mxu0 0.0
        %2191 = vmatprep.subr.mxu0 0.0
        %2192 = vmatpush1.msra.mxu0 0.0
        %2193 = vmatprep.subr.mxu0 0.0
        %2194 = vmatpush1.msra.mxu0 0.0
        %2195 = vmatprep.subr.mxu0 0.0
        %2196 = vmatpush1.msra.mxu0 0.0
        %2197 = vmatprep.subr.mxu0 0.0
        %2198 = vmatpush1.msra.mxu0 0.0
        %2199 = vmatprep.subr.mxu0 0.0
        %2200 = vmatpush1.msra.mxu0 0.0
        %2201 = vmatprep.subr.mxu0 0.0
        %2202 = vmatpush1.msra.mxu0 0.0
        %2203 = vmatprep.subr.mxu0 0.0
        %2204 = vmatpush1.msra.mxu0 0.0
        %2205 = vmatprep.mubr.f32.mxu0 0.0
        %2206 = vmatmul.mubr.f32.gmra.mrb[0].mxu0 %v2139
        %v2207 = vpop.f32.mrb[0].mxu0
        %v2208 = vadd.f32 0.0, %v2207
        %v2209 = vpop.f32.mrb[0].mxu0
        %2210 = vdwg.mxu0
        %2211 = vrot.lane.b32.xlu0 %v1643, 104
        %v2212 = vpop.permute.xlu0 %2211
        %2213 = vrot.lane.b32.xlu0 %v1710, 104
        %v2214 = vpop.permute.xlu0 %2213
        %v2215 = vsel %vm801, %v2212, 0
        %v2217 = vsel %vm801, %v2214, 0
        %2219 = vmatprep.subr.mxu0 0.0
        %2220 = vmatpush1.xpose.msra.mxu0 %v2217
        %2221 = vmatprep.subr.mxu0 0.0
        %2222 = vmatpush1.xpose.msra.mxu0 0.0
        %2223 = vmatprep.subr.mxu0 0.0
        %2224 = vmatpush1.xpose.msra.mxu0 0.0
        %2225 = vmatprep.subr.mxu0 0.0
        %2226 = vmatpush1.xpose.msra.mxu0 0.0
        %2227 = vmatprep.subr.mxu0 0.0
        %2228 = vmatpush1.xpose.msra.mxu0 0.0
        %2229 = vmatprep.subr.mxu0 0.0
        %2230 = vmatpush1.xpose.msra.mxu0 0.0
        %2231 = vmatprep.subr.mxu0 0.0
        %2232 = vmatpush1.xpose.msra.mxu0 0.0
        %2233 = vmatprep.subr.mxu0 0.0
        %2234 = vmatpush1.xpose.msra.mxu0 0.0
        %2235 = vmatprep.subr.mxu0 0.0
        %2236 = vmatpush1.xpose.msra.mxu0 0.0
        %2237 = vmatprep.subr.mxu0 0.0
        %2238 = vmatpush1.xpose.msra.mxu0 0.0
        %2239 = vmatprep.subr.mxu0 0.0
        %2240 = vmatpush1.xpose.msra.mxu0 0.0
        %2241 = vmatprep.subr.mxu0 0.0
        %2242 = vmatpush1.xpose.msra.mxu0 0.0
        %2243 = vmatprep.subr.mxu0 0.0
        %2244 = vmatpush1.xpose.msra.mxu0 0.0
        %2245 = vmatprep.subr.mxu0 0.0
        %2246 = vmatpush1.xpose.msra.mxu0 0.0
        %2247 = vmatprep.subr.mxu0 0.0
        %2248 = vmatpush1.xpose.msra.mxu0 0.0
        %2249 = vmatprep.subr.mxu0 0.0
        %2250 = vmatpush1.xpose.msra.mxu0 0.0
        %2251 = vmatprep.subr.mxu0 0.0
        %2252 = vmatpush1.xpose.msra.mxu0 0.0
        %2253 = vmatprep.subr.mxu0 0.0
        %2254 = vmatpush1.xpose.msra.mxu0 0.0
        %2255 = vmatprep.subr.mxu0 0.0
        %2256 = vmatpush1.xpose.msra.mxu0 0.0
        %2257 = vmatprep.subr.mxu0 0.0
        %2258 = vmatpush1.xpose.msra.mxu0 0.0
        %2259 = vmatprep.subr.mxu0 0.0
        %2260 = vmatpush1.xpose.msra.mxu0 0.0
        %2261 = vmatprep.subr.mxu0 0.0
        %2262 = vmatpush1.xpose.msra.mxu0 0.0
        %2263 = vmatprep.subr.mxu0 0.0
        %2264 = vmatpush1.xpose.msra.mxu0 0.0
        %2265 = vmatprep.subr.mxu0 0.0
        %2266 = vmatpush1.xpose.msra.mxu0 0.0
        %2267 = vmatprep.subr.mxu0 0.0
        %2268 = vmatpush1.xpose.msra.mxu0 0.0
        %2269 = vmatprep.subr.mxu0 0.0
        %2270 = vmatpush1.xpose.msra.mxu0 0.0
        %2271 = vmatprep.subr.mxu0 0.0
        %2272 = vmatpush1.xpose.msra.mxu0 0.0
        %2273 = vmatprep.subr.mxu0 0.0
        %2274 = vmatpush1.xpose.msra.mxu0 0.0
        %2275 = vmatprep.subr.mxu0 0.0
        %2276 = vmatpush1.xpose.msra.mxu0 0.0
        %2277 = vmatprep.subr.mxu0 0.0
        %2278 = vmatpush1.xpose.msra.mxu0 0.0
        %2279 = vmatprep.subr.mxu0 0.0
        %2280 = vmatpush1.xpose.msra.mxu0 0.0
        %2281 = vmatprep.subr.mxu0 0.0
        %2282 = vmatpush1.xpose.msra.mxu0 0.0
        %2283 = vmatprep.mubr.f32.mxu0 0.0
        %2284 = vmatmul.mubr.f32.gmra.mrb[0].mxu0 %v2215
        %v2285 = vpop.f32.mrb[0].mxu0
        %v2286 = vadd.f32 0.0, %v2285
        %v2287 = vpop.f32.mrb[0].mxu0
        %2288 = vdwg.mxu0
        %v2289 = vmul.f32 %v2286, 0.35355338
        %v2290 = vsel %vm801, %v2289, -inf
        %2291 = vmax.xlane.f32.xlu0 %v2290
        %v2292 = vpop.xlane.xlu0 %2291
        %v2293 = vsub.f32 %v2289, %v2292
        %v2294 = vmul.f32 %v2293, 1.442695
        %v2295 = vpow.pop %v2294
        %v2296 = vsel %vm801, %v2295, 0.0
        %2297 = vadd.xlane.f32.xlu0 %v2296
        %v2298 = vpop.xlane.xlu0 %2297
        %v2299 = vrcp.pop %v2298
        %v2300 = vmul.f32 %v2295, %v2299
        %2301 = vrot.lane.b32.xlu0 %v1710, 72
        %v2302 = vpop.permute.xlu0 %2301
        %v2305 = vsel %vm801, %v2300, 0
        %2307 = vmatprep.subr.mxu0 0.0
        %2308 = vmatpush1.msra.mxu0 %v2302
        %2309 = vmatprep.subr.mxu0 0.0
        %2310 = vmatpush1.msra.mxu0 0.0
        %2311 = vmatprep.subr.mxu0 0.0
        %2312 = vmatpush1.msra.mxu0 0.0
        %2313 = vmatprep.subr.mxu0 0.0
        %2314 = vmatpush1.msra.mxu0 0.0
        %2315 = vmatprep.subr.mxu0 0.0
        %2316 = vmatpush1.msra.mxu0 0.0
        %2317 = vmatprep.subr.mxu0 0.0
        %2318 = vmatpush1.msra.mxu0 0.0
        %2319 = vmatprep.subr.mxu0 0.0
        %2320 = vmatpush1.msra.mxu0 0.0
        %2321 = vmatprep.subr.mxu0 0.0
        %2322 = vmatpush1.msra.mxu0 0.0
        %2323 = vmatprep.subr.mxu0 0.0
        %2324 = vmatpush1.msra.mxu0 0.0
        %2325 = vmatprep.subr.mxu0 0.0
        %2326 = vmatpush1.msra.mxu0 0.0
        %2327 = vmatprep.subr.mxu0 0.0
        %2328 = vmatpush1.msra.mxu0 0.0
        %2329 = vmatprep.subr.mxu0 0.0
        %2330 = vmatpush1.msra.mxu0 0.0
        %2331 = vmatprep.subr.mxu0 0.0
        %2332 = vmatpush1.msra.mxu0 0.0
        %2333 = vmatprep.subr.mxu0 0.0
        %2334 = vmatpush1.msra.mxu0 0.0
        %2335 = vmatprep.subr.mxu0 0.0
        %2336 = vmatpush1.msra.mxu0 0.0
        %2337 = vmatprep.subr.mxu0 0.0
        %2338 = vmatpush1.msra.mxu0 0.0
        %2339 = vmatprep.subr.mxu0 0.0
        %2340 = vmatpush1.msra.mxu0 0.0
        %2341 = vmatprep.subr.mxu0 0.0
        %2342 = vmatpush1.msra.mxu0 0.0
        %2343 = vmatprep.subr.mxu0 0.0
        %2344 = vmatpush1.msra.mxu0 0.0
        %2345 = vmatprep.subr.mxu0 0.0
        %2346 = vmatpush1.msra.mxu0 0.0
        %2347 = vmatprep.subr.mxu0 0.0
        %2348 = vmatpush1.msra.mxu0 0.0
        %2349 = vmatprep.subr.mxu0 0.0
        %2350 = vmatpush1.msra.mxu0 0.0
        %2351 = vmatprep.subr.mxu0 0.0
        %2352 = vmatpush1.msra.mxu0 0.0
        %2353 = vmatprep.subr.mxu0 0.0
        %2354 = vmatpush1.msra.mxu0 0.0
        %2355 = vmatprep.subr.mxu0 0.0
        %2356 = vmatpush1.msra.mxu0 0.0
        %2357 = vmatprep.subr.mxu0 0.0
        %2358 = vmatpush1.msra.mxu0 0.0
        %2359 = vmatprep.subr.mxu0 0.0
        %2360 = vmatpush1.msra.mxu0 0.0
        %2361 = vmatprep.subr.mxu0 0.0
        %2362 = vmatpush1.msra.mxu0 0.0
        %2363 = vmatprep.subr.mxu0 0.0
        %2364 = vmatpush1.msra.mxu0 0.0
        %2365 = vmatprep.subr.mxu0 0.0
        %2366 = vmatpush1.msra.mxu0 0.0
        %2367 = vmatprep.subr.mxu0 0.0
        %2368 = vmatpush1.msra.mxu0 0.0
        %2369 = vmatprep.subr.mxu0 0.0
        %2370 = vmatpush1.msra.mxu0 0.0
        %2371 = vmatprep.mubr.f32.mxu0 0.0
        %2372 = vmatmul.mubr.f32.gmra.mrb[0].mxu0 %v2305
        %v2373 = vpop.f32.mrb[0].mxu0
        %v2374 = vadd.f32 0.0, %v2373
        %v2375 = vpop.f32.mrb[0].mxu0
        %2376 = vdwg.mxu0
        %2378 = vrot.lane.b32.xlu0 %v2042, 8
        %v2379 = vpop.permute.xlu0 %2378
        %2382 = vrot.lane.b32.xlu0 %v2208, 16
        %v2383 = vpop.permute.xlu0 %2382
        %2386 = vrot.lane.b32.xlu0 %v2374, 24
        %v2387 = vpop.permute.xlu0 %2386
        %v2389 = vsel %vm801, %v1876, %v2379
        %v2390 = vsel %vm1479, %v2389, %v2383
        %v2391 = vsel %vm1481, %v2390, %v2387
        %v2392 = vpack.c.bf16 %v2391, %v2391
        %v2393 = vld [vmem:[%s12] sm:$0xf]
        %v2394 = vld [vmem:[%s12 + $0x4] sm:$0xf]
        %v2395 = vld [vmem:[%s12 + $0x8] sm:$0xf]
        %v2396 = vld [vmem:[%s12 + $0xc] sm:$0xf]
        %v2397 = vld [vmem:[%s13] sm:$0x1]
        %v2399 = vlaneseq
        %v2400 = vshrl.u32 %v2399, 7
        %v2401 = vsub.s32 0, %v2400
        %v2402 = vrot.slane %v2397, %v2401
        %v2408 = vunpack.c.l.b16 %v2393
        %v2409 = vunpack.c.l.b16 %v2394
        %v2410 = vunpack.c.l.b16 %v2395
        %v2411 = vunpack.c.l.b16 %v2396
        %v2412 = vpack.c.b16 %v2409, %v2408
        %v2413 = vpack.c.b16 %v2411, %v2410
        %v2417 = vsel %vm749, %v2392, 0
        %2419 = vmatprep.subr.bf16.mxu0 0
        %2420 = vmatpush1.bf16.msra.mxu0 %v2412
        %2421 = vmatprep.subr.bf16.mxu0 0
        %2422 = vmatpush1.bf16.msra.mxu0 %v2413
        %2423 = vmatprep.subr.bf16.mxu0 0
        %2424 = vmatpush1.bf16.msra.mxu0 0
        %2425 = vmatprep.subr.bf16.mxu0 0
        %2426 = vmatpush1.bf16.msra.mxu0 0
        %2427 = vmatprep.subr.bf16.mxu0 0
        %2428 = vmatpush1.bf16.msra.mxu0 0
        %2429 = vmatprep.subr.bf16.mxu0 0
        %2430 = vmatpush1.bf16.msra.mxu0 0
        %2431 = vmatprep.subr.bf16.mxu0 0
        %2432 = vmatpush1.bf16.msra.mxu0 0
        %2433 = vmatprep.subr.bf16.mxu0 0
        %2434 = vmatpush1.bf16.msra.mxu0 0
        %2435 = vmatprep.subr.bf16.mxu0 0
        %2436 = vmatpush1.bf16.msra.mxu0 0
        %2437 = vmatprep.subr.bf16.mxu0 0
        %2438 = vmatpush1.bf16.msra.mxu0 0
        %2439 = vmatprep.subr.bf16.mxu0 0
        %2440 = vmatpush1.bf16.msra.mxu0 0
        %2441 = vmatprep.subr.bf16.mxu0 0
        %2442 = vmatpush1.bf16.msra.mxu0 0
        %2443 = vmatprep.subr.bf16.mxu0 0
        %2444 = vmatpush1.bf16.msra.mxu0 0
        %2445 = vmatprep.subr.bf16.mxu0 0
        %2446 = vmatpush1.bf16.msra.mxu0 0
        %2447 = vmatprep.subr.bf16.mxu0 0
        %2448 = vmatpush1.bf16.msra.mxu0 0
        %2449 = vmatprep.subr.bf16.mxu0 0
        %2450 = vmatpush1.bf16.msra.mxu0 0
        %2451 = vmatprep.mubr.bf16.mxu0 0
        %2452 = vmatmul.mubr.bf16.gmra.mrb[0].mxu0 %v2417
        %v2453 = vpop.f32.mrb[0].mxu0
        %v2454 = vadd.f32 %v2402, %v2453
        %v2455 = vpop.f32.mrb[0].mxu0
        %v2456 = vpop.f32.mrb[0].mxu0
        %v2457 = vpop.f32.mrb[0].mxu0
        %2458 = vdwg.mxu0
        %v2459 = vadd.f32 %v2454, %v1580
        %v2460 = vld [vmem:[%s14] sm:$0x1]
        %v2461 = vld [vmem:[%s15] sm:$0x1]
        %v2462 = vsel %vm749, %v2459, 0.0
        %2463 = vadd.xlane.f32.xlu0 %v2462
        %v2464 = vpop.xlane.xlu0 %2463
        %v2465 = vmul.f32 %v2464, %v1556
        %v2466 = vsub.f32 %v2459, %v2465
        %v2467 = vmul.f32 %v2466, %v2466
        %v2468 = vsel %vm749, %v2467, 0.0
        %2469 = vadd.xlane.f32.xlu0 %v2468
        %v2470 = vpop.xlane.xlu0 %2469
        %v2471 = vmul.f32 %v2470, %v1556
        %v2472 = vadd.f32 %v2471, 1e-05
        %v2473 = vrsqrt.pop %v2472
        %v2474 = vmul.f32 %v2466, %v2473
        %v2476 = vlaneseq
        %v2477 = vshrl.u32 %v2476, 7
        %v2478 = vsub.s32 0, %v2477
        %v2479 = vrot.slane %v2460, %v2478
        %v2481 = vmul.f32 %v2474, %v2479
        %v2483 = vlaneseq
        %v2484 = vshrl.u32 %v2483, 7
        %v2485 = vsub.s32 0, %v2484
        %v2486 = vrot.slane %v2461, %v2485
        %v2488 = vadd.f32 %v2481, %v2486
        %v2489 = vpack.c.bf16 %v2488, %v2488
        %v2490 = vld [vmem:[%s16] sm:$0xf]
        %v2491 = vld [vmem:[%s16 + $0x4] sm:$0xf]
        %v2492 = vld [vmem:[%s16 + $0x8] sm:$0xf]
        %v2493 = vld [vmem:[%s16 + $0xc] sm:$0xf]
        %v2494 = vld [vmem:[%s17] sm:$0x1]
        %v2496 = vlaneseq
        %v2497 = vshrl.u32 %v2496, 7
        %v2498 = vsub.s32 0, %v2497
        %v2499 = vrot.slane %v2494, %v2498
        %v2505 = vunpack.c.l.b16 %v2490
        %v2506 = vunpack.c.l.b16 %v2491
        %v2507 = vunpack.c.l.b16 %v2492
        %v2508 = vunpack.c.l.b16 %v2493
        %v2509 = vpack.c.b16 %v2506, %v2505
        %v2510 = vpack.c.b16 %v2508, %v2507
        %v2514 = vsel %vm749, %v2489, 0
        %2516 = vmatprep.subr.bf16.mxu0 0
        %2517 = vmatpush1.bf16.msra.mxu0 %v2509
        %2518 = vmatprep.subr.bf16.mxu0 0
        %2519 = vmatpush1.bf16.msra.mxu0 %v2510
        %2520 = vmatprep.subr.bf16.mxu0 0
        %2521 = vmatpush1.bf16.msra.mxu0 0
        %2522 = vmatprep.subr.bf16.mxu0 0
        %2523 = vmatpush1.bf16.msra.mxu0 0
        %2524 = vmatprep.subr.bf16.mxu0 0
        %2525 = vmatpush1.bf16.msra.mxu0 0
        %2526 = vmatprep.subr.bf16.mxu0 0
        %2527 = vmatpush1.bf16.msra.mxu0 0
        %2528 = vmatprep.subr.bf16.mxu0 0
        %2529 = vmatpush1.bf16.msra.mxu0 0
        %2530 = vmatprep.subr.bf16.mxu0 0
        %2531 = vmatpush1.bf16.msra.mxu0 0
        %2532 = vmatprep.subr.bf16.mxu0 0
        %2533 = vmatpush1.bf16.msra.mxu0 0
        %2534 = vmatprep.subr.bf16.mxu0 0
        %2535 = vmatpush1.bf16.msra.mxu0 0
        %2536 = vmatprep.subr.bf16.mxu0 0
        %2537 = vmatpush1.bf16.msra.mxu0 0
        %2538 = vmatprep.subr.bf16.mxu0 0
        %2539 = vmatpush1.bf16.msra.mxu0 0
        %2540 = vmatprep.subr.bf16.mxu0 0
        %2541 = vmatpush1.bf16.msra.mxu0 0
        %2542 = vmatprep.subr.bf16.mxu0 0
        %2543 = vmatpush1.bf16.msra.mxu0 0
        %2544 = vmatprep.subr.bf16.mxu0 0
        %2545 = vmatpush1.bf16.msra.mxu0 0
        %2546 = vmatprep.subr.bf16.mxu0 0
        %2547 = vmatpush1.bf16.msra.mxu0 0
        %2548 = vmatprep.mubr.bf16.mxu0 0
        %2549 = vmatmul.mubr.bf16.gmra.mrb[0].mxu0 %v2514
        %v2550 = vpop.f32.mrb[0].mxu0
        %v2551 = vadd.f32 %v2499, %v2550
        %v2552 = vpop.f32.mrb[0].mxu0
        %v2553 = vpop.f32.mrb[0].mxu0
        %v2554 = vpop.f32.mrb[0].mxu0
        %2555 = vdwg.mxu0
        %v2556 = vmax.f32 %v2551, 0.0
        %v2557 = vpack.c.bf16 %v2556, %v2556
        %v2558 = vld [vmem:[%s18] sm:$0xf]
        %v2559 = vld [vmem:[%s18 + $0x4] sm:$0xf]
        %v2560 = vld [vmem:[%s18 + $0x8] sm:$0xf]
        %v2561 = vld [vmem:[%s18 + $0xc] sm:$0xf]
        %v2562 = vld [vmem:[%s18 + $0x10] sm:$0xf]
        %v2563 = vld [vmem:[%s18 + $0x14] sm:$0xf]
        %v2564 = vld [vmem:[%s18 + $0x18] sm:$0xf]
        %v2565 = vld [vmem:[%s18 + $0x1c] sm:$0xf]
        %v2566 = vld [vmem:[%s18 + $0x20] sm:$0xf]
        %v2567 = vld [vmem:[%s18 + $0x24] sm:$0xf]
        %v2568 = vld [vmem:[%s18 + $0x28] sm:$0xf]
        %v2569 = vld [vmem:[%s18 + $0x2c] sm:$0xf]
        %v2570 = vld [vmem:[%s18 + $0x30] sm:$0xf]
        %v2571 = vld [vmem:[%s18 + $0x34] sm:$0xf]
        %v2572 = vld [vmem:[%s18 + $0x38] sm:$0xf]
        %v2573 = vld [vmem:[%s18 + $0x3c] sm:$0xf]
        %v2574 = vld [vmem:[%s19] sm:$0x1]
        %v2576 = vlaneseq
        %v2577 = vshrl.u32 %v2576, 7
        %v2578 = vsub.s32 0, %v2577
        %v2579 = vrot.slane %v2574, %v2578
        %v2597 = vunpack.c.l.b16 %v2558
        %v2598 = vunpack.c.l.b16 %v2559
        %v2599 = vunpack.c.l.b16 %v2560
        %v2600 = vunpack.c.l.b16 %v2561
        %v2601 = vunpack.c.l.b16 %v2562
        %v2602 = vunpack.c.l.b16 %v2563
        %v2603 = vunpack.c.l.b16 %v2564
        %v2604 = vunpack.c.l.b16 %v2565
        %v2605 = vunpack.c.l.b16 %v2566
        %v2606 = vunpack.c.l.b16 %v2567
        %v2607 = vunpack.c.l.b16 %v2568
        %v2608 = vunpack.c.l.b16 %v2569
        %v2609 = vunpack.c.l.b16 %v2570
        %v2610 = vunpack.c.l.b16 %v2571
        %v2611 = vunpack.c.l.b16 %v2572
        %v2612 = vunpack.c.l.b16 %v2573
        %v2613 = vpack.c.b16 %v2598, %v2597
        %v2614 = vpack.c.b16 %v2600, %v2599
        %v2615 = vpack.c.b16 %v2602, %v2601
        %v2616 = vpack.c.b16 %v2604, %v2603
        %v2617 = vpack.c.b16 %v2606, %v2605
        %v2618 = vpack.c.b16 %v2608, %v2607
        %v2619 = vpack.c.b16 %v2610, %v2609
        %v2620 = vpack.c.b16 %v2612, %v2611
        %2629 = vmatprep.subr.bf16.mxu0 0
        %2630 = vmatpush1.bf16.msra.mxu0 %v2613
        %2631 = vmatprep.subr.bf16.mxu0 0
        %2632 = vmatpush1.bf16.msra.mxu0 %v2614
        %2633 = vmatprep.subr.bf16.mxu0 0
        %2634 = vmatpush1.bf16.msra.mxu0 %v2615
        %2635 = vmatprep.subr.bf16.mxu0 0
        %2636 = vmatpush1.bf16.msra.mxu0 %v2616
        %2637 = vmatprep.subr.bf16.mxu0 0
        %2638 = vmatpush1.bf16.msra.mxu0 %v2617
        %2639 = vmatprep.subr.bf16.mxu0 0
        %2640 = vmatpush1.bf16.msra.mxu0 %v2618
        %2641 = vmatprep.subr.bf16.mxu0 0
        %2642 = vmatpush1.bf16.msra.mxu0 %v2619
        %2643 = vmatprep.subr.bf16.mxu0 0
        %2644 = vmatpush1.bf16.msra.mxu0 %v2620
        %2645 = vmatprep.subr.bf16.mxu0 0
        %2646 = vmatpush1.bf16.msra.mxu0 0
        %2647 = vmatprep.subr.bf16.mxu0 0
        %2648 = vmatpush1.bf16.msra.mxu0 0
        %2649 = vmatprep.subr.bf16.mxu0 0
        %2650 = vmatpush1.bf16.msra.mxu0 0
        %2651 = vmatprep.subr.bf16.mxu0 0
        %2652 = vmatpush1.bf16.msra.mxu0 0
        %2653 = vmatprep.subr.bf16.mxu0 0
        %2654 = vmatpush1.bf16.msra.mxu0 0
        %2655 = vmatprep.subr.bf16.mxu0 0
        %2656 = vmatpush1.bf16.msra.mxu0 0
        %2657 = vmatprep.subr.bf16.mxu0 0
        %2658 = vmatpush1.bf16.msra.mxu0 0
        %2659 = vmatprep.subr.bf16.mxu0 0
        %2660 = vmatpush1.bf16.msra.mxu0 0
        %2661 = vmatprep.mubr.bf16.mxu0 0
        %2662 = vmatmul.mubr.bf16.gmra.mrb[0].mxu0 %v2557
        %v2663 = vpop.f32.mrb[0].mxu0
        %v2664 = vadd.f32 %v2579, %v2663
        %v2665 = vpop.f32.mrb[0].mxu0
        %v2666 = vpop.f32.mrb[0].mxu0
        %v2667 = vpop.f32.mrb[0].mxu0
        %2668 = vdwg.mxu0
        %v2669 = vadd.f32 %v2664, %v2488
        %v2670 = vld [vmem:[#allocation2] sm:$0x1]
        %v2671 = vld [vmem:[#allocation4] sm:$0x1]
        %v2672 = vsel %vm749, %v2669, 0.0
        %2673 = vadd.xlane.f32.xlu0 %v2672
        %v2674 = vpop.xlane.xlu0 %2673
        %v2675 = vmul.f32 %v2674, %v1556
        %v2676 = vsub.f32 %v2669, %v2675
        %v2677 = vmul.f32 %v2676, %v2676
        %v2678 = vsel %vm749, %v2677, 0.0
        %2679 = vadd.xlane.f32.xlu0 %v2678
        %v2680 = vpop.xlane.xlu0 %2679
        %v2681 = vmul.f32 %v2680, %v1556
        %v2682 = vadd.f32 %v2681, 1e-05
        %v2683 = vrsqrt.pop %v2682
        %v2684 = vmul.f32 %v2676, %v2683
        %v2686 = vlaneseq
        %v2687 = vshrl.u32 %v2686, 7
        %v2688 = vsub.s32 0, %v2687
        %v2689 = vrot.slane %v2670, %v2688
        %v2691 = vmul.f32 %v2684, %v2689
        %v2693 = vlaneseq
        %v2694 = vshrl.u32 %v2693, 7
        %v2695 = vsub.s32 0, %v2694
        %v2696 = vrot.slane %v2671, %v2695
        %v2698 = vadd.f32 %v2691, %v2696
        %2699 = vst.msk [vmem:[%s721] sm:$0xff] %vm749, %v2698
        %p2700 = scmp.lt.s32.totalorder %s35, 1
        %s2701 = scalar_select %p2700, %s35, 1
        %s2702 = smul.addr %s2701, 8
        %s2703 = scalar_lea.vmem %s22, %s2702
        // Predicated region
        $region117: #{decoder_forward.4} parent=107 // pred_check
          %p2704 = pneg %p525
        $region118: #{decoder_forward.4} parent=107 // pred_check_branch
          %2706 = sbr.rel (%p2704) target = $region120
        $region119: #{decoder_forward.4} parent=107 // pred_region
          _
        $region120: #{decoder_forward.4} parent=107 // pred_fallthru
          _
      $region108: #{decoder_forward.4} parent=5 // pred_fallthru
        _
      %p2707 = scmp.le.s32.totalorder 2, %s30
      // Predicated region
      $region121: #{decoder_forward.4} parent=5 // pred_check
        %p2708 = pneg %p2707
      $region122: #{decoder_forward.4} parent=5 // pred_check_branch
        %2710 = sbr.rel (%p2708) target = $region124
      $region123: #{decoder_forward.4} parent=5 // pred_region
        %s2711 = ssub.s32 %s30, 2
        // Predicated region
        $region125: #{decoder_forward.4} parent=123 // pred_check
          %p2712 = pneg %p531
        $region126: #{decoder_forward.4} parent=123 // pred_check_branch
          %2714 = sbr.rel (%p2712) target = $region128
        $region127: #{decoder_forward.4} parent=123 // pred_region
          %p2715 = scmp.lt.s32.totalorder %s36, 1
          %s2716 = scalar_select %p2715, %s36, 1
          %s2717 = smul.addr %s2716, 8
          %s2718 = scalar_lea.vmem %s22, %s2717
        $region128: #{decoder_forward.4} parent=123 // pred_fallthru
          _
      $region124: #{decoder_forward.4} parent=5 // pred_fallthru
        _
    $region6: #{decoder_forward.4} parent=1 // loop_footer
      %s34 = sadd.s32 1, %s30
    $region7: #{decoder_forward.4} parent=1 // loop_footer_branch
      %29 = sbr.rel target = $region3
    $region8: #{decoder_forward.4} parent=1 // loop_exit
      _
    %2719 = vsyncpa [#allocation3], 1
    %s2720 = scalar_lea.sflag [#allocation3], 1
    %2721 = vsyncpa %s2720, 1
    %2722 = vsyncpa [#allocation5], 1

</llo_original>
